<compile_context>
chip_gen: v7x
topology: tpu7x:2x2x1
jax: 0.10.0
libtpu: 0.0.40
codegen_flags: <defaults>
</compile_context>

<pallas_src>
import math

import jax
import jax.numpy as jnp
from jax import lax
from jax.experimental import pallas as pl
from jax.experimental.pallas import tpu as pltpu

D_MODEL = 32
HEADS = 4
D_K = D_MODEL // HEADS
D_FF = 2048                  # FeedForward default d_ff in the PyTorch module
FF_CHUNK = 512               # feed-forward tiled along d_ff
EPS = 1e-6
NEG_INF = -1000000000.0


# ----------------------------- in-kernel helpers -----------------------------

def _norm(x, alpha, bias):
    # torch Norm: alpha * (x - mean) / (std_unbiased + eps) + bias   (exact division)
    mean = jnp.mean(x, axis=-1, keepdims=True)
    diff = x - mean
    var = jnp.sum(diff * diff, axis=-1, keepdims=True) * (1.0 / (x.shape[-1] - 1))
    return alpha * (diff / (jnp.sqrt(var) + EPS)) + bias


# ----------------------------- fused encoder kernel --------------------------

def encoder_kernel(x_ref, mask_ref,
                   na_ref, nb_ref, wqkv_ref, bqkv_ref, wo_ref, bo_ref,
                   w1_ref, b1_ref, w2_ref, b2_ref,
                   o_ref):
    R, D = x_ref.shape                    # R = Bblk * S flattened rows
    Bblk, S = mask_ref.shape
    n_layers = wqkv_ref.shape[0]

    x = x_ref[...]                        # (R, D) f32
    m = mask_ref[...]                     # (Bblk, S) f32

    # masked_fill semantics as a fused multiply-add, built in-kernel from the 2-D mask:
    #   keep==1 -> score/sqrt(d_k),   keep==0 -> exactly NEG_INF
    keep = (m[:, :, None] * m[:, None, :] != 0.0).astype(jnp.float32)      # (Bblk,S,S)
    kscale = jnp.concatenate([keep * (1.0 / math.sqrt(D_K))] * HEADS, axis=0)
    negb = jnp.concatenate([(1.0 - keep) * NEG_INF] * HEADS, axis=0)       # (H*Bblk,S,S)

    for l in range(n_layers):             # static unroll; fine for small N
        # TODO(synk): switch to lax.fori_loop with dynamic ref[l] loads for deep stacks.
        na_l = na_ref[l]                  # (2, D)
        nb_l = nb_ref[l]

        # ---- sub-layer 1: pre-norm + multi-head self-attention + residual ----
        x2 = _norm(x, na_l[0], nb_l[0])
        qkv = jnp.dot(x2.astype(jnp.bfloat16), wqkv_ref[l],
                      preferred_element_type=jnp.float32) + bqkv_ref[l]     # (R, 3D)
        qkv3 = qkv.reshape(Bblk, S, 3 * D)

        # stack heads along the (single) batch axis -> one batched dot_general per step
        qh = jnp.concatenate(
            [qkv3[:, :, h * D_K:(h + 1) * D_K] for h in range(HEADS)],
            axis=0).astype(jnp.bfloat16)                                    # (H*Bblk,S,D_K)
        kh = jnp.concatenate(
            [qkv3[:, :, D + h * D_K:D + (h + 1) * D_K] for h in range(HEADS)],
            axis=0).astype(jnp.bfloat16)
        vh = jnp.concatenate(
            [qkv3[:, :, 2 * D + h * D_K:2 * D + (h + 1) * D_K] for h in range(HEADS)],
            axis=0).astype(jnp.bfloat16)

        s = lax.dot_general(qh, kh, (((2,), (2,)), ((0,), (0,))),
                            preferred_element_type=jnp.float32)             # (H*Bblk,S,S)
        s = s * kscale + negb
        p = jnp.exp(s - jnp.max(s, axis=-1, keepdims=True))
        p = p * pl.reciprocal(jnp.sum(p, axis=-1, keepdims=True), approx=True)
        oh = lax.dot_general(p.astype(jnp.bfloat16), vh,
                             (((2,), (1,)), ((0,), (0,))),
                             preferred_element_type=jnp.float32)            # (H*Bblk,S,D_K)
        # "concat" in head-major order, then a single (R,32)x(32,32) output projection
        concat = jnp.concatenate(
            [oh[h * Bblk:(h + 1) * Bblk] for h in range(HEADS)], axis=-1)   # (Bblk,S,D)
        attn = jnp.dot(concat.reshape(R, D).astype(jnp.bfloat16), wo_ref[l],
                       preferred_element_type=jnp.float32)
        x = x + attn + bo_ref[l]

        # ---- sub-layer 2: pre-norm + feed-forward, tiled along d_ff ----
        x2 = _norm(x, na_l[1], nb_l[1]).astype(jnp.bfloat16)
        ff = jnp.zeros((R, D), jnp.float32)
        for c in range(0, D_FF, FF_CHUNK):
            h1 = jnp.dot(x2, w1_ref[l, :, c:c + FF_CHUNK],
                         preferred_element_type=jnp.float32) + b1_ref[l, c:c + FF_CHUNK]
            h1 = jnp.maximum(h1, 0.0)
            ff = ff + jnp.dot(h1.astype(jnp.bfloat16), w2_ref[l, c:c + FF_CHUNK, :],
                              preferred_element_type=jnp.float32)
        x = x + ff + b2_ref[l]

    o_ref[...] = x


# ----------------------------- wrapper ---------------------------------------

def prepare_params(params):
    """One-time bf16 cast of the matmul weight stacks (f32 accumulation in-kernel)."""
    p = dict(params)
    for k in ("wqkv", "wo", "w1", "w2"):
        p[k] = params[k].astype(jnp.bfloat16)
    return p


def encoder_forward(x, mask, params, rows_per_block=512):
    """x: (B, S, D) f32; mask: (B, S) or None; params from prepare_params()."""
    B, S, D = x.shape
    assert D == D_MODEL

    if mask is None:
        mask2d = jnp.ones((B, S), jnp.float32)
    else:
        mask2d = mask.astype(jnp.float32)

    # ---- row-block selection: M = Bblk*S is the only large MXU dimension ----
    Bblk_target = max(1, rows_per_block // S)
    if B <= Bblk_target:
        Bblk = B                                    # whole batch in one grid step
        half = B // 2
        # v7x has 2 TensorCores: split into 2 "parallel" steps if each half keeps
        # a healthy, 8-row-aligned M; single step stays optimal for small problems.
        if B % 2 == 0 and half % 8 == 0 and half * S >= 256:
            Bblk = half
    else:
        Bblk = max(8, (Bblk_target // 8) * 8)       # tile-aligned multi-step blocks
        if Bblk >= B:
            Bblk = B

    # pad the batch up to a multiple of Bblk instead of shrinking Bblk for awkward B
    B_pad = ((B + Bblk - 1) // Bblk) * Bblk
    if B_pad != B:
        x = jnp.concatenate([x, jnp.zeros((B_pad - B, S, D), x.dtype)], axis=0)
        mask2d = jnp.concatenate(
            [mask2d, jnp.ones((B_pad - B, S), jnp.float32)], axis=0)
    R = Bblk * S
    grid = (B_pad // Bblk,)

    def const_spec(shape):
        rank = len(shape)
        return pl.BlockSpec(shape, lambda i, _r=rank: (0,) * _r)

    # rough VMEM budget: activations + double-buffered weights + largest intermediates
    weight_bytes = sum(int(v.size) * v.dtype.itemsize for v in params.values())
    est = (4 * R * D * 4                         # x in/out, double-buffered
           + 2 * weight_bytes                    # constant blocks, double-buffered
           + R * 3 * D * 4                       # qkv
           + 3 * HEADS * Bblk * S * S * 4        # scores / probs / mask terms
           + 3 * R * FF_CHUNK * 4                # d_ff chunk (f32 + bf16) + slack
           + (4 << 20))
    vmem_limit = min(64 << 20, max(32 << 20, est))

    out_flat = pl.pallas_call(
        encoder_kernel,
        out_shape=jax.ShapeDtypeStruct((B_pad * S, D), jnp.float32),
        grid=grid,
        in_specs=[
            pl.BlockSpec((R, D), lambda i: (i, 0)),        # x, flattened rows
            pl.BlockSpec((Bblk, S), lambda i: (i, 0)),     # 2-D padding mask
            const_spec(params["norm_alpha"].shape),
            const_spec(params["norm_bias"].shape),
            const_spec(params["wqkv"].shape),
            const_spec(params["bqkv"].shape),
            const_spec(params["wo"].shape),
            const_spec(params["bo"].shape),
            const_spec(params["w1"].shape),
            const_spec(params["b1"].shape),
            const_spec(params["w2"].shape),
            const_spec(params["b2"].shape),
        ],
        out_specs=pl.BlockSpec((R, D), lambda i: (i, 0)),
        compiler_params=pltpu.CompilerParams(
            dimension_semantics=("parallel",),
            vmem_limit_bytes=vmem_limit),
    )(
        x.reshape(B_pad * S, D), mask2d,
        params["norm_alpha"], params["norm_bias"],
        params["wqkv"], params["bqkv"],
        params["wo"], params["bo"],
        params["w1"], params["b1"],
        params["w2"], params["b2"],
    )
    return out_flat[: B * S].reshape(B, S, D)


# ----------------------------- params + pure-JAX reference -------------------

def init_params(key, n_layers):
    D, F = D_MODEL, D_FF
    ks = jax.random.split(key, 8)

    def rnd(k, shape, scale):
        return jax.random.normal(k, shape, jnp.float32) * scale

    # Linear weights stored pre-transposed to (in, out): kernel computes x @ W
    return dict(
        norm_alpha=jnp.ones((n_layers, 2, D), jnp.float32),
        norm_bias=jnp.zeros((n_layers, 2, D), jnp.float32),
        wqkv=rnd(ks[0], (n_layers, D, 3 * D), 0.05),   # [Wq^T | Wk^T | Wv^T]
        bqkv=rnd(ks[1], (n_layers, 3 * D), 0.02),
        wo=rnd(ks[2], (n_layers, D, D), 0.05),
        bo=rnd(ks[3], (n_layers, D), 0.02),
        w1=rnd(ks[4], (n_layers, D, F), 0.05),
        b1=rnd(ks[5], (n_layers, F), 0.02),
        w2=rnd(ks[6], (n_layers, F, D), 0.05),
        b2=rnd(ks[7], (n_layers, D), 0.02),
    )


def reference(x, mask, p):
    n_layers = p["w1"].shape[0]

    def norm(x, a, b):
        mean = jnp.mean(x, axis=-1, keepdims=True)
        std = jnp.std(x, axis=-1, keepdims=True, ddof=1)
        return a * (x - mean) / (std + EPS) + b

    def mha(xin, mask, wqkv, bqkv, wo, bo):
        B, S, D = xin.shape
        qkv = xin @ wqkv + bqkv
        q, k, v = [qkv[..., i * D:(i + 1) * D]
                   .reshape(B, S, HEADS, D_K).transpose(0, 2, 1, 3)
                   for i in range(3)]
        scores = jnp.einsum("bhqd,bhkd->bhqk", q, k) / math.sqrt(D_K)
        if mask is not None:
            m = mask.astype(jnp.float32)
            mask2d = m[:, None, :, None] * m[:, None, None, :]
            scores = jnp.where(mask2d == 0.0, NEG_INF, scores)
        probs = jax.nn.softmax(scores, axis=-1)
        out = jnp.einsum("bhqk,bhkd->bhqd", probs, v)
        out = out.transpose(0, 2, 1, 3).reshape(B, S, D)
        return out @ wo + bo

    for l in range(n_layers):
        x2 = norm(x, p["norm_alpha"][l, 0], p["norm_bias"][l, 0])
        x = x + mha(x2, mask, p["wqkv"][l], p["bqkv"][l], p["wo"][l], p["bo"][l])
        x2 = norm(x, p["norm_alpha"][l, 1], p["norm_bias"][l, 1])
        h = jnp.maximum(x2 @ p["w1"][l] + p["b1"][l], 0.0)
        x = x + h @ p["w2"][l] + p["b2"][l]
    return x


# ----------------------------- main -------------------------------------------

if __name__ == "__main__":
    key = jax.random.PRNGKey(0)
    B, S, N_LAYERS = 2, 8, 2
    k0, k1 = jax.random.split(key, 2)
    x = jax.random.normal(k0, (B, S, D_MODEL), jnp.float32)
    # 2-D padding mask (batch, seq) with some zeroed (padded) positions
    mask = (jnp.arange(S)[None, :] < jnp.array([6, 8])[:, None]).astype(jnp.float32)

    params = init_params(k1, N_LAYERS)
    dev_params = prepare_params(params)      # bf16 weight cast hoisted out of forward

    fwd = jax.jit(lambda xx, mm: encoder_forward(xx, mm, dev_params))
    out = jax.block_until_ready(fwd(x, mask))

    ref = reference(x, mask, params)
    err = float(jnp.max(jnp.abs(out - ref)))
    # bf16 matmul operands (f32 accumulation) + approx softmax reciprocal -> tolerance
    assert jnp.allclose(out, ref, atol=2e-2, rtol=2e-2), f"max abs err = {err}"
    print("KERNEL_OK")
</pallas_src>

<mosaic_0001>
module attributes {stable_mosaic.version = 11 : i64} {
  func.func @encoder_kernel(%arg0: i32, %arg1: memref<16x32xf32, #tpu.memory_space<vmem>>, %arg2: memref<2x8xf32, #tpu.memory_space<vmem>>, %arg3: memref<2x2x32xf32, #tpu.memory_space<vmem>>, %arg4: memref<2x2x32xf32, #tpu.memory_space<vmem>>, %arg5: memref<2x32x96xbf16, #tpu.memory_space<vmem>>, %arg6: memref<2x96xf32, #tpu.memory_space<vmem>>, %arg7: memref<2x32x32xbf16, #tpu.memory_space<vmem>>, %arg8: memref<2x32xf32, #tpu.memory_space<vmem>>, %arg9: memref<2x32x2048xbf16, #tpu.memory_space<vmem>>, %arg10: memref<2x2048xf32, #tpu.memory_space<vmem>>, %arg11: memref<2x2048x32xbf16, #tpu.memory_space<vmem>>, %arg12: memref<2x32xf32, #tpu.memory_space<vmem>>, %arg13: memref<16x32xf32, #tpu.memory_space<vmem>>) attributes {dimension_semantics = [#tpu.dimension_semantics<parallel>], iteration_bounds = array<i64: 1>, scalar_prefetch = 0 : i64, scratch_operands = 0 : i64, tpu.core_type = #tpu.core_type<tc>, window_params = [{transform_indices = @transform_0, window_bounds = array<i64: 16, 32>}, {transform_indices = @transform_1, window_bounds = array<i64: 2, 8>}, {pipeline_mode = #tpu.pipeline_mode<synchronous>, transform_indices = @transform_2, window_bounds = array<i64: 2, 2, 32>}, {pipeline_mode = #tpu.pipeline_mode<synchronous>, transform_indices = @transform_3, window_bounds = array<i64: 2, 2, 32>}, {pipeline_mode = #tpu.pipeline_mode<synchronous>, transform_indices = @transform_4, window_bounds = array<i64: 2, 32, 96>}, {pipeline_mode = #tpu.pipeline_mode<synchronous>, transform_indices = @transform_5, window_bounds = array<i64: 2, 96>}, {pipeline_mode = #tpu.pipeline_mode<synchronous>, transform_indices = @transform_6, window_bounds = array<i64: 2, 32, 32>}, {pipeline_mode = #tpu.pipeline_mode<synchronous>, transform_indices = @transform_7, window_bounds = array<i64: 2, 32>}, {pipeline_mode = #tpu.pipeline_mode<synchronous>, transform_indices = @transform_8, window_bounds = array<i64: 2, 32, 2048>}, {pipeline_mode = #tpu.pipeline_mode<synchronous>, transform_indices = @transform_9, window_bounds = array<i64: 2, 2048>}, {pipeline_mode = #tpu.pipeline_mode<synchronous>, transform_indices = @transform_10, window_bounds = array<i64: 2, 2048, 32>}, {pipeline_mode = #tpu.pipeline_mode<synchronous>, transform_indices = @transform_11, window_bounds = array<i64: 2, 32>}, {transform_indices = @transform_12, window_bounds = array<i64: 16, 32>}]} {
    %c0 = arith.constant 0 : index
    %c0_0 = arith.constant 0 : index
    %0 = vector.load %arg1[%c0, %c0_0] : memref<16x32xf32, #tpu.memory_space<vmem>>, vector<16x32xf32>
    %c0_1 = arith.constant 0 : index
    %c0_2 = arith.constant 0 : index
    %1 = vector.load %arg2[%c0_1, %c0_2] : memref<2x8xf32, #tpu.memory_space<vmem>>, vector<2x8xf32>
    %2 = vector.shape_cast %1 : vector<2x8xf32> to vector<2x8x1xf32>
    %3 = vector.shape_cast %1 : vector<2x8xf32> to vector<2x1x8xf32>
    %4 = vector.broadcast %2 : vector<2x8x1xf32> to vector<2x8x8xf32>
    %5 = vector.broadcast %3 : vector<2x1x8xf32> to vector<2x8x8xf32>
    %6 = arith.mulf %4, %5 : vector<2x8x8xf32>
    %cst = arith.constant 0.000000e+00 : f32
    %7 = vector.broadcast %cst : f32 to vector<2x8x8xf32>
    %8 = arith.cmpf one, %6, %7 : vector<2x8x8xf32>
    %9 = arith.extui %8 : vector<2x8x8xi1> to vector<2x8x8xi32>
    %10 = arith.sitofp %9 : vector<2x8x8xi32> to vector<2x8x8xf32>
    %cst_3 = arith.constant 0.353553385 : f32
    %11 = vector.broadcast %cst_3 : f32 to vector<2x8x8xf32>
    %12 = arith.mulf %10, %11 : vector<2x8x8xf32>
    %13 = tpu.concatenate %12, %12, %12, %12 in 0 : vector<2x8x8xf32>, vector<2x8x8xf32>, vector<2x8x8xf32>, vector<2x8x8xf32> -> vector<8x8x8xf32>
    %cst_4 = arith.constant 1.000000e+00 : f32
    %14 = vector.broadcast %cst_4 : f32 to vector<2x8x8xf32>
    %15 = arith.subf %14, %10 : vector<2x8x8xf32>
    %cst_5 = arith.constant -1.000000e+09 : f32
    %16 = vector.broadcast %cst_5 : f32 to vector<2x8x8xf32>
    %17 = arith.mulf %15, %16 : vector<2x8x8xf32>
    %18 = tpu.concatenate %17, %17, %17, %17 in 0 : vector<2x8x8xf32>, vector<2x8x8xf32>, vector<2x8x8xf32>, vector<2x8x8xf32> -> vector<8x8x8xf32>
    %c0_6 = arith.constant 0 : index
    %c0_7 = arith.constant 0 : index
    %c0_8 = arith.constant 0 : index
    %19 = vector.load %arg3[%c0_6, %c0_7, %c0_8] : memref<2x2x32xf32, #tpu.memory_space<vmem>>, vector<1x2x32xf32>
    %20 = vector.shape_cast %19 : vector<1x2x32xf32> to vector<2x32xf32>
    %c0_9 = arith.constant 0 : index
    %c0_10 = arith.constant 0 : index
    %c0_11 = arith.constant 0 : index
    %21 = vector.load %arg4[%c0_9, %c0_10, %c0_11] : memref<2x2x32xf32, #tpu.memory_space<vmem>>, vector<1x2x32xf32>
    %22 = vector.shape_cast %21 : vector<1x2x32xf32> to vector<2x32xf32>
    %23 = vector.extract_strided_slice %20 {offsets = [0, 0], sizes = [1, 32], strides = [1, 1]} : vector<2x32xf32> to vector<1x32xf32>
    %24 = vector.shape_cast %23 : vector<1x32xf32> to vector<32xf32>
    %25 = vector.extract_strided_slice %22 {offsets = [0, 0], sizes = [1, 32], strides = [1, 1]} : vector<2x32xf32> to vector<1x32xf32>
    %26 = vector.shape_cast %25 : vector<1x32xf32> to vector<32xf32>
    %cst_12 = arith.constant dense<0.000000e+00> : vector<16xf32>
    %27 = vector.multi_reduction <add>, %0, %cst_12 [1] : vector<16x32xf32> to vector<16xf32>
    %28 = vector.shape_cast %27 : vector<16xf32> to vector<16x1xf32>
    %cst_13 = arith.constant 3.200000e+01 : f32
    %29 = vector.broadcast %cst_13 : f32 to vector<16x1xf32>
    %30 = arith.divf %28, %29 : vector<16x1xf32>
    %31 = vector.broadcast %30 : vector<16x1xf32> to vector<16x32xf32>
    %32 = arith.subf %0, %31 : vector<16x32xf32>
    %33 = arith.mulf %32, %32 : vector<16x32xf32>
    %cst_14 = arith.constant dense<0.000000e+00> : vector<16xf32>
    %34 = vector.multi_reduction <add>, %33, %cst_14 [1] : vector<16x32xf32> to vector<16xf32>
    %35 = vector.shape_cast %34 : vector<16xf32> to vector<16x1xf32>
    %cst_15 = arith.constant 0.0322580636 : f32
    %36 = vector.broadcast %cst_15 : f32 to vector<16x1xf32>
    %37 = arith.mulf %35, %36 : vector<16x1xf32>
    %38 = math.sqrt %37 : vector<16x1xf32>
    %cst_16 = arith.constant 9.99999997E-7 : f32
    %39 = vector.broadcast %cst_16 : f32 to vector<16x1xf32>
    %40 = arith.addf %38, %39 : vector<16x1xf32>
    %41 = vector.broadcast %40 : vector<16x1xf32> to vector<16x32xf32>
    %42 = arith.divf %32, %41 : vector<16x32xf32>
    %43 = vector.shape_cast %24 : vector<32xf32> to vector<1x32xf32>
    %44 = vector.broadcast %43 : vector<1x32xf32> to vector<16x32xf32>
    %45 = arith.mulf %44, %42 : vector<16x32xf32>
    %46 = vector.shape_cast %26 : vector<32xf32> to vector<1x32xf32>
    %47 = vector.broadcast %46 : vector<1x32xf32> to vector<16x32xf32>
    %48 = arith.addf %45, %47 : vector<16x32xf32>
    %49 = arith.truncf %48 : vector<16x32xf32> to vector<16x32xbf16>
    %c0_17 = arith.constant 0 : index
    %c0_18 = arith.constant 0 : index
    %c0_19 = arith.constant 0 : index
    %50 = vector.load %arg5[%c0_17, %c0_18, %c0_19] : memref<2x32x96xbf16, #tpu.memory_space<vmem>>, vector<1x32x96xbf16>
    %51 = vector.shape_cast %50 : vector<1x32x96xbf16> to vector<32x96xbf16>
    %cst_20 = arith.constant dense<0.000000e+00> : vector<16x96xf32>
    %52 = tpu.matmul %49, %51, %cst_20 {dimension_numbers = #tpu.dot_dimension_numbers<[1], [0], [0], [1], [0, 0, 1, 1], [], []>} : vector<16x32xbf16>, vector<32x96xbf16>, vector<16x96xf32> -> vector<16x96xf32>
    %c0_21 = arith.constant 0 : index
    %c0_22 = arith.constant 0 : index
    %53 = vector.load %arg6[%c0_21, %c0_22] : memref<2x96xf32, #tpu.memory_space<vmem>>, vector<1x96xf32>
    %54 = vector.shape_cast %53 : vector<1x96xf32> to vector<96xf32>
    %55 = vector.shape_cast %54 : vector<96xf32> to vector<1x96xf32>
    %56 = vector.broadcast %55 : vector<1x96xf32> to vector<16x96xf32>
    %57 = arith.addf %52, %56 : vector<16x96xf32>
    %58 = vector.shape_cast %57 : vector<16x96xf32> to vector<2x8x96xf32>
    %59 = vector.extract_strided_slice %58 {offsets = [0, 0, 0], sizes = [2, 8, 8], strides = [1, 1, 1]} : vector<2x8x96xf32> to vector<2x8x8xf32>
    %60 = vector.extract_strided_slice %58 {offsets = [0, 0, 8], sizes = [2, 8, 8], strides = [1, 1, 1]} : vector<2x8x96xf32> to vector<2x8x8xf32>
    %61 = vector.extract_strided_slice %58 {offsets = [0, 0, 16], sizes = [2, 8, 8], strides = [1, 1, 1]} : vector<2x8x96xf32> to vector<2x8x8xf32>
    %62 = vector.extract_strided_slice %58 {offsets = [0, 0, 24], sizes = [2, 8, 8], strides = [1, 1, 1]} : vector<2x8x96xf32> to vector<2x8x8xf32>
    %63 = tpu.concatenate %59, %60, %61, %62 in 0 : vector<2x8x8xf32>, vector<2x8x8xf32>, vector<2x8x8xf32>, vector<2x8x8xf32> -> vector<8x8x8xf32>
    %64 = arith.truncf %63 : vector<8x8x8xf32> to vector<8x8x8xbf16>
    %65 = vector.extract_strided_slice %58 {offsets = [0, 0, 32], sizes = [2, 8, 8], strides = [1, 1, 1]} : vector<2x8x96xf32> to vector<2x8x8xf32>
    %66 = vector.extract_strided_slice %58 {offsets = [0, 0, 40], sizes = [2, 8, 8], strides = [1, 1, 1]} : vector<2x8x96xf32> to vector<2x8x8xf32>
    %67 = vector.extract_strided_slice %58 {offsets = [0, 0, 48], sizes = [2, 8, 8], strides = [1, 1, 1]} : vector<2x8x96xf32> to vector<2x8x8xf32>
    %68 = vector.extract_strided_slice %58 {offsets = [0, 0, 56], sizes = [2, 8, 8], strides = [1, 1, 1]} : vector<2x8x96xf32> to vector<2x8x8xf32>
    %69 = tpu.concatenate %65, %66, %67, %68 in 0 : vector<2x8x8xf32>, vector<2x8x8xf32>, vector<2x8x8xf32>, vector<2x8x8xf32> -> vector<8x8x8xf32>
    %70 = arith.truncf %69 : vector<8x8x8xf32> to vector<8x8x8xbf16>
    %71 = vector.extract_strided_slice %58 {offsets = [0, 0, 64], sizes = [2, 8, 8], strides = [1, 1, 1]} : vector<2x8x96xf32> to vector<2x8x8xf32>
    %72 = vector.extract_strided_slice %58 {offsets = [0, 0, 72], sizes = [2, 8, 8], strides = [1, 1, 1]} : vector<2x8x96xf32> to vector<2x8x8xf32>
    %73 = vector.extract_strided_slice %58 {offsets = [0, 0, 80], sizes = [2, 8, 8], strides = [1, 1, 1]} : vector<2x8x96xf32> to vector<2x8x8xf32>
    %74 = vector.extract_strided_slice %58 {offsets = [0, 0, 88], sizes = [2, 8, 8], strides = [1, 1, 1]} : vector<2x8x96xf32> to vector<2x8x8xf32>
    %75 = tpu.concatenate %71, %72, %73, %74 in 0 : vector<2x8x8xf32>, vector<2x8x8xf32>, vector<2x8x8xf32>, vector<2x8x8xf32> -> vector<8x8x8xf32>
    %76 = arith.truncf %75 : vector<8x8x8xf32> to vector<8x8x8xbf16>
    %cst_23 = arith.constant dense<0.000000e+00> : vector<8x8x8xf32>
    %77 = tpu.matmul %64, %70, %cst_23 {dimension_numbers = #tpu.dot_dimension_numbers<[2], [2], [1], [1], [0, 0, 0, 1, 1, 1], [0], [0]>} : vector<8x8x8xbf16>, vector<8x8x8xbf16>, vector<8x8x8xf32> -> vector<8x8x8xf32>
    %78 = arith.mulf %77, %13 : vector<8x8x8xf32>
    %79 = arith.addf %78, %18 : vector<8x8x8xf32>
    %cst_24 = arith.constant dense<0xFF800000> : vector<8x8xf32>
    %80 = vector.multi_reduction <maximumf>, %79, %cst_24 [2] : vector<8x8x8xf32> to vector<8x8xf32>
    %81 = vector.shape_cast %80 : vector<8x8xf32> to vector<8x8x1xf32>
    %82 = vector.broadcast %81 : vector<8x8x1xf32> to vector<8x8x8xf32>
    %83 = arith.subf %79, %82 : vector<8x8x8xf32>
    %84 = math.exp %83 : vector<8x8x8xf32>
    %cst_25 = arith.constant dense<0.000000e+00> : vector<8x8xf32>
    %85 = vector.multi_reduction <add>, %84, %cst_25 [2] : vector<8x8x8xf32> to vector<8x8xf32>
    %86 = vector.shape_cast %85 : vector<8x8xf32> to vector<8x8x1xf32>
    %87 = tpu.reciprocal %86 {approx = true} : vector<8x8x1xf32> -> vector<8x8x1xf32>
    %88 = vector.broadcast %87 : vector<8x8x1xf32> to vector<8x8x8xf32>
    %89 = arith.mulf %84, %88 : vector<8x8x8xf32>
    %90 = arith.truncf %89 : vector<8x8x8xf32> to vector<8x8x8xbf16>
    %cst_26 = arith.constant dense<0.000000e+00> : vector<8x8x8xf32>
    %91 = tpu.matmul %90, %76, %cst_26 {dimension_numbers = #tpu.dot_dimension_numbers<[2], [1], [1], [2], [0, 0, 0, 1, 1, 2], [0], [0]>} : vector<8x8x8xbf16>, vector<8x8x8xbf16>, vector<8x8x8xf32> -> vector<8x8x8xf32>
    %92 = vector.extract_strided_slice %91 {offsets = [0, 0, 0], sizes = [2, 8, 8], strides = [1, 1, 1]} : vector<8x8x8xf32> to vector<2x8x8xf32>
    %93 = vector.extract_strided_slice %91 {offsets = [2, 0, 0], sizes = [2, 8, 8], strides = [1, 1, 1]} : vector<8x8x8xf32> to vector<2x8x8xf32>
    %94 = vector.extract_strided_slice %91 {offsets = [4, 0, 0], sizes = [2, 8, 8], strides = [1, 1, 1]} : vector<8x8x8xf32> to vector<2x8x8xf32>
    %95 = vector.extract_strided_slice %91 {offsets = [6, 0, 0], sizes = [2, 8, 8], strides = [1, 1, 1]} : vector<8x8x8xf32> to vector<2x8x8xf32>
    %96 = tpu.concatenate %92, %93, %94, %95 in 2 : vector<2x8x8xf32>, vector<2x8x8xf32>, vector<2x8x8xf32>, vector<2x8x8xf32> -> vector<2x8x32xf32>
    %97 = vector.shape_cast %96 : vector<2x8x32xf32> to vector<16x32xf32>
    %98 = arith.truncf %97 : vector<16x32xf32> to vector<16x32xbf16>
    %c0_27 = arith.constant 0 : index
    %c0_28 = arith.constant 0 : index
    %c0_29 = arith.constant 0 : index
    %99 = vector.load %arg7[%c0_27, %c0_28, %c0_29] : memref<2x32x32xbf16, #tpu.memory_space<vmem>>, vector<1x32x32xbf16>
    %100 = vector.shape_cast %99 : vector<1x32x32xbf16> to vector<32x32xbf16>
    %cst_30 = arith.constant dense<0.000000e+00> : vector<16x32xf32>
    %101 = tpu.matmul %98, %100, %cst_30 {dimension_numbers = #tpu.dot_dimension_numbers<[1], [0], [0], [1], [0, 0, 1, 1], [], []>} : vector<16x32xbf16>, vector<32x32xbf16>, vector<16x32xf32> -> vector<16x32xf32>
    %102 = arith.addf %0, %101 : vector<16x32xf32>
    %c0_31 = arith.constant 0 : index
    %c0_32 = arith.constant 0 : index
    %103 = vector.load %arg8[%c0_31, %c0_32] : memref<2x32xf32, #tpu.memory_space<vmem>>, vector<1x32xf32>
    %104 = vector.shape_cast %103 : vector<1x32xf32> to vector<32xf32>
    %105 = vector.shape_cast %104 : vector<32xf32> to vector<1x32xf32>
    %106 = vector.broadcast %105 : vector<1x32xf32> to vector<16x32xf32>
    %107 = arith.addf %102, %106 : vector<16x32xf32>
    %108 = vector.extract_strided_slice %20 {offsets = [1, 0], sizes = [1, 32], strides = [1, 1]} : vector<2x32xf32> to vector<1x32xf32>
    %109 = vector.shape_cast %108 : vector<1x32xf32> to vector<32xf32>
    %110 = vector.extract_strided_slice %22 {offsets = [1, 0], sizes = [1, 32], strides = [1, 1]} : vector<2x32xf32> to vector<1x32xf32>
    %111 = vector.shape_cast %110 : vector<1x32xf32> to vector<32xf32>
    %cst_33 = arith.constant dense<0.000000e+00> : vector<16xf32>
    %112 = vector.multi_reduction <add>, %107, %cst_33 [1] : vector<16x32xf32> to vector<16xf32>
    %113 = vector.shape_cast %112 : vector<16xf32> to vector<16x1xf32>
    %cst_34 = arith.constant 3.200000e+01 : f32
    %114 = vector.broadcast %cst_34 : f32 to vector<16x1xf32>
    %115 = arith.divf %113, %114 : vector<16x1xf32>
    %116 = vector.broadcast %115 : vector<16x1xf32> to vector<16x32xf32>
    %117 = arith.subf %107, %116 : vector<16x32xf32>
    %118 = arith.mulf %117, %117 : vector<16x32xf32>
    %cst_35 = arith.constant dense<0.000000e+00> : vector<16xf32>
    %119 = vector.multi_reduction <add>, %118, %cst_35 [1] : vector<16x32xf32> to vector<16xf32>
    %120 = vector.shape_cast %119 : vector<16xf32> to vector<16x1xf32>
    %cst_36 = arith.constant 0.0322580636 : f32
    %121 = vector.broadcast %cst_36 : f32 to vector<16x1xf32>
    %122 = arith.mulf %120, %121 : vector<16x1xf32>
    %123 = math.sqrt %122 : vector<16x1xf32>
    %cst_37 = arith.constant 9.99999997E-7 : f32
    %124 = vector.broadcast %cst_37 : f32 to vector<16x1xf32>
    %125 = arith.addf %123, %124 : vector<16x1xf32>
    %126 = vector.broadcast %125 : vector<16x1xf32> to vector<16x32xf32>
    %127 = arith.divf %117, %126 : vector<16x32xf32>
    %128 = vector.shape_cast %109 : vector<32xf32> to vector<1x32xf32>
    %129 = vector.broadcast %128 : vector<1x32xf32> to vector<16x32xf32>
    %130 = arith.mulf %129, %127 : vector<16x32xf32>
    %131 = vector.shape_cast %111 : vector<32xf32> to vector<1x32xf32>
    %132 = vector.broadcast %131 : vector<1x32xf32> to vector<16x32xf32>
    %133 = arith.addf %130, %132 : vector<16x32xf32>
    %134 = arith.truncf %133 : vector<16x32xf32> to vector<16x32xbf16>
    %cst_38 = arith.constant 0.000000e+00 : f32
    %135 = vector.broadcast %cst_38 : f32 to vector<16x32xf32>
    %c0_39 = arith.constant 0 : index
    %c0_40 = arith.constant 0 : index
    %c0_41 = arith.constant 0 : index
    %136 = vector.load %arg9[%c0_39, %c0_40, %c0_41] : memref<2x32x2048xbf16, #tpu.memory_space<vmem>>, vector<1x32x512xbf16>
    %137 = vector.shape_cast %136 : vector<1x32x512xbf16> to vector<32x512xbf16>
    %cst_42 = arith.constant dense<0.000000e+00> : vector<16x512xf32>
    %138 = tpu.matmul %134, %137, %cst_42 {dimension_numbers = #tpu.dot_dimension_numbers<[1], [0], [0], [1], [0, 0, 1, 1], [], []>} : vector<16x32xbf16>, vector<32x512xbf16>, vector<16x512xf32> -> vector<16x512xf32>
    %c0_43 = arith.constant 0 : index
    %c0_44 = arith.constant 0 : index
    %139 = vector.load %arg10[%c0_43, %c0_44] : memref<2x2048xf32, #tpu.memory_space<vmem>>, vector<1x512xf32>
    %140 = vector.shape_cast %139 : vector<1x512xf32> to vector<512xf32>
    %141 = vector.shape_cast %140 : vector<512xf32> to vector<1x512xf32>
    %142 = vector.broadcast %141 : vector<1x512xf32> to vector<16x512xf32>
    %143 = arith.addf %138, %142 : vector<16x512xf32>
    %cst_45 = arith.constant 0.000000e+00 : f32
    %144 = vector.broadcast %cst_45 : f32 to vector<16x512xf32>
    %145 = arith.maximumf %143, %144 : vector<16x512xf32>
    %146 = arith.truncf %145 : vector<16x512xf32> to vector<16x512xbf16>
    %c0_46 = arith.constant 0 : index
    %c0_47 = arith.constant 0 : index
    %c0_48 = arith.constant 0 : index
    %147 = vector.load %arg11[%c0_46, %c0_47, %c0_48] : memref<2x2048x32xbf16, #tpu.memory_space<vmem>>, vector<1x512x32xbf16>
    %148 = vector.shape_cast %147 : vector<1x512x32xbf16> to vector<512x32xbf16>
    %cst_49 = arith.constant dense<0.000000e+00> : vector<16x32xf32>
    %149 = tpu.matmul %146, %148, %cst_49 {dimension_numbers = #tpu.dot_dimension_numbers<[1], [0], [0], [1], [0, 0, 1, 1], [], []>} : vector<16x512xbf16>, vector<512x32xbf16>, vector<16x32xf32> -> vector<16x32xf32>
    %150 = arith.addf %135, %149 : vector<16x32xf32>
    %c0_50 = arith.constant 0 : index
    %c0_51 = arith.constant 0 : index
    %c512 = arith.constant 512 : index
    %151 = vector.load %arg9[%c0_50, %c0_51, %c512] : memref<2x32x2048xbf16, #tpu.memory_space<vmem>>, vector<1x32x512xbf16>
    %152 = vector.shape_cast %151 : vector<1x32x512xbf16> to vector<32x512xbf16>
    %cst_52 = arith.constant dense<0.000000e+00> : vector<16x512xf32>
    %153 = tpu.matmul %134, %152, %cst_52 {dimension_numbers = #tpu.dot_dimension_numbers<[1], [0], [0], [1], [0, 0, 1, 1], [], []>} : vector<16x32xbf16>, vector<32x512xbf16>, vector<16x512xf32> -> vector<16x512xf32>
    %c0_53 = arith.constant 0 : index
    %c512_54 = arith.constant 512 : index
    %154 = vector.load %arg10[%c0_53, %c512_54] : memref<2x2048xf32, #tpu.memory_space<vmem>>, vector<1x512xf32>
    %155 = vector.shape_cast %154 : vector<1x512xf32> to vector<512xf32>
    %156 = vector.shape_cast %155 : vector<512xf32> to vector<1x512xf32>
    %157 = vector.broadcast %156 : vector<1x512xf32> to vector<16x512xf32>
    %158 = arith.addf %153, %157 : vector<16x512xf32>
    %cst_55 = arith.constant 0.000000e+00 : f32
    %159 = vector.broadcast %cst_55 : f32 to vector<16x512xf32>
    %160 = arith.maximumf %158, %159 : vector<16x512xf32>
    %161 = arith.truncf %160 : vector<16x512xf32> to vector<16x512xbf16>
    %c0_56 = arith.constant 0 : index
    %c512_57 = arith.constant 512 : index
    %c0_58 = arith.constant 0 : index
    %162 = vector.load %arg11[%c0_56, %c512_57, %c0_58] : memref<2x2048x32xbf16, #tpu.memory_space<vmem>>, vector<1x512x32xbf16>
    %163 = vector.shape_cast %162 : vector<1x512x32xbf16> to vector<512x32xbf16>
    %cst_59 = arith.constant dense<0.000000e+00> : vector<16x32xf32>
    %164 = tpu.matmul %161, %163, %cst_59 {dimension_numbers = #tpu.dot_dimension_numbers<[1], [0], [0], [1], [0, 0, 1, 1], [], []>} : vector<16x512xbf16>, vector<512x32xbf16>, vector<16x32xf32> -> vector<16x32xf32>
    %165 = arith.addf %150, %164 : vector<16x32xf32>
    %c0_60 = arith.constant 0 : index
    %c0_61 = arith.constant 0 : index
    %c1024 = arith.constant 1024 : index
    %166 = vector.load %arg9[%c0_60, %c0_61, %c1024] : memref<2x32x2048xbf16, #tpu.memory_space<vmem>>, vector<1x32x512xbf16>
    %167 = vector.shape_cast %166 : vector<1x32x512xbf16> to vector<32x512xbf16>
    %cst_62 = arith.constant dense<0.000000e+00> : vector<16x512xf32>
    %168 = tpu.matmul %134, %167, %cst_62 {dimension_numbers = #tpu.dot_dimension_numbers<[1], [0], [0], [1], [0, 0, 1, 1], [], []>} : vector<16x32xbf16>, vector<32x512xbf16>, vector<16x512xf32> -> vector<16x512xf32>
    %c0_63 = arith.constant 0 : index
    %c1024_64 = arith.constant 1024 : index
    %169 = vector.load %arg10[%c0_63, %c1024_64] : memref<2x2048xf32, #tpu.memory_space<vmem>>, vector<1x512xf32>
    %170 = vector.shape_cast %169 : vector<1x512xf32> to vector<512xf32>
    %171 = vector.shape_cast %170 : vector<512xf32> to vector<1x512xf32>
    %172 = vector.broadcast %171 : vector<1x512xf32> to vector<16x512xf32>
    %173 = arith.addf %168, %172 : vector<16x512xf32>
    %cst_65 = arith.constant 0.000000e+00 : f32
    %174 = vector.broadcast %cst_65 : f32 to vector<16x512xf32>
    %175 = arith.maximumf %173, %174 : vector<16x512xf32>
    %176 = arith.truncf %175 : vector<16x512xf32> to vector<16x512xbf16>
    %c0_66 = arith.constant 0 : index
    %c1024_67 = arith.constant 1024 : index
    %c0_68 = arith.constant 0 : index
    %177 = vector.load %arg11[%c0_66, %c1024_67, %c0_68] : memref<2x2048x32xbf16, #tpu.memory_space<vmem>>, vector<1x512x32xbf16>
    %178 = vector.shape_cast %177 : vector<1x512x32xbf16> to vector<512x32xbf16>
    %cst_69 = arith.constant dense<0.000000e+00> : vector<16x32xf32>
    %179 = tpu.matmul %176, %178, %cst_69 {dimension_numbers = #tpu.dot_dimension_numbers<[1], [0], [0], [1], [0, 0, 1, 1], [], []>} : vector<16x512xbf16>, vector<512x32xbf16>, vector<16x32xf32> -> vector<16x32xf32>
    %180 = arith.addf %165, %179 : vector<16x32xf32>
    %c0_70 = arith.constant 0 : index
    %c0_71 = arith.constant 0 : index
    %c1536 = arith.constant 1536 : index
    %181 = vector.load %arg9[%c0_70, %c0_71, %c1536] : memref<2x32x2048xbf16, #tpu.memory_space<vmem>>, vector<1x32x512xbf16>
    %182 = vector.shape_cast %181 : vector<1x32x512xbf16> to vector<32x512xbf16>
    %cst_72 = arith.constant dense<0.000000e+00> : vector<16x512xf32>
    %183 = tpu.matmul %134, %182, %cst_72 {dimension_numbers = #tpu.dot_dimension_numbers<[1], [0], [0], [1], [0, 0, 1, 1], [], []>} : vector<16x32xbf16>, vector<32x512xbf16>, vector<16x512xf32> -> vector<16x512xf32>
    %c0_73 = arith.constant 0 : index
    %c1536_74 = arith.constant 1536 : index
    %184 = vector.load %arg10[%c0_73, %c1536_74] : memref<2x2048xf32, #tpu.memory_space<vmem>>, vector<1x512xf32>
    %185 = vector.shape_cast %184 : vector<1x512xf32> to vector<512xf32>
    %186 = vector.shape_cast %185 : vector<512xf32> to vector<1x512xf32>
    %187 = vector.broadcast %186 : vector<1x512xf32> to vector<16x512xf32>
    %188 = arith.addf %183, %187 : vector<16x512xf32>
    %cst_75 = arith.constant 0.000000e+00 : f32
    %189 = vector.broadcast %cst_75 : f32 to vector<16x512xf32>
    %190 = arith.maximumf %188, %189 : vector<16x512xf32>
    %191 = arith.truncf %190 : vector<16x512xf32> to vector<16x512xbf16>
    %c0_76 = arith.constant 0 : index
    %c1536_77 = arith.constant 1536 : index
    %c0_78 = arith.constant 0 : index
    %192 = vector.load %arg11[%c0_76, %c1536_77, %c0_78] : memref<2x2048x32xbf16, #tpu.memory_space<vmem>>, vector<1x512x32xbf16>
    %193 = vector.shape_cast %192 : vector<1x512x32xbf16> to vector<512x32xbf16>
    %cst_79 = arith.constant dense<0.000000e+00> : vector<16x32xf32>
    %194 = tpu.matmul %191, %193, %cst_79 {dimension_numbers = #tpu.dot_dimension_numbers<[1], [0], [0], [1], [0, 0, 1, 1], [], []>} : vector<16x512xbf16>, vector<512x32xbf16>, vector<16x32xf32> -> vector<16x32xf32>
    %195 = arith.addf %180, %194 : vector<16x32xf32>
    %196 = arith.addf %107, %195 : vector<16x32xf32>
    %c0_80 = arith.constant 0 : index
    %c0_81 = arith.constant 0 : index
    %197 = vector.load %arg12[%c0_80, %c0_81] : memref<2x32xf32, #tpu.memory_space<vmem>>, vector<1x32xf32>
    %198 = vector.shape_cast %197 : vector<1x32xf32> to vector<32xf32>
    %199 = vector.shape_cast %198 : vector<32xf32> to vector<1x32xf32>
    %200 = vector.broadcast %199 : vector<1x32xf32> to vector<16x32xf32>
    %201 = arith.addf %196, %200 : vector<16x32xf32>
    %c1 = arith.constant 1 : index
    %c0_82 = arith.constant 0 : index
    %c0_83 = arith.constant 0 : index
    %202 = vector.load %arg3[%c1, %c0_82, %c0_83] : memref<2x2x32xf32, #tpu.memory_space<vmem>>, vector<1x2x32xf32>
    %203 = vector.shape_cast %202 : vector<1x2x32xf32> to vector<2x32xf32>
    %c1_84 = arith.constant 1 : index
    %c0_85 = arith.constant 0 : index
    %c0_86 = arith.constant 0 : index
    %204 = vector.load %arg4[%c1_84, %c0_85, %c0_86] : memref<2x2x32xf32, #tpu.memory_space<vmem>>, vector<1x2x32xf32>
    %205 = vector.shape_cast %204 : vector<1x2x32xf32> to vector<2x32xf32>
    %206 = vector.extract_strided_slice %203 {offsets = [0, 0], sizes = [1, 32], strides = [1, 1]} : vector<2x32xf32> to vector<1x32xf32>
    %207 = vector.shape_cast %206 : vector<1x32xf32> to vector<32xf32>
    %208 = vector.extract_strided_slice %205 {offsets = [0, 0], sizes = [1, 32], strides = [1, 1]} : vector<2x32xf32> to vector<1x32xf32>
    %209 = vector.shape_cast %208 : vector<1x32xf32> to vector<32xf32>
    %cst_87 = arith.constant dense<0.000000e+00> : vector<16xf32>
    %210 = vector.multi_reduction <add>, %201, %cst_87 [1] : vector<16x32xf32> to vector<16xf32>
    %211 = vector.shape_cast %210 : vector<16xf32> to vector<16x1xf32>
    %cst_88 = arith.constant 3.200000e+01 : f32
    %212 = vector.broadcast %cst_88 : f32 to vector<16x1xf32>
    %213 = arith.divf %211, %212 : vector<16x1xf32>
    %214 = vector.broadcast %213 : vector<16x1xf32> to vector<16x32xf32>
    %215 = arith.subf %201, %214 : vector<16x32xf32>
    %216 = arith.mulf %215, %215 : vector<16x32xf32>
    %cst_89 = arith.constant dense<0.000000e+00> : vector<16xf32>
    %217 = vector.multi_reduction <add>, %216, %cst_89 [1] : vector<16x32xf32> to vector<16xf32>
    %218 = vector.shape_cast %217 : vector<16xf32> to vector<16x1xf32>
    %cst_90 = arith.constant 0.0322580636 : f32
    %219 = vector.broadcast %cst_90 : f32 to vector<16x1xf32>
    %220 = arith.mulf %218, %219 : vector<16x1xf32>
    %221 = math.sqrt %220 : vector<16x1xf32>
    %cst_91 = arith.constant 9.99999997E-7 : f32
    %222 = vector.broadcast %cst_91 : f32 to vector<16x1xf32>
    %223 = arith.addf %221, %222 : vector<16x1xf32>
    %224 = vector.broadcast %223 : vector<16x1xf32> to vector<16x32xf32>
    %225 = arith.divf %215, %224 : vector<16x32xf32>
    %226 = vector.shape_cast %207 : vector<32xf32> to vector<1x32xf32>
    %227 = vector.broadcast %226 : vector<1x32xf32> to vector<16x32xf32>
    %228 = arith.mulf %227, %225 : vector<16x32xf32>
    %229 = vector.shape_cast %209 : vector<32xf32> to vector<1x32xf32>
    %230 = vector.broadcast %229 : vector<1x32xf32> to vector<16x32xf32>
    %231 = arith.addf %228, %230 : vector<16x32xf32>
    %232 = arith.truncf %231 : vector<16x32xf32> to vector<16x32xbf16>
    %c1_92 = arith.constant 1 : index
    %c0_93 = arith.constant 0 : index
    %c0_94 = arith.constant 0 : index
    %233 = vector.load %arg5[%c1_92, %c0_93, %c0_94] : memref<2x32x96xbf16, #tpu.memory_space<vmem>>, vector<1x32x96xbf16>
    %234 = vector.shape_cast %233 : vector<1x32x96xbf16> to vector<32x96xbf16>
    %cst_95 = arith.constant dense<0.000000e+00> : vector<16x96xf32>
    %235 = tpu.matmul %232, %234, %cst_95 {dimension_numbers = #tpu.dot_dimension_numbers<[1], [0], [0], [1], [0, 0, 1, 1], [], []>} : vector<16x32xbf16>, vector<32x96xbf16>, vector<16x96xf32> -> vector<16x96xf32>
    %c1_96 = arith.constant 1 : index
    %c0_97 = arith.constant 0 : index
    %236 = vector.load %arg6[%c1_96, %c0_97] : memref<2x96xf32, #tpu.memory_space<vmem>>, vector<1x96xf32>
    %237 = vector.shape_cast %236 : vector<1x96xf32> to vector<96xf32>
    %238 = vector.shape_cast %237 : vector<96xf32> to vector<1x96xf32>
    %239 = vector.broadcast %238 : vector<1x96xf32> to vector<16x96xf32>
    %240 = arith.addf %235, %239 : vector<16x96xf32>
    %241 = vector.shape_cast %240 : vector<16x96xf32> to vector<2x8x96xf32>
    %242 = vector.extract_strided_slice %241 {offsets = [0, 0, 0], sizes = [2, 8, 8], strides = [1, 1, 1]} : vector<2x8x96xf32> to vector<2x8x8xf32>
    %243 = vector.extract_strided_slice %241 {offsets = [0, 0, 8], sizes = [2, 8, 8], strides = [1, 1, 1]} : vector<2x8x96xf32> to vector<2x8x8xf32>
    %244 = vector.extract_strided_slice %241 {offsets = [0, 0, 16], sizes = [2, 8, 8], strides = [1, 1, 1]} : vector<2x8x96xf32> to vector<2x8x8xf32>
    %245 = vector.extract_strided_slice %241 {offsets = [0, 0, 24], sizes = [2, 8, 8], strides = [1, 1, 1]} : vector<2x8x96xf32> to vector<2x8x8xf32>
    %246 = tpu.concatenate %242, %243, %244, %245 in 0 : vector<2x8x8xf32>, vector<2x8x8xf32>, vector<2x8x8xf32>, vector<2x8x8xf32> -> vector<8x8x8xf32>
    %247 = arith.truncf %246 : vector<8x8x8xf32> to vector<8x8x8xbf16>
    %248 = vector.extract_strided_slice %241 {offsets = [0, 0, 32], sizes = [2, 8, 8], strides = [1, 1, 1]} : vector<2x8x96xf32> to vector<2x8x8xf32>
    %249 = vector.extract_strided_slice %241 {offsets = [0, 0, 40], sizes = [2, 8, 8], strides = [1, 1, 1]} : vector<2x8x96xf32> to vector<2x8x8xf32>
    %250 = vector.extract_strided_slice %241 {offsets = [0, 0, 48], sizes = [2, 8, 8], strides = [1, 1, 1]} : vector<2x8x96xf32> to vector<2x8x8xf32>
    %251 = vector.extract_strided_slice %241 {offsets = [0, 0, 56], sizes = [2, 8, 8], strides = [1, 1, 1]} : vector<2x8x96xf32> to vector<2x8x8xf32>
    %252 = tpu.concatenate %248, %249, %250, %251 in 0 : vector<2x8x8xf32>, vector<2x8x8xf32>, vector<2x8x8xf32>, vector<2x8x8xf32> -> vector<8x8x8xf32>
    %253 = arith.truncf %252 : vector<8x8x8xf32> to vector<8x8x8xbf16>
    %254 = vector.extract_strided_slice %241 {offsets = [0, 0, 64], sizes = [2, 8, 8], strides = [1, 1, 1]} : vector<2x8x96xf32> to vector<2x8x8xf32>
    %255 = vector.extract_strided_slice %241 {offsets = [0, 0, 72], sizes = [2, 8, 8], strides = [1, 1, 1]} : vector<2x8x96xf32> to vector<2x8x8xf32>
    %256 = vector.extract_strided_slice %241 {offsets = [0, 0, 80], sizes = [2, 8, 8], strides = [1, 1, 1]} : vector<2x8x96xf32> to vector<2x8x8xf32>
    %257 = vector.extract_strided_slice %241 {offsets = [0, 0, 88], sizes = [2, 8, 8], strides = [1, 1, 1]} : vector<2x8x96xf32> to vector<2x8x8xf32>
    %258 = tpu.concatenate %254, %255, %256, %257 in 0 : vector<2x8x8xf32>, vector<2x8x8xf32>, vector<2x8x8xf32>, vector<2x8x8xf32> -> vector<8x8x8xf32>
    %259 = arith.truncf %258 : vector<8x8x8xf32> to vector<8x8x8xbf16>
    %cst_98 = arith.constant dense<0.000000e+00> : vector<8x8x8xf32>
    %260 = tpu.matmul %247, %253, %cst_98 {dimension_numbers = #tpu.dot_dimension_numbers<[2], [2], [1], [1], [0, 0, 0, 1, 1, 1], [0], [0]>} : vector<8x8x8xbf16>, vector<8x8x8xbf16>, vector<8x8x8xf32> -> vector<8x8x8xf32>
    %261 = arith.mulf %260, %13 : vector<8x8x8xf32>
    %262 = arith.addf %261, %18 : vector<8x8x8xf32>
    %cst_99 = arith.constant dense<0xFF800000> : vector<8x8xf32>
    %263 = vector.multi_reduction <maximumf>, %262, %cst_99 [2] : vector<8x8x8xf32> to vector<8x8xf32>
    %264 = vector.shape_cast %263 : vector<8x8xf32> to vector<8x8x1xf32>
    %265 = vector.broadcast %264 : vector<8x8x1xf32> to vector<8x8x8xf32>
    %266 = arith.subf %262, %265 : vector<8x8x8xf32>
    %267 = math.exp %266 : vector<8x8x8xf32>
    %cst_100 = arith.constant dense<0.000000e+00> : vector<8x8xf32>
    %268 = vector.multi_reduction <add>, %267, %cst_100 [2] : vector<8x8x8xf32> to vector<8x8xf32>
    %269 = vector.shape_cast %268 : vector<8x8xf32> to vector<8x8x1xf32>
    %270 = tpu.reciprocal %269 {approx = true} : vector<8x8x1xf32> -> vector<8x8x1xf32>
    %271 = vector.broadcast %270 : vector<8x8x1xf32> to vector<8x8x8xf32>
    %272 = arith.mulf %267, %271 : vector<8x8x8xf32>
    %273 = arith.truncf %272 : vector<8x8x8xf32> to vector<8x8x8xbf16>
    %cst_101 = arith.constant dense<0.000000e+00> : vector<8x8x8xf32>
    %274 = tpu.matmul %273, %259, %cst_101 {dimension_numbers = #tpu.dot_dimension_numbers<[2], [1], [1], [2], [0, 0, 0, 1, 1, 2], [0], [0]>} : vector<8x8x8xbf16>, vector<8x8x8xbf16>, vector<8x8x8xf32> -> vector<8x8x8xf32>
    %275 = vector.extract_strided_slice %274 {offsets = [0, 0, 0], sizes = [2, 8, 8], strides = [1, 1, 1]} : vector<8x8x8xf32> to vector<2x8x8xf32>
    %276 = vector.extract_strided_slice %274 {offsets = [2, 0, 0], sizes = [2, 8, 8], strides = [1, 1, 1]} : vector<8x8x8xf32> to vector<2x8x8xf32>
    %277 = vector.extract_strided_slice %274 {offsets = [4, 0, 0], sizes = [2, 8, 8], strides = [1, 1, 1]} : vector<8x8x8xf32> to vector<2x8x8xf32>
    %278 = vector.extract_strided_slice %274 {offsets = [6, 0, 0], sizes = [2, 8, 8], strides = [1, 1, 1]} : vector<8x8x8xf32> to vector<2x8x8xf32>
    %279 = tpu.concatenate %275, %276, %277, %278 in 2 : vector<2x8x8xf32>, vector<2x8x8xf32>, vector<2x8x8xf32>, vector<2x8x8xf32> -> vector<2x8x32xf32>
    %280 = vector.shape_cast %279 : vector<2x8x32xf32> to vector<16x32xf32>
    %281 = arith.truncf %280 : vector<16x32xf32> to vector<16x32xbf16>
    %c1_102 = arith.constant 1 : index
    %c0_103 = arith.constant 0 : index
    %c0_104 = arith.constant 0 : index
    %282 = vector.load %arg7[%c1_102, %c0_103, %c0_104] : memref<2x32x32xbf16, #tpu.memory_space<vmem>>, vector<1x32x32xbf16>
    %283 = vector.shape_cast %282 : vector<1x32x32xbf16> to vector<32x32xbf16>
    %cst_105 = arith.constant dense<0.000000e+00> : vector<16x32xf32>
    %284 = tpu.matmul %281, %283, %cst_105 {dimension_numbers = #tpu.dot_dimension_numbers<[1], [0], [0], [1], [0, 0, 1, 1], [], []>} : vector<16x32xbf16>, vector<32x32xbf16>, vector<16x32xf32> -> vector<16x32xf32>
    %285 = arith.addf %201, %284 : vector<16x32xf32>
    %c1_106 = arith.constant 1 : index
    %c0_107 = arith.constant 0 : index
    %286 = vector.load %arg8[%c1_106, %c0_107] : memref<2x32xf32, #tpu.memory_space<vmem>>, vector<1x32xf32>
    %287 = vector.shape_cast %286 : vector<1x32xf32> to vector<32xf32>
    %288 = vector.shape_cast %287 : vector<32xf32> to vector<1x32xf32>
    %289 = vector.broadcast %288 : vector<1x32xf32> to vector<16x32xf32>
    %290 = arith.addf %285, %289 : vector<16x32xf32>
    %291 = vector.extract_strided_slice %203 {offsets = [1, 0], sizes = [1, 32], strides = [1, 1]} : vector<2x32xf32> to vector<1x32xf32>
    %292 = vector.shape_cast %291 : vector<1x32xf32> to vector<32xf32>
    %293 = vector.extract_strided_slice %205 {offsets = [1, 0], sizes = [1, 32], strides = [1, 1]} : vector<2x32xf32> to vector<1x32xf32>
    %294 = vector.shape_cast %293 : vector<1x32xf32> to vector<32xf32>
    %cst_108 = arith.constant dense<0.000000e+00> : vector<16xf32>
    %295 = vector.multi_reduction <add>, %290, %cst_108 [1] : vector<16x32xf32> to vector<16xf32>
    %296 = vector.shape_cast %295 : vector<16xf32> to vector<16x1xf32>
    %cst_109 = arith.constant 3.200000e+01 : f32
    %297 = vector.broadcast %cst_109 : f32 to vector<16x1xf32>
    %298 = arith.divf %296, %297 : vector<16x1xf32>
    %299 = vector.broadcast %298 : vector<16x1xf32> to vector<16x32xf32>
    %300 = arith.subf %290, %299 : vector<16x32xf32>
    %301 = arith.mulf %300, %300 : vector<16x32xf32>
    %cst_110 = arith.constant dense<0.000000e+00> : vector<16xf32>
    %302 = vector.multi_reduction <add>, %301, %cst_110 [1] : vector<16x32xf32> to vector<16xf32>
    %303 = vector.shape_cast %302 : vector<16xf32> to vector<16x1xf32>
    %cst_111 = arith.constant 0.0322580636 : f32
    %304 = vector.broadcast %cst_111 : f32 to vector<16x1xf32>
    %305 = arith.mulf %303, %304 : vector<16x1xf32>
    %306 = math.sqrt %305 : vector<16x1xf32>
    %cst_112 = arith.constant 9.99999997E-7 : f32
    %307 = vector.broadcast %cst_112 : f32 to vector<16x1xf32>
    %308 = arith.addf %306, %307 : vector<16x1xf32>
    %309 = vector.broadcast %308 : vector<16x1xf32> to vector<16x32xf32>
    %310 = arith.divf %300, %309 : vector<16x32xf32>
    %311 = vector.shape_cast %292 : vector<32xf32> to vector<1x32xf32>
    %312 = vector.broadcast %311 : vector<1x32xf32> to vector<16x32xf32>
    %313 = arith.mulf %312, %310 : vector<16x32xf32>
    %314 = vector.shape_cast %294 : vector<32xf32> to vector<1x32xf32>
    %315 = vector.broadcast %314 : vector<1x32xf32> to vector<16x32xf32>
    %316 = arith.addf %313, %315 : vector<16x32xf32>
    %317 = arith.truncf %316 : vector<16x32xf32> to vector<16x32xbf16>
    %cst_113 = arith.constant 0.000000e+00 : f32
    %318 = vector.broadcast %cst_113 : f32 to vector<16x32xf32>
    %c1_114 = arith.constant 1 : index
    %c0_115 = arith.constant 0 : index
    %c0_116 = arith.constant 0 : index
    %319 = vector.load %arg9[%c1_114, %c0_115, %c0_116] : memref<2x32x2048xbf16, #tpu.memory_space<vmem>>, vector<1x32x512xbf16>
    %320 = vector.shape_cast %319 : vector<1x32x512xbf16> to vector<32x512xbf16>
    %cst_117 = arith.constant dense<0.000000e+00> : vector<16x512xf32>
    %321 = tpu.matmul %317, %320, %cst_117 {dimension_numbers = #tpu.dot_dimension_numbers<[1], [0], [0], [1], [0, 0, 1, 1], [], []>} : vector<16x32xbf16>, vector<32x512xbf16>, vector<16x512xf32> -> vector<16x512xf32>
    %c1_118 = arith.constant 1 : index
    %c0_119 = arith.constant 0 : index
    %322 = vector.load %arg10[%c1_118, %c0_119] : memref<2x2048xf32, #tpu.memory_space<vmem>>, vector<1x512xf32>
    %323 = vector.shape_cast %322 : vector<1x512xf32> to vector<512xf32>
    %324 = vector.shape_cast %323 : vector<512xf32> to vector<1x512xf32>
    %325 = vector.broadcast %324 : vector<1x512xf32> to vector<16x512xf32>
    %326 = arith.addf %321, %325 : vector<16x512xf32>
    %cst_120 = arith.constant 0.000000e+00 : f32
    %327 = vector.broadcast %cst_120 : f32 to vector<16x512xf32>
    %328 = arith.maximumf %326, %327 : vector<16x512xf32>
    %329 = arith.truncf %328 : vector<16x512xf32> to vector<16x512xbf16>
    %c1_121 = arith.constant 1 : index
    %c0_122 = arith.constant 0 : index
    %c0_123 = arith.constant 0 : index
    %330 = vector.load %arg11[%c1_121, %c0_122, %c0_123] : memref<2x2048x32xbf16, #tpu.memory_space<vmem>>, vector<1x512x32xbf16>
    %331 = vector.shape_cast %330 : vector<1x512x32xbf16> to vector<512x32xbf16>
    %cst_124 = arith.constant dense<0.000000e+00> : vector<16x32xf32>
    %332 = tpu.matmul %329, %331, %cst_124 {dimension_numbers = #tpu.dot_dimension_numbers<[1], [0], [0], [1], [0, 0, 1, 1], [], []>} : vector<16x512xbf16>, vector<512x32xbf16>, vector<16x32xf32> -> vector<16x32xf32>
    %333 = arith.addf %318, %332 : vector<16x32xf32>
    %c1_125 = arith.constant 1 : index
    %c0_126 = arith.constant 0 : index
    %c512_127 = arith.constant 512 : index
    %334 = vector.load %arg9[%c1_125, %c0_126, %c512_127] : memref<2x32x2048xbf16, #tpu.memory_space<vmem>>, vector<1x32x512xbf16>
    %335 = vector.shape_cast %334 : vector<1x32x512xbf16> to vector<32x512xbf16>
    %cst_128 = arith.constant dense<0.000000e+00> : vector<16x512xf32>
    %336 = tpu.matmul %317, %335, %cst_128 {dimension_numbers = #tpu.dot_dimension_numbers<[1], [0], [0], [1], [0, 0, 1, 1], [], []>} : vector<16x32xbf16>, vector<32x512xbf16>, vector<16x512xf32> -> vector<16x512xf32>
    %c1_129 = arith.constant 1 : index
    %c512_130 = arith.constant 512 : index
    %337 = vector.load %arg10[%c1_129, %c512_130] : memref<2x2048xf32, #tpu.memory_space<vmem>>, vector<1x512xf32>
    %338 = vector.shape_cast %337 : vector<1x512xf32> to vector<512xf32>
    %339 = vector.shape_cast %338 : vector<512xf32> to vector<1x512xf32>
    %340 = vector.broadcast %339 : vector<1x512xf32> to vector<16x512xf32>
    %341 = arith.addf %336, %340 : vector<16x512xf32>
    %cst_131 = arith.constant 0.000000e+00 : f32
    %342 = vector.broadcast %cst_131 : f32 to vector<16x512xf32>
    %343 = arith.maximumf %341, %342 : vector<16x512xf32>
    %344 = arith.truncf %343 : vector<16x512xf32> to vector<16x512xbf16>
    %c1_132 = arith.constant 1 : index
    %c512_133 = arith.constant 512 : index
    %c0_134 = arith.constant 0 : index
    %345 = vector.load %arg11[%c1_132, %c512_133, %c0_134] : memref<2x2048x32xbf16, #tpu.memory_space<vmem>>, vector<1x512x32xbf16>
    %346 = vector.shape_cast %345 : vector<1x512x32xbf16> to vector<512x32xbf16>
    %cst_135 = arith.constant dense<0.000000e+00> : vector<16x32xf32>
    %347 = tpu.matmul %344, %346, %cst_135 {dimension_numbers = #tpu.dot_dimension_numbers<[1], [0], [0], [1], [0, 0, 1, 1], [], []>} : vector<16x512xbf16>, vector<512x32xbf16>, vector<16x32xf32> -> vector<16x32xf32>
    %348 = arith.addf %333, %347 : vector<16x32xf32>
    %c1_136 = arith.constant 1 : index
    %c0_137 = arith.constant 0 : index
    %c1024_138 = arith.constant 1024 : index
    %349 = vector.load %arg9[%c1_136, %c0_137, %c1024_138] : memref<2x32x2048xbf16, #tpu.memory_space<vmem>>, vector<1x32x512xbf16>
    %350 = vector.shape_cast %349 : vector<1x32x512xbf16> to vector<32x512xbf16>
    %cst_139 = arith.constant dense<0.000000e+00> : vector<16x512xf32>
    %351 = tpu.matmul %317, %350, %cst_139 {dimension_numbers = #tpu.dot_dimension_numbers<[1], [0], [0], [1], [0, 0, 1, 1], [], []>} : vector<16x32xbf16>, vector<32x512xbf16>, vector<16x512xf32> -> vector<16x512xf32>
    %c1_140 = arith.constant 1 : index
    %c1024_141 = arith.constant 1024 : index
    %352 = vector.load %arg10[%c1_140, %c1024_141] : memref<2x2048xf32, #tpu.memory_space<vmem>>, vector<1x512xf32>
    %353 = vector.shape_cast %352 : vector<1x512xf32> to vector<512xf32>
    %354 = vector.shape_cast %353 : vector<512xf32> to vector<1x512xf32>
    %355 = vector.broadcast %354 : vector<1x512xf32> to vector<16x512xf32>
    %356 = arith.addf %351, %355 : vector<16x512xf32>
    %cst_142 = arith.constant 0.000000e+00 : f32
    %357 = vector.broadcast %cst_142 : f32 to vector<16x512xf32>
    %358 = arith.maximumf %356, %357 : vector<16x512xf32>
    %359 = arith.truncf %358 : vector<16x512xf32> to vector<16x512xbf16>
    %c1_143 = arith.constant 1 : index
    %c1024_144 = arith.constant 1024 : index
    %c0_145 = arith.constant 0 : index
    %360 = vector.load %arg11[%c1_143, %c1024_144, %c0_145] : memref<2x2048x32xbf16, #tpu.memory_space<vmem>>, vector<1x512x32xbf16>
    %361 = vector.shape_cast %360 : vector<1x512x32xbf16> to vector<512x32xbf16>
    %cst_146 = arith.constant dense<0.000000e+00> : vector<16x32xf32>
    %362 = tpu.matmul %359, %361, %cst_146 {dimension_numbers = #tpu.dot_dimension_numbers<[1], [0], [0], [1], [0, 0, 1, 1], [], []>} : vector<16x512xbf16>, vector<512x32xbf16>, vector<16x32xf32> -> vector<16x32xf32>
    %363 = arith.addf %348, %362 : vector<16x32xf32>
    %c1_147 = arith.constant 1 : index
    %c0_148 = arith.constant 0 : index
    %c1536_149 = arith.constant 1536 : index
    %364 = vector.load %arg9[%c1_147, %c0_148, %c1536_149] : memref<2x32x2048xbf16, #tpu.memory_space<vmem>>, vector<1x32x512xbf16>
    %365 = vector.shape_cast %364 : vector<1x32x512xbf16> to vector<32x512xbf16>
    %cst_150 = arith.constant dense<0.000000e+00> : vector<16x512xf32>
    %366 = tpu.matmul %317, %365, %cst_150 {dimension_numbers = #tpu.dot_dimension_numbers<[1], [0], [0], [1], [0, 0, 1, 1], [], []>} : vector<16x32xbf16>, vector<32x512xbf16>, vector<16x512xf32> -> vector<16x512xf32>
    %c1_151 = arith.constant 1 : index
    %c1536_152 = arith.constant 1536 : index
    %367 = vector.load %arg10[%c1_151, %c1536_152] : memref<2x2048xf32, #tpu.memory_space<vmem>>, vector<1x512xf32>
    %368 = vector.shape_cast %367 : vector<1x512xf32> to vector<512xf32>
    %369 = vector.shape_cast %368 : vector<512xf32> to vector<1x512xf32>
    %370 = vector.broadcast %369 : vector<1x512xf32> to vector<16x512xf32>
    %371 = arith.addf %366, %370 : vector<16x512xf32>
    %cst_153 = arith.constant 0.000000e+00 : f32
    %372 = vector.broadcast %cst_153 : f32 to vector<16x512xf32>
    %373 = arith.maximumf %371, %372 : vector<16x512xf32>
    %374 = arith.truncf %373 : vector<16x512xf32> to vector<16x512xbf16>
    %c1_154 = arith.constant 1 : index
    %c1536_155 = arith.constant 1536 : index
    %c0_156 = arith.constant 0 : index
    %375 = vector.load %arg11[%c1_154, %c1536_155, %c0_156] : memref<2x2048x32xbf16, #tpu.memory_space<vmem>>, vector<1x512x32xbf16>
    %376 = vector.shape_cast %375 : vector<1x512x32xbf16> to vector<512x32xbf16>
    %cst_157 = arith.constant dense<0.000000e+00> : vector<16x32xf32>
    %377 = tpu.matmul %374, %376, %cst_157 {dimension_numbers = #tpu.dot_dimension_numbers<[1], [0], [0], [1], [0, 0, 1, 1], [], []>} : vector<16x512xbf16>, vector<512x32xbf16>, vector<16x32xf32> -> vector<16x32xf32>
    %378 = arith.addf %363, %377 : vector<16x32xf32>
    %379 = arith.addf %290, %378 : vector<16x32xf32>
    %c1_158 = arith.constant 1 : index
    %c0_159 = arith.constant 0 : index
    %380 = vector.load %arg12[%c1_158, %c0_159] : memref<2x32xf32, #tpu.memory_space<vmem>>, vector<1x32xf32>
    %381 = vector.shape_cast %380 : vector<1x32xf32> to vector<32xf32>
    %382 = vector.shape_cast %381 : vector<32xf32> to vector<1x32xf32>
    %383 = vector.broadcast %382 : vector<1x32xf32> to vector<16x32xf32>
    %384 = arith.addf %379, %383 : vector<16x32xf32>
    %c0_160 = arith.constant 0 : index
    %c0_161 = arith.constant 0 : index
    %385 = vector.load %arg13[%c0_160, %c0_161] : memref<16x32xf32, #tpu.memory_space<vmem>>, vector<16x32xf32>
    tpu.vector_store %arg13[%c0_160, %c0_161], %384 {strides = array<i32>} : memref<16x32xf32, #tpu.memory_space<vmem>>, vector<16x32xf32>,
    return
  }
  func.func @transform_0(%arg0: i32) -> (i32, i32) {
    %c0_i32 = arith.constant 0 : i32
    %c0_i32_0 = arith.constant 0 : i32
    return %arg0, %c0_i32 : i32, i32
  }
  func.func @transform_1(%arg0: i32) -> (i32, i32) {
    %c0_i32 = arith.constant 0 : i32
    %c0_i32_0 = arith.constant 0 : i32
    return %arg0, %c0_i32 : i32, i32
  }
  func.func @transform_2(%arg0: i32) -> (i32, i32, i32) {
    %c0_i32 = arith.constant 0 : i32
    %c0_i32_0 = arith.constant 0 : i32
    %c0_i32_1 = arith.constant 0 : i32
    %c0_i32_2 = arith.constant 0 : i32
    return %c0_i32, %c0_i32_0, %c0_i32_1 : i32, i32, i32
  }
  func.func @transform_3(%arg0: i32) -> (i32, i32, i32) {
    %c0_i32 = arith.constant 0 : i32
    %c0_i32_0 = arith.constant 0 : i32
    %c0_i32_1 = arith.constant 0 : i32
    %c0_i32_2 = arith.constant 0 : i32
    return %c0_i32, %c0_i32_0, %c0_i32_1 : i32, i32, i32
  }
  func.func @transform_4(%arg0: i32) -> (i32, i32, i32) {
    %c0_i32 = arith.constant 0 : i32
    %c0_i32_0 = arith.constant 0 : i32
    %c0_i32_1 = arith.constant 0 : i32
    %c0_i32_2 = arith.constant 0 : i32
    return %c0_i32, %c0_i32_0, %c0_i32_1 : i32, i32, i32
  }
  func.func @transform_5(%arg0: i32) -> (i32, i32) {
    %c0_i32 = arith.constant 0 : i32
    %c0_i32_0 = arith.constant 0 : i32
    %c0_i32_1 = arith.constant 0 : i32
    return %c0_i32, %c0_i32_0 : i32, i32
  }
  func.func @transform_6(%arg0: i32) -> (i32, i32, i32) {
    %c0_i32 = arith.constant 0 : i32
    %c0_i32_0 = arith.constant 0 : i32
    %c0_i32_1 = arith.constant 0 : i32
    %c0_i32_2 = arith.constant 0 : i32
    return %c0_i32, %c0_i32_0, %c0_i32_1 : i32, i32, i32
  }
  func.func @transform_7(%arg0: i32) -> (i32, i32) {
    %c0_i32 = arith.constant 0 : i32
    %c0_i32_0 = arith.constant 0 : i32
    %c0_i32_1 = arith.constant 0 : i32
    return %c0_i32, %c0_i32_0 : i32, i32
  }
  func.func @transform_8(%arg0: i32) -> (i32, i32, i32) {
    %c0_i32 = arith.constant 0 : i32
    %c0_i32_0 = arith.constant 0 : i32
    %c0_i32_1 = arith.constant 0 : i32
    %c0_i32_2 = arith.constant 0 : i32
    return %c0_i32, %c0_i32_0, %c0_i32_1 : i32, i32, i32
  }
  func.func @transform_9(%arg0: i32) -> (i32, i32) {
    %c0_i32 = arith.constant 0 : i32
    %c0_i32_0 = arith.constant 0 : i32
    %c0_i32_1 = arith.constant 0 : i32
    return %c0_i32, %c0_i32_0 : i32, i32
  }
  func.func @transform_10(%arg0: i32) -> (i32, i32, i32) {
    %c0_i32 = arith.constant 0 : i32
    %c0_i32_0 = arith.constant 0 : i32
    %c0_i32_1 = arith.constant 0 : i32
    %c0_i32_2 = arith.constant 0 : i32
    return %c0_i32, %c0_i32_0, %c0_i32_1 : i32, i32, i32
  }
  func.func @transform_11(%arg0: i32) -> (i32, i32) {
    %c0_i32 = arith.constant 0 : i32
    %c0_i32_0 = arith.constant 0 : i32
    %c0_i32_1 = arith.constant 0 : i32
    return %c0_i32, %c0_i32_0 : i32, i32
  }
  func.func @transform_12(%arg0: i32) -> (i32, i32) {
    %c0_i32 = arith.constant 0 : i32
    %c0_i32_0 = arith.constant 0 : i32
    return %arg0, %c0_i32 : i32, i32
  }
}

</mosaic_0001>

<llo_original>
// kernel: _lambda_.1
$region0: #{_lambda_.1}
  #allocation0 [shape = 'u32[]', space=smem, size = 0x4, offset = 0x4, fixed_abs, tag = 'smem constant byte address 0x4 - core index']
  #allocation1 [shape = 'u32[144,128]{1,0:T(1,128)}', space=vmem, size = 0x12000, scoped, tag = 'internal scratch']
  %s0 = inlined_call_operand.vmem [shape: f32[16,32], index: 0, kind: input, shape index: {}]
  %s1 = inlined_call_operand.vmem [shape: f32[2,8], index: 1, kind: input, shape index: {}]
  %s2 = inlined_call_operand.vmem [shape: f32[2,2,32], index: 2, kind: input, shape index: {}]
  %s3 = inlined_call_operand.vmem [shape: f32[2,2,32], index: 3, kind: input, shape index: {}]
  %s4 = inlined_call_operand.vmem [shape: bf16[2,32,96], index: 4, kind: input, shape index: {}]
  %s5 = inlined_call_operand.vmem [shape: f32[2,96], index: 5, kind: input, shape index: {}]
  %s6 = inlined_call_operand.vmem [shape: bf16[2,32,32], index: 6, kind: input, shape index: {}]
  %s7 = inlined_call_operand.vmem [shape: f32[2,32], index: 7, kind: input, shape index: {}]
  %s8 = inlined_call_operand.vmem [shape: bf16[2,32,2048], index: 8, kind: input, shape index: {}]
  %s9 = inlined_call_operand.vmem [shape: f32[2,2048], index: 9, kind: input, shape index: {}]
  %s10 = inlined_call_operand.hbm [shape: bf16[2,2048,32], index: 10, kind: input, shape index: {}]
  %s11 = inlined_call_operand.vmem [shape: f32[2,32], index: 11, kind: input, shape index: {}]
  %s12 = inlined_call_operand.hbm [shape: f32[16,32], index: 12, kind: output, shape index: {}]
  %s13 = sld [smem:[#allocation0]]
  $region62: #{_lambda_.1} parent=0
    _
  %s15 = ssub.s32 1, %s13
  %s16 = scalar_select 0, %s15, %s13
  $region1: #{_lambda_.1} parent=0
    #allocation2 [shape = 'u8[1048576]{0}', space=vmem, size = 0x100000, scoped, tag = 'input window, operand 10, single buffered']
    #allocation3 [shape = 's32[1]{0}', space=sflag, size = 0x4, scoped, tag = 'scoped memory for _lambda_.1']
    #allocation4 [shape = 's32[1]{0}', space=sflag, size = 0x4, scoped, tag = 'scoped memory for _lambda_.1']
    #allocation5 [shape = 'u8[8192]{0}', space=vmem, size = 0x2000, scoped, tag = 'output window, operand 0, single buffered']
    %17 = vsyncpa [#allocation3], 0
    %18 = vsyncpa [#allocation4], 0
    // Predicated region
    $region2: #{_lambda_.1} parent=1 // pred_check
      _
    $region3: #{_lambda_.1} parent=1 // pred_check_branch
      %20 = sbr.rel (0) target = $region5
    $region4: #{_lambda_.1} parent=1 // pred_region
      _
    $region5: #{_lambda_.1} parent=1 // pred_fallthru
      _
    // Predicated region
    $region6: #{_lambda_.1} parent=1 // pred_check
      _
    $region7: #{_lambda_.1} parent=1 // pred_check_branch
      %22 = sbr.rel (0) target = $region9
    $region8: #{_lambda_.1} parent=1 // pred_region
      _
    $region9: #{_lambda_.1} parent=1 // pred_fallthru
      _
    // Predicated region
    $region10: #{_lambda_.1} parent=1 // pred_check
      _
    $region11: #{_lambda_.1} parent=1 // pred_check_branch
      %24 = sbr.rel (0) target = $region13
    $region12: #{_lambda_.1} parent=1 // pred_region
      _
    $region13: #{_lambda_.1} parent=1 // pred_fallthru
      _
    // Predicated region
    $region14: #{_lambda_.1} parent=1 // pred_check
      _
    $region15: #{_lambda_.1} parent=1 // pred_check_branch
      %26 = sbr.rel (0) target = $region17
    $region16: #{_lambda_.1} parent=1 // pred_region
      _
    $region17: #{_lambda_.1} parent=1 // pred_fallthru
      _
    // Predicated region
    $region18: #{_lambda_.1} parent=1 // pred_check
      _
    $region19: #{_lambda_.1} parent=1 // pred_check_branch
      %28 = sbr.rel (0) target = $region21
    $region20: #{_lambda_.1} parent=1 // pred_region
      _
    $region21: #{_lambda_.1} parent=1 // pred_fallthru
      _
    // Predicated region
    $region22: #{_lambda_.1} parent=1 // pred_check
      _
    $region23: #{_lambda_.1} parent=1 // pred_check_branch
      %30 = sbr.rel (0) target = $region25
    $region24: #{_lambda_.1} parent=1 // pred_region
      _
    $region25: #{_lambda_.1} parent=1 // pred_fallthru
      _
    // Predicated region
    $region26: #{_lambda_.1} parent=1 // pred_check
      _
    $region27: #{_lambda_.1} parent=1 // pred_check_branch
      %32 = sbr.rel (0) target = $region29
    $region28: #{_lambda_.1} parent=1 // pred_region
      _
    $region29: #{_lambda_.1} parent=1 // pred_fallthru
      _
    // Predicated region
    $region30: #{_lambda_.1} parent=1 // pred_check
      _
    $region31: #{_lambda_.1} parent=1 // pred_check_branch
      %34 = sbr.rel (0) target = $region33
    $region32: #{_lambda_.1} parent=1 // pred_region
      _
    $region33: #{_lambda_.1} parent=1 // pred_fallthru
      _
    // Predicated region
    $region34: #{_lambda_.1} parent=1 // pred_check
      _
    $region35: #{_lambda_.1} parent=1 // pred_check_branch
      %36 = sbr.rel (0) target = $region37
    $region36: #{_lambda_.1} parent=1 // pred_region
      _
    $region37: #{_lambda_.1} parent=1 // pred_fallthru
      _
    // Predicated region
    $region38: #{_lambda_.1} parent=1 // pred_check
      _
    $region39: #{_lambda_.1} parent=1 // pred_check_branch
      %38 = sbr.rel (0) target = $region41
    $region40: #{_lambda_.1} parent=1 // pred_region
      _
    $region41: #{_lambda_.1} parent=1 // pred_fallthru
      _
    // Predicated region
    $region42: #{_lambda_.1} parent=1 // pred_check
      _
    $region43: #{_lambda_.1} parent=1 // pred_check_branch
      %40 = sbr.rel (0) target = $region45
    $region44: #{_lambda_.1} parent=1 // pred_region
      %s42 = ssub.s32 32768, 32768
      %43 = vsyncadd [#allocation3], %s42
      %s44 = sshll.u32 [#allocation2], 4
      %s45 = int_to_ptr.vmem [resolvable:$true] %s44
      %50 = dma.hbm_to_vmem [thread:$0]  %s10, 32768, %s45, [#allocation3], 64, 64, 4
    $region45: #{_lambda_.1} parent=1 // pred_fallthru
      _
    // Predicated region
    $region46: #{_lambda_.1} parent=1 // pred_check
      _
    $region47: #{_lambda_.1} parent=1 // pred_check_branch
      %52 = sbr.rel (0) target = $region49
    $region48: #{_lambda_.1} parent=1 // pred_region
      _
    $region49: #{_lambda_.1} parent=1 // pred_fallthru
      _
    // Predicated region
    $region50: #{_lambda_.1} parent=1 // pred_check
      _
    $region51: #{_lambda_.1} parent=1 // pred_check_branch
      %54 = sbr.rel (0) target = $region53
    $region52: #{_lambda_.1} parent=1 // pred_region
      %55 = dma.done [#allocation3], 32768
    $region53: #{_lambda_.1} parent=1 // pred_fallthru
      _
    %v57 = vld [vmem:[%s0] sm:$0xff]
    %v58 = vld [vmem:[%s0 + $0x8] sm:$0xff]
    %v59 = vld [vmem:[%s1] sm:$0x3]
    %v60 = vlaneseq
    %v61 = vshrl.u32 %v60, 7
    %v62 = vsub.s32 0, %v61
    %v63 = vrot.slane %v59, %v62
    %65 = vbcast.lane.b32.xlu0 %v63, 256
    %v66 = vpop.permute.xlu0 %65
    %v67 = vlaneseq
    %v68 = vshrl.u32 %v67, 7
    %v69 = vsub.s32 1, %v68
    %v70 = vrot.slane %v59, %v69
    %72 = vbcast.lane.b32.xlu0 %v70, 256
    %v73 = vpop.permute.xlu0 %72
    %v76 = vunpack.c.l.s4 1966171168
    %v77 = vunpack.c.0.s8 %v76
    %v78 = vlaneseq
    %v79 = vshrl.u32 %v78, 7
    %v80 = vsub.s32 %v77, %v79
    %v81 = vrot.slane %v59, %v80
    %v82 = vcombine.high %v81, %v81
    %v84 = vunpack.c.l.s4 1966171168
    %v85 = vunpack.c.0.s8 %v84
    %v86 = vlaneseq
    %v87 = vshrl.u32 %v86, 7
    %v88 = vsub.s32 %v85, %v87
    %v89 = vrot.slane %v81, %v88
    %v91 = vunpack.c.l.s4 1966171168
    %v92 = vunpack.c.0.s8 %v91
    %v93 = vlaneseq
    %v94 = vshrl.u32 %v93, 7
    %v95 = vsub.s32 %v92, %v94
    %v96 = vrot.slane %v82, %v95
    %v97 = vlaneseq
    %v98 = vshrl.u32 %v97, 7
    %v99 = vsub.s32 0, %v98
    %v100 = vrot.slane %v89, %v99
    %v101 = vlaneseq
    %v102 = vshrl.u32 %v101, 7
    %v103 = vsub.s32 0, %v102
    %v104 = vrot.slane %v96, %v103
    %v107 = vmul.f32 %v66, %v100
    %v108 = vmul.f32 %v73, %v104
    %vm109 = vcmp.ne.f32.partialorder %v107, 0.0
    %vm110 = vcmp.ne.f32.partialorder %v108, 0.0
    %v111 = vsel %vm109, 1, 0
    %v112 = vsel %vm110, 1, 0
    %v113 = vcvt.s32.f32 %v111
    %v114 = vcvt.s32.f32 %v112
    %v115 = vmul.f32 %v113, 0.35355338
    %v116 = vmul.f32 %v114, 0.35355338
    %v117 = vsub.f32 1.0, %v113
    %v118 = vsub.f32 1.0, %v114
    %v119 = vmul.f32 %v117, -1e+09
    %v120 = vmul.f32 %v118, -1e+09
    %v121 = vld [vmem:[%s2] sm:$0x3]
    %v122 = vld [vmem:[%s3] sm:$0x3]
    %vm123 = vcmask 261120
    %v124 = vsel %vm123, %v57, 0.0
    %125 = vadd.xlane.f32.xlu0 %v124
    %v126 = vpop.xlane.xlu0 %125
    %v127 = vsel %vm123, %v58, 0.0
    %128 = vadd.xlane.f32.xlu0 %v127
    %v129 = vpop.xlane.xlu0 %128
    %v130 = vrcp.pop 32.0
    %v131 = vmul.f32 %v126, %v130
    %v132 = vmul.f32 %v129, %v130
    %v133 = vsub.f32 %v57, %v131
    %v134 = vsub.f32 %v58, %v132
    %v135 = vmul.f32 %v133, %v133
    %v136 = vmul.f32 %v134, %v134
    %v137 = vsel %vm123, %v135, 0.0
    %138 = vadd.xlane.f32.xlu0 %v137
    %v139 = vpop.xlane.xlu0 %138
    %v140 = vsel %vm123, %v136, 0.0
    %141 = vadd.xlane.f32.xlu0 %v140
    %v142 = vpop.xlane.xlu0 %141
    %v143 = vmul.f32 %v139, 0.032258064
    %v144 = vmul.f32 %v142, 0.032258064
    %v145 = vrsqrt.pop %v143
    %v146 = vmul.f32 %v143, %v145
    %vm147 = vcmp.eq.f32.partialorder %v143, inf
    %v148 = vsel %vm147, %v143, %v146
    %vm149 = vcmp.eq.f32.partialorder %v143, 0.0
    %v150 = vand.u32 %v143, 2147483648
    %v151 = vsel %vm149, %v150, %v148
    %v152 = vrsqrt.pop %v144
    %v153 = vmul.f32 %v144, %v152
    %vm154 = vcmp.eq.f32.partialorder %v144, inf
    %v155 = vsel %vm154, %v144, %v153
    %vm156 = vcmp.eq.f32.partialorder %v144, 0.0
    %v157 = vand.u32 %v144, 2147483648
    %v158 = vsel %vm156, %v157, %v155
    %v159 = vadd.f32 %v151, 1e-06
    %v160 = vadd.f32 %v158, 1e-06
    %v161 = vrcp.pop %v159
    %v162 = vmul.f32 %v133, %v161
    %v163 = vrcp.pop %v160
    %v164 = vmul.f32 %v134, %v163
    %v165 = vlaneseq
    %v166 = vshrl.u32 %v165, 7
    %v167 = vsub.s32 0, %v166
    %v168 = vrot.slane %v121, %v167
    %v169 = vmul.f32 %v168, %v162
    %v170 = vmul.f32 %v168, %v164
    %v171 = vlaneseq
    %v172 = vshrl.u32 %v171, 7
    %v173 = vsub.s32 0, %v172
    %v174 = vrot.slane %v122, %v173
    %v175 = vadd.f32 %v169, %v174
    %v176 = vadd.f32 %v170, %v174
    %v177 = vpack.c.bf16 %v176, %v175
    %v178 = vld [vmem:[%s4] sm:$0xf]
    %v179 = vld [vmem:[%s4 + $0x4] sm:$0xf]
    %v180 = vld [vmem:[%s4 + $0x8] sm:$0xf]
    %v181 = vld [vmem:[%s4 + $0xc] sm:$0xf]
    %v182 = vld [vmem:[%s5] sm:$0x1]
    %v183 = vlaneseq
    %v184 = vshrl.u32 %v183, 7
    %v185 = vsub.s32 0, %v184
    %v186 = vrot.slane %v182, %v185
    %v191 = vunpack.c.l.b16 %v178
    %v192 = vunpack.c.l.b16 %v179
    %v193 = vunpack.c.l.b16 %v180
    %v194 = vunpack.c.l.b16 %v181
    %v195 = vpack.c.b16 %v192, %v191
    %v196 = vpack.c.b16 %v194, %v193
    %v200 = vsel %vm123, %v177, 0
    %202 = vmatprep.subr.bf16.mxu0 0
    %203 = vmatpush1.bf16.msra.mxu0 %v195
    %204 = vmatprep.subr.bf16.mxu0 0
    %205 = vmatpush1.bf16.msra.mxu0 %v196
    %206 = vmatprep.subr.bf16.mxu0 0
    %207 = vmatpush1.bf16.msra.mxu0 0
    %208 = vmatprep.subr.bf16.mxu0 0
    %209 = vmatpush1.bf16.msra.mxu0 0
    %210 = vmatprep.subr.bf16.mxu0 0
    %211 = vmatpush1.bf16.msra.mxu0 0
    %212 = vmatprep.subr.bf16.mxu0 0
    %213 = vmatpush1.bf16.msra.mxu0 0
    %214 = vmatprep.subr.bf16.mxu0 0
    %215 = vmatpush1.bf16.msra.mxu0 0
    %216 = vmatprep.subr.bf16.mxu0 0
    %217 = vmatpush1.bf16.msra.mxu0 0
    %218 = vmatprep.subr.bf16.mxu0 0
    %219 = vmatpush1.bf16.msra.mxu0 0
    %220 = vmatprep.subr.bf16.mxu0 0
    %221 = vmatpush1.bf16.msra.mxu0 0
    %222 = vmatprep.subr.bf16.mxu0 0
    %223 = vmatpush1.bf16.msra.mxu0 0
    %224 = vmatprep.subr.bf16.mxu0 0
    %225 = vmatpush1.bf16.msra.mxu0 0
    %226 = vmatprep.subr.bf16.mxu0 0
    %227 = vmatpush1.bf16.msra.mxu0 0
    %228 = vmatprep.subr.bf16.mxu0 0
    %229 = vmatpush1.bf16.msra.mxu0 0
    %230 = vmatprep.subr.bf16.mxu0 0
    %231 = vmatpush1.bf16.msra.mxu0 0
    %232 = vmatprep.subr.bf16.mxu0 0
    %233 = vmatpush1.bf16.msra.mxu0 0
    %234 = vmatprep.mubr.bf16.mxu0 0
    %235 = vmatmul.mubr.bf16.gmra.mrb[0].mxu0 %v200
    %v236 = vpop.f32.mrb[0].mxu0
    %v237 = vadd.f32 %v186, %v236
    %v238 = vpop.f32.mrb[0].mxu0
    %v239 = vpop.f32.mrb[0].mxu0
    %v240 = vadd.f32 %v186, %v239
    %v241 = vpop.f32.mrb[0].mxu0
    %242 = vdwg.mxu0
    %245 = vrot.lane.b32.xlu0 %v237, 120
    %v246 = vpop.permute.xlu0 %245
    %247 = vrot.lane.b32.xlu0 %v240, 120
    %v248 = vpop.permute.xlu0 %247
    %251 = vrot.lane.b32.xlu0 %v237, 112
    %v252 = vpop.permute.xlu0 %251
    %253 = vrot.lane.b32.xlu0 %v240, 112
    %v254 = vpop.permute.xlu0 %253
    %257 = vrot.lane.b32.xlu0 %v237, 104
    %v258 = vpop.permute.xlu0 %257
    %259 = vrot.lane.b32.xlu0 %v240, 104
    %v260 = vpop.permute.xlu0 %259
    %v263 = vpack.c.bf16 %v237, %v237
    %v264 = vpack.c.bf16 %v240, %v240
    %v265 = vpack.c.bf16 %v246, %v246
    %v266 = vpack.c.bf16 %v248, %v248
    %v267 = vpack.c.bf16 %v252, %v252
    %v268 = vpack.c.bf16 %v254, %v254
    %v269 = vpack.c.bf16 %v258, %v258
    %v270 = vpack.c.bf16 %v260, %v260
    %272 = vrot.lane.b32.xlu0 %v263, 96
    %v273 = vpop.permute.xlu0 %272
    %vm274 = vcmask 64512
    %v276 = vsel %vm274, %v263, 0
    %v279 = vsel %vm274, %v273, 0
    %281 = vmatprep.subr.bf16.mxu0 0
    %282 = vmatpush1.bf16.xpose.msra.mxu0 %v279
    %283 = vmatprep.subr.bf16.mxu0 0
    %284 = vmatpush1.bf16.xpose.msra.mxu0 0
    %285 = vmatprep.subr.bf16.mxu0 0
    %286 = vmatpush1.bf16.xpose.msra.mxu0 0
    %287 = vmatprep.subr.bf16.mxu0 0
    %288 = vmatpush1.bf16.xpose.msra.mxu0 0
    %289 = vmatprep.subr.bf16.mxu0 0
    %290 = vmatpush1.bf16.xpose.msra.mxu0 0
    %291 = vmatprep.subr.bf16.mxu0 0
    %292 = vmatpush1.bf16.xpose.msra.mxu0 0
    %293 = vmatprep.subr.bf16.mxu0 0
    %294 = vmatpush1.bf16.xpose.msra.mxu0 0
    %295 = vmatprep.subr.bf16.mxu0 0
    %296 = vmatpush1.bf16.xpose.msra.mxu0 0
    %297 = vmatprep.subr.bf16.mxu0 0
    %298 = vmatpush1.bf16.xpose.msra.mxu0 0
    %299 = vmatprep.subr.bf16.mxu0 0
    %300 = vmatpush1.bf16.xpose.msra.mxu0 0
    %301 = vmatprep.subr.bf16.mxu0 0
    %302 = vmatpush1.bf16.xpose.msra.mxu0 0
    %303 = vmatprep.subr.bf16.mxu0 0
    %304 = vmatpush1.bf16.xpose.msra.mxu0 0
    %305 = vmatprep.subr.bf16.mxu0 0
    %306 = vmatpush1.bf16.xpose.msra.mxu0 0
    %307 = vmatprep.subr.bf16.mxu0 0
    %308 = vmatpush1.bf16.xpose.msra.mxu0 0
    %309 = vmatprep.subr.bf16.mxu0 0
    %310 = vmatpush1.bf16.xpose.msra.mxu0 0
    %311 = vmatprep.subr.bf16.mxu0 0
    %312 = vmatpush1.bf16.xpose.msra.mxu0 0
    %313 = vmatprep.mubr.bf16.mxu0 0
    %314 = vmatmul.mubr.bf16.gmra.mrb[0].mxu0 %v276
    %v315 = vpop.f32.mrb[0].mxu0
    %v316 = vadd.f32 0.0, %v315
    %v317 = vpop.f32.mrb[0].mxu0
    %v318 = vpop.f32.mrb[0].mxu0
    %v319 = vpop.f32.mrb[0].mxu0
    %320 = vdwg.mxu0
    %322 = vrot.lane.b32.xlu0 %v264, 96
    %v323 = vpop.permute.xlu0 %322
    %v325 = vsel %vm274, %v264, 0
    %v328 = vsel %vm274, %v323, 0
    %330 = vmatprep.subr.bf16.mxu0 0
    %331 = vmatpush1.bf16.xpose.msra.mxu0 %v328
    %332 = vmatprep.subr.bf16.mxu0 0
    %333 = vmatpush1.bf16.xpose.msra.mxu0 0
    %334 = vmatprep.subr.bf16.mxu0 0
    %335 = vmatpush1.bf16.xpose.msra.mxu0 0
    %336 = vmatprep.subr.bf16.mxu0 0
    %337 = vmatpush1.bf16.xpose.msra.mxu0 0
    %338 = vmatprep.subr.bf16.mxu0 0
    %339 = vmatpush1.bf16.xpose.msra.mxu0 0
    %340 = vmatprep.subr.bf16.mxu0 0
    %341 = vmatpush1.bf16.xpose.msra.mxu0 0
    %342 = vmatprep.subr.bf16.mxu0 0
    %343 = vmatpush1.bf16.xpose.msra.mxu0 0
    %344 = vmatprep.subr.bf16.mxu0 0
    %345 = vmatpush1.bf16.xpose.msra.mxu0 0
    %346 = vmatprep.subr.bf16.mxu0 0
    %347 = vmatpush1.bf16.xpose.msra.mxu0 0
    %348 = vmatprep.subr.bf16.mxu0 0
    %349 = vmatpush1.bf16.xpose.msra.mxu0 0
    %350 = vmatprep.subr.bf16.mxu0 0
    %351 = vmatpush1.bf16.xpose.msra.mxu0 0
    %352 = vmatprep.subr.bf16.mxu0 0
    %353 = vmatpush1.bf16.xpose.msra.mxu0 0
    %354 = vmatprep.subr.bf16.mxu0 0
    %355 = vmatpush1.bf16.xpose.msra.mxu0 0
    %356 = vmatprep.subr.bf16.mxu0 0
    %357 = vmatpush1.bf16.xpose.msra.mxu0 0
    %358 = vmatprep.subr.bf16.mxu0 0
    %359 = vmatpush1.bf16.xpose.msra.mxu0 0
    %360 = vmatprep.subr.bf16.mxu0 0
    %361 = vmatpush1.bf16.xpose.msra.mxu0 0
    %362 = vmatprep.mubr.bf16.mxu0 0
    %363 = vmatmul.mubr.bf16.gmra.mrb[0].mxu0 %v325
    %v364 = vpop.f32.mrb[0].mxu0
    %v365 = vadd.f32 0.0, %v364
    %v366 = vpop.f32.mrb[0].mxu0
    %v367 = vpop.f32.mrb[0].mxu0
    %v368 = vpop.f32.mrb[0].mxu0
    %369 = vdwg.mxu0
    %371 = vrot.lane.b32.xlu0 %v265, 96
    %v372 = vpop.permute.xlu0 %371
    %v374 = vsel %vm274, %v265, 0
    %v377 = vsel %vm274, %v372, 0
    %379 = vmatprep.subr.bf16.mxu0 0
    %380 = vmatpush1.bf16.xpose.msra.mxu0 %v377
    %381 = vmatprep.subr.bf16.mxu0 0
    %382 = vmatpush1.bf16.xpose.msra.mxu0 0
    %383 = vmatprep.subr.bf16.mxu0 0
    %384 = vmatpush1.bf16.xpose.msra.mxu0 0
    %385 = vmatprep.subr.bf16.mxu0 0
    %386 = vmatpush1.bf16.xpose.msra.mxu0 0
    %387 = vmatprep.subr.bf16.mxu0 0
    %388 = vmatpush1.bf16.xpose.msra.mxu0 0
    %389 = vmatprep.subr.bf16.mxu0 0
    %390 = vmatpush1.bf16.xpose.msra.mxu0 0
    %391 = vmatprep.subr.bf16.mxu0 0
    %392 = vmatpush1.bf16.xpose.msra.mxu0 0
    %393 = vmatprep.subr.bf16.mxu0 0
    %394 = vmatpush1.bf16.xpose.msra.mxu0 0
    %395 = vmatprep.subr.bf16.mxu0 0
    %396 = vmatpush1.bf16.xpose.msra.mxu0 0
    %397 = vmatprep.subr.bf16.mxu0 0
    %398 = vmatpush1.bf16.xpose.msra.mxu0 0
    %399 = vmatprep.subr.bf16.mxu0 0
    %400 = vmatpush1.bf16.xpose.msra.mxu0 0
    %401 = vmatprep.subr.bf16.mxu0 0
    %402 = vmatpush1.bf16.xpose.msra.mxu0 0
    %403 = vmatprep.subr.bf16.mxu0 0
    %404 = vmatpush1.bf16.xpose.msra.mxu0 0
    %405 = vmatprep.subr.bf16.mxu0 0
    %406 = vmatpush1.bf16.xpose.msra.mxu0 0
    %407 = vmatprep.subr.bf16.mxu0 0
    %408 = vmatpush1.bf16.xpose.msra.mxu0 0
    %409 = vmatprep.subr.bf16.mxu0 0
    %410 = vmatpush1.bf16.xpose.msra.mxu0 0
    %411 = vmatprep.mubr.bf16.mxu0 0
    %412 = vmatmul.mubr.bf16.gmra.mrb[0].mxu0 %v374
    %v413 = vpop.f32.mrb[0].mxu0
    %v414 = vadd.f32 0.0, %v413
    %v415 = vpop.f32.mrb[0].mxu0
    %v416 = vpop.f32.mrb[0].mxu0
    %v417 = vpop.f32.mrb[0].mxu0
    %418 = vdwg.mxu0
    %420 = vrot.lane.b32.xlu0 %v266, 96
    %v421 = vpop.permute.xlu0 %420
    %v423 = vsel %vm274, %v266, 0
    %v426 = vsel %vm274, %v421, 0
    %428 = vmatprep.subr.bf16.mxu0 0
    %429 = vmatpush1.bf16.xpose.msra.mxu0 %v426
    %430 = vmatprep.subr.bf16.mxu0 0
    %431 = vmatpush1.bf16.xpose.msra.mxu0 0
    %432 = vmatprep.subr.bf16.mxu0 0
    %433 = vmatpush1.bf16.xpose.msra.mxu0 0
    %434 = vmatprep.subr.bf16.mxu0 0
    %435 = vmatpush1.bf16.xpose.msra.mxu0 0
    %436 = vmatprep.subr.bf16.mxu0 0
    %437 = vmatpush1.bf16.xpose.msra.mxu0 0
    %438 = vmatprep.subr.bf16.mxu0 0
    %439 = vmatpush1.bf16.xpose.msra.mxu0 0
    %440 = vmatprep.subr.bf16.mxu0 0
    %441 = vmatpush1.bf16.xpose.msra.mxu0 0
    %442 = vmatprep.subr.bf16.mxu0 0
    %443 = vmatpush1.bf16.xpose.msra.mxu0 0
    %444 = vmatprep.subr.bf16.mxu0 0
    %445 = vmatpush1.bf16.xpose.msra.mxu0 0
    %446 = vmatprep.subr.bf16.mxu0 0
    %447 = vmatpush1.bf16.xpose.msra.mxu0 0
    %448 = vmatprep.subr.bf16.mxu0 0
    %449 = vmatpush1.bf16.xpose.msra.mxu0 0
    %450 = vmatprep.subr.bf16.mxu0 0
    %451 = vmatpush1.bf16.xpose.msra.mxu0 0
    %452 = vmatprep.subr.bf16.mxu0 0
    %453 = vmatpush1.bf16.xpose.msra.mxu0 0
    %454 = vmatprep.subr.bf16.mxu0 0
    %455 = vmatpush1.bf16.xpose.msra.mxu0 0
    %456 = vmatprep.subr.bf16.mxu0 0
    %457 = vmatpush1.bf16.xpose.msra.mxu0 0
    %458 = vmatprep.subr.bf16.mxu0 0
    %459 = vmatpush1.bf16.xpose.msra.mxu0 0
    %460 = vmatprep.mubr.bf16.mxu0 0
    %461 = vmatmul.mubr.bf16.gmra.mrb[0].mxu0 %v423
    %v462 = vpop.f32.mrb[0].mxu0
    %v463 = vadd.f32 0.0, %v462
    %v464 = vpop.f32.mrb[0].mxu0
    %v465 = vpop.f32.mrb[0].mxu0
    %v466 = vpop.f32.mrb[0].mxu0
    %467 = vdwg.mxu0
    %469 = vrot.lane.b32.xlu0 %v267, 96
    %v470 = vpop.permute.xlu0 %469
    %v472 = vsel %vm274, %v267, 0
    %v475 = vsel %vm274, %v470, 0
    %477 = vmatprep.subr.bf16.mxu0 0
    %478 = vmatpush1.bf16.xpose.msra.mxu0 %v475
    %479 = vmatprep.subr.bf16.mxu0 0
    %480 = vmatpush1.bf16.xpose.msra.mxu0 0
    %481 = vmatprep.subr.bf16.mxu0 0
    %482 = vmatpush1.bf16.xpose.msra.mxu0 0
    %483 = vmatprep.subr.bf16.mxu0 0
    %484 = vmatpush1.bf16.xpose.msra.mxu0 0
    %485 = vmatprep.subr.bf16.mxu0 0
    %486 = vmatpush1.bf16.xpose.msra.mxu0 0
    %487 = vmatprep.subr.bf16.mxu0 0
    %488 = vmatpush1.bf16.xpose.msra.mxu0 0
    %489 = vmatprep.subr.bf16.mxu0 0
    %490 = vmatpush1.bf16.xpose.msra.mxu0 0
    %491 = vmatprep.subr.bf16.mxu0 0
    %492 = vmatpush1.bf16.xpose.msra.mxu0 0
    %493 = vmatprep.subr.bf16.mxu0 0
    %494 = vmatpush1.bf16.xpose.msra.mxu0 0
    %495 = vmatprep.subr.bf16.mxu0 0
    %496 = vmatpush1.bf16.xpose.msra.mxu0 0
    %497 = vmatprep.subr.bf16.mxu0 0
    %498 = vmatpush1.bf16.xpose.msra.mxu0 0
    %499 = vmatprep.subr.bf16.mxu0 0
    %500 = vmatpush1.bf16.xpose.msra.mxu0 0
    %501 = vmatprep.subr.bf16.mxu0 0
    %502 = vmatpush1.bf16.xpose.msra.mxu0 0
    %503 = vmatprep.subr.bf16.mxu0 0
    %504 = vmatpush1.bf16.xpose.msra.mxu0 0
    %505 = vmatprep.subr.bf16.mxu0 0
    %506 = vmatpush1.bf16.xpose.msra.mxu0 0
    %507 = vmatprep.subr.bf16.mxu0 0
    %508 = vmatpush1.bf16.xpose.msra.mxu0 0
    %509 = vmatprep.mubr.bf16.mxu0 0
    %510 = vmatmul.mubr.bf16.gmra.mrb[0].mxu0 %v472
    %v511 = vpop.f32.mrb[0].mxu0
    %v512 = vadd.f32 0.0, %v511
    %v513 = vpop.f32.mrb[0].mxu0
    %v514 = vpop.f32.mrb[0].mxu0
    %v515 = vpop.f32.mrb[0].mxu0
    %516 = vdwg.mxu0
    %518 = vrot.lane.b32.xlu0 %v268, 96
    %v519 = vpop.permute.xlu0 %518
    %v521 = vsel %vm274, %v268, 0
    %v524 = vsel %vm274, %v519, 0
    %526 = vmatprep.subr.bf16.mxu0 0
    %527 = vmatpush1.bf16.xpose.msra.mxu0 %v524
    %528 = vmatprep.subr.bf16.mxu0 0
    %529 = vmatpush1.bf16.xpose.msra.mxu0 0
    %530 = vmatprep.subr.bf16.mxu0 0
    %531 = vmatpush1.bf16.xpose.msra.mxu0 0
    %532 = vmatprep.subr.bf16.mxu0 0
    %533 = vmatpush1.bf16.xpose.msra.mxu0 0
    %534 = vmatprep.subr.bf16.mxu0 0
    %535 = vmatpush1.bf16.xpose.msra.mxu0 0
    %536 = vmatprep.subr.bf16.mxu0 0
    %537 = vmatpush1.bf16.xpose.msra.mxu0 0
    %538 = vmatprep.subr.bf16.mxu0 0
    %539 = vmatpush1.bf16.xpose.msra.mxu0 0
    %540 = vmatprep.subr.bf16.mxu0 0
    %541 = vmatpush1.bf16.xpose.msra.mxu0 0
    %542 = vmatprep.subr.bf16.mxu0 0
    %543 = vmatpush1.bf16.xpose.msra.mxu0 0
    %544 = vmatprep.subr.bf16.mxu0 0
    %545 = vmatpush1.bf16.xpose.msra.mxu0 0
    %546 = vmatprep.subr.bf16.mxu0 0
    %547 = vmatpush1.bf16.xpose.msra.mxu0 0
    %548 = vmatprep.subr.bf16.mxu0 0
    %549 = vmatpush1.bf16.xpose.msra.mxu0 0
    %550 = vmatprep.subr.bf16.mxu0 0
    %551 = vmatpush1.bf16.xpose.msra.mxu0 0
    %552 = vmatprep.subr.bf16.mxu0 0
    %553 = vmatpush1.bf16.xpose.msra.mxu0 0
    %554 = vmatprep.subr.bf16.mxu0 0
    %555 = vmatpush1.bf16.xpose.msra.mxu0 0
    %556 = vmatprep.subr.bf16.mxu0 0
    %557 = vmatpush1.bf16.xpose.msra.mxu0 0
    %558 = vmatprep.mubr.bf16.mxu0 0
    %559 = vmatmul.mubr.bf16.gmra.mrb[0].mxu0 %v521
    %v560 = vpop.f32.mrb[0].mxu0
    %v561 = vadd.f32 0.0, %v560
    %v562 = vpop.f32.mrb[0].mxu0
    %v563 = vpop.f32.mrb[0].mxu0
    %v564 = vpop.f32.mrb[0].mxu0
    %565 = vdwg.mxu0
    %567 = vrot.lane.b32.xlu0 %v269, 96
    %v568 = vpop.permute.xlu0 %567
    %v570 = vsel %vm274, %v269, 0
    %v573 = vsel %vm274, %v568, 0
    %575 = vmatprep.subr.bf16.mxu0 0
    %576 = vmatpush1.bf16.xpose.msra.mxu0 %v573
    %577 = vmatprep.subr.bf16.mxu0 0
    %578 = vmatpush1.bf16.xpose.msra.mxu0 0
    %579 = vmatprep.subr.bf16.mxu0 0
    %580 = vmatpush1.bf16.xpose.msra.mxu0 0
    %581 = vmatprep.subr.bf16.mxu0 0
    %582 = vmatpush1.bf16.xpose.msra.mxu0 0
    %583 = vmatprep.subr.bf16.mxu0 0
    %584 = vmatpush1.bf16.xpose.msra.mxu0 0
    %585 = vmatprep.subr.bf16.mxu0 0
    %586 = vmatpush1.bf16.xpose.msra.mxu0 0
    %587 = vmatprep.subr.bf16.mxu0 0
    %588 = vmatpush1.bf16.xpose.msra.mxu0 0
    %589 = vmatprep.subr.bf16.mxu0 0
    %590 = vmatpush1.bf16.xpose.msra.mxu0 0
    %591 = vmatprep.subr.bf16.mxu0 0
    %592 = vmatpush1.bf16.xpose.msra.mxu0 0
    %593 = vmatprep.subr.bf16.mxu0 0
    %594 = vmatpush1.bf16.xpose.msra.mxu0 0
    %595 = vmatprep.subr.bf16.mxu0 0
    %596 = vmatpush1.bf16.xpose.msra.mxu0 0
    %597 = vmatprep.subr.bf16.mxu0 0
    %598 = vmatpush1.bf16.xpose.msra.mxu0 0
    %599 = vmatprep.subr.bf16.mxu0 0
    %600 = vmatpush1.bf16.xpose.msra.mxu0 0
    %601 = vmatprep.subr.bf16.mxu0 0
    %602 = vmatpush1.bf16.xpose.msra.mxu0 0
    %603 = vmatprep.subr.bf16.mxu0 0
    %604 = vmatpush1.bf16.xpose.msra.mxu0 0
    %605 = vmatprep.subr.bf16.mxu0 0
    %606 = vmatpush1.bf16.xpose.msra.mxu0 0
    %607 = vmatprep.mubr.bf16.mxu0 0
    %608 = vmatmul.mubr.bf16.gmra.mrb[0].mxu0 %v570
    %v609 = vpop.f32.mrb[0].mxu0
    %v610 = vadd.f32 0.0, %v609
    %v611 = vpop.f32.mrb[0].mxu0
    %v612 = vpop.f32.mrb[0].mxu0
    %v613 = vpop.f32.mrb[0].mxu0
    %614 = vdwg.mxu0
    %616 = vrot.lane.b32.xlu0 %v270, 96
    %v617 = vpop.permute.xlu0 %616
    %v619 = vsel %vm274, %v270, 0
    %v622 = vsel %vm274, %v617, 0
    %624 = vmatprep.subr.bf16.mxu0 0
    %625 = vmatpush1.bf16.xpose.msra.mxu0 %v622
    %626 = vmatprep.subr.bf16.mxu0 0
    %627 = vmatpush1.bf16.xpose.msra.mxu0 0
    %628 = vmatprep.subr.bf16.mxu0 0
    %629 = vmatpush1.bf16.xpose.msra.mxu0 0
    %630 = vmatprep.subr.bf16.mxu0 0
    %631 = vmatpush1.bf16.xpose.msra.mxu0 0
    %632 = vmatprep.subr.bf16.mxu0 0
    %633 = vmatpush1.bf16.xpose.msra.mxu0 0
    %634 = vmatprep.subr.bf16.mxu0 0
    %635 = vmatpush1.bf16.xpose.msra.mxu0 0
    %636 = vmatprep.subr.bf16.mxu0 0
    %637 = vmatpush1.bf16.xpose.msra.mxu0 0
    %638 = vmatprep.subr.bf16.mxu0 0
    %639 = vmatpush1.bf16.xpose.msra.mxu0 0
    %640 = vmatprep.subr.bf16.mxu0 0
    %641 = vmatpush1.bf16.xpose.msra.mxu0 0
    %642 = vmatprep.subr.bf16.mxu0 0
    %643 = vmatpush1.bf16.xpose.msra.mxu0 0
    %644 = vmatprep.subr.bf16.mxu0 0
    %645 = vmatpush1.bf16.xpose.msra.mxu0 0
    %646 = vmatprep.subr.bf16.mxu0 0
    %647 = vmatpush1.bf16.xpose.msra.mxu0 0
    %648 = vmatprep.subr.bf16.mxu0 0
    %649 = vmatpush1.bf16.xpose.msra.mxu0 0
    %650 = vmatprep.subr.bf16.mxu0 0
    %651 = vmatpush1.bf16.xpose.msra.mxu0 0
    %652 = vmatprep.subr.bf16.mxu0 0
    %653 = vmatpush1.bf16.xpose.msra.mxu0 0
    %654 = vmatprep.subr.bf16.mxu0 0
    %655 = vmatpush1.bf16.xpose.msra.mxu0 0
    %656 = vmatprep.mubr.bf16.mxu0 0
    %657 = vmatmul.mubr.bf16.gmra.mrb[0].mxu0 %v619
    %v658 = vpop.f32.mrb[0].mxu0
    %v659 = vadd.f32 0.0, %v658
    %v660 = vpop.f32.mrb[0].mxu0
    %v661 = vpop.f32.mrb[0].mxu0
    %v662 = vpop.f32.mrb[0].mxu0
    %663 = vdwg.mxu0
    %v664 = vmul.f32 %v316, %v115
    %v665 = vmul.f32 %v365, %v116
    %v666 = vmul.f32 %v414, %v115
    %v667 = vmul.f32 %v463, %v116
    %v668 = vmul.f32 %v512, %v115
    %v669 = vmul.f32 %v561, %v116
    %v670 = vmul.f32 %v610, %v115
    %v671 = vmul.f32 %v659, %v116
    %v672 = vadd.f32 %v664, %v119
    %v673 = vadd.f32 %v665, %v120
    %v674 = vadd.f32 %v666, %v119
    %v675 = vadd.f32 %v667, %v120
    %v676 = vadd.f32 %v668, %v119
    %v677 = vadd.f32 %v669, %v120
    %v678 = vadd.f32 %v670, %v119
    %v679 = vadd.f32 %v671, %v120
    %v680 = vsel %vm274, %v672, -inf
    %681 = vmax.xlane.f32.xlu0 %v680
    %v682 = vpop.xlane.xlu0 %681
    %v683 = vsel %vm274, %v673, -inf
    %684 = vmax.xlane.f32.xlu0 %v683
    %v685 = vpop.xlane.xlu0 %684
    %v686 = vsel %vm274, %v674, -inf
    %687 = vmax.xlane.f32.xlu0 %v686
    %v688 = vpop.xlane.xlu0 %687
    %v689 = vsel %vm274, %v675, -inf
    %690 = vmax.xlane.f32.xlu0 %v689
    %v691 = vpop.xlane.xlu0 %690
    %v692 = vsel %vm274, %v676, -inf
    %693 = vmax.xlane.f32.xlu0 %v692
    %v694 = vpop.xlane.xlu0 %693
    %v695 = vsel %vm274, %v677, -inf
    %696 = vmax.xlane.f32.xlu0 %v695
    %v697 = vpop.xlane.xlu0 %696
    %v698 = vsel %vm274, %v678, -inf
    %699 = vmax.xlane.f32.xlu0 %v698
    %v700 = vpop.xlane.xlu0 %699
    %v701 = vsel %vm274, %v679, -inf
    %702 = vmax.xlane.f32.xlu0 %v701
    %v703 = vpop.xlane.xlu0 %702
    %v704 = vsub.f32 %v672, %v682
    %v705 = vsub.f32 %v673, %v685
    %v706 = vsub.f32 %v674, %v688
    %v707 = vsub.f32 %v675, %v691
    %v708 = vsub.f32 %v676, %v694
    %v709 = vsub.f32 %v677, %v697
    %v710 = vsub.f32 %v678, %v700
    %v711 = vsub.f32 %v679, %v703
    %v712 = vmul.f32 %v704, 1.442695
    %v713 = vpow.pop %v712
    %v714 = vmul.f32 %v705, 1.442695
    %v715 = vpow.pop %v714
    %v716 = vmul.f32 %v706, 1.442695
    %v717 = vpow.pop %v716
    %v718 = vmul.f32 %v707, 1.442695
    %v719 = vpow.pop %v718
    %v720 = vmul.f32 %v708, 1.442695
    %v721 = vpow.pop %v720
    %v722 = vmul.f32 %v709, 1.442695
    %v723 = vpow.pop %v722
    %v724 = vmul.f32 %v710, 1.442695
    %v725 = vpow.pop %v724
    %v726 = vmul.f32 %v711, 1.442695
    %v727 = vpow.pop %v726
    %v728 = vsel %vm274, %v713, 0.0
    %729 = vadd.xlane.f32.xlu0 %v728
    %v730 = vpop.xlane.xlu0 %729
    %v731 = vsel %vm274, %v715, 0.0
    %732 = vadd.xlane.f32.xlu0 %v731
    %v733 = vpop.xlane.xlu0 %732
    %v734 = vsel %vm274, %v717, 0.0
    %735 = vadd.xlane.f32.xlu0 %v734
    %v736 = vpop.xlane.xlu0 %735
    %v737 = vsel %vm274, %v719, 0.0
    %738 = vadd.xlane.f32.xlu0 %v737
    %v739 = vpop.xlane.xlu0 %738
    %v740 = vsel %vm274, %v721, 0.0
    %741 = vadd.xlane.f32.xlu0 %v740
    %v742 = vpop.xlane.xlu0 %741
    %v743 = vsel %vm274, %v723, 0.0
    %744 = vadd.xlane.f32.xlu0 %v743
    %v745 = vpop.xlane.xlu0 %744
    %v746 = vsel %vm274, %v725, 0.0
    %747 = vadd.xlane.f32.xlu0 %v746
    %v748 = vpop.xlane.xlu0 %747
    %v749 = vsel %vm274, %v727, 0.0
    %750 = vadd.xlane.f32.xlu0 %v749
    %v751 = vpop.xlane.xlu0 %750
    %v752 = vrcp.pop %v730
    %v753 = vrcp.pop %v733
    %v754 = vrcp.pop %v736
    %v755 = vrcp.pop %v739
    %v756 = vrcp.pop %v742
    %v757 = vrcp.pop %v745
    %v758 = vrcp.pop %v748
    %v759 = vrcp.pop %v751
    %v760 = vmul.f32 %v713, %v752
    %v761 = vmul.f32 %v715, %v753
    %v762 = vmul.f32 %v717, %v754
    %v763 = vmul.f32 %v719, %v755
    %v764 = vmul.f32 %v721, %v756
    %v765 = vmul.f32 %v723, %v757
    %v766 = vmul.f32 %v725, %v758
    %v767 = vmul.f32 %v727, %v759
    %v768 = vpack.c.bf16 %v760, %v760
    %v769 = vpack.c.bf16 %v761, %v761
    %v770 = vpack.c.bf16 %v762, %v762
    %v771 = vpack.c.bf16 %v763, %v763
    %v772 = vpack.c.bf16 %v764, %v764
    %v773 = vpack.c.bf16 %v765, %v765
    %v774 = vpack.c.bf16 %v766, %v766
    %v775 = vpack.c.bf16 %v767, %v767
    %776 = vrot.lane.b32.xlu0 %v263, 64
    %v777 = vpop.permute.xlu0 %776
    %v779 = vsel %vm274, %v768, 0
    %vm781 = vcmask 1043456
    %v783 = vsel %vm781, %v777, 0
    %785 = vmatprep.subr.bf16.mxu0 0
    %786 = vmatpush1.bf16.msra.mxu0 %v783
    %787 = vmatprep.subr.bf16.mxu0 0
    %788 = vmatpush1.bf16.msra.mxu0 0
    %789 = vmatprep.subr.bf16.mxu0 0
    %790 = vmatpush1.bf16.msra.mxu0 0
    %791 = vmatprep.subr.bf16.mxu0 0
    %792 = vmatpush1.bf16.msra.mxu0 0
    %793 = vmatprep.subr.bf16.mxu0 0
    %794 = vmatpush1.bf16.msra.mxu0 0
    %795 = vmatprep.subr.bf16.mxu0 0
    %796 = vmatpush1.bf16.msra.mxu0 0
    %797 = vmatprep.subr.bf16.mxu0 0
    %798 = vmatpush1.bf16.msra.mxu0 0
    %799 = vmatprep.subr.bf16.mxu0 0
    %800 = vmatpush1.bf16.msra.mxu0 0
    %801 = vmatprep.subr.bf16.mxu0 0
    %802 = vmatpush1.bf16.msra.mxu0 0
    %803 = vmatprep.subr.bf16.mxu0 0
    %804 = vmatpush1.bf16.msra.mxu0 0
    %805 = vmatprep.subr.bf16.mxu0 0
    %806 = vmatpush1.bf16.msra.mxu0 0
    %807 = vmatprep.subr.bf16.mxu0 0
    %808 = vmatpush1.bf16.msra.mxu0 0
    %809 = vmatprep.subr.bf16.mxu0 0
    %810 = vmatpush1.bf16.msra.mxu0 0
    %811 = vmatprep.subr.bf16.mxu0 0
    %812 = vmatpush1.bf16.msra.mxu0 0
    %813 = vmatprep.subr.bf16.mxu0 0
    %814 = vmatpush1.bf16.msra.mxu0 0
    %815 = vmatprep.subr.bf16.mxu0 0
    %816 = vmatpush1.bf16.msra.mxu0 0
    %817 = vmatprep.mubr.bf16.mxu0 0
    %818 = vmatmul.mubr.bf16.gmra.mrb[0].mxu0 %v779
    %v819 = vpop.f32.mrb[0].mxu0
    %v820 = vadd.f32 0.0, %v819
    %v821 = vpop.f32.mrb[0].mxu0
    %v822 = vpop.f32.mrb[0].mxu0
    %v823 = vpop.f32.mrb[0].mxu0
    %824 = vdwg.mxu0
    %825 = vrot.lane.b32.xlu0 %v264, 64
    %v826 = vpop.permute.xlu0 %825
    %v828 = vsel %vm274, %v769, 0
    %v831 = vsel %vm781, %v826, 0
    %833 = vmatprep.subr.bf16.mxu0 0
    %834 = vmatpush1.bf16.msra.mxu0 %v831
    %835 = vmatprep.subr.bf16.mxu0 0
    %836 = vmatpush1.bf16.msra.mxu0 0
    %837 = vmatprep.subr.bf16.mxu0 0
    %838 = vmatpush1.bf16.msra.mxu0 0
    %839 = vmatprep.subr.bf16.mxu0 0
    %840 = vmatpush1.bf16.msra.mxu0 0
    %841 = vmatprep.subr.bf16.mxu0 0
    %842 = vmatpush1.bf16.msra.mxu0 0
    %843 = vmatprep.subr.bf16.mxu0 0
    %844 = vmatpush1.bf16.msra.mxu0 0
    %845 = vmatprep.subr.bf16.mxu0 0
    %846 = vmatpush1.bf16.msra.mxu0 0
    %847 = vmatprep.subr.bf16.mxu0 0
    %848 = vmatpush1.bf16.msra.mxu0 0
    %849 = vmatprep.subr.bf16.mxu0 0
    %850 = vmatpush1.bf16.msra.mxu0 0
    %851 = vmatprep.subr.bf16.mxu0 0
    %852 = vmatpush1.bf16.msra.mxu0 0
    %853 = vmatprep.subr.bf16.mxu0 0
    %854 = vmatpush1.bf16.msra.mxu0 0
    %855 = vmatprep.subr.bf16.mxu0 0
    %856 = vmatpush1.bf16.msra.mxu0 0
    %857 = vmatprep.subr.bf16.mxu0 0
    %858 = vmatpush1.bf16.msra.mxu0 0
    %859 = vmatprep.subr.bf16.mxu0 0
    %860 = vmatpush1.bf16.msra.mxu0 0
    %861 = vmatprep.subr.bf16.mxu0 0
    %862 = vmatpush1.bf16.msra.mxu0 0
    %863 = vmatprep.subr.bf16.mxu0 0
    %864 = vmatpush1.bf16.msra.mxu0 0
    %865 = vmatprep.mubr.bf16.mxu0 0
    %866 = vmatmul.mubr.bf16.gmra.mrb[0].mxu0 %v828
    %v867 = vpop.f32.mrb[0].mxu0
    %v868 = vadd.f32 0.0, %v867
    %v869 = vpop.f32.mrb[0].mxu0
    %v870 = vpop.f32.mrb[0].mxu0
    %v871 = vpop.f32.mrb[0].mxu0
    %872 = vdwg.mxu0
    %873 = vrot.lane.b32.xlu0 %v265, 64
    %v874 = vpop.permute.xlu0 %873
    %v876 = vsel %vm274, %v770, 0
    %v879 = vsel %vm781, %v874, 0
    %881 = vmatprep.subr.bf16.mxu0 0
    %882 = vmatpush1.bf16.msra.mxu0 %v879
    %883 = vmatprep.subr.bf16.mxu0 0
    %884 = vmatpush1.bf16.msra.mxu0 0
    %885 = vmatprep.subr.bf16.mxu0 0
    %886 = vmatpush1.bf16.msra.mxu0 0
    %887 = vmatprep.subr.bf16.mxu0 0
    %888 = vmatpush1.bf16.msra.mxu0 0
    %889 = vmatprep.subr.bf16.mxu0 0
    %890 = vmatpush1.bf16.msra.mxu0 0
    %891 = vmatprep.subr.bf16.mxu0 0
    %892 = vmatpush1.bf16.msra.mxu0 0
    %893 = vmatprep.subr.bf16.mxu0 0
    %894 = vmatpush1.bf16.msra.mxu0 0
    %895 = vmatprep.subr.bf16.mxu0 0
    %896 = vmatpush1.bf16.msra.mxu0 0
    %897 = vmatprep.subr.bf16.mxu0 0
    %898 = vmatpush1.bf16.msra.mxu0 0
    %899 = vmatprep.subr.bf16.mxu0 0
    %900 = vmatpush1.bf16.msra.mxu0 0
    %901 = vmatprep.subr.bf16.mxu0 0
    %902 = vmatpush1.bf16.msra.mxu0 0
    %903 = vmatprep.subr.bf16.mxu0 0
    %904 = vmatpush1.bf16.msra.mxu0 0
    %905 = vmatprep.subr.bf16.mxu0 0
    %906 = vmatpush1.bf16.msra.mxu0 0
    %907 = vmatprep.subr.bf16.mxu0 0
    %908 = vmatpush1.bf16.msra.mxu0 0
    %909 = vmatprep.subr.bf16.mxu0 0
    %910 = vmatpush1.bf16.msra.mxu0 0
    %911 = vmatprep.subr.bf16.mxu0 0
    %912 = vmatpush1.bf16.msra.mxu0 0
    %913 = vmatprep.mubr.bf16.mxu0 0
    %914 = vmatmul.mubr.bf16.gmra.mrb[0].mxu0 %v876
    %v915 = vpop.f32.mrb[0].mxu0
    %v916 = vadd.f32 0.0, %v915
    %v917 = vpop.f32.mrb[0].mxu0
    %v918 = vpop.f32.mrb[0].mxu0
    %v919 = vpop.f32.mrb[0].mxu0
    %920 = vdwg.mxu0
    %921 = vrot.lane.b32.xlu0 %v266, 64
    %v922 = vpop.permute.xlu0 %921
    %v924 = vsel %vm274, %v771, 0
    %v927 = vsel %vm781, %v922, 0
    %929 = vmatprep.subr.bf16.mxu0 0
    %930 = vmatpush1.bf16.msra.mxu0 %v927
    %931 = vmatprep.subr.bf16.mxu0 0
    %932 = vmatpush1.bf16.msra.mxu0 0
    %933 = vmatprep.subr.bf16.mxu0 0
    %934 = vmatpush1.bf16.msra.mxu0 0
    %935 = vmatprep.subr.bf16.mxu0 0
    %936 = vmatpush1.bf16.msra.mxu0 0
    %937 = vmatprep.subr.bf16.mxu0 0
    %938 = vmatpush1.bf16.msra.mxu0 0
    %939 = vmatprep.subr.bf16.mxu0 0
    %940 = vmatpush1.bf16.msra.mxu0 0
    %941 = vmatprep.subr.bf16.mxu0 0
    %942 = vmatpush1.bf16.msra.mxu0 0
    %943 = vmatprep.subr.bf16.mxu0 0
    %944 = vmatpush1.bf16.msra.mxu0 0
    %945 = vmatprep.subr.bf16.mxu0 0
    %946 = vmatpush1.bf16.msra.mxu0 0
    %947 = vmatprep.subr.bf16.mxu0 0
    %948 = vmatpush1.bf16.msra.mxu0 0
    %949 = vmatprep.subr.bf16.mxu0 0
    %950 = vmatpush1.bf16.msra.mxu0 0
    %951 = vmatprep.subr.bf16.mxu0 0
    %952 = vmatpush1.bf16.msra.mxu0 0
    %953 = vmatprep.subr.bf16.mxu0 0
    %954 = vmatpush1.bf16.msra.mxu0 0
    %955 = vmatprep.subr.bf16.mxu0 0
    %956 = vmatpush1.bf16.msra.mxu0 0
    %957 = vmatprep.subr.bf16.mxu0 0
    %958 = vmatpush1.bf16.msra.mxu0 0
    %959 = vmatprep.subr.bf16.mxu0 0
    %960 = vmatpush1.bf16.msra.mxu0 0
    %961 = vmatprep.mubr.bf16.mxu0 0
    %962 = vmatmul.mubr.bf16.gmra.mrb[0].mxu0 %v924
    %v963 = vpop.f32.mrb[0].mxu0
    %v964 = vadd.f32 0.0, %v963
    %v965 = vpop.f32.mrb[0].mxu0
    %v966 = vpop.f32.mrb[0].mxu0
    %v967 = vpop.f32.mrb[0].mxu0
    %968 = vdwg.mxu0
    %969 = vrot.lane.b32.xlu0 %v267, 64
    %v970 = vpop.permute.xlu0 %969
    %v972 = vsel %vm274, %v772, 0
    %v975 = vsel %vm781, %v970, 0
    %977 = vmatprep.subr.bf16.mxu0 0
    %978 = vmatpush1.bf16.msra.mxu0 %v975
    %979 = vmatprep.subr.bf16.mxu0 0
    %980 = vmatpush1.bf16.msra.mxu0 0
    %981 = vmatprep.subr.bf16.mxu0 0
    %982 = vmatpush1.bf16.msra.mxu0 0
    %983 = vmatprep.subr.bf16.mxu0 0
    %984 = vmatpush1.bf16.msra.mxu0 0
    %985 = vmatprep.subr.bf16.mxu0 0
    %986 = vmatpush1.bf16.msra.mxu0 0
    %987 = vmatprep.subr.bf16.mxu0 0
    %988 = vmatpush1.bf16.msra.mxu0 0
    %989 = vmatprep.subr.bf16.mxu0 0
    %990 = vmatpush1.bf16.msra.mxu0 0
    %991 = vmatprep.subr.bf16.mxu0 0
    %992 = vmatpush1.bf16.msra.mxu0 0
    %993 = vmatprep.subr.bf16.mxu0 0
    %994 = vmatpush1.bf16.msra.mxu0 0
    %995 = vmatprep.subr.bf16.mxu0 0
    %996 = vmatpush1.bf16.msra.mxu0 0
    %997 = vmatprep.subr.bf16.mxu0 0
    %998 = vmatpush1.bf16.msra.mxu0 0
    %999 = vmatprep.subr.bf16.mxu0 0
    %1000 = vmatpush1.bf16.msra.mxu0 0
    %1001 = vmatprep.subr.bf16.mxu0 0
    %1002 = vmatpush1.bf16.msra.mxu0 0
    %1003 = vmatprep.subr.bf16.mxu0 0
    %1004 = vmatpush1.bf16.msra.mxu0 0
    %1005 = vmatprep.subr.bf16.mxu0 0
    %1006 = vmatpush1.bf16.msra.mxu0 0
    %1007 = vmatprep.subr.bf16.mxu0 0
    %1008 = vmatpush1.bf16.msra.mxu0 0
    %1009 = vmatprep.mubr.bf16.mxu0 0
    %1010 = vmatmul.mubr.bf16.gmra.mrb[0].mxu0 %v972
    %v1011 = vpop.f32.mrb[0].mxu0
    %v1012 = vadd.f32 0.0, %v1011
    %v1013 = vpop.f32.mrb[0].mxu0
    %v1014 = vpop.f32.mrb[0].mxu0
    %v1015 = vpop.f32.mrb[0].mxu0
    %1016 = vdwg.mxu0
    %1017 = vrot.lane.b32.xlu0 %v268, 64
    %v1018 = vpop.permute.xlu0 %1017
    %v1020 = vsel %vm274, %v773, 0
    %v1023 = vsel %vm781, %v1018, 0
    %1025 = vmatprep.subr.bf16.mxu0 0
    %1026 = vmatpush1.bf16.msra.mxu0 %v1023
    %1027 = vmatprep.subr.bf16.mxu0 0
    %1028 = vmatpush1.bf16.msra.mxu0 0
    %1029 = vmatprep.subr.bf16.mxu0 0
    %1030 = vmatpush1.bf16.msra.mxu0 0
    %1031 = vmatprep.subr.bf16.mxu0 0
    %1032 = vmatpush1.bf16.msra.mxu0 0
    %1033 = vmatprep.subr.bf16.mxu0 0
    %1034 = vmatpush1.bf16.msra.mxu0 0
    %1035 = vmatprep.subr.bf16.mxu0 0
    %1036 = vmatpush1.bf16.msra.mxu0 0
    %1037 = vmatprep.subr.bf16.mxu0 0
    %1038 = vmatpush1.bf16.msra.mxu0 0
    %1039 = vmatprep.subr.bf16.mxu0 0
    %1040 = vmatpush1.bf16.msra.mxu0 0
    %1041 = vmatprep.subr.bf16.mxu0 0
    %1042 = vmatpush1.bf16.msra.mxu0 0
    %1043 = vmatprep.subr.bf16.mxu0 0
    %1044 = vmatpush1.bf16.msra.mxu0 0
    %1045 = vmatprep.subr.bf16.mxu0 0
    %1046 = vmatpush1.bf16.msra.mxu0 0
    %1047 = vmatprep.subr.bf16.mxu0 0
    %1048 = vmatpush1.bf16.msra.mxu0 0
    %1049 = vmatprep.subr.bf16.mxu0 0
    %1050 = vmatpush1.bf16.msra.mxu0 0
    %1051 = vmatprep.subr.bf16.mxu0 0
    %1052 = vmatpush1.bf16.msra.mxu0 0
    %1053 = vmatprep.subr.bf16.mxu0 0
    %1054 = vmatpush1.bf16.msra.mxu0 0
    %1055 = vmatprep.subr.bf16.mxu0 0
    %1056 = vmatpush1.bf16.msra.mxu0 0
    %1057 = vmatprep.mubr.bf16.mxu0 0
    %1058 = vmatmul.mubr.bf16.gmra.mrb[0].mxu0 %v1020
    %v1059 = vpop.f32.mrb[0].mxu0
    %v1060 = vadd.f32 0.0, %v1059
    %v1061 = vpop.f32.mrb[0].mxu0
    %v1062 = vpop.f32.mrb[0].mxu0
    %v1063 = vpop.f32.mrb[0].mxu0
    %1064 = vdwg.mxu0
    %1065 = vrot.lane.b32.xlu0 %v269, 64
    %v1066 = vpop.permute.xlu0 %1065
    %v1068 = vsel %vm274, %v774, 0
    %v1071 = vsel %vm781, %v1066, 0
    %1073 = vmatprep.subr.bf16.mxu0 0
    %1074 = vmatpush1.bf16.msra.mxu0 %v1071
    %1075 = vmatprep.subr.bf16.mxu0 0
    %1076 = vmatpush1.bf16.msra.mxu0 0
    %1077 = vmatprep.subr.bf16.mxu0 0
    %1078 = vmatpush1.bf16.msra.mxu0 0
    %1079 = vmatprep.subr.bf16.mxu0 0
    %1080 = vmatpush1.bf16.msra.mxu0 0
    %1081 = vmatprep.subr.bf16.mxu0 0
    %1082 = vmatpush1.bf16.msra.mxu0 0
    %1083 = vmatprep.subr.bf16.mxu0 0
    %1084 = vmatpush1.bf16.msra.mxu0 0
    %1085 = vmatprep.subr.bf16.mxu0 0
    %1086 = vmatpush1.bf16.msra.mxu0 0
    %1087 = vmatprep.subr.bf16.mxu0 0
    %1088 = vmatpush1.bf16.msra.mxu0 0
    %1089 = vmatprep.subr.bf16.mxu0 0
    %1090 = vmatpush1.bf16.msra.mxu0 0
    %1091 = vmatprep.subr.bf16.mxu0 0
    %1092 = vmatpush1.bf16.msra.mxu0 0
    %1093 = vmatprep.subr.bf16.mxu0 0
    %1094 = vmatpush1.bf16.msra.mxu0 0
    %1095 = vmatprep.subr.bf16.mxu0 0
    %1096 = vmatpush1.bf16.msra.mxu0 0
    %1097 = vmatprep.subr.bf16.mxu0 0
    %1098 = vmatpush1.bf16.msra.mxu0 0
    %1099 = vmatprep.subr.bf16.mxu0 0
    %1100 = vmatpush1.bf16.msra.mxu0 0
    %1101 = vmatprep.subr.bf16.mxu0 0
    %1102 = vmatpush1.bf16.msra.mxu0 0
    %1103 = vmatprep.subr.bf16.mxu0 0
    %1104 = vmatpush1.bf16.msra.mxu0 0
    %1105 = vmatprep.mubr.bf16.mxu0 0
    %1106 = vmatmul.mubr.bf16.gmra.mrb[0].mxu0 %v1068
    %v1107 = vpop.f32.mrb[0].mxu0
    %v1108 = vadd.f32 0.0, %v1107
    %v1109 = vpop.f32.mrb[0].mxu0
    %v1110 = vpop.f32.mrb[0].mxu0
    %v1111 = vpop.f32.mrb[0].mxu0
    %1112 = vdwg.mxu0
    %1113 = vrot.lane.b32.xlu0 %v270, 64
    %v1114 = vpop.permute.xlu0 %1113
    %v1116 = vsel %vm274, %v775, 0
    %v1119 = vsel %vm781, %v1114, 0
    %1121 = vmatprep.subr.bf16.mxu0 0
    %1122 = vmatpush1.bf16.msra.mxu0 %v1119
    %1123 = vmatprep.subr.bf16.mxu0 0
    %1124 = vmatpush1.bf16.msra.mxu0 0
    %1125 = vmatprep.subr.bf16.mxu0 0
    %1126 = vmatpush1.bf16.msra.mxu0 0
    %1127 = vmatprep.subr.bf16.mxu0 0
    %1128 = vmatpush1.bf16.msra.mxu0 0
    %1129 = vmatprep.subr.bf16.mxu0 0
    %1130 = vmatpush1.bf16.msra.mxu0 0
    %1131 = vmatprep.subr.bf16.mxu0 0
    %1132 = vmatpush1.bf16.msra.mxu0 0
    %1133 = vmatprep.subr.bf16.mxu0 0
    %1134 = vmatpush1.bf16.msra.mxu0 0
    %1135 = vmatprep.subr.bf16.mxu0 0
    %1136 = vmatpush1.bf16.msra.mxu0 0
    %1137 = vmatprep.subr.bf16.mxu0 0
    %1138 = vmatpush1.bf16.msra.mxu0 0
    %1139 = vmatprep.subr.bf16.mxu0 0
    %1140 = vmatpush1.bf16.msra.mxu0 0
    %1141 = vmatprep.subr.bf16.mxu0 0
    %1142 = vmatpush1.bf16.msra.mxu0 0
    %1143 = vmatprep.subr.bf16.mxu0 0
    %1144 = vmatpush1.bf16.msra.mxu0 0
    %1145 = vmatprep.subr.bf16.mxu0 0
    %1146 = vmatpush1.bf16.msra.mxu0 0
    %1147 = vmatprep.subr.bf16.mxu0 0
    %1148 = vmatpush1.bf16.msra.mxu0 0
    %1149 = vmatprep.subr.bf16.mxu0 0
    %1150 = vmatpush1.bf16.msra.mxu0 0
    %1151 = vmatprep.subr.bf16.mxu0 0
    %1152 = vmatpush1.bf16.msra.mxu0 0
    %1153 = vmatprep.mubr.bf16.mxu0 0
    %1154 = vmatmul.mubr.bf16.gmra.mrb[0].mxu0 %v1116
    %v1155 = vpop.f32.mrb[0].mxu0
    %v1156 = vadd.f32 0.0, %v1155
    %v1157 = vpop.f32.mrb[0].mxu0
    %v1158 = vpop.f32.mrb[0].mxu0
    %v1159 = vpop.f32.mrb[0].mxu0
    %1160 = vdwg.mxu0
    %1163 = vrot.lane.b32.xlu0 %v916, 8
    %v1164 = vpop.permute.xlu0 %1163
    %1165 = vrot.lane.b32.xlu0 %v964, 8
    %v1166 = vpop.permute.xlu0 %1165
    %1171 = vrot.lane.b32.xlu0 %v1012, 16
    %v1172 = vpop.permute.xlu0 %1171
    %1173 = vrot.lane.b32.xlu0 %v1060, 16
    %v1174 = vpop.permute.xlu0 %1173
    %1179 = vrot.lane.b32.xlu0 %v1108, 24
    %v1180 = vpop.permute.xlu0 %1179
    %1181 = vrot.lane.b32.xlu0 %v1156, 24
    %v1182 = vpop.permute.xlu0 %1181
    %v1185 = vsel %vm274, %v820, %v1164
    %v1186 = vsel %vm274, %v868, %v1166
    %vm1187 = vcmask 130048
    %v1188 = vsel %vm1187, %v1185, %v1172
    %v1189 = vsel %vm1187, %v1186, %v1174
    %vm1190 = vcmask 195584
    %v1191 = vsel %vm1190, %v1188, %v1180
    %v1192 = vsel %vm1190, %v1189, %v1182
    %v1193 = vpack.c.bf16 %v1192, %v1191
    %v1194 = vld [vmem:[%s6] sm:$0xf]
    %v1195 = vld [vmem:[%s6 + $0x4] sm:$0xf]
    %v1196 = vld [vmem:[%s6 + $0x8] sm:$0xf]
    %v1197 = vld [vmem:[%s6 + $0xc] sm:$0xf]
    %v1202 = vunpack.c.l.b16 %v1194
    %v1203 = vunpack.c.l.b16 %v1195
    %v1204 = vunpack.c.l.b16 %v1196
    %v1205 = vunpack.c.l.b16 %v1197
    %v1206 = vpack.c.b16 %v1203, %v1202
    %v1207 = vpack.c.b16 %v1205, %v1204
    %v1211 = vsel %vm123, %v1193, 0
    %1213 = vmatprep.subr.bf16.mxu0 0
    %1214 = vmatpush1.bf16.msra.mxu0 %v1206
    %1215 = vmatprep.subr.bf16.mxu0 0
    %1216 = vmatpush1.bf16.msra.mxu0 %v1207
    %1217 = vmatprep.subr.bf16.mxu0 0
    %1218 = vmatpush1.bf16.msra.mxu0 0
    %1219 = vmatprep.subr.bf16.mxu0 0
    %1220 = vmatpush1.bf16.msra.mxu0 0
    %1221 = vmatprep.subr.bf16.mxu0 0
    %1222 = vmatpush1.bf16.msra.mxu0 0
    %1223 = vmatprep.subr.bf16.mxu0 0
    %1224 = vmatpush1.bf16.msra.mxu0 0
    %1225 = vmatprep.subr.bf16.mxu0 0
    %1226 = vmatpush1.bf16.msra.mxu0 0
    %1227 = vmatprep.subr.bf16.mxu0 0
    %1228 = vmatpush1.bf16.msra.mxu0 0
    %1229 = vmatprep.subr.bf16.mxu0 0
    %1230 = vmatpush1.bf16.msra.mxu0 0
    %1231 = vmatprep.subr.bf16.mxu0 0
    %1232 = vmatpush1.bf16.msra.mxu0 0
    %1233 = vmatprep.subr.bf16.mxu0 0
    %1234 = vmatpush1.bf16.msra.mxu0 0
    %1235 = vmatprep.subr.bf16.mxu0 0
    %1236 = vmatpush1.bf16.msra.mxu0 0
    %1237 = vmatprep.subr.bf16.mxu0 0
    %1238 = vmatpush1.bf16.msra.mxu0 0
    %1239 = vmatprep.subr.bf16.mxu0 0
    %1240 = vmatpush1.bf16.msra.mxu0 0
    %1241 = vmatprep.subr.bf16.mxu0 0
    %1242 = vmatpush1.bf16.msra.mxu0 0
    %1243 = vmatprep.subr.bf16.mxu0 0
    %1244 = vmatpush1.bf16.msra.mxu0 0
    %1245 = vmatprep.mubr.bf16.mxu0 0
    %1246 = vmatmul.mubr.bf16.gmra.mrb[0].mxu0 %v1211
    %v1247 = vpop.f32.mrb[0].mxu0
    %v1248 = vadd.f32 0.0, %v1247
    %v1249 = vpop.f32.mrb[0].mxu0
    %v1250 = vpop.f32.mrb[0].mxu0
    %v1251 = vadd.f32 0.0, %v1250
    %v1252 = vpop.f32.mrb[0].mxu0
    %1253 = vdwg.mxu0
    %v1254 = vadd.f32 %v57, %v1248
    %v1255 = vadd.f32 %v58, %v1251
    %v1256 = vld [vmem:[%s7] sm:$0x1]
    %v1257 = vlaneseq
    %v1258 = vshrl.u32 %v1257, 7
    %v1259 = vsub.s32 0, %v1258
    %v1260 = vrot.slane %v1256, %v1259
    %v1261 = vadd.f32 %v1254, %v1260
    %v1262 = vadd.f32 %v1255, %v1260
    %v1263 = vsel %vm123, %v1261, 0.0
    %1264 = vadd.xlane.f32.xlu0 %v1263
    %v1265 = vpop.xlane.xlu0 %1264
    %v1266 = vsel %vm123, %v1262, 0.0
    %1267 = vadd.xlane.f32.xlu0 %v1266
    %v1268 = vpop.xlane.xlu0 %1267
    %v1269 = vmul.f32 %v1265, %v130
    %v1270 = vmul.f32 %v1268, %v130
    %v1271 = vsub.f32 %v1261, %v1269
    %v1272 = vsub.f32 %v1262, %v1270
    %v1273 = vmul.f32 %v1271, %v1271
    %v1274 = vmul.f32 %v1272, %v1272
    %v1275 = vsel %vm123, %v1273, 0.0
    %1276 = vadd.xlane.f32.xlu0 %v1275
    %v1277 = vpop.xlane.xlu0 %1276
    %v1278 = vsel %vm123, %v1274, 0.0
    %1279 = vadd.xlane.f32.xlu0 %v1278
    %v1280 = vpop.xlane.xlu0 %1279
    %v1281 = vmul.f32 %v1277, 0.032258064
    %v1282 = vmul.f32 %v1280, 0.032258064
    %v1283 = vrsqrt.pop %v1281
    %v1284 = vmul.f32 %v1281, %v1283
    %vm1285 = vcmp.eq.f32.partialorder %v1281, inf
    %v1286 = vsel %vm1285, %v1281, %v1284
    %vm1287 = vcmp.eq.f32.partialorder %v1281, 0.0
    %v1288 = vand.u32 %v1281, 2147483648
    %v1289 = vsel %vm1287, %v1288, %v1286
    %v1290 = vrsqrt.pop %v1282
    %v1291 = vmul.f32 %v1282, %v1290
    %vm1292 = vcmp.eq.f32.partialorder %v1282, inf
    %v1293 = vsel %vm1292, %v1282, %v1291
    %vm1294 = vcmp.eq.f32.partialorder %v1282, 0.0
    %v1295 = vand.u32 %v1282, 2147483648
    %v1296 = vsel %vm1294, %v1295, %v1293
    %v1297 = vadd.f32 %v1289, 1e-06
    %v1298 = vadd.f32 %v1296, 1e-06
    %v1299 = vrcp.pop %v1297
    %v1300 = vmul.f32 %v1271, %v1299
    %v1301 = vrcp.pop %v1298
    %v1302 = vmul.f32 %v1272, %v1301
    %v1303 = vlaneseq
    %v1304 = vshrl.u32 %v1303, 7
    %v1305 = vsub.s32 1, %v1304
    %v1306 = vrot.slane %v121, %v1305
    %v1307 = vmul.f32 %v1306, %v1300
    %v1308 = vmul.f32 %v1306, %v1302
    %v1309 = vlaneseq
    %v1310 = vshrl.u32 %v1309, 7
    %v1311 = vsub.s32 1, %v1310
    %v1312 = vrot.slane %v122, %v1311
    %v1313 = vadd.f32 %v1307, %v1312
    %v1314 = vadd.f32 %v1308, %v1312
    %v1315 = vpack.c.bf16 %v1314, %v1313
    %v1316 = vld [vmem:[%s8] sm:$0xff]
    %v1317 = vld [vmem:[%s8 + $0x8] sm:$0xff]
    %v1318 = vld [vmem:[%s8 + $0x40] sm:$0xff]
    %v1319 = vld [vmem:[%s8 + $0x48] sm:$0xff]
    %v1320 = vld [vmem:[%s8 + $0x80] sm:$0xff]
    %v1321 = vld [vmem:[%s8 + $0x88] sm:$0xff]
    %v1322 = vld [vmem:[%s8 + $0xc0] sm:$0xff]
    %v1323 = vld [vmem:[%s8 + $0xc8] sm:$0xff]
    %v1324 = vld [vmem:[%s9] ss:$2 sm:$0xf]
    %v1326 = vlaneseq
    %v1327 = vshrl.u32 %v1326, 7
    %v1328 = vsub.s32 0, %v1327
    %v1329 = vrot.slane %v1324, %v1328
    %v1330 = vlaneseq
    %v1331 = vshrl.u32 %v1330, 7
    %v1332 = vsub.s32 1, %v1331
    %v1333 = vrot.slane %v1324, %v1332
    %v1334 = vlaneseq
    %v1335 = vshrl.u32 %v1334, 7
    %v1336 = vsub.s32 2, %v1335
    %v1337 = vrot.slane %v1324, %v1336
    %v1338 = vlaneseq
    %v1339 = vshrl.u32 %v1338, 7
    %v1340 = vsub.s32 3, %v1339
    %v1341 = vrot.slane %v1324, %v1340
    %v1354 = vunpack.c.l.b16 %v1316
    %v1355 = vunpack.c.h.b16 %v1316
    %v1356 = vunpack.c.l.b16 %v1317
    %v1357 = vunpack.c.h.b16 %v1317
    %v1358 = vunpack.c.l.b16 %v1318
    %v1359 = vunpack.c.h.b16 %v1318
    %v1360 = vunpack.c.l.b16 %v1319
    %v1361 = vunpack.c.h.b16 %v1319
    %v1362 = vunpack.c.l.b16 %v1320
    %v1363 = vunpack.c.h.b16 %v1320
    %v1364 = vunpack.c.l.b16 %v1321
    %v1365 = vunpack.c.h.b16 %v1321
    %v1366 = vunpack.c.l.b16 %v1322
    %v1367 = vunpack.c.h.b16 %v1322
    %v1368 = vunpack.c.l.b16 %v1323
    %v1369 = vunpack.c.h.b16 %v1323
    %v1370 = vpack.c.b16 %v1358, %v1354
    %v1371 = vpack.c.b16 %v1359, %v1355
    %v1372 = vpack.c.b16 %v1360, %v1356
    %v1373 = vpack.c.b16 %v1361, %v1357
    %v1374 = vpack.c.b16 %v1366, %v1362
    %v1375 = vpack.c.b16 %v1367, %v1363
    %v1376 = vpack.c.b16 %v1368, %v1364
    %v1377 = vpack.c.b16 %v1369, %v1365
    %v1387 = vsel %vm123, %v1315, 0
    %1389 = vmatprep.subr.bf16.mxu0 %v1371
    %1390 = vmatpush1.bf16.msra.mxu0 %v1370
    %1391 = vmatprep.subr.bf16.mxu0 %v1375
    %1392 = vmatpush1.bf16.msra.mxu0 %v1374
    %1393 = vmatprep.subr.bf16.mxu0 0
    %1394 = vmatpush1.bf16.msra.mxu0 0
    %1395 = vmatprep.subr.bf16.mxu0 0
    %1396 = vmatpush1.bf16.msra.mxu0 0
    %1397 = vmatprep.subr.bf16.mxu0 0
    %1398 = vmatpush1.bf16.msra.mxu0 0
    %1399 = vmatprep.subr.bf16.mxu0 0
    %1400 = vmatpush1.bf16.msra.mxu0 0
    %1401 = vmatprep.subr.bf16.mxu0 0
    %1402 = vmatpush1.bf16.msra.mxu0 0
    %1403 = vmatprep.subr.bf16.mxu0 0
    %1404 = vmatpush1.bf16.msra.mxu0 0
    %1405 = vmatprep.subr.bf16.mxu0 0
    %1406 = vmatpush1.bf16.msra.mxu0 0
    %1407 = vmatprep.subr.bf16.mxu0 0
    %1408 = vmatpush1.bf16.msra.mxu0 0
    %1409 = vmatprep.subr.bf16.mxu0 0
    %1410 = vmatpush1.bf16.msra.mxu0 0
    %1411 = vmatprep.subr.bf16.mxu0 0
    %1412 = vmatpush1.bf16.msra.mxu0 0
    %1413 = vmatprep.subr.bf16.mxu0 0
    %1414 = vmatpush1.bf16.msra.mxu0 0
    %1415 = vmatprep.subr.bf16.mxu0 0
    %1416 = vmatpush1.bf16.msra.mxu0 0
    %1417 = vmatprep.subr.bf16.mxu0 0
    %1418 = vmatpush1.bf16.msra.mxu0 0
    %1419 = vmatprep.subr.bf16.mxu0 0
    %1420 = vmatpush1.bf16.msra.mxu0 0
    %1421 = vmatprep.mubr.bf16.mxu0 0
    %1422 = vmatmul.mubr.bf16.gmra.mrb[0].mxu0 %v1387
    %v1423 = vpop.f32.mrb[0].mxu0
    %v1424 = vadd.f32 %v1329, %v1423
    %v1425 = vpop.f32.mrb[0].mxu0
    %v1426 = vadd.f32 %v1333, %v1425
    %v1427 = vpop.f32.mrb[0].mxu0
    %v1428 = vadd.f32 %v1329, %v1427
    %v1429 = vpop.f32.mrb[0].mxu0
    %v1430 = vadd.f32 %v1333, %v1429
    %1431 = vdwg.mxu0
    %1432 = vmatprep.subr.bf16.mxu0 %v1373
    %1433 = vmatpush1.bf16.msra.mxu0 %v1372
    %1434 = vmatprep.subr.bf16.mxu0 %v1377
    %1435 = vmatpush1.bf16.msra.mxu0 %v1376
    %1436 = vmatprep.subr.bf16.mxu0 0
    %1437 = vmatpush1.bf16.msra.mxu0 0
    %1438 = vmatprep.subr.bf16.mxu0 0
    %1439 = vmatpush1.bf16.msra.mxu0 0
    %1440 = vmatprep.subr.bf16.mxu0 0
    %1441 = vmatpush1.bf16.msra.mxu0 0
    %1442 = vmatprep.subr.bf16.mxu0 0
    %1443 = vmatpush1.bf16.msra.mxu0 0
    %1444 = vmatprep.subr.bf16.mxu0 0
    %1445 = vmatpush1.bf16.msra.mxu0 0
    %1446 = vmatprep.subr.bf16.mxu0 0
    %1447 = vmatpush1.bf16.msra.mxu0 0
    %1448 = vmatprep.subr.bf16.mxu0 0
    %1449 = vmatpush1.bf16.msra.mxu0 0
    %1450 = vmatprep.subr.bf16.mxu0 0
    %1451 = vmatpush1.bf16.msra.mxu0 0
    %1452 = vmatprep.subr.bf16.mxu0 0
    %1453 = vmatpush1.bf16.msra.mxu0 0
    %1454 = vmatprep.subr.bf16.mxu0 0
    %1455 = vmatpush1.bf16.msra.mxu0 0
    %1456 = vmatprep.subr.bf16.mxu0 0
    %1457 = vmatpush1.bf16.msra.mxu0 0
    %1458 = vmatprep.subr.bf16.mxu0 0
    %1459 = vmatpush1.bf16.msra.mxu0 0
    %1460 = vmatprep.subr.bf16.mxu0 0
    %1461 = vmatpush1.bf16.msra.mxu0 0
    %1462 = vmatprep.subr.bf16.mxu0 0
    %1463 = vmatpush1.bf16.msra.mxu0 0
    %1464 = vmatprep.mubr.bf16.mxu0 0
    %1465 = vmatmul.mubr.bf16.gmra.mrb[0].mxu0 %v1387
    %v1466 = vpop.f32.mrb[0].mxu0
    %v1467 = vadd.f32 %v1337, %v1466
    %v1468 = vpop.f32.mrb[0].mxu0
    %v1469 = vadd.f32 %v1341, %v1468
    %v1470 = vpop.f32.mrb[0].mxu0
    %v1471 = vadd.f32 %v1337, %v1470
    %v1472 = vpop.f32.mrb[0].mxu0
    %v1473 = vadd.f32 %v1341, %v1472
    %1474 = vdwg.mxu0
    %v1475 = vmax.f32 %v1424, 0.0
    %v1476 = vmax.f32 %v1426, 0.0
    %v1477 = vmax.f32 %v1467, 0.0
    %v1478 = vmax.f32 %v1469, 0.0
    %v1479 = vmax.f32 %v1428, 0.0
    %v1480 = vmax.f32 %v1430, 0.0
    %v1481 = vmax.f32 %v1471, 0.0
    %v1482 = vmax.f32 %v1473, 0.0
    %v1483 = vpack.c.bf16 %v1479, %v1475
    %v1484 = vpack.c.bf16 %v1480, %v1476
    %v1485 = vpack.c.bf16 %v1481, %v1477
    %v1486 = vpack.c.bf16 %v1482, %v1478
    %v1487 = vld [vmem:[#allocation2] sm:$0xf]
    %v1488 = vld [vmem:[#allocation2 + $0x4] sm:$0xf]
    %v1489 = vld [vmem:[#allocation2 + $0x8] sm:$0xf]
    %v1490 = vld [vmem:[#allocation2 + $0xc] sm:$0xf]
    %v1491 = vld [vmem:[#allocation2 + $0x10] sm:$0xf]
    %v1492 = vld [vmem:[#allocation2 + $0x14] sm:$0xf]
    %v1493 = vld [vmem:[#allocation2 + $0x18] sm:$0xf]
    %v1494 = vld [vmem:[#allocation2 + $0x1c] sm:$0xf]
    %v1495 = vld [vmem:[#allocation2 + $0x20] sm:$0xf]
    %v1496 = vld [vmem:[#allocation2 + $0x24] sm:$0xf]
    %v1497 = vld [vmem:[#allocation2 + $0x28] sm:$0xf]
    %v1498 = vld [vmem:[#allocation2 + $0x2c] sm:$0xf]
    %v1499 = vld [vmem:[#allocation2 + $0x30] sm:$0xf]
    %v1500 = vld [vmem:[#allocation2 + $0x34] sm:$0xf]
    %v1501 = vld [vmem:[#allocation2 + $0x38] sm:$0xf]
    %v1502 = vld [vmem:[#allocation2 + $0x3c] sm:$0xf]
    %v1503 = vld [vmem:[#allocation2 + $0x40] sm:$0xf]
    %v1504 = vld [vmem:[#allocation2 + $0x44] sm:$0xf]
    %v1505 = vld [vmem:[#allocation2 + $0x48] sm:$0xf]
    %v1506 = vld [vmem:[#allocation2 + $0x4c] sm:$0xf]
    %v1507 = vld [vmem:[#allocation2 + $0x50] sm:$0xf]
    %v1508 = vld [vmem:[#allocation2 + $0x54] sm:$0xf]
    %v1509 = vld [vmem:[#allocation2 + $0x58] sm:$0xf]
    %v1510 = vld [vmem:[#allocation2 + $0x5c] sm:$0xf]
    %v1511 = vld [vmem:[#allocation2 + $0x60] sm:$0xf]
    %v1512 = vld [vmem:[#allocation2 + $0x64] sm:$0xf]
    %v1513 = vld [vmem:[#allocation2 + $0x68] sm:$0xf]
    %v1514 = vld [vmem:[#allocation2 + $0x6c] sm:$0xf]
    %v1515 = vld [vmem:[#allocation2 + $0x70] sm:$0xf]
    %v1516 = vld [vmem:[#allocation2 + $0x74] sm:$0xf]
    %v1517 = vld [vmem:[#allocation2 + $0x78] sm:$0xf]
    %v1518 = vld [vmem:[#allocation2 + $0x7c] sm:$0xf]
    %v1519 = vld [vmem:[#allocation2 + $0x80] sm:$0xf]
    %v1520 = vld [vmem:[#allocation2 + $0x84] sm:$0xf]
    %v1521 = vld [vmem:[#allocation2 + $0x88] sm:$0xf]
    %v1522 = vld [vmem:[#allocation2 + $0x8c] sm:$0xf]
    %v1523 = vld [vmem:[#allocation2 + $0x90] sm:$0xf]
    %v1524 = vld [vmem:[#allocation2 + $0x94] sm:$0xf]
    %v1525 = vld [vmem:[#allocation2 + $0x98] sm:$0xf]
    %v1526 = vld [vmem:[#allocation2 + $0x9c] sm:$0xf]
    %v1527 = vld [vmem:[#allocation2 + $0xa0] sm:$0xf]
    %v1528 = vld [vmem:[#allocation2 + $0xa4] sm:$0xf]
    %v1529 = vld [vmem:[#allocation2 + $0xa8] sm:$0xf]
    %v1530 = vld [vmem:[#allocation2 + $0xac] sm:$0xf]
    %v1531 = vld [vmem:[#allocation2 + $0xb0] sm:$0xf]
    %v1532 = vld [vmem:[#allocation2 + $0xb4] sm:$0xf]
    %v1533 = vld [vmem:[#allocation2 + $0xb8] sm:$0xf]
    %v1534 = vld [vmem:[#allocation2 + $0xbc] sm:$0xf]
    %v1535 = vld [vmem:[#allocation2 + $0xc0] sm:$0xf]
    %v1536 = vld [vmem:[#allocation2 + $0xc4] sm:$0xf]
    %v1537 = vld [vmem:[#allocation2 + $0xc8] sm:$0xf]
    %v1538 = vld [vmem:[#allocation2 + $0xcc] sm:$0xf]
    %v1539 = vld [vmem:[#allocation2 + $0xd0] sm:$0xf]
    %v1540 = vld [vmem:[#allocation2 + $0xd4] sm:$0xf]
    %v1541 = vld [vmem:[#allocation2 + $0xd8] sm:$0xf]
    %v1542 = vld [vmem:[#allocation2 + $0xdc] sm:$0xf]
    %v1543 = vld [vmem:[#allocation2 + $0xe0] sm:$0xf]
    %v1544 = vld [vmem:[#allocation2 + $0xe4] sm:$0xf]
    %v1545 = vld [vmem:[#allocation2 + $0xe8] sm:$0xf]
    %v1546 = vld [vmem:[#allocation2 + $0xec] sm:$0xf]
    %v1547 = vld [vmem:[#allocation2 + $0xf0] sm:$0xf]
    %v1548 = vld [vmem:[#allocation2 + $0xf4] sm:$0xf]
    %v1549 = vld [vmem:[#allocation2 + $0xf8] sm:$0xf]
    %v1550 = vld [vmem:[#allocation2 + $0xfc] sm:$0xf]
    %v1551 = vld [vmem:[%s8 + $0x10] sm:$0xff]
    %v1552 = vld [vmem:[%s8 + $0x18] sm:$0xff]
    %v1553 = vld [vmem:[%s8 + $0x50] sm:$0xff]
    %v1554 = vld [vmem:[%s8 + $0x58] sm:$0xff]
    %v1555 = vld [vmem:[%s8 + $0x90] sm:$0xff]
    %v1556 = vld [vmem:[%s8 + $0x98] sm:$0xff]
    %v1557 = vld [vmem:[%s8 + $0xd0] sm:$0xff]
    %v1558 = vld [vmem:[%s8 + $0xd8] sm:$0xff]
    %s1559 = scalar_lea.vmem %s9, 8
    %v1560 = vld [vmem:[%s1559] ss:$2 sm:$0xf]
    %v1562 = vlaneseq
    %v1563 = vshrl.u32 %v1562, 7
    %v1564 = vsub.s32 0, %v1563
    %v1565 = vrot.slane %v1560, %v1564
    %v1566 = vlaneseq
    %v1567 = vshrl.u32 %v1566, 7
    %v1568 = vsub.s32 1, %v1567
    %v1569 = vrot.slane %v1560, %v1568
    %v1570 = vlaneseq
    %v1571 = vshrl.u32 %v1570, 7
    %v1572 = vsub.s32 2, %v1571
    %v1573 = vrot.slane %v1560, %v1572
    %v1574 = vlaneseq
    %v1575 = vshrl.u32 %v1574, 7
    %v1576 = vsub.s32 3, %v1575
    %v1577 = vrot.slane %v1560, %v1576
    %v1590 = vunpack.c.l.b16 %v1551
    %v1591 = vunpack.c.h.b16 %v1551
    %v1592 = vunpack.c.l.b16 %v1552
    %v1593 = vunpack.c.h.b16 %v1552
    %v1594 = vunpack.c.l.b16 %v1553
    %v1595 = vunpack.c.h.b16 %v1553
    %v1596 = vunpack.c.l.b16 %v1554
    %v1597 = vunpack.c.h.b16 %v1554
    %v1598 = vunpack.c.l.b16 %v1555
    %v1599 = vunpack.c.h.b16 %v1555
    %v1600 = vunpack.c.l.b16 %v1556
    %v1601 = vunpack.c.h.b16 %v1556
    %v1602 = vunpack.c.l.b16 %v1557
    %v1603 = vunpack.c.h.b16 %v1557
    %v1604 = vunpack.c.l.b16 %v1558
    %v1605 = vunpack.c.h.b16 %v1558
    %v1606 = vpack.c.b16 %v1594, %v1590
    %v1607 = vpack.c.b16 %v1595, %v1591
    %v1608 = vpack.c.b16 %v1596, %v1592
    %v1609 = vpack.c.b16 %v1597, %v1593
    %v1610 = vpack.c.b16 %v1602, %v1598
    %v1611 = vpack.c.b16 %v1603, %v1599
    %v1612 = vpack.c.b16 %v1604, %v1600
    %v1613 = vpack.c.b16 %v1605, %v1601
    %1622 = vmatprep.subr.bf16.mxu0 %v1607
    %1623 = vmatpush1.bf16.msra.mxu0 %v1606
    %1624 = vmatprep.subr.bf16.mxu0 %v1611
    %1625 = vmatpush1.bf16.msra.mxu0 %v1610
    %1626 = vmatprep.subr.bf16.mxu0 0
    %1627 = vmatpush1.bf16.msra.mxu0 0
    %1628 = vmatprep.subr.bf16.mxu0 0
    %1629 = vmatpush1.bf16.msra.mxu0 0
    %1630 = vmatprep.subr.bf16.mxu0 0
    %1631 = vmatpush1.bf16.msra.mxu0 0
    %1632 = vmatprep.subr.bf16.mxu0 0
    %1633 = vmatpush1.bf16.msra.mxu0 0
    %1634 = vmatprep.subr.bf16.mxu0 0
    %1635 = vmatpush1.bf16.msra.mxu0 0
    %1636 = vmatprep.subr.bf16.mxu0 0
    %1637 = vmatpush1.bf16.msra.mxu0 0
    %1638 = vmatprep.subr.bf16.mxu0 0
    %1639 = vmatpush1.bf16.msra.mxu0 0
    %1640 = vmatprep.subr.bf16.mxu0 0
    %1641 = vmatpush1.bf16.msra.mxu0 0
    %1642 = vmatprep.subr.bf16.mxu0 0
    %1643 = vmatpush1.bf16.msra.mxu0 0
    %1644 = vmatprep.subr.bf16.mxu0 0
    %1645 = vmatpush1.bf16.msra.mxu0 0
    %1646 = vmatprep.subr.bf16.mxu0 0
    %1647 = vmatpush1.bf16.msra.mxu0 0
    %1648 = vmatprep.subr.bf16.mxu0 0
    %1649 = vmatpush1.bf16.msra.mxu0 0
    %1650 = vmatprep.subr.bf16.mxu0 0
    %1651 = vmatpush1.bf16.msra.mxu0 0
    %1652 = vmatprep.subr.bf16.mxu0 0
    %1653 = vmatpush1.bf16.msra.mxu0 0
    %1654 = vmatprep.mubr.bf16.mxu0 0
    %1655 = vmatmul.mubr.bf16.gmra.mrb[0].mxu0 %v1387
    %v1656 = vpop.f32.mrb[0].mxu0
    %v1657 = vadd.f32 %v1565, %v1656
    %v1658 = vpop.f32.mrb[0].mxu0
    %v1659 = vadd.f32 %v1569, %v1658
    %v1660 = vpop.f32.mrb[0].mxu0
    %v1661 = vadd.f32 %v1565, %v1660
    %v1662 = vpop.f32.mrb[0].mxu0
    %v1663 = vadd.f32 %v1569, %v1662
    %1664 = vdwg.mxu0
    %1665 = vmatprep.subr.bf16.mxu0 %v1609
    %1666 = vmatpush1.bf16.msra.mxu0 %v1608
    %1667 = vmatprep.subr.bf16.mxu0 %v1613
    %1668 = vmatpush1.bf16.msra.mxu0 %v1612
    %1669 = vmatprep.subr.bf16.mxu0 0
    %1670 = vmatpush1.bf16.msra.mxu0 0
    %1671 = vmatprep.subr.bf16.mxu0 0
    %1672 = vmatpush1.bf16.msra.mxu0 0
    %1673 = vmatprep.subr.bf16.mxu0 0
    %1674 = vmatpush1.bf16.msra.mxu0 0
    %1675 = vmatprep.subr.bf16.mxu0 0
    %1676 = vmatpush1.bf16.msra.mxu0 0
    %1677 = vmatprep.subr.bf16.mxu0 0
    %1678 = vmatpush1.bf16.msra.mxu0 0
    %1679 = vmatprep.subr.bf16.mxu0 0
    %1680 = vmatpush1.bf16.msra.mxu0 0
    %1681 = vmatprep.subr.bf16.mxu0 0
    %1682 = vmatpush1.bf16.msra.mxu0 0
    %1683 = vmatprep.subr.bf16.mxu0 0
    %1684 = vmatpush1.bf16.msra.mxu0 0
    %1685 = vmatprep.subr.bf16.mxu0 0
    %1686 = vmatpush1.bf16.msra.mxu0 0
    %1687 = vmatprep.subr.bf16.mxu0 0
    %1688 = vmatpush1.bf16.msra.mxu0 0
    %1689 = vmatprep.subr.bf16.mxu0 0
    %1690 = vmatpush1.bf16.msra.mxu0 0
    %1691 = vmatprep.subr.bf16.mxu0 0
    %1692 = vmatpush1.bf16.msra.mxu0 0
    %1693 = vmatprep.subr.bf16.mxu0 0
    %1694 = vmatpush1.bf16.msra.mxu0 0
    %1695 = vmatprep.subr.bf16.mxu0 0
    %1696 = vmatpush1.bf16.msra.mxu0 0
    %1697 = vmatprep.mubr.bf16.mxu0 0
    %1698 = vmatmul.mubr.bf16.gmra.mrb[0].mxu0 %v1387
    %v1699 = vpop.f32.mrb[0].mxu0
    %v1700 = vadd.f32 %v1573, %v1699
    %v1701 = vpop.f32.mrb[0].mxu0
    %v1702 = vadd.f32 %v1577, %v1701
    %v1703 = vpop.f32.mrb[0].mxu0
    %v1704 = vadd.f32 %v1573, %v1703
    %v1705 = vpop.f32.mrb[0].mxu0
    %v1706 = vadd.f32 %v1577, %v1705
    %1707 = vdwg.mxu0
    %v1708 = vmax.f32 %v1657, 0.0
    %v1709 = vmax.f32 %v1659, 0.0
    %v1710 = vmax.f32 %v1700, 0.0
    %v1711 = vmax.f32 %v1702, 0.0
    %v1712 = vmax.f32 %v1661, 0.0
    %v1713 = vmax.f32 %v1663, 0.0
    %v1714 = vmax.f32 %v1704, 0.0
    %v1715 = vmax.f32 %v1706, 0.0
    %v1716 = vpack.c.bf16 %v1712, %v1708
    %v1717 = vpack.c.bf16 %v1713, %v1709
    %v1718 = vpack.c.bf16 %v1714, %v1710
    %v1719 = vpack.c.bf16 %v1715, %v1711
    %v1720 = vld [vmem:[#allocation2 + $0x100] sm:$0xf]
    %v1721 = vld [vmem:[#allocation2 + $0x104] sm:$0xf]
    %v1722 = vld [vmem:[#allocation2 + $0x108] sm:$0xf]
    %v1723 = vld [vmem:[#allocation2 + $0x10c] sm:$0xf]
    %v1724 = vld [vmem:[#allocation2 + $0x110] sm:$0xf]
    %v1725 = vld [vmem:[#allocation2 + $0x114] sm:$0xf]
    %v1726 = vld [vmem:[#allocation2 + $0x118] sm:$0xf]
    %v1727 = vld [vmem:[#allocation2 + $0x11c] sm:$0xf]
    %v1728 = vld [vmem:[#allocation2 + $0x120] sm:$0xf]
    %v1729 = vld [vmem:[#allocation2 + $0x124] sm:$0xf]
    %v1730 = vld [vmem:[#allocation2 + $0x128] sm:$0xf]
    %v1731 = vld [vmem:[#allocation2 + $0x12c] sm:$0xf]
    %v1732 = vld [vmem:[#allocation2 + $0x130] sm:$0xf]
    %v1733 = vld [vmem:[#allocation2 + $0x134] sm:$0xf]
    %v1734 = vld [vmem:[#allocation2 + $0x138] sm:$0xf]
    %v1735 = vld [vmem:[#allocation2 + $0x13c] sm:$0xf]
    %v1736 = vld [vmem:[#allocation2 + $0x140] sm:$0xf]
    %v1737 = vld [vmem:[#allocation2 + $0x144] sm:$0xf]
    %v1738 = vld [vmem:[#allocation2 + $0x148] sm:$0xf]
    %v1739 = vld [vmem:[#allocation2 + $0x14c] sm:$0xf]
    %v1740 = vld [vmem:[#allocation2 + $0x150] sm:$0xf]
    %v1741 = vld [vmem:[#allocation2 + $0x154] sm:$0xf]
    %v1742 = vld [vmem:[#allocation2 + $0x158] sm:$0xf]
    %v1743 = vld [vmem:[#allocation2 + $0x15c] sm:$0xf]
    %v1744 = vld [vmem:[#allocation2 + $0x160] sm:$0xf]
    %v1745 = vld [vmem:[#allocation2 + $0x164] sm:$0xf]
    %v1746 = vld [vmem:[#allocation2 + $0x168] sm:$0xf]
    %v1747 = vld [vmem:[#allocation2 + $0x16c] sm:$0xf]
    %v1748 = vld [vmem:[#allocation2 + $0x170] sm:$0xf]
    %v1749 = vld [vmem:[#allocation2 + $0x174] sm:$0xf]
    %v1750 = vld [vmem:[#allocation2 + $0x178] sm:$0xf]
    %v1751 = vld [vmem:[#allocation2 + $0x17c] sm:$0xf]
    %v1752 = vld [vmem:[#allocation2 + $0x180] sm:$0xf]
    %v1753 = vld [vmem:[#allocation2 + $0x184] sm:$0xf]
    %v1754 = vld [vmem:[#allocation2 + $0x188] sm:$0xf]
    %v1755 = vld [vmem:[#allocation2 + $0x18c] sm:$0xf]
    %v1756 = vld [vmem:[#allocation2 + $0x190] sm:$0xf]
    %v1757 = vld [vmem:[#allocation2 + $0x194] sm:$0xf]
    %v1758 = vld [vmem:[#allocation2 + $0x198] sm:$0xf]
    %v1759 = vld [vmem:[#allocation2 + $0x19c] sm:$0xf]
    %v1760 = vld [vmem:[#allocation2 + $0x1a0] sm:$0xf]
    %v1761 = vld [vmem:[#allocation2 + $0x1a4] sm:$0xf]
    %v1762 = vld [vmem:[#allocation2 + $0x1a8] sm:$0xf]
    %v1763 = vld [vmem:[#allocation2 + $0x1ac] sm:$0xf]
    %v1764 = vld [vmem:[#allocation2 + $0x1b0] sm:$0xf]
    %v1765 = vld [vmem:[#allocation2 + $0x1b4] sm:$0xf]
    %v1766 = vld [vmem:[#allocation2 + $0x1b8] sm:$0xf]
    %v1767 = vld [vmem:[#allocation2 + $0x1bc] sm:$0xf]
    %v1768 = vld [vmem:[#allocation2 + $0x1c0] sm:$0xf]
    %v1769 = vld [vmem:[#allocation2 + $0x1c4] sm:$0xf]
    %v1770 = vld [vmem:[#allocation2 + $0x1c8] sm:$0xf]
    %v1771 = vld [vmem:[#allocation2 + $0x1cc] sm:$0xf]
    %v1772 = vld [vmem:[#allocation2 + $0x1d0] sm:$0xf]
    %v1773 = vld [vmem:[#allocation2 + $0x1d4] sm:$0xf]
    %v1774 = vld [vmem:[#allocation2 + $0x1d8] sm:$0xf]
    %v1775 = vld [vmem:[#allocation2 + $0x1dc] sm:$0xf]
    %v1776 = vld [vmem:[#allocation2 + $0x1e0] sm:$0xf]
    %v1777 = vld [vmem:[#allocation2 + $0x1e4] sm:$0xf]
    %v1778 = vld [vmem:[#allocation2 + $0x1e8] sm:$0xf]
    %v1779 = vld [vmem:[#allocation2 + $0x1ec] sm:$0xf]
    %v1780 = vld [vmem:[#allocation2 + $0x1f0] sm:$0xf]
    %v1781 = vld [vmem:[#allocation2 + $0x1f4] sm:$0xf]
    %v1782 = vld [vmem:[#allocation2 + $0x1f8] sm:$0xf]
    %v1783 = vld [vmem:[#allocation2 + $0x1fc] sm:$0xf]
    %v1848 = vunpack.c.l.b16 %v1720
    %v1849 = vunpack.c.l.b16 %v1721
    %v1850 = vunpack.c.l.b16 %v1722
    %v1851 = vunpack.c.l.b16 %v1723
    %v1852 = vunpack.c.l.b16 %v1724
    %v1853 = vunpack.c.l.b16 %v1725
    %v1854 = vunpack.c.l.b16 %v1726
    %v1855 = vunpack.c.l.b16 %v1727
    %v1856 = vunpack.c.l.b16 %v1728
    %v1857 = vunpack.c.l.b16 %v1729
    %v1858 = vunpack.c.l.b16 %v1730
    %v1859 = vunpack.c.l.b16 %v1731
    %v1860 = vunpack.c.l.b16 %v1732
    %v1861 = vunpack.c.l.b16 %v1733
    %v1862 = vunpack.c.l.b16 %v1734
    %v1863 = vunpack.c.l.b16 %v1735
    %v1864 = vunpack.c.l.b16 %v1736
    %v1865 = vunpack.c.l.b16 %v1737
    %v1866 = vunpack.c.l.b16 %v1738
    %v1867 = vunpack.c.l.b16 %v1739
    %v1868 = vunpack.c.l.b16 %v1740
    %v1869 = vunpack.c.l.b16 %v1741
    %v1870 = vunpack.c.l.b16 %v1742
    %v1871 = vunpack.c.l.b16 %v1743
    %v1872 = vunpack.c.l.b16 %v1744
    %v1873 = vunpack.c.l.b16 %v1745
    %v1874 = vunpack.c.l.b16 %v1746
    %v1875 = vunpack.c.l.b16 %v1747
    %v1876 = vunpack.c.l.b16 %v1748
    %v1877 = vunpack.c.l.b16 %v1749
    %v1878 = vunpack.c.l.b16 %v1750
    %v1879 = vunpack.c.l.b16 %v1751
    %v1880 = vunpack.c.l.b16 %v1752
    %v1881 = vunpack.c.l.b16 %v1753
    %v1882 = vunpack.c.l.b16 %v1754
    %v1883 = vunpack.c.l.b16 %v1755
    %v1884 = vunpack.c.l.b16 %v1756
    %v1885 = vunpack.c.l.b16 %v1757
    %v1886 = vunpack.c.l.b16 %v1758
    %v1887 = vunpack.c.l.b16 %v1759
    %v1888 = vunpack.c.l.b16 %v1760
    %v1889 = vunpack.c.l.b16 %v1761
    %v1890 = vunpack.c.l.b16 %v1762
    %v1891 = vunpack.c.l.b16 %v1763
    %v1892 = vunpack.c.l.b16 %v1764
    %v1893 = vunpack.c.l.b16 %v1765
    %v1894 = vunpack.c.l.b16 %v1766
    %v1895 = vunpack.c.l.b16 %v1767
    %v1896 = vunpack.c.l.b16 %v1768
    %v1897 = vunpack.c.l.b16 %v1769
    %v1898 = vunpack.c.l.b16 %v1770
    %v1899 = vunpack.c.l.b16 %v1771
    %v1900 = vunpack.c.l.b16 %v1772
    %v1901 = vunpack.c.l.b16 %v1773
    %v1902 = vunpack.c.l.b16 %v1774
    %v1903 = vunpack.c.l.b16 %v1775
    %v1904 = vunpack.c.l.b16 %v1776
    %v1905 = vunpack.c.l.b16 %v1777
    %v1906 = vunpack.c.l.b16 %v1778
    %v1907 = vunpack.c.l.b16 %v1779
    %v1908 = vunpack.c.l.b16 %v1780
    %v1909 = vunpack.c.l.b16 %v1781
    %v1910 = vunpack.c.l.b16 %v1782
    %v1911 = vunpack.c.l.b16 %v1783
    %v1912 = vpack.c.b16 %v1849, %v1848
    %v1913 = vpack.c.b16 %v1851, %v1850
    %v1914 = vpack.c.b16 %v1853, %v1852
    %v1915 = vpack.c.b16 %v1855, %v1854
    %v1916 = vpack.c.b16 %v1857, %v1856
    %v1917 = vpack.c.b16 %v1859, %v1858
    %v1918 = vpack.c.b16 %v1861, %v1860
    %v1919 = vpack.c.b16 %v1863, %v1862
    %v1920 = vpack.c.b16 %v1865, %v1864
    %v1921 = vpack.c.b16 %v1867, %v1866
    %v1922 = vpack.c.b16 %v1869, %v1868
    %v1923 = vpack.c.b16 %v1871, %v1870
    %v1924 = vpack.c.b16 %v1873, %v1872
    %v1925 = vpack.c.b16 %v1875, %v1874
    %v1926 = vpack.c.b16 %v1877, %v1876
    %v1927 = vpack.c.b16 %v1879, %v1878
    %v1928 = vpack.c.b16 %v1881, %v1880
    %v1929 = vpack.c.b16 %v1883, %v1882
    %v1930 = vpack.c.b16 %v1885, %v1884
    %v1931 = vpack.c.b16 %v1887, %v1886
    %v1932 = vpack.c.b16 %v1889, %v1888
    %v1933 = vpack.c.b16 %v1891, %v1890
    %v1934 = vpack.c.b16 %v1893, %v1892
    %v1935 = vpack.c.b16 %v1895, %v1894
    %v1936 = vpack.c.b16 %v1897, %v1896
    %v1937 = vpack.c.b16 %v1899, %v1898
    %v1938 = vpack.c.b16 %v1901, %v1900
    %v1939 = vpack.c.b16 %v1903, %v1902
    %v1940 = vpack.c.b16 %v1905, %v1904
    %v1941 = vpack.c.b16 %v1907, %v1906
    %v1942 = vpack.c.b16 %v1909, %v1908
    %v1943 = vpack.c.b16 %v1911, %v1910
    %1976 = vmatprep.subr.bf16.mxu0 0
    %1977 = vmatpush1.bf16.msra.mxu0 %v1912
    %1978 = vmatprep.subr.bf16.mxu0 0
    %1979 = vmatpush1.bf16.msra.mxu0 %v1913
    %1980 = vmatprep.subr.bf16.mxu0 0
    %1981 = vmatpush1.bf16.msra.mxu0 %v1914
    %1982 = vmatprep.subr.bf16.mxu0 0
    %1983 = vmatpush1.bf16.msra.mxu0 %v1915
    %1984 = vmatprep.subr.bf16.mxu0 0
    %1985 = vmatpush1.bf16.msra.mxu0 %v1916
    %1986 = vmatprep.subr.bf16.mxu0 0
    %1987 = vmatpush1.bf16.msra.mxu0 %v1917
    %1988 = vmatprep.subr.bf16.mxu0 0
    %1989 = vmatpush1.bf16.msra.mxu0 %v1918
    %1990 = vmatprep.subr.bf16.mxu0 0
    %1991 = vmatpush1.bf16.msra.mxu0 %v1919
    %1992 = vmatprep.subr.bf16.mxu0 0
    %1993 = vmatpush1.bf16.msra.mxu0 %v1920
    %1994 = vmatprep.subr.bf16.mxu0 0
    %1995 = vmatpush1.bf16.msra.mxu0 %v1921
    %1996 = vmatprep.subr.bf16.mxu0 0
    %1997 = vmatpush1.bf16.msra.mxu0 %v1922
    %1998 = vmatprep.subr.bf16.mxu0 0
    %1999 = vmatpush1.bf16.msra.mxu0 %v1923
    %2000 = vmatprep.subr.bf16.mxu0 0
    %2001 = vmatpush1.bf16.msra.mxu0 %v1924
    %2002 = vmatprep.subr.bf16.mxu0 0
    %2003 = vmatpush1.bf16.msra.mxu0 %v1925
    %2004 = vmatprep.subr.bf16.mxu0 0
    %2005 = vmatpush1.bf16.msra.mxu0 %v1926
    %2006 = vmatprep.subr.bf16.mxu0 0
    %2007 = vmatpush1.bf16.msra.mxu0 %v1927
    %2008 = vmatprep.mubr.bf16.mxu0 %v1717
    %2009 = vmatmul.mubr.bf16.gmra.mrb[0].mxu0 %v1716
    %v2010 = vpop.f32.mrb[0].mxu0
    %v2011 = vadd.f32 0.0, %v2010
    %v2012 = vpop.f32.mrb[0].mxu0
    %v2013 = vpop.f32.mrb[0].mxu0
    %v2014 = vadd.f32 0.0, %v2013
    %v2015 = vpop.f32.mrb[0].mxu0
    %2016 = vdwg.mxu0
    %2017 = vmatprep.subr.bf16.mxu0 0
    %2018 = vmatpush1.bf16.msra.mxu0 %v1928
    %2019 = vmatprep.subr.bf16.mxu0 0
    %2020 = vmatpush1.bf16.msra.mxu0 %v1929
    %2021 = vmatprep.subr.bf16.mxu0 0
    %2022 = vmatpush1.bf16.msra.mxu0 %v1930
    %2023 = vmatprep.subr.bf16.mxu0 0
    %2024 = vmatpush1.bf16.msra.mxu0 %v1931
    %2025 = vmatprep.subr.bf16.mxu0 0
    %2026 = vmatpush1.bf16.msra.mxu0 %v1932
    %2027 = vmatprep.subr.bf16.mxu0 0
    %2028 = vmatpush1.bf16.msra.mxu0 %v1933
    %2029 = vmatprep.subr.bf16.mxu0 0
    %2030 = vmatpush1.bf16.msra.mxu0 %v1934
    %2031 = vmatprep.subr.bf16.mxu0 0
    %2032 = vmatpush1.bf16.msra.mxu0 %v1935
    %2033 = vmatprep.subr.bf16.mxu0 0
    %2034 = vmatpush1.bf16.msra.mxu0 %v1936
    %2035 = vmatprep.subr.bf16.mxu0 0
    %2036 = vmatpush1.bf16.msra.mxu0 %v1937
    %2037 = vmatprep.subr.bf16.mxu0 0
    %2038 = vmatpush1.bf16.msra.mxu0 %v1938
    %2039 = vmatprep.subr.bf16.mxu0 0
    %2040 = vmatpush1.bf16.msra.mxu0 %v1939
    %2041 = vmatprep.subr.bf16.mxu0 0
    %2042 = vmatpush1.bf16.msra.mxu0 %v1940
    %2043 = vmatprep.subr.bf16.mxu0 0
    %2044 = vmatpush1.bf16.msra.mxu0 %v1941
    %2045 = vmatprep.subr.bf16.mxu0 0
    %2046 = vmatpush1.bf16.msra.mxu0 %v1942
    %2047 = vmatprep.subr.bf16.mxu0 0
    %2048 = vmatpush1.bf16.msra.mxu0 %v1943
    %2049 = vmatprep.mubr.bf16.mxu0 %v1719
    %2050 = vmatmul.mubr.bf16.gmra.mrb[0].mxu0 %v1718
    %v2051 = vpop.f32.mrb[0].mxu0
    %v2052 = vadd.f32 %v2011, %v2051
    %v2053 = vpop.f32.mrb[0].mxu0
    %v2054 = vpop.f32.mrb[0].mxu0
    %v2055 = vadd.f32 %v2014, %v2054
    %v2056 = vpop.f32.mrb[0].mxu0
    %2057 = vdwg.mxu0
    %v2122 = vunpack.c.l.b16 %v1487
    %v2123 = vunpack.c.l.b16 %v1488
    %v2124 = vunpack.c.l.b16 %v1489
    %v2125 = vunpack.c.l.b16 %v1490
    %v2126 = vunpack.c.l.b16 %v1491
    %v2127 = vunpack.c.l.b16 %v1492
    %v2128 = vunpack.c.l.b16 %v1493
    %v2129 = vunpack.c.l.b16 %v1494
    %v2130 = vunpack.c.l.b16 %v1495
    %v2131 = vunpack.c.l.b16 %v1496
    %v2132 = vunpack.c.l.b16 %v1497
    %v2133 = vunpack.c.l.b16 %v1498
    %v2134 = vunpack.c.l.b16 %v1499
    %v2135 = vunpack.c.l.b16 %v1500
    %v2136 = vunpack.c.l.b16 %v1501
    %v2137 = vunpack.c.l.b16 %v1502
    %v2138 = vunpack.c.l.b16 %v1503
    %v2139 = vunpack.c.l.b16 %v1504
    %v2140 = vunpack.c.l.b16 %v1505
    %v2141 = vunpack.c.l.b16 %v1506
    %v2142 = vunpack.c.l.b16 %v1507
    %v2143 = vunpack.c.l.b16 %v1508
    %v2144 = vunpack.c.l.b16 %v1509
    %v2145 = vunpack.c.l.b16 %v1510
    %v2146 = vunpack.c.l.b16 %v1511
    %v2147 = vunpack.c.l.b16 %v1512
    %v2148 = vunpack.c.l.b16 %v1513
    %v2149 = vunpack.c.l.b16 %v1514
    %v2150 = vunpack.c.l.b16 %v1515
    %v2151 = vunpack.c.l.b16 %v1516
    %v2152 = vunpack.c.l.b16 %v1517
    %v2153 = vunpack.c.l.b16 %v1518
    %v2154 = vunpack.c.l.b16 %v1519
    %v2155 = vunpack.c.l.b16 %v1520
    %v2156 = vunpack.c.l.b16 %v1521
    %v2157 = vunpack.c.l.b16 %v1522
    %v2158 = vunpack.c.l.b16 %v1523
    %v2159 = vunpack.c.l.b16 %v1524
    %v2160 = vunpack.c.l.b16 %v1525
    %v2161 = vunpack.c.l.b16 %v1526
    %v2162 = vunpack.c.l.b16 %v1527
    %v2163 = vunpack.c.l.b16 %v1528
    %v2164 = vunpack.c.l.b16 %v1529
    %v2165 = vunpack.c.l.b16 %v1530
    %v2166 = vunpack.c.l.b16 %v1531
    %v2167 = vunpack.c.l.b16 %v1532
    %v2168 = vunpack.c.l.b16 %v1533
    %v2169 = vunpack.c.l.b16 %v1534
    %v2170 = vunpack.c.l.b16 %v1535
    %v2171 = vunpack.c.l.b16 %v1536
    %v2172 = vunpack.c.l.b16 %v1537
    %v2173 = vunpack.c.l.b16 %v1538
    %v2174 = vunpack.c.l.b16 %v1539
    %v2175 = vunpack.c.l.b16 %v1540
    %v2176 = vunpack.c.l.b16 %v1541
    %v2177 = vunpack.c.l.b16 %v1542
    %v2178 = vunpack.c.l.b16 %v1543
    %v2179 = vunpack.c.l.b16 %v1544
    %v2180 = vunpack.c.l.b16 %v1545
    %v2181 = vunpack.c.l.b16 %v1546
    %v2182 = vunpack.c.l.b16 %v1547
    %v2183 = vunpack.c.l.b16 %v1548
    %v2184 = vunpack.c.l.b16 %v1549
    %v2185 = vunpack.c.l.b16 %v1550
    %v2186 = vpack.c.b16 %v2123, %v2122
    %v2187 = vpack.c.b16 %v2125, %v2124
    %v2188 = vpack.c.b16 %v2127, %v2126
    %v2189 = vpack.c.b16 %v2129, %v2128
    %v2190 = vpack.c.b16 %v2131, %v2130
    %v2191 = vpack.c.b16 %v2133, %v2132
    %v2192 = vpack.c.b16 %v2135, %v2134
    %v2193 = vpack.c.b16 %v2137, %v2136
    %v2194 = vpack.c.b16 %v2139, %v2138
    %v2195 = vpack.c.b16 %v2141, %v2140
    %v2196 = vpack.c.b16 %v2143, %v2142
    %v2197 = vpack.c.b16 %v2145, %v2144
    %v2198 = vpack.c.b16 %v2147, %v2146
    %v2199 = vpack.c.b16 %v2149, %v2148
    %v2200 = vpack.c.b16 %v2151, %v2150
    %v2201 = vpack.c.b16 %v2153, %v2152
    %v2202 = vpack.c.b16 %v2155, %v2154
    %v2203 = vpack.c.b16 %v2157, %v2156
    %v2204 = vpack.c.b16 %v2159, %v2158
    %v2205 = vpack.c.b16 %v2161, %v2160
    %v2206 = vpack.c.b16 %v2163, %v2162
    %v2207 = vpack.c.b16 %v2165, %v2164
    %v2208 = vpack.c.b16 %v2167, %v2166
    %v2209 = vpack.c.b16 %v2169, %v2168
    %v2210 = vpack.c.b16 %v2171, %v2170
    %v2211 = vpack.c.b16 %v2173, %v2172
    %v2212 = vpack.c.b16 %v2175, %v2174
    %v2213 = vpack.c.b16 %v2177, %v2176
    %v2214 = vpack.c.b16 %v2179, %v2178
    %v2215 = vpack.c.b16 %v2181, %v2180
    %v2216 = vpack.c.b16 %v2183, %v2182
    %v2217 = vpack.c.b16 %v2185, %v2184
    %2250 = vmatprep.subr.bf16.mxu0 0
    %2251 = vmatpush1.bf16.msra.mxu0 %v2186
    %2252 = vmatprep.subr.bf16.mxu0 0
    %2253 = vmatpush1.bf16.msra.mxu0 %v2187
    %2254 = vmatprep.subr.bf16.mxu0 0
    %2255 = vmatpush1.bf16.msra.mxu0 %v2188
    %2256 = vmatprep.subr.bf16.mxu0 0
    %2257 = vmatpush1.bf16.msra.mxu0 %v2189
    %2258 = vmatprep.subr.bf16.mxu0 0
    %2259 = vmatpush1.bf16.msra.mxu0 %v2190
    %2260 = vmatprep.subr.bf16.mxu0 0
    %2261 = vmatpush1.bf16.msra.mxu0 %v2191
    %2262 = vmatprep.subr.bf16.mxu0 0
    %2263 = vmatpush1.bf16.msra.mxu0 %v2192
    %2264 = vmatprep.subr.bf16.mxu0 0
    %2265 = vmatpush1.bf16.msra.mxu0 %v2193
    %2266 = vmatprep.subr.bf16.mxu0 0
    %2267 = vmatpush1.bf16.msra.mxu0 %v2194
    %2268 = vmatprep.subr.bf16.mxu0 0
    %2269 = vmatpush1.bf16.msra.mxu0 %v2195
    %2270 = vmatprep.subr.bf16.mxu0 0
    %2271 = vmatpush1.bf16.msra.mxu0 %v2196
    %2272 = vmatprep.subr.bf16.mxu0 0
    %2273 = vmatpush1.bf16.msra.mxu0 %v2197
    %2274 = vmatprep.subr.bf16.mxu0 0
    %2275 = vmatpush1.bf16.msra.mxu0 %v2198
    %2276 = vmatprep.subr.bf16.mxu0 0
    %2277 = vmatpush1.bf16.msra.mxu0 %v2199
    %2278 = vmatprep.subr.bf16.mxu0 0
    %2279 = vmatpush1.bf16.msra.mxu0 %v2200
    %2280 = vmatprep.subr.bf16.mxu0 0
    %2281 = vmatpush1.bf16.msra.mxu0 %v2201
    %2282 = vmatprep.mubr.bf16.mxu0 %v1484
    %2283 = vmatmul.mubr.bf16.gmra.mrb[0].mxu0 %v1483
    %v2284 = vpop.f32.mrb[0].mxu0
    %v2285 = vadd.f32 %v2052, %v2284
    %v2286 = vpop.f32.mrb[0].mxu0
    %v2287 = vpop.f32.mrb[0].mxu0
    %v2288 = vadd.f32 %v2055, %v2287
    %v2289 = vpop.f32.mrb[0].mxu0
    %2290 = vdwg.mxu0
    %2291 = vmatprep.subr.bf16.mxu0 0
    %2292 = vmatpush1.bf16.msra.mxu0 %v2202
    %2293 = vmatprep.subr.bf16.mxu0 0
    %2294 = vmatpush1.bf16.msra.mxu0 %v2203
    %2295 = vmatprep.subr.bf16.mxu0 0
    %2296 = vmatpush1.bf16.msra.mxu0 %v2204
    %2297 = vmatprep.subr.bf16.mxu0 0
    %2298 = vmatpush1.bf16.msra.mxu0 %v2205
    %2299 = vmatprep.subr.bf16.mxu0 0
    %2300 = vmatpush1.bf16.msra.mxu0 %v2206
    %2301 = vmatprep.subr.bf16.mxu0 0
    %2302 = vmatpush1.bf16.msra.mxu0 %v2207
    %2303 = vmatprep.subr.bf16.mxu0 0
    %2304 = vmatpush1.bf16.msra.mxu0 %v2208
    %2305 = vmatprep.subr.bf16.mxu0 0
    %2306 = vmatpush1.bf16.msra.mxu0 %v2209
    %2307 = vmatprep.subr.bf16.mxu0 0
    %2308 = vmatpush1.bf16.msra.mxu0 %v2210
    %2309 = vmatprep.subr.bf16.mxu0 0
    %2310 = vmatpush1.bf16.msra.mxu0 %v2211
    %2311 = vmatprep.subr.bf16.mxu0 0
    %2312 = vmatpush1.bf16.msra.mxu0 %v2212
    %2313 = vmatprep.subr.bf16.mxu0 0
    %2314 = vmatpush1.bf16.msra.mxu0 %v2213
    %2315 = vmatprep.subr.bf16.mxu0 0
    %2316 = vmatpush1.bf16.msra.mxu0 %v2214
    %2317 = vmatprep.subr.bf16.mxu0 0
    %2318 = vmatpush1.bf16.msra.mxu0 %v2215
    %2319 = vmatprep.subr.bf16.mxu0 0
    %2320 = vmatpush1.bf16.msra.mxu0 %v2216
    %2321 = vmatprep.subr.bf16.mxu0 0
    %2322 = vmatpush1.bf16.msra.mxu0 %v2217
    %2323 = vmatprep.mubr.bf16.mxu0 %v1486
    %2324 = vmatmul.mubr.bf16.gmra.mrb[0].mxu0 %v1485
    %v2325 = vpop.f32.mrb[0].mxu0
    %v2326 = vadd.f32 %v2285, %v2325
    %v2327 = vpop.f32.mrb[0].mxu0
    %v2328 = vpop.f32.mrb[0].mxu0
    %v2329 = vadd.f32 %v2288, %v2328
    %v2330 = vpop.f32.mrb[0].mxu0
    %2331 = vdwg.mxu0
    %v2332 = vld [vmem:[%s8 + $0x20] sm:$0xff]
    %v2333 = vld [vmem:[%s8 + $0x28] sm:$0xff]
    %v2334 = vld [vmem:[%s8 + $0x60] sm:$0xff]
    %v2335 = vld [vmem:[%s8 + $0x68] sm:$0xff]
    %v2336 = vld [vmem:[%s8 + $0xa0] sm:$0xff]
    %v2337 = vld [vmem:[%s8 + $0xa8] sm:$0xff]
    %v2338 = vld [vmem:[%s8 + $0xe0] sm:$0xff]
    %v2339 = vld [vmem:[%s8 + $0xe8] sm:$0xff]
    %s2340 = scalar_lea.vmem %s9, 16
    %v2341 = vld [vmem:[%s2340] ss:$2 sm:$0xf]
    %v2343 = vlaneseq
    %v2344 = vshrl.u32 %v2343, 7
    %v2345 = vsub.s32 0, %v2344
    %v2346 = vrot.slane %v2341, %v2345
    %v2347 = vlaneseq
    %v2348 = vshrl.u32 %v2347, 7
    %v2349 = vsub.s32 1, %v2348
    %v2350 = vrot.slane %v2341, %v2349
    %v2351 = vlaneseq
    %v2352 = vshrl.u32 %v2351, 7
    %v2353 = vsub.s32 2, %v2352
    %v2354 = vrot.slane %v2341, %v2353
    %v2355 = vlaneseq
    %v2356 = vshrl.u32 %v2355, 7
    %v2357 = vsub.s32 3, %v2356
    %v2358 = vrot.slane %v2341, %v2357
    %v2371 = vunpack.c.l.b16 %v2332
    %v2372 = vunpack.c.h.b16 %v2332
    %v2373 = vunpack.c.l.b16 %v2333
    %v2374 = vunpack.c.h.b16 %v2333
    %v2375 = vunpack.c.l.b16 %v2334
    %v2376 = vunpack.c.h.b16 %v2334
    %v2377 = vunpack.c.l.b16 %v2335
    %v2378 = vunpack.c.h.b16 %v2335
    %v2379 = vunpack.c.l.b16 %v2336
    %v2380 = vunpack.c.h.b16 %v2336
    %v2381 = vunpack.c.l.b16 %v2337
    %v2382 = vunpack.c.h.b16 %v2337
    %v2383 = vunpack.c.l.b16 %v2338
    %v2384 = vunpack.c.h.b16 %v2338
    %v2385 = vunpack.c.l.b16 %v2339
    %v2386 = vunpack.c.h.b16 %v2339
    %v2387 = vpack.c.b16 %v2375, %v2371
    %v2388 = vpack.c.b16 %v2376, %v2372
    %v2389 = vpack.c.b16 %v2377, %v2373
    %v2390 = vpack.c.b16 %v2378, %v2374
    %v2391 = vpack.c.b16 %v2383, %v2379
    %v2392 = vpack.c.b16 %v2384, %v2380
    %v2393 = vpack.c.b16 %v2385, %v2381
    %v2394 = vpack.c.b16 %v2386, %v2382
    %2403 = vmatprep.subr.bf16.mxu0 %v2388
    %2404 = vmatpush1.bf16.msra.mxu0 %v2387
    %2405 = vmatprep.subr.bf16.mxu0 %v2392
    %2406 = vmatpush1.bf16.msra.mxu0 %v2391
    %2407 = vmatprep.subr.bf16.mxu0 0
    %2408 = vmatpush1.bf16.msra.mxu0 0
    %2409 = vmatprep.subr.bf16.mxu0 0
    %2410 = vmatpush1.bf16.msra.mxu0 0
    %2411 = vmatprep.subr.bf16.mxu0 0
    %2412 = vmatpush1.bf16.msra.mxu0 0
    %2413 = vmatprep.subr.bf16.mxu0 0
    %2414 = vmatpush1.bf16.msra.mxu0 0
    %2415 = vmatprep.subr.bf16.mxu0 0
    %2416 = vmatpush1.bf16.msra.mxu0 0
    %2417 = vmatprep.subr.bf16.mxu0 0
    %2418 = vmatpush1.bf16.msra.mxu0 0
    %2419 = vmatprep.subr.bf16.mxu0 0
    %2420 = vmatpush1.bf16.msra.mxu0 0
    %2421 = vmatprep.subr.bf16.mxu0 0
    %2422 = vmatpush1.bf16.msra.mxu0 0
    %2423 = vmatprep.subr.bf16.mxu0 0
    %2424 = vmatpush1.bf16.msra.mxu0 0
    %2425 = vmatprep.subr.bf16.mxu0 0
    %2426 = vmatpush1.bf16.msra.mxu0 0
    %2427 = vmatprep.subr.bf16.mxu0 0
    %2428 = vmatpush1.bf16.msra.mxu0 0
    %2429 = vmatprep.subr.bf16.mxu0 0
    %2430 = vmatpush1.bf16.msra.mxu0 0
    %2431 = vmatprep.subr.bf16.mxu0 0
    %2432 = vmatpush1.bf16.msra.mxu0 0
    %2433 = vmatprep.subr.bf16.mxu0 0
    %2434 = vmatpush1.bf16.msra.mxu0 0
    %2435 = vmatprep.mubr.bf16.mxu0 0
    %2436 = vmatmul.mubr.bf16.gmra.mrb[0].mxu0 %v1387
    %v2437 = vpop.f32.mrb[0].mxu0
    %v2438 = vadd.f32 %v2346, %v2437
    %v2439 = vpop.f32.mrb[0].mxu0
    %v2440 = vadd.f32 %v2350, %v2439
    %v2441 = vpop.f32.mrb[0].mxu0
    %v2442 = vadd.f32 %v2346, %v2441
    %v2443 = vpop.f32.mrb[0].mxu0
    %v2444 = vadd.f32 %v2350, %v2443
    %2445 = vdwg.mxu0
    %2446 = vmatprep.subr.bf16.mxu0 %v2390
    %2447 = vmatpush1.bf16.msra.mxu0 %v2389
    %2448 = vmatprep.subr.bf16.mxu0 %v2394
    %2449 = vmatpush1.bf16.msra.mxu0 %v2393
    %2450 = vmatprep.subr.bf16.mxu0 0
    %2451 = vmatpush1.bf16.msra.mxu0 0
    %2452 = vmatprep.subr.bf16.mxu0 0
    %2453 = vmatpush1.bf16.msra.mxu0 0
    %2454 = vmatprep.subr.bf16.mxu0 0
    %2455 = vmatpush1.bf16.msra.mxu0 0
    %2456 = vmatprep.subr.bf16.mxu0 0
    %2457 = vmatpush1.bf16.msra.mxu0 0
    %2458 = vmatprep.subr.bf16.mxu0 0
    %2459 = vmatpush1.bf16.msra.mxu0 0
    %2460 = vmatprep.subr.bf16.mxu0 0
    %2461 = vmatpush1.bf16.msra.mxu0 0
    %2462 = vmatprep.subr.bf16.mxu0 0
    %2463 = vmatpush1.bf16.msra.mxu0 0
    %2464 = vmatprep.subr.bf16.mxu0 0
    %2465 = vmatpush1.bf16.msra.mxu0 0
    %2466 = vmatprep.subr.bf16.mxu0 0
    %2467 = vmatpush1.bf16.msra.mxu0 0
    %2468 = vmatprep.subr.bf16.mxu0 0
    %2469 = vmatpush1.bf16.msra.mxu0 0
    %2470 = vmatprep.subr.bf16.mxu0 0
    %2471 = vmatpush1.bf16.msra.mxu0 0
    %2472 = vmatprep.subr.bf16.mxu0 0
    %2473 = vmatpush1.bf16.msra.mxu0 0
    %2474 = vmatprep.subr.bf16.mxu0 0
    %2475 = vmatpush1.bf16.msra.mxu0 0
    %2476 = vmatprep.subr.bf16.mxu0 0
    %2477 = vmatpush1.bf16.msra.mxu0 0
    %2478 = vmatprep.mubr.bf16.mxu0 0
    %2479 = vmatmul.mubr.bf16.gmra.mrb[0].mxu0 %v1387
    %v2480 = vpop.f32.mrb[0].mxu0
    %v2481 = vadd.f32 %v2354, %v2480
    %v2482 = vpop.f32.mrb[0].mxu0
    %v2483 = vadd.f32 %v2358, %v2482
    %v2484 = vpop.f32.mrb[0].mxu0
    %v2485 = vadd.f32 %v2354, %v2484
    %v2486 = vpop.f32.mrb[0].mxu0
    %v2487 = vadd.f32 %v2358, %v2486
    %2488 = vdwg.mxu0
    %v2489 = vmax.f32 %v2438, 0.0
    %v2490 = vmax.f32 %v2440, 0.0
    %v2491 = vmax.f32 %v2481, 0.0
    %v2492 = vmax.f32 %v2483, 0.0
    %v2493 = vmax.f32 %v2442, 0.0
    %v2494 = vmax.f32 %v2444, 0.0
    %v2495 = vmax.f32 %v2485, 0.0
    %v2496 = vmax.f32 %v2487, 0.0
    %v2497 = vpack.c.bf16 %v2493, %v2489
    %v2498 = vpack.c.bf16 %v2494, %v2490
    %v2499 = vpack.c.bf16 %v2495, %v2491
    %v2500 = vpack.c.bf16 %v2496, %v2492
    %v2501 = vld [vmem:[#allocation2 + $0x200] sm:$0xf]
    %v2502 = vld [vmem:[#allocation2 + $0x204] sm:$0xf]
    %v2503 = vld [vmem:[#allocation2 + $0x208] sm:$0xf]
    %v2504 = vld [vmem:[#allocation2 + $0x20c] sm:$0xf]
    %v2505 = vld [vmem:[#allocation2 + $0x210] sm:$0xf]
    %v2506 = vld [vmem:[#allocation2 + $0x214] sm:$0xf]
    %v2507 = vld [vmem:[#allocation2 + $0x218] sm:$0xf]
    %v2508 = vld [vmem:[#allocation2 + $0x21c] sm:$0xf]
    %v2509 = vld [vmem:[#allocation2 + $0x220] sm:$0xf]
    %v2510 = vld [vmem:[#allocation2 + $0x224] sm:$0xf]
    %v2511 = vld [vmem:[#allocation2 + $0x228] sm:$0xf]
    %v2512 = vld [vmem:[#allocation2 + $0x22c] sm:$0xf]
    %v2513 = vld [vmem:[#allocation2 + $0x230] sm:$0xf]
    %v2514 = vld [vmem:[#allocation2 + $0x234] sm:$0xf]
    %v2515 = vld [vmem:[#allocation2 + $0x238] sm:$0xf]
    %v2516 = vld [vmem:[#allocation2 + $0x23c] sm:$0xf]
    %v2517 = vld [vmem:[#allocation2 + $0x240] sm:$0xf]
    %v2518 = vld [vmem:[#allocation2 + $0x244] sm:$0xf]
    %v2519 = vld [vmem:[#allocation2 + $0x248] sm:$0xf]
    %v2520 = vld [vmem:[#allocation2 + $0x24c] sm:$0xf]
    %v2521 = vld [vmem:[#allocation2 + $0x250] sm:$0xf]
    %v2522 = vld [vmem:[#allocation2 + $0x254] sm:$0xf]
    %v2523 = vld [vmem:[#allocation2 + $0x258] sm:$0xf]
    %v2524 = vld [vmem:[#allocation2 + $0x25c] sm:$0xf]
    %v2525 = vld [vmem:[#allocation2 + $0x260] sm:$0xf]
    %v2526 = vld [vmem:[#allocation2 + $0x264] sm:$0xf]
    %v2527 = vld [vmem:[#allocation2 + $0x268] sm:$0xf]
    %v2528 = vld [vmem:[#allocation2 + $0x26c] sm:$0xf]
    %v2529 = vld [vmem:[#allocation2 + $0x270] sm:$0xf]
    %v2530 = vld [vmem:[#allocation2 + $0x274] sm:$0xf]
    %v2531 = vld [vmem:[#allocation2 + $0x278] sm:$0xf]
    %v2532 = vld [vmem:[#allocation2 + $0x27c] sm:$0xf]
    %v2533 = vld [vmem:[#allocation2 + $0x280] sm:$0xf]
    %v2534 = vld [vmem:[#allocation2 + $0x284] sm:$0xf]
    %v2535 = vld [vmem:[#allocation2 + $0x288] sm:$0xf]
    %v2536 = vld [vmem:[#allocation2 + $0x28c] sm:$0xf]
    %v2537 = vld [vmem:[#allocation2 + $0x290] sm:$0xf]
    %v2538 = vld [vmem:[#allocation2 + $0x294] sm:$0xf]
    %v2539 = vld [vmem:[#allocation2 + $0x298] sm:$0xf]
    %v2540 = vld [vmem:[#allocation2 + $0x29c] sm:$0xf]
    %v2541 = vld [vmem:[#allocation2 + $0x2a0] sm:$0xf]
    %v2542 = vld [vmem:[#allocation2 + $0x2a4] sm:$0xf]
    %v2543 = vld [vmem:[#allocation2 + $0x2a8] sm:$0xf]
    %v2544 = vld [vmem:[#allocation2 + $0x2ac] sm:$0xf]
    %v2545 = vld [vmem:[#allocation2 + $0x2b0] sm:$0xf]
    %v2546 = vld [vmem:[#allocation2 + $0x2b4] sm:$0xf]
    %v2547 = vld [vmem:[#allocation2 + $0x2b8] sm:$0xf]
    %v2548 = vld [vmem:[#allocation2 + $0x2bc] sm:$0xf]
    %v2549 = vld [vmem:[#allocation2 + $0x2c0] sm:$0xf]
    %v2550 = vld [vmem:[#allocation2 + $0x2c4] sm:$0xf]
    %v2551 = vld [vmem:[#allocation2 + $0x2c8] sm:$0xf]
    %v2552 = vld [vmem:[#allocation2 + $0x2cc] sm:$0xf]
    %v2553 = vld [vmem:[#allocation2 + $0x2d0] sm:$0xf]
    %v2554 = vld [vmem:[#allocation2 + $0x2d4] sm:$0xf]
    %v2555 = vld [vmem:[#allocation2 + $0x2d8] sm:$0xf]
    %v2556 = vld [vmem:[#allocation2 + $0x2dc] sm:$0xf]
    %v2557 = vld [vmem:[#allocation2 + $0x2e0] sm:$0xf]
    %v2558 = vld [vmem:[#allocation2 + $0x2e4] sm:$0xf]
    %v2559 = vld [vmem:[#allocation2 + $0x2e8] sm:$0xf]
    %v2560 = vld [vmem:[#allocation2 + $0x2ec] sm:$0xf]
    %v2561 = vld [vmem:[#allocation2 + $0x2f0] sm:$0xf]
    %v2562 = vld [vmem:[#allocation2 + $0x2f4] sm:$0xf]
    %v2563 = vld [vmem:[#allocation2 + $0x2f8] sm:$0xf]
    %v2564 = vld [vmem:[#allocation2 + $0x2fc] sm:$0xf]
    %v2629 = vunpack.c.l.b16 %v2501
    %v2630 = vunpack.c.l.b16 %v2502
    %v2631 = vunpack.c.l.b16 %v2503
    %v2632 = vunpack.c.l.b16 %v2504
    %v2633 = vunpack.c.l.b16 %v2505
    %v2634 = vunpack.c.l.b16 %v2506
    %v2635 = vunpack.c.l.b16 %v2507
    %v2636 = vunpack.c.l.b16 %v2508
    %v2637 = vunpack.c.l.b16 %v2509
    %v2638 = vunpack.c.l.b16 %v2510
    %v2639 = vunpack.c.l.b16 %v2511
    %v2640 = vunpack.c.l.b16 %v2512
    %v2641 = vunpack.c.l.b16 %v2513
    %v2642 = vunpack.c.l.b16 %v2514
    %v2643 = vunpack.c.l.b16 %v2515
    %v2644 = vunpack.c.l.b16 %v2516
    %v2645 = vunpack.c.l.b16 %v2517
    %v2646 = vunpack.c.l.b16 %v2518
    %v2647 = vunpack.c.l.b16 %v2519
    %v2648 = vunpack.c.l.b16 %v2520
    %v2649 = vunpack.c.l.b16 %v2521
    %v2650 = vunpack.c.l.b16 %v2522
    %v2651 = vunpack.c.l.b16 %v2523
    %v2652 = vunpack.c.l.b16 %v2524
    %v2653 = vunpack.c.l.b16 %v2525
    %v2654 = vunpack.c.l.b16 %v2526
    %v2655 = vunpack.c.l.b16 %v2527
    %v2656 = vunpack.c.l.b16 %v2528
    %v2657 = vunpack.c.l.b16 %v2529
    %v2658 = vunpack.c.l.b16 %v2530
    %v2659 = vunpack.c.l.b16 %v2531
    %v2660 = vunpack.c.l.b16 %v2532
    %v2661 = vunpack.c.l.b16 %v2533
    %v2662 = vunpack.c.l.b16 %v2534
    %v2663 = vunpack.c.l.b16 %v2535
    %v2664 = vunpack.c.l.b16 %v2536
    %v2665 = vunpack.c.l.b16 %v2537
    %v2666 = vunpack.c.l.b16 %v2538
    %v2667 = vunpack.c.l.b16 %v2539
    %v2668 = vunpack.c.l.b16 %v2540
    %v2669 = vunpack.c.l.b16 %v2541
    %v2670 = vunpack.c.l.b16 %v2542
    %v2671 = vunpack.c.l.b16 %v2543
    %v2672 = vunpack.c.l.b16 %v2544
    %v2673 = vunpack.c.l.b16 %v2545
    %v2674 = vunpack.c.l.b16 %v2546
    %v2675 = vunpack.c.l.b16 %v2547
    %v2676 = vunpack.c.l.b16 %v2548
    %v2677 = vunpack.c.l.b16 %v2549
    %v2678 = vunpack.c.l.b16 %v2550
    %v2679 = vunpack.c.l.b16 %v2551
    %v2680 = vunpack.c.l.b16 %v2552
    %v2681 = vunpack.c.l.b16 %v2553
    %v2682 = vunpack.c.l.b16 %v2554
    %v2683 = vunpack.c.l.b16 %v2555
    %v2684 = vunpack.c.l.b16 %v2556
    %v2685 = vunpack.c.l.b16 %v2557
    %v2686 = vunpack.c.l.b16 %v2558
    %v2687 = vunpack.c.l.b16 %v2559
    %v2688 = vunpack.c.l.b16 %v2560
    %v2689 = vunpack.c.l.b16 %v2561
    %v2690 = vunpack.c.l.b16 %v2562
    %v2691 = vunpack.c.l.b16 %v2563
    %v2692 = vunpack.c.l.b16 %v2564
    %v2693 = vpack.c.b16 %v2630, %v2629
    %v2694 = vpack.c.b16 %v2632, %v2631
    %v2695 = vpack.c.b16 %v2634, %v2633
    %v2696 = vpack.c.b16 %v2636, %v2635
    %v2697 = vpack.c.b16 %v2638, %v2637
    %v2698 = vpack.c.b16 %v2640, %v2639
    %v2699 = vpack.c.b16 %v2642, %v2641
    %v2700 = vpack.c.b16 %v2644, %v2643
    %v2701 = vpack.c.b16 %v2646, %v2645
    %v2702 = vpack.c.b16 %v2648, %v2647
    %v2703 = vpack.c.b16 %v2650, %v2649
    %v2704 = vpack.c.b16 %v2652, %v2651
    %v2705 = vpack.c.b16 %v2654, %v2653
    %v2706 = vpack.c.b16 %v2656, %v2655
    %v2707 = vpack.c.b16 %v2658, %v2657
    %v2708 = vpack.c.b16 %v2660, %v2659
    %v2709 = vpack.c.b16 %v2662, %v2661
    %v2710 = vpack.c.b16 %v2664, %v2663
    %v2711 = vpack.c.b16 %v2666, %v2665
    %v2712 = vpack.c.b16 %v2668, %v2667
    %v2713 = vpack.c.b16 %v2670, %v2669
    %v2714 = vpack.c.b16 %v2672, %v2671
    %v2715 = vpack.c.b16 %v2674, %v2673
    %v2716 = vpack.c.b16 %v2676, %v2675
    %v2717 = vpack.c.b16 %v2678, %v2677
    %v2718 = vpack.c.b16 %v2680, %v2679
    %v2719 = vpack.c.b16 %v2682, %v2681
    %v2720 = vpack.c.b16 %v2684, %v2683
    %v2721 = vpack.c.b16 %v2686, %v2685
    %v2722 = vpack.c.b16 %v2688, %v2687
    %v2723 = vpack.c.b16 %v2690, %v2689
    %v2724 = vpack.c.b16 %v2692, %v2691
    %2757 = vmatprep.subr.bf16.mxu0 0
    %2758 = vmatpush1.bf16.msra.mxu0 %v2693
    %2759 = vmatprep.subr.bf16.mxu0 0
    %2760 = vmatpush1.bf16.msra.mxu0 %v2694
    %2761 = vmatprep.subr.bf16.mxu0 0
    %2762 = vmatpush1.bf16.msra.mxu0 %v2695
    %2763 = vmatprep.subr.bf16.mxu0 0
    %2764 = vmatpush1.bf16.msra.mxu0 %v2696
    %2765 = vmatprep.subr.bf16.mxu0 0
    %2766 = vmatpush1.bf16.msra.mxu0 %v2697
    %2767 = vmatprep.subr.bf16.mxu0 0
    %2768 = vmatpush1.bf16.msra.mxu0 %v2698
    %2769 = vmatprep.subr.bf16.mxu0 0
    %2770 = vmatpush1.bf16.msra.mxu0 %v2699
    %2771 = vmatprep.subr.bf16.mxu0 0
    %2772 = vmatpush1.bf16.msra.mxu0 %v2700
    %2773 = vmatprep.subr.bf16.mxu0 0
    %2774 = vmatpush1.bf16.msra.mxu0 %v2701
    %2775 = vmatprep.subr.bf16.mxu0 0
    %2776 = vmatpush1.bf16.msra.mxu0 %v2702
    %2777 = vmatprep.subr.bf16.mxu0 0
    %2778 = vmatpush1.bf16.msra.mxu0 %v2703
    %2779 = vmatprep.subr.bf16.mxu0 0
    %2780 = vmatpush1.bf16.msra.mxu0 %v2704
    %2781 = vmatprep.subr.bf16.mxu0 0
    %2782 = vmatpush1.bf16.msra.mxu0 %v2705
    %2783 = vmatprep.subr.bf16.mxu0 0
    %2784 = vmatpush1.bf16.msra.mxu0 %v2706
    %2785 = vmatprep.subr.bf16.mxu0 0
    %2786 = vmatpush1.bf16.msra.mxu0 %v2707
    %2787 = vmatprep.subr.bf16.mxu0 0
    %2788 = vmatpush1.bf16.msra.mxu0 %v2708
    %2789 = vmatprep.mubr.bf16.mxu0 %v2498
    %2790 = vmatmul.mubr.bf16.gmra.mrb[0].mxu0 %v2497
    %v2791 = vpop.f32.mrb[0].mxu0
    %v2792 = vadd.f32 0.0, %v2791
    %v2793 = vpop.f32.mrb[0].mxu0
    %v2794 = vpop.f32.mrb[0].mxu0
    %v2795 = vadd.f32 0.0, %v2794
    %v2796 = vpop.f32.mrb[0].mxu0
    %2797 = vdwg.mxu0
    %2798 = vmatprep.subr.bf16.mxu0 0
    %2799 = vmatpush1.bf16.msra.mxu0 %v2709
    %2800 = vmatprep.subr.bf16.mxu0 0
    %2801 = vmatpush1.bf16.msra.mxu0 %v2710
    %2802 = vmatprep.subr.bf16.mxu0 0
    %2803 = vmatpush1.bf16.msra.mxu0 %v2711
    %2804 = vmatprep.subr.bf16.mxu0 0
    %2805 = vmatpush1.bf16.msra.mxu0 %v2712
    %2806 = vmatprep.subr.bf16.mxu0 0
    %2807 = vmatpush1.bf16.msra.mxu0 %v2713
    %2808 = vmatprep.subr.bf16.mxu0 0
    %2809 = vmatpush1.bf16.msra.mxu0 %v2714
    %2810 = vmatprep.subr.bf16.mxu0 0
    %2811 = vmatpush1.bf16.msra.mxu0 %v2715
    %2812 = vmatprep.subr.bf16.mxu0 0
    %2813 = vmatpush1.bf16.msra.mxu0 %v2716
    %2814 = vmatprep.subr.bf16.mxu0 0
    %2815 = vmatpush1.bf16.msra.mxu0 %v2717
    %2816 = vmatprep.subr.bf16.mxu0 0
    %2817 = vmatpush1.bf16.msra.mxu0 %v2718
    %2818 = vmatprep.subr.bf16.mxu0 0
    %2819 = vmatpush1.bf16.msra.mxu0 %v2719
    %2820 = vmatprep.subr.bf16.mxu0 0
    %2821 = vmatpush1.bf16.msra.mxu0 %v2720
    %2822 = vmatprep.subr.bf16.mxu0 0
    %2823 = vmatpush1.bf16.msra.mxu0 %v2721
    %2824 = vmatprep.subr.bf16.mxu0 0
    %2825 = vmatpush1.bf16.msra.mxu0 %v2722
    %2826 = vmatprep.subr.bf16.mxu0 0
    %2827 = vmatpush1.bf16.msra.mxu0 %v2723
    %2828 = vmatprep.subr.bf16.mxu0 0
    %2829 = vmatpush1.bf16.msra.mxu0 %v2724
    %2830 = vmatprep.mubr.bf16.mxu0 %v2500
    %2831 = vmatmul.mubr.bf16.gmra.mrb[0].mxu0 %v2499
    %v2832 = vpop.f32.mrb[0].mxu0
    %v2833 = vadd.f32 %v2792, %v2832
    %v2834 = vpop.f32.mrb[0].mxu0
    %v2835 = vpop.f32.mrb[0].mxu0
    %v2836 = vadd.f32 %v2795, %v2835
    %v2837 = vpop.f32.mrb[0].mxu0
    %2838 = vdwg.mxu0
    %v2839 = vadd.f32 %v2326, %v2833
    %v2840 = vadd.f32 %v2329, %v2836
    %v2841 = vld [vmem:[%s8 + $0x30] sm:$0xff]
    %v2842 = vld [vmem:[%s8 + $0x38] sm:$0xff]
    %v2843 = vld [vmem:[%s8 + $0x70] sm:$0xff]
    %v2844 = vld [vmem:[%s8 + $0x78] sm:$0xff]
    %v2845 = vld [vmem:[%s8 + $0xb0] sm:$0xff]
    %v2846 = vld [vmem:[%s8 + $0xb8] sm:$0xff]
    %v2847 = vld [vmem:[%s8 + $0xf0] sm:$0xff]
    %v2848 = vld [vmem:[%s8 + $0xf8] sm:$0xff]
    %s2849 = scalar_lea.vmem %s9, 24
    %v2850 = vld [vmem:[%s2849] ss:$2 sm:$0xf]
    %v2852 = vlaneseq
    %v2853 = vshrl.u32 %v2852, 7
    %v2854 = vsub.s32 0, %v2853
    %v2855 = vrot.slane %v2850, %v2854
    %v2856 = vlaneseq
    %v2857 = vshrl.u32 %v2856, 7
    %v2858 = vsub.s32 1, %v2857
    %v2859 = vrot.slane %v2850, %v2858
    %v2860 = vlaneseq
    %v2861 = vshrl.u32 %v2860, 7
    %v2862 = vsub.s32 2, %v2861
    %v2863 = vrot.slane %v2850, %v2862
    %v2864 = vlaneseq
    %v2865 = vshrl.u32 %v2864, 7
    %v2866 = vsub.s32 3, %v2865
    %v2867 = vrot.slane %v2850, %v2866
    %v2880 = vunpack.c.l.b16 %v2841
    %v2881 = vunpack.c.h.b16 %v2841
    %v2882 = vunpack.c.l.b16 %v2842
    %v2883 = vunpack.c.h.b16 %v2842
    %v2884 = vunpack.c.l.b16 %v2843
    %v2885 = vunpack.c.h.b16 %v2843
    %v2886 = vunpack.c.l.b16 %v2844
    %v2887 = vunpack.c.h.b16 %v2844
    %v2888 = vunpack.c.l.b16 %v2845
    %v2889 = vunpack.c.h.b16 %v2845
    %v2890 = vunpack.c.l.b16 %v2846
    %v2891 = vunpack.c.h.b16 %v2846
    %v2892 = vunpack.c.l.b16 %v2847
    %v2893 = vunpack.c.h.b16 %v2847
    %v2894 = vunpack.c.l.b16 %v2848
    %v2895 = vunpack.c.h.b16 %v2848
    %v2896 = vpack.c.b16 %v2884, %v2880
    %v2897 = vpack.c.b16 %v2885, %v2881
    %v2898 = vpack.c.b16 %v2886, %v2882
    %v2899 = vpack.c.b16 %v2887, %v2883
    %v2900 = vpack.c.b16 %v2892, %v2888
    %v2901 = vpack.c.b16 %v2893, %v2889
    %v2902 = vpack.c.b16 %v2894, %v2890
    %v2903 = vpack.c.b16 %v2895, %v2891
    %2912 = vmatprep.subr.bf16.mxu0 %v2897
    %2913 = vmatpush1.bf16.msra.mxu0 %v2896
    %2914 = vmatprep.subr.bf16.mxu0 %v2901
    %2915 = vmatpush1.bf16.msra.mxu0 %v2900
    %2916 = vmatprep.subr.bf16.mxu0 0
    %2917 = vmatpush1.bf16.msra.mxu0 0
    %2918 = vmatprep.subr.bf16.mxu0 0
    %2919 = vmatpush1.bf16.msra.mxu0 0
    %2920 = vmatprep.subr.bf16.mxu0 0
    %2921 = vmatpush1.bf16.msra.mxu0 0
    %2922 = vmatprep.subr.bf16.mxu0 0
    %2923 = vmatpush1.bf16.msra.mxu0 0
    %2924 = vmatprep.subr.bf16.mxu0 0
    %2925 = vmatpush1.bf16.msra.mxu0 0
    %2926 = vmatprep.subr.bf16.mxu0 0
    %2927 = vmatpush1.bf16.msra.mxu0 0
    %2928 = vmatprep.subr.bf16.mxu0 0
    %2929 = vmatpush1.bf16.msra.mxu0 0
    %2930 = vmatprep.subr.bf16.mxu0 0
    %2931 = vmatpush1.bf16.msra.mxu0 0
    %2932 = vmatprep.subr.bf16.mxu0 0
    %2933 = vmatpush1.bf16.msra.mxu0 0
    %2934 = vmatprep.subr.bf16.mxu0 0
    %2935 = vmatpush1.bf16.msra.mxu0 0
    %2936 = vmatprep.subr.bf16.mxu0 0
    %2937 = vmatpush1.bf16.msra.mxu0 0
    %2938 = vmatprep.subr.bf16.mxu0 0
    %2939 = vmatpush1.bf16.msra.mxu0 0
    %2940 = vmatprep.subr.bf16.mxu0 0
    %2941 = vmatpush1.bf16.msra.mxu0 0
    %2942 = vmatprep.subr.bf16.mxu0 0
    %2943 = vmatpush1.bf16.msra.mxu0 0
    %2944 = vmatprep.mubr.bf16.mxu0 0
    %2945 = vmatmul.mubr.bf16.gmra.mrb[0].mxu0 %v1387
    %v2946 = vpop.f32.mrb[0].mxu0
    %v2947 = vadd.f32 %v2855, %v2946
    %v2948 = vpop.f32.mrb[0].mxu0
    %v2949 = vadd.f32 %v2859, %v2948
    %v2950 = vpop.f32.mrb[0].mxu0
    %v2951 = vadd.f32 %v2855, %v2950
    %v2952 = vpop.f32.mrb[0].mxu0
    %v2953 = vadd.f32 %v2859, %v2952
    %2954 = vdwg.mxu0
    %2955 = vmatprep.subr.bf16.mxu0 %v2899
    %2956 = vmatpush1.bf16.msra.mxu0 %v2898
    %2957 = vmatprep.subr.bf16.mxu0 %v2903
    %2958 = vmatpush1.bf16.msra.mxu0 %v2902
    %2959 = vmatprep.subr.bf16.mxu0 0
    %2960 = vmatpush1.bf16.msra.mxu0 0
    %2961 = vmatprep.subr.bf16.mxu0 0
    %2962 = vmatpush1.bf16.msra.mxu0 0
    %2963 = vmatprep.subr.bf16.mxu0 0
    %2964 = vmatpush1.bf16.msra.mxu0 0
    %2965 = vmatprep.subr.bf16.mxu0 0
    %2966 = vmatpush1.bf16.msra.mxu0 0
    %2967 = vmatprep.subr.bf16.mxu0 0
    %2968 = vmatpush1.bf16.msra.mxu0 0
    %2969 = vmatprep.subr.bf16.mxu0 0
    %2970 = vmatpush1.bf16.msra.mxu0 0
    %2971 = vmatprep.subr.bf16.mxu0 0
    %2972 = vmatpush1.bf16.msra.mxu0 0
    %2973 = vmatprep.subr.bf16.mxu0 0
    %2974 = vmatpush1.bf16.msra.mxu0 0
    %2975 = vmatprep.subr.bf16.mxu0 0
    %2976 = vmatpush1.bf16.msra.mxu0 0
    %2977 = vmatprep.subr.bf16.mxu0 0
    %2978 = vmatpush1.bf16.msra.mxu0 0
    %2979 = vmatprep.subr.bf16.mxu0 0
    %2980 = vmatpush1.bf16.msra.mxu0 0
    %2981 = vmatprep.subr.bf16.mxu0 0
    %2982 = vmatpush1.bf16.msra.mxu0 0
    %2983 = vmatprep.subr.bf16.mxu0 0
    %2984 = vmatpush1.bf16.msra.mxu0 0
    %2985 = vmatprep.subr.bf16.mxu0 0
    %2986 = vmatpush1.bf16.msra.mxu0 0
    %2987 = vmatprep.mubr.bf16.mxu0 0
    %2988 = vmatmul.mubr.bf16.gmra.mrb[0].mxu0 %v1387
    %v2989 = vpop.f32.mrb[0].mxu0
    %v2990 = vadd.f32 %v2863, %v2989
    %v2991 = vpop.f32.mrb[0].mxu0
    %v2992 = vadd.f32 %v2867, %v2991
    %v2993 = vpop.f32.mrb[0].mxu0
    %v2994 = vadd.f32 %v2863, %v2993
    %v2995 = vpop.f32.mrb[0].mxu0
    %v2996 = vadd.f32 %v2867, %v2995
    %2997 = vdwg.mxu0
    %v2998 = vmax.f32 %v2947, 0.0
    %v2999 = vmax.f32 %v2949, 0.0
    %v3000 = vmax.f32 %v2990, 0.0
    %v3001 = vmax.f32 %v2992, 0.0
    %v3002 = vmax.f32 %v2951, 0.0
    %v3003 = vmax.f32 %v2953, 0.0
    %v3004 = vmax.f32 %v2994, 0.0
    %v3005 = vmax.f32 %v2996, 0.0
    %v3006 = vpack.c.bf16 %v3002, %v2998
    %v3007 = vpack.c.bf16 %v3003, %v2999
    %v3008 = vpack.c.bf16 %v3004, %v3000
    %v3009 = vpack.c.bf16 %v3005, %v3001
    %v3010 = vld [vmem:[#allocation2 + $0x300] sm:$0xf]
    %v3011 = vld [vmem:[#allocation2 + $0x304] sm:$0xf]
    %v3012 = vld [vmem:[#allocation2 + $0x308] sm:$0xf]
    %v3013 = vld [vmem:[#allocation2 + $0x30c] sm:$0xf]
    %v3014 = vld [vmem:[#allocation2 + $0x310] sm:$0xf]
    %v3015 = vld [vmem:[#allocation2 + $0x314] sm:$0xf]
    %v3016 = vld [vmem:[#allocation2 + $0x318] sm:$0xf]
    %v3017 = vld [vmem:[#allocation2 + $0x31c] sm:$0xf]
    %v3018 = vld [vmem:[#allocation2 + $0x320] sm:$0xf]
    %v3019 = vld [vmem:[#allocation2 + $0x324] sm:$0xf]
    %v3020 = vld [vmem:[#allocation2 + $0x328] sm:$0xf]
    %v3021 = vld [vmem:[#allocation2 + $0x32c] sm:$0xf]
    %v3022 = vld [vmem:[#allocation2 + $0x330] sm:$0xf]
    %v3023 = vld [vmem:[#allocation2 + $0x334] sm:$0xf]
    %v3024 = vld [vmem:[#allocation2 + $0x338] sm:$0xf]
    %v3025 = vld [vmem:[#allocation2 + $0x33c] sm:$0xf]
    %v3026 = vld [vmem:[#allocation2 + $0x340] sm:$0xf]
    %v3027 = vld [vmem:[#allocation2 + $0x344] sm:$0xf]
    %v3028 = vld [vmem:[#allocation2 + $0x348] sm:$0xf]
    %v3029 = vld [vmem:[#allocation2 + $0x34c] sm:$0xf]
    %v3030 = vld [vmem:[#allocation2 + $0x350] sm:$0xf]
    %v3031 = vld [vmem:[#allocation2 + $0x354] sm:$0xf]
    %v3032 = vld [vmem:[#allocation2 + $0x358] sm:$0xf]
    %v3033 = vld [vmem:[#allocation2 + $0x35c] sm:$0xf]
    %v3034 = vld [vmem:[#allocation2 + $0x360] sm:$0xf]
    %v3035 = vld [vmem:[#allocation2 + $0x364] sm:$0xf]
    %v3036 = vld [vmem:[#allocation2 + $0x368] sm:$0xf]
    %v3037 = vld [vmem:[#allocation2 + $0x36c] sm:$0xf]
    %v3038 = vld [vmem:[#allocation2 + $0x370] sm:$0xf]
    %v3039 = vld [vmem:[#allocation2 + $0x374] sm:$0xf]
    %v3040 = vld [vmem:[#allocation2 + $0x378] sm:$0xf]
    %v3041 = vld [vmem:[#allocation2 + $0x37c] sm:$0xf]
    %v3042 = vld [vmem:[#allocation2 + $0x380] sm:$0xf]
    %v3043 = vld [vmem:[#allocation2 + $0x384] sm:$0xf]
    %v3044 = vld [vmem:[#allocation2 + $0x388] sm:$0xf]
    %v3045 = vld [vmem:[#allocation2 + $0x38c] sm:$0xf]
    %v3046 = vld [vmem:[#allocation2 + $0x390] sm:$0xf]
    %v3047 = vld [vmem:[#allocation2 + $0x394] sm:$0xf]
    %v3048 = vld [vmem:[#allocation2 + $0x398] sm:$0xf]
    %v3049 = vld [vmem:[#allocation2 + $0x39c] sm:$0xf]
    %v3050 = vld [vmem:[#allocation2 + $0x3a0] sm:$0xf]
    %v3051 = vld [vmem:[#allocation2 + $0x3a4] sm:$0xf]
    %v3052 = vld [vmem:[#allocation2 + $0x3a8] sm:$0xf]
    %v3053 = vld [vmem:[#allocation2 + $0x3ac] sm:$0xf]
    %v3054 = vld [vmem:[#allocation2 + $0x3b0] sm:$0xf]
    %v3055 = vld [vmem:[#allocation2 + $0x3b4] sm:$0xf]
    %v3056 = vld [vmem:[#allocation2 + $0x3b8] sm:$0xf]
    %v3057 = vld [vmem:[#allocation2 + $0x3bc] sm:$0xf]
    %v3058 = vld [vmem:[#allocation2 + $0x3c0] sm:$0xf]
    %v3059 = vld [vmem:[#allocation2 + $0x3c4] sm:$0xf]
    %v3060 = vld [vmem:[#allocation2 + $0x3c8] sm:$0xf]
    %v3061 = vld [vmem:[#allocation2 + $0x3cc] sm:$0xf]
    %v3062 = vld [vmem:[#allocation2 + $0x3d0] sm:$0xf]
    %v3063 = vld [vmem:[#allocation2 + $0x3d4] sm:$0xf]
    %v3064 = vld [vmem:[#allocation2 + $0x3d8] sm:$0xf]
    %v3065 = vld [vmem:[#allocation2 + $0x3dc] sm:$0xf]
    %v3066 = vld [vmem:[#allocation2 + $0x3e0] sm:$0xf]
    %v3067 = vld [vmem:[#allocation2 + $0x3e4] sm:$0xf]
    %v3068 = vld [vmem:[#allocation2 + $0x3e8] sm:$0xf]
    %v3069 = vld [vmem:[#allocation2 + $0x3ec] sm:$0xf]
    %v3070 = vld [vmem:[#allocation2 + $0x3f0] sm:$0xf]
    %v3071 = vld [vmem:[#allocation2 + $0x3f4] sm:$0xf]
    %v3072 = vld [vmem:[#allocation2 + $0x3f8] sm:$0xf]
    %v3073 = vld [vmem:[#allocation2 + $0x3fc] sm:$0xf]
    %v3138 = vunpack.c.l.b16 %v3010
    %v3139 = vunpack.c.l.b16 %v3011
    %v3140 = vunpack.c.l.b16 %v3012
    %v3141 = vunpack.c.l.b16 %v3013
    %v3142 = vunpack.c.l.b16 %v3014
    %v3143 = vunpack.c.l.b16 %v3015
    %v3144 = vunpack.c.l.b16 %v3016
    %v3145 = vunpack.c.l.b16 %v3017
    %v3146 = vunpack.c.l.b16 %v3018
    %v3147 = vunpack.c.l.b16 %v3019
    %v3148 = vunpack.c.l.b16 %v3020
    %v3149 = vunpack.c.l.b16 %v3021
    %v3150 = vunpack.c.l.b16 %v3022
    %v3151 = vunpack.c.l.b16 %v3023
    %v3152 = vunpack.c.l.b16 %v3024
    %v3153 = vunpack.c.l.b16 %v3025
    %v3154 = vunpack.c.l.b16 %v3026
    %v3155 = vunpack.c.l.b16 %v3027
    %v3156 = vunpack.c.l.b16 %v3028
    %v3157 = vunpack.c.l.b16 %v3029
    %v3158 = vunpack.c.l.b16 %v3030
    %v3159 = vunpack.c.l.b16 %v3031
    %v3160 = vunpack.c.l.b16 %v3032
    %v3161 = vunpack.c.l.b16 %v3033
    %v3162 = vunpack.c.l.b16 %v3034
    %v3163 = vunpack.c.l.b16 %v3035
    %v3164 = vunpack.c.l.b16 %v3036
    %v3165 = vunpack.c.l.b16 %v3037
    %v3166 = vunpack.c.l.b16 %v3038
    %v3167 = vunpack.c.l.b16 %v3039
    %v3168 = vunpack.c.l.b16 %v3040
    %v3169 = vunpack.c.l.b16 %v3041
    %v3170 = vunpack.c.l.b16 %v3042
    %v3171 = vunpack.c.l.b16 %v3043
    %v3172 = vunpack.c.l.b16 %v3044
    %v3173 = vunpack.c.l.b16 %v3045
    %v3174 = vunpack.c.l.b16 %v3046
    %v3175 = vunpack.c.l.b16 %v3047
    %v3176 = vunpack.c.l.b16 %v3048
    %v3177 = vunpack.c.l.b16 %v3049
    %v3178 = vunpack.c.l.b16 %v3050
    %v3179 = vunpack.c.l.b16 %v3051
    %v3180 = vunpack.c.l.b16 %v3052
    %v3181 = vunpack.c.l.b16 %v3053
    %v3182 = vunpack.c.l.b16 %v3054
    %v3183 = vunpack.c.l.b16 %v3055
    %v3184 = vunpack.c.l.b16 %v3056
    %v3185 = vunpack.c.l.b16 %v3057
    %v3186 = vunpack.c.l.b16 %v3058
    %v3187 = vunpack.c.l.b16 %v3059
    %v3188 = vunpack.c.l.b16 %v3060
    %v3189 = vunpack.c.l.b16 %v3061
    %v3190 = vunpack.c.l.b16 %v3062
    %v3191 = vunpack.c.l.b16 %v3063
    %v3192 = vunpack.c.l.b16 %v3064
    %v3193 = vunpack.c.l.b16 %v3065
    %v3194 = vunpack.c.l.b16 %v3066
    %v3195 = vunpack.c.l.b16 %v3067
    %v3196 = vunpack.c.l.b16 %v3068
    %v3197 = vunpack.c.l.b16 %v3069
    %v3198 = vunpack.c.l.b16 %v3070
    %v3199 = vunpack.c.l.b16 %v3071
    %v3200 = vunpack.c.l.b16 %v3072
    %v3201 = vunpack.c.l.b16 %v3073
    %v3202 = vpack.c.b16 %v3139, %v3138
    %v3203 = vpack.c.b16 %v3141, %v3140
    %v3204 = vpack.c.b16 %v3143, %v3142
    %v3205 = vpack.c.b16 %v3145, %v3144
    %v3206 = vpack.c.b16 %v3147, %v3146
    %v3207 = vpack.c.b16 %v3149, %v3148
    %v3208 = vpack.c.b16 %v3151, %v3150
    %v3209 = vpack.c.b16 %v3153, %v3152
    %v3210 = vpack.c.b16 %v3155, %v3154
    %v3211 = vpack.c.b16 %v3157, %v3156
    %v3212 = vpack.c.b16 %v3159, %v3158
    %v3213 = vpack.c.b16 %v3161, %v3160
    %v3214 = vpack.c.b16 %v3163, %v3162
    %v3215 = vpack.c.b16 %v3165, %v3164
    %v3216 = vpack.c.b16 %v3167, %v3166
    %v3217 = vpack.c.b16 %v3169, %v3168
    %v3218 = vpack.c.b16 %v3171, %v3170
    %v3219 = vpack.c.b16 %v3173, %v3172
    %v3220 = vpack.c.b16 %v3175, %v3174
    %v3221 = vpack.c.b16 %v3177, %v3176
    %v3222 = vpack.c.b16 %v3179, %v3178
    %v3223 = vpack.c.b16 %v3181, %v3180
    %v3224 = vpack.c.b16 %v3183, %v3182
    %v3225 = vpack.c.b16 %v3185, %v3184
    %v3226 = vpack.c.b16 %v3187, %v3186
    %v3227 = vpack.c.b16 %v3189, %v3188
    %v3228 = vpack.c.b16 %v3191, %v3190
    %v3229 = vpack.c.b16 %v3193, %v3192
    %v3230 = vpack.c.b16 %v3195, %v3194
    %v3231 = vpack.c.b16 %v3197, %v3196
    %v3232 = vpack.c.b16 %v3199, %v3198
    %v3233 = vpack.c.b16 %v3201, %v3200
    %3266 = vmatprep.subr.bf16.mxu0 0
    %3267 = vmatpush1.bf16.msra.mxu0 %v3202
    %3268 = vmatprep.subr.bf16.mxu0 0
    %3269 = vmatpush1.bf16.msra.mxu0 %v3203
    %3270 = vmatprep.subr.bf16.mxu0 0
    %3271 = vmatpush1.bf16.msra.mxu0 %v3204
    %3272 = vmatprep.subr.bf16.mxu0 0
    %3273 = vmatpush1.bf16.msra.mxu0 %v3205
    %3274 = vmatprep.subr.bf16.mxu0 0
    %3275 = vmatpush1.bf16.msra.mxu0 %v3206
    %3276 = vmatprep.subr.bf16.mxu0 0
    %3277 = vmatpush1.bf16.msra.mxu0 %v3207
    %3278 = vmatprep.subr.bf16.mxu0 0
    %3279 = vmatpush1.bf16.msra.mxu0 %v3208
    %3280 = vmatprep.subr.bf16.mxu0 0
    %3281 = vmatpush1.bf16.msra.mxu0 %v3209
    %3282 = vmatprep.subr.bf16.mxu0 0
    %3283 = vmatpush1.bf16.msra.mxu0 %v3210
    %3284 = vmatprep.subr.bf16.mxu0 0
    %3285 = vmatpush1.bf16.msra.mxu0 %v3211
    %3286 = vmatprep.subr.bf16.mxu0 0
    %3287 = vmatpush1.bf16.msra.mxu0 %v3212
    %3288 = vmatprep.subr.bf16.mxu0 0
    %3289 = vmatpush1.bf16.msra.mxu0 %v3213
    %3290 = vmatprep.subr.bf16.mxu0 0
    %3291 = vmatpush1.bf16.msra.mxu0 %v3214
    %3292 = vmatprep.subr.bf16.mxu0 0
    %3293 = vmatpush1.bf16.msra.mxu0 %v3215
    %3294 = vmatprep.subr.bf16.mxu0 0
    %3295 = vmatpush1.bf16.msra.mxu0 %v3216
    %3296 = vmatprep.subr.bf16.mxu0 0
    %3297 = vmatpush1.bf16.msra.mxu0 %v3217
    %3298 = vmatprep.mubr.bf16.mxu0 %v3007
    %3299 = vmatmul.mubr.bf16.gmra.mrb[0].mxu0 %v3006
    %v3300 = vpop.f32.mrb[0].mxu0
    %v3301 = vadd.f32 0.0, %v3300
    %v3302 = vpop.f32.mrb[0].mxu0
    %v3303 = vpop.f32.mrb[0].mxu0
    %v3304 = vadd.f32 0.0, %v3303
    %v3305 = vpop.f32.mrb[0].mxu0
    %3306 = vdwg.mxu0
    %3307 = vmatprep.subr.bf16.mxu0 0
    %3308 = vmatpush1.bf16.msra.mxu0 %v3218
    %3309 = vmatprep.subr.bf16.mxu0 0
    %3310 = vmatpush1.bf16.msra.mxu0 %v3219
    %3311 = vmatprep.subr.bf16.mxu0 0
    %3312 = vmatpush1.bf16.msra.mxu0 %v3220
    %3313 = vmatprep.subr.bf16.mxu0 0
    %3314 = vmatpush1.bf16.msra.mxu0 %v3221
    %3315 = vmatprep.subr.bf16.mxu0 0
    %3316 = vmatpush1.bf16.msra.mxu0 %v3222
    %3317 = vmatprep.subr.bf16.mxu0 0
    %3318 = vmatpush1.bf16.msra.mxu0 %v3223
    %3319 = vmatprep.subr.bf16.mxu0 0
    %3320 = vmatpush1.bf16.msra.mxu0 %v3224
    %3321 = vmatprep.subr.bf16.mxu0 0
    %3322 = vmatpush1.bf16.msra.mxu0 %v3225
    %3323 = vmatprep.subr.bf16.mxu0 0
    %3324 = vmatpush1.bf16.msra.mxu0 %v3226
    %3325 = vmatprep.subr.bf16.mxu0 0
    %3326 = vmatpush1.bf16.msra.mxu0 %v3227
    %3327 = vmatprep.subr.bf16.mxu0 0
    %3328 = vmatpush1.bf16.msra.mxu0 %v3228
    %3329 = vmatprep.subr.bf16.mxu0 0
    %3330 = vmatpush1.bf16.msra.mxu0 %v3229
    %3331 = vmatprep.subr.bf16.mxu0 0
    %3332 = vmatpush1.bf16.msra.mxu0 %v3230
    %3333 = vmatprep.subr.bf16.mxu0 0
    %3334 = vmatpush1.bf16.msra.mxu0 %v3231
    %3335 = vmatprep.subr.bf16.mxu0 0
    %3336 = vmatpush1.bf16.msra.mxu0 %v3232
    %3337 = vmatprep.subr.bf16.mxu0 0
    %3338 = vmatpush1.bf16.msra.mxu0 %v3233
    %3339 = vmatprep.mubr.bf16.mxu0 %v3009
    %3340 = vmatmul.mubr.bf16.gmra.mrb[0].mxu0 %v3008
    %v3341 = vpop.f32.mrb[0].mxu0
    %v3342 = vadd.f32 %v3301, %v3341
    %v3343 = vpop.f32.mrb[0].mxu0
    %v3344 = vpop.f32.mrb[0].mxu0
    %v3345 = vadd.f32 %v3304, %v3344
    %v3346 = vpop.f32.mrb[0].mxu0
    %3347 = vdwg.mxu0
    %v3348 = vadd.f32 %v2839, %v3342
    %v3349 = vadd.f32 %v2840, %v3345
    %v3350 = vadd.f32 %v1261, %v3348
    %v3351 = vadd.f32 %v1262, %v3349
    %v3352 = vld [vmem:[%s11] sm:$0x1]
    %v3353 = vlaneseq
    %v3354 = vshrl.u32 %v3353, 7
    %v3355 = vsub.s32 0, %v3354
    %v3356 = vrot.slane %v3352, %v3355
    %v3357 = vadd.f32 %v3350, %v3356
    %v3358 = vadd.f32 %v3351, %v3356
    %s3359 = scalar_lea.vmem %s2, 2
    %v3360 = vld [vmem:[%s3359] sm:$0x3]
    %s3361 = scalar_lea.vmem %s3, 2
    %v3362 = vld [vmem:[%s3361] sm:$0x3]
    %v3363 = vsel %vm123, %v3357, 0.0
    %3364 = vadd.xlane.f32.xlu0 %v3363
    %v3365 = vpop.xlane.xlu0 %3364
    %v3366 = vsel %vm123, %v3358, 0.0
    %3367 = vadd.xlane.f32.xlu0 %v3366
    %v3368 = vpop.xlane.xlu0 %3367
    %v3369 = vmul.f32 %v3365, %v130
    %v3370 = vmul.f32 %v3368, %v130
    %v3371 = vsub.f32 %v3357, %v3369
    %v3372 = vsub.f32 %v3358, %v3370
    %v3373 = vmul.f32 %v3371, %v3371
    %v3374 = vmul.f32 %v3372, %v3372
    %v3375 = vsel %vm123, %v3373, 0.0
    %3376 = vadd.xlane.f32.xlu0 %v3375
    %v3377 = vpop.xlane.xlu0 %3376
    %v3378 = vsel %vm123, %v3374, 0.0
    %3379 = vadd.xlane.f32.xlu0 %v3378
    %v3380 = vpop.xlane.xlu0 %3379
    %v3381 = vmul.f32 %v3377, 0.032258064
    %v3382 = vmul.f32 %v3380, 0.032258064
    %v3383 = vrsqrt.pop %v3381
    %v3384 = vmul.f32 %v3381, %v3383
    %vm3385 = vcmp.eq.f32.partialorder %v3381, inf
    %v3386 = vsel %vm3385, %v3381, %v3384
    %vm3387 = vcmp.eq.f32.partialorder %v3381, 0.0
    %v3388 = vand.u32 %v3381, 2147483648
    %v3389 = vsel %vm3387, %v3388, %v3386
    %v3390 = vrsqrt.pop %v3382
    %v3391 = vmul.f32 %v3382, %v3390
    %vm3392 = vcmp.eq.f32.partialorder %v3382, inf
    %v3393 = vsel %vm3392, %v3382, %v3391
    %vm3394 = vcmp.eq.f32.partialorder %v3382, 0.0
    %v3395 = vand.u32 %v3382, 2147483648
    %v3396 = vsel %vm3394, %v3395, %v3393
    %v3397 = vadd.f32 %v3389, 1e-06
    %v3398 = vadd.f32 %v3396, 1e-06
    %v3399 = vrcp.pop %v3397
    %v3400 = vmul.f32 %v3371, %v3399
    %v3401 = vrcp.pop %v3398
    %v3402 = vmul.f32 %v3372, %v3401
    %v3403 = vlaneseq
    %v3404 = vshrl.u32 %v3403, 7
    %v3405 = vsub.s32 0, %v3404
    %v3406 = vrot.slane %v3360, %v3405
    %v3407 = vmul.f32 %v3406, %v3400
    %v3408 = vmul.f32 %v3406, %v3402
    %v3409 = vlaneseq
    %v3410 = vshrl.u32 %v3409, 7
    %v3411 = vsub.s32 0, %v3410
    %v3412 = vrot.slane %v3362, %v3411
    %v3413 = vadd.f32 %v3407, %v3412
    %v3414 = vadd.f32 %v3408, %v3412
    %v3415 = vpack.c.bf16 %v3414, %v3413
    %s3416 = scalar_lea.vmem %s4, 16
    %v3417 = vld [vmem:[%s3416] sm:$0xf]
    %v3418 = vld [vmem:[%s3416 + $0x4] sm:$0xf]
    %v3419 = vld [vmem:[%s3416 + $0x8] sm:$0xf]
    %v3420 = vld [vmem:[%s3416 + $0xc] sm:$0xf]
    %v3421 = vld [vmem:[%s5 + $0x1] sm:$0x1]
    %v3422 = vlaneseq
    %v3423 = vshrl.u32 %v3422, 7
    %v3424 = vsub.s32 0, %v3423
    %v3425 = vrot.slane %v3421, %v3424
    %v3430 = vunpack.c.l.b16 %v3417
    %v3431 = vunpack.c.l.b16 %v3418
    %v3432 = vunpack.c.l.b16 %v3419
    %v3433 = vunpack.c.l.b16 %v3420
    %v3434 = vpack.c.b16 %v3431, %v3430
    %v3435 = vpack.c.b16 %v3433, %v3432
    %v3439 = vsel %vm123, %v3415, 0
    %3441 = vmatprep.subr.bf16.mxu0 0
    %3442 = vmatpush1.bf16.msra.mxu0 %v3434
    %3443 = vmatprep.subr.bf16.mxu0 0
    %3444 = vmatpush1.bf16.msra.mxu0 %v3435
    %3445 = vmatprep.subr.bf16.mxu0 0
    %3446 = vmatpush1.bf16.msra.mxu0 0
    %3447 = vmatprep.subr.bf16.mxu0 0
    %3448 = vmatpush1.bf16.msra.mxu0 0
    %3449 = vmatprep.subr.bf16.mxu0 0
    %3450 = vmatpush1.bf16.msra.mxu0 0
    %3451 = vmatprep.subr.bf16.mxu0 0
    %3452 = vmatpush1.bf16.msra.mxu0 0
    %3453 = vmatprep.subr.bf16.mxu0 0
    %3454 = vmatpush1.bf16.msra.mxu0 0
    %3455 = vmatprep.subr.bf16.mxu0 0
    %3456 = vmatpush1.bf16.msra.mxu0 0
    %3457 = vmatprep.subr.bf16.mxu0 0
    %3458 = vmatpush1.bf16.msra.mxu0 0
    %3459 = vmatprep.subr.bf16.mxu0 0
    %3460 = vmatpush1.bf16.msra.mxu0 0
    %3461 = vmatprep.subr.bf16.mxu0 0
    %3462 = vmatpush1.bf16.msra.mxu0 0
    %3463 = vmatprep.subr.bf16.mxu0 0
    %3464 = vmatpush1.bf16.msra.mxu0 0
    %3465 = vmatprep.subr.bf16.mxu0 0
    %3466 = vmatpush1.bf16.msra.mxu0 0
    %3467 = vmatprep.subr.bf16.mxu0 0
    %3468 = vmatpush1.bf16.msra.mxu0 0
    %3469 = vmatprep.subr.bf16.mxu0 0
    %3470 = vmatpush1.bf16.msra.mxu0 0
    %3471 = vmatprep.subr.bf16.mxu0 0
    %3472 = vmatpush1.bf16.msra.mxu0 0
    %3473 = vmatprep.mubr.bf16.mxu0 0
    %3474 = vmatmul.mubr.bf16.gmra.mrb[0].mxu0 %v3439
    %v3475 = vpop.f32.mrb[0].mxu0
    %v3476 = vadd.f32 %v3425, %v3475
    %v3477 = vpop.f32.mrb[0].mxu0
    %v3478 = vpop.f32.mrb[0].mxu0
    %v3479 = vadd.f32 %v3425, %v3478
    %v3480 = vpop.f32.mrb[0].mxu0
    %3481 = vdwg.mxu0
    %3484 = vrot.lane.b32.xlu0 %v3476, 120
    %v3485 = vpop.permute.xlu0 %3484
    %3486 = vrot.lane.b32.xlu0 %v3479, 120
    %v3487 = vpop.permute.xlu0 %3486
    %3490 = vrot.lane.b32.xlu0 %v3476, 112
    %v3491 = vpop.permute.xlu0 %3490
    %3492 = vrot.lane.b32.xlu0 %v3479, 112
    %v3493 = vpop.permute.xlu0 %3492
    %3496 = vrot.lane.b32.xlu0 %v3476, 104
    %v3497 = vpop.permute.xlu0 %3496
    %3498 = vrot.lane.b32.xlu0 %v3479, 104
    %v3499 = vpop.permute.xlu0 %3498
    %v3502 = vpack.c.bf16 %v3476, %v3476
    %v3503 = vpack.c.bf16 %v3479, %v3479
    %v3504 = vpack.c.bf16 %v3485, %v3485
    %v3505 = vpack.c.bf16 %v3487, %v3487
    %v3506 = vpack.c.bf16 %v3491, %v3491
    %v3507 = vpack.c.bf16 %v3493, %v3493
    %v3508 = vpack.c.bf16 %v3497, %v3497
    %v3509 = vpack.c.bf16 %v3499, %v3499
    %3511 = vrot.lane.b32.xlu0 %v3502, 96
    %v3512 = vpop.permute.xlu0 %3511
    %v3514 = vsel %vm274, %v3502, 0
    %v3517 = vsel %vm274, %v3512, 0
    %3519 = vmatprep.subr.bf16.mxu0 0
    %3520 = vmatpush1.bf16.xpose.msra.mxu0 %v3517
    %3521 = vmatprep.subr.bf16.mxu0 0
    %3522 = vmatpush1.bf16.xpose.msra.mxu0 0
    %3523 = vmatprep.subr.bf16.mxu0 0
    %3524 = vmatpush1.bf16.xpose.msra.mxu0 0
    %3525 = vmatprep.subr.bf16.mxu0 0
    %3526 = vmatpush1.bf16.xpose.msra.mxu0 0
    %3527 = vmatprep.subr.bf16.mxu0 0
    %3528 = vmatpush1.bf16.xpose.msra.mxu0 0
    %3529 = vmatprep.subr.bf16.mxu0 0
    %3530 = vmatpush1.bf16.xpose.msra.mxu0 0
    %3531 = vmatprep.subr.bf16.mxu0 0
    %3532 = vmatpush1.bf16.xpose.msra.mxu0 0
    %3533 = vmatprep.subr.bf16.mxu0 0
    %3534 = vmatpush1.bf16.xpose.msra.mxu0 0
    %3535 = vmatprep.subr.bf16.mxu0 0
    %3536 = vmatpush1.bf16.xpose.msra.mxu0 0
    %3537 = vmatprep.subr.bf16.mxu0 0
    %3538 = vmatpush1.bf16.xpose.msra.mxu0 0
    %3539 = vmatprep.subr.bf16.mxu0 0
    %3540 = vmatpush1.bf16.xpose.msra.mxu0 0
    %3541 = vmatprep.subr.bf16.mxu0 0
    %3542 = vmatpush1.bf16.xpose.msra.mxu0 0
    %3543 = vmatprep.subr.bf16.mxu0 0
    %3544 = vmatpush1.bf16.xpose.msra.mxu0 0
    %3545 = vmatprep.subr.bf16.mxu0 0
    %3546 = vmatpush1.bf16.xpose.msra.mxu0 0
    %3547 = vmatprep.subr.bf16.mxu0 0
    %3548 = vmatpush1.bf16.xpose.msra.mxu0 0
    %3549 = vmatprep.subr.bf16.mxu0 0
    %3550 = vmatpush1.bf16.xpose.msra.mxu0 0
    %3551 = vmatprep.mubr.bf16.mxu0 0
    %3552 = vmatmul.mubr.bf16.gmra.mrb[0].mxu0 %v3514
    %v3553 = vpop.f32.mrb[0].mxu0
    %v3554 = vadd.f32 0.0, %v3553
    %v3555 = vpop.f32.mrb[0].mxu0
    %v3556 = vpop.f32.mrb[0].mxu0
    %v3557 = vpop.f32.mrb[0].mxu0
    %3558 = vdwg.mxu0
    %3560 = vrot.lane.b32.xlu0 %v3503, 96
    %v3561 = vpop.permute.xlu0 %3560
    %v3563 = vsel %vm274, %v3503, 0
    %v3566 = vsel %vm274, %v3561, 0
    %3568 = vmatprep.subr.bf16.mxu0 0
    %3569 = vmatpush1.bf16.xpose.msra.mxu0 %v3566
    %3570 = vmatprep.subr.bf16.mxu0 0
    %3571 = vmatpush1.bf16.xpose.msra.mxu0 0
    %3572 = vmatprep.subr.bf16.mxu0 0
    %3573 = vmatpush1.bf16.xpose.msra.mxu0 0
    %3574 = vmatprep.subr.bf16.mxu0 0
    %3575 = vmatpush1.bf16.xpose.msra.mxu0 0
    %3576 = vmatprep.subr.bf16.mxu0 0
    %3577 = vmatpush1.bf16.xpose.msra.mxu0 0
    %3578 = vmatprep.subr.bf16.mxu0 0
    %3579 = vmatpush1.bf16.xpose.msra.mxu0 0
    %3580 = vmatprep.subr.bf16.mxu0 0
    %3581 = vmatpush1.bf16.xpose.msra.mxu0 0
    %3582 = vmatprep.subr.bf16.mxu0 0
    %3583 = vmatpush1.bf16.xpose.msra.mxu0 0
    %3584 = vmatprep.subr.bf16.mxu0 0
    %3585 = vmatpush1.bf16.xpose.msra.mxu0 0
    %3586 = vmatprep.subr.bf16.mxu0 0
    %3587 = vmatpush1.bf16.xpose.msra.mxu0 0
    %3588 = vmatprep.subr.bf16.mxu0 0
    %3589 = vmatpush1.bf16.xpose.msra.mxu0 0
    %3590 = vmatprep.subr.bf16.mxu0 0
    %3591 = vmatpush1.bf16.xpose.msra.mxu0 0
    %3592 = vmatprep.subr.bf16.mxu0 0
    %3593 = vmatpush1.bf16.xpose.msra.mxu0 0
    %3594 = vmatprep.subr.bf16.mxu0 0
    %3595 = vmatpush1.bf16.xpose.msra.mxu0 0
    %3596 = vmatprep.subr.bf16.mxu0 0
    %3597 = vmatpush1.bf16.xpose.msra.mxu0 0
    %3598 = vmatprep.subr.bf16.mxu0 0
    %3599 = vmatpush1.bf16.xpose.msra.mxu0 0
    %3600 = vmatprep.mubr.bf16.mxu0 0
    %3601 = vmatmul.mubr.bf16.gmra.mrb[0].mxu0 %v3563
    %v3602 = vpop.f32.mrb[0].mxu0
    %v3603 = vadd.f32 0.0, %v3602
    %v3604 = vpop.f32.mrb[0].mxu0
    %v3605 = vpop.f32.mrb[0].mxu0
    %v3606 = vpop.f32.mrb[0].mxu0
    %3607 = vdwg.mxu0
    %3609 = vrot.lane.b32.xlu0 %v3504, 96
    %v3610 = vpop.permute.xlu0 %3609
    %v3612 = vsel %vm274, %v3504, 0
    %v3615 = vsel %vm274, %v3610, 0
    %3617 = vmatprep.subr.bf16.mxu0 0
    %3618 = vmatpush1.bf16.xpose.msra.mxu0 %v3615
    %3619 = vmatprep.subr.bf16.mxu0 0
    %3620 = vmatpush1.bf16.xpose.msra.mxu0 0
    %3621 = vmatprep.subr.bf16.mxu0 0
    %3622 = vmatpush1.bf16.xpose.msra.mxu0 0
    %3623 = vmatprep.subr.bf16.mxu0 0
    %3624 = vmatpush1.bf16.xpose.msra.mxu0 0
    %3625 = vmatprep.subr.bf16.mxu0 0
    %3626 = vmatpush1.bf16.xpose.msra.mxu0 0
    %3627 = vmatprep.subr.bf16.mxu0 0
    %3628 = vmatpush1.bf16.xpose.msra.mxu0 0
    %3629 = vmatprep.subr.bf16.mxu0 0
    %3630 = vmatpush1.bf16.xpose.msra.mxu0 0
    %3631 = vmatprep.subr.bf16.mxu0 0
    %3632 = vmatpush1.bf16.xpose.msra.mxu0 0
    %3633 = vmatprep.subr.bf16.mxu0 0
    %3634 = vmatpush1.bf16.xpose.msra.mxu0 0
    %3635 = vmatprep.subr.bf16.mxu0 0
    %3636 = vmatpush1.bf16.xpose.msra.mxu0 0
    %3637 = vmatprep.subr.bf16.mxu0 0
    %3638 = vmatpush1.bf16.xpose.msra.mxu0 0
    %3639 = vmatprep.subr.bf16.mxu0 0
    %3640 = vmatpush1.bf16.xpose.msra.mxu0 0
    %3641 = vmatprep.subr.bf16.mxu0 0
    %3642 = vmatpush1.bf16.xpose.msra.mxu0 0
    %3643 = vmatprep.subr.bf16.mxu0 0
    %3644 = vmatpush1.bf16.xpose.msra.mxu0 0
    %3645 = vmatprep.subr.bf16.mxu0 0
    %3646 = vmatpush1.bf16.xpose.msra.mxu0 0
    %3647 = vmatprep.subr.bf16.mxu0 0
    %3648 = vmatpush1.bf16.xpose.msra.mxu0 0
    %3649 = vmatprep.mubr.bf16.mxu0 0
    %3650 = vmatmul.mubr.bf16.gmra.mrb[0].mxu0 %v3612
    %v3651 = vpop.f32.mrb[0].mxu0
    %v3652 = vadd.f32 0.0, %v3651
    %v3653 = vpop.f32.mrb[0].mxu0
    %v3654 = vpop.f32.mrb[0].mxu0
    %v3655 = vpop.f32.mrb[0].mxu0
    %3656 = vdwg.mxu0
    %3658 = vrot.lane.b32.xlu0 %v3505, 96
    %v3659 = vpop.permute.xlu0 %3658
    %v3661 = vsel %vm274, %v3505, 0
    %v3664 = vsel %vm274, %v3659, 0
    %3666 = vmatprep.subr.bf16.mxu0 0
    %3667 = vmatpush1.bf16.xpose.msra.mxu0 %v3664
    %3668 = vmatprep.subr.bf16.mxu0 0
    %3669 = vmatpush1.bf16.xpose.msra.mxu0 0
    %3670 = vmatprep.subr.bf16.mxu0 0
    %3671 = vmatpush1.bf16.xpose.msra.mxu0 0
    %3672 = vmatprep.subr.bf16.mxu0 0
    %3673 = vmatpush1.bf16.xpose.msra.mxu0 0
    %3674 = vmatprep.subr.bf16.mxu0 0
    %3675 = vmatpush1.bf16.xpose.msra.mxu0 0
    %3676 = vmatprep.subr.bf16.mxu0 0
    %3677 = vmatpush1.bf16.xpose.msra.mxu0 0
    %3678 = vmatprep.subr.bf16.mxu0 0
    %3679 = vmatpush1.bf16.xpose.msra.mxu0 0
    %3680 = vmatprep.subr.bf16.mxu0 0
    %3681 = vmatpush1.bf16.xpose.msra.mxu0 0
    %3682 = vmatprep.subr.bf16.mxu0 0
    %3683 = vmatpush1.bf16.xpose.msra.mxu0 0
    %3684 = vmatprep.subr.bf16.mxu0 0
    %3685 = vmatpush1.bf16.xpose.msra.mxu0 0
    %3686 = vmatprep.subr.bf16.mxu0 0
    %3687 = vmatpush1.bf16.xpose.msra.mxu0 0
    %3688 = vmatprep.subr.bf16.mxu0 0
    %3689 = vmatpush1.bf16.xpose.msra.mxu0 0
    %3690 = vmatprep.subr.bf16.mxu0 0
    %3691 = vmatpush1.bf16.xpose.msra.mxu0 0
    %3692 = vmatprep.subr.bf16.mxu0 0
    %3693 = vmatpush1.bf16.xpose.msra.mxu0 0
    %3694 = vmatprep.subr.bf16.mxu0 0
    %3695 = vmatpush1.bf16.xpose.msra.mxu0 0
    %3696 = vmatprep.subr.bf16.mxu0 0
    %3697 = vmatpush1.bf16.xpose.msra.mxu0 0
    %3698 = vmatprep.mubr.bf16.mxu0 0
    %3699 = vmatmul.mubr.bf16.gmra.mrb[0].mxu0 %v3661
    %v3700 = vpop.f32.mrb[0].mxu0
    %v3701 = vadd.f32 0.0, %v3700
    %v3702 = vpop.f32.mrb[0].mxu0
    %v3703 = vpop.f32.mrb[0].mxu0
    %v3704 = vpop.f32.mrb[0].mxu0
    %3705 = vdwg.mxu0
    %3707 = vrot.lane.b32.xlu0 %v3506, 96
    %v3708 = vpop.permute.xlu0 %3707
    %v3710 = vsel %vm274, %v3506, 0
    %v3713 = vsel %vm274, %v3708, 0
    %3715 = vmatprep.subr.bf16.mxu0 0
    %3716 = vmatpush1.bf16.xpose.msra.mxu0 %v3713
    %3717 = vmatprep.subr.bf16.mxu0 0
    %3718 = vmatpush1.bf16.xpose.msra.mxu0 0
    %3719 = vmatprep.subr.bf16.mxu0 0
    %3720 = vmatpush1.bf16.xpose.msra.mxu0 0
    %3721 = vmatprep.subr.bf16.mxu0 0
    %3722 = vmatpush1.bf16.xpose.msra.mxu0 0
    %3723 = vmatprep.subr.bf16.mxu0 0
    %3724 = vmatpush1.bf16.xpose.msra.mxu0 0
    %3725 = vmatprep.subr.bf16.mxu0 0
    %3726 = vmatpush1.bf16.xpose.msra.mxu0 0
    %3727 = vmatprep.subr.bf16.mxu0 0
    %3728 = vmatpush1.bf16.xpose.msra.mxu0 0
    %3729 = vmatprep.subr.bf16.mxu0 0
    %3730 = vmatpush1.bf16.xpose.msra.mxu0 0
    %3731 = vmatprep.subr.bf16.mxu0 0
    %3732 = vmatpush1.bf16.xpose.msra.mxu0 0
    %3733 = vmatprep.subr.bf16.mxu0 0
    %3734 = vmatpush1.bf16.xpose.msra.mxu0 0
    %3735 = vmatprep.subr.bf16.mxu0 0
    %3736 = vmatpush1.bf16.xpose.msra.mxu0 0
    %3737 = vmatprep.subr.bf16.mxu0 0
    %3738 = vmatpush1.bf16.xpose.msra.mxu0 0
    %3739 = vmatprep.subr.bf16.mxu0 0
    %3740 = vmatpush1.bf16.xpose.msra.mxu0 0
    %3741 = vmatprep.subr.bf16.mxu0 0
    %3742 = vmatpush1.bf16.xpose.msra.mxu0 0
    %3743 = vmatprep.subr.bf16.mxu0 0
    %3744 = vmatpush1.bf16.xpose.msra.mxu0 0
    %3745 = vmatprep.subr.bf16.mxu0 0
    %3746 = vmatpush1.bf16.xpose.msra.mxu0 0
    %3747 = vmatprep.mubr.bf16.mxu0 0
    %3748 = vmatmul.mubr.bf16.gmra.mrb[0].mxu0 %v3710
    %v3749 = vpop.f32.mrb[0].mxu0
    %v3750 = vadd.f32 0.0, %v3749
    %v3751 = vpop.f32.mrb[0].mxu0
    %v3752 = vpop.f32.mrb[0].mxu0
    %v3753 = vpop.f32.mrb[0].mxu0
    %3754 = vdwg.mxu0
    %3756 = vrot.lane.b32.xlu0 %v3507, 96
    %v3757 = vpop.permute.xlu0 %3756
    %v3759 = vsel %vm274, %v3507, 0
    %v3762 = vsel %vm274, %v3757, 0
    %3764 = vmatprep.subr.bf16.mxu0 0
    %3765 = vmatpush1.bf16.xpose.msra.mxu0 %v3762
    %3766 = vmatprep.subr.bf16.mxu0 0
    %3767 = vmatpush1.bf16.xpose.msra.mxu0 0
    %3768 = vmatprep.subr.bf16.mxu0 0
    %3769 = vmatpush1.bf16.xpose.msra.mxu0 0
    %3770 = vmatprep.subr.bf16.mxu0 0
    %3771 = vmatpush1.bf16.xpose.msra.mxu0 0
    %3772 = vmatprep.subr.bf16.mxu0 0
    %3773 = vmatpush1.bf16.xpose.msra.mxu0 0
    %3774 = vmatprep.subr.bf16.mxu0 0
    %3775 = vmatpush1.bf16.xpose.msra.mxu0 0
    %3776 = vmatprep.subr.bf16.mxu0 0
    %3777 = vmatpush1.bf16.xpose.msra.mxu0 0
    %3778 = vmatprep.subr.bf16.mxu0 0
    %3779 = vmatpush1.bf16.xpose.msra.mxu0 0
    %3780 = vmatprep.subr.bf16.mxu0 0
    %3781 = vmatpush1.bf16.xpose.msra.mxu0 0
    %3782 = vmatprep.subr.bf16.mxu0 0
    %3783 = vmatpush1.bf16.xpose.msra.mxu0 0
    %3784 = vmatprep.subr.bf16.mxu0 0
    %3785 = vmatpush1.bf16.xpose.msra.mxu0 0
    %3786 = vmatprep.subr.bf16.mxu0 0
    %3787 = vmatpush1.bf16.xpose.msra.mxu0 0
    %3788 = vmatprep.subr.bf16.mxu0 0
    %3789 = vmatpush1.bf16.xpose.msra.mxu0 0
    %3790 = vmatprep.subr.bf16.mxu0 0
    %3791 = vmatpush1.bf16.xpose.msra.mxu0 0
    %3792 = vmatprep.subr.bf16.mxu0 0
    %3793 = vmatpush1.bf16.xpose.msra.mxu0 0
    %3794 = vmatprep.subr.bf16.mxu0 0
    %3795 = vmatpush1.bf16.xpose.msra.mxu0 0
    %3796 = vmatprep.mubr.bf16.mxu0 0
    %3797 = vmatmul.mubr.bf16.gmra.mrb[0].mxu0 %v3759
    %v3798 = vpop.f32.mrb[0].mxu0
    %v3799 = vadd.f32 0.0, %v3798
    %v3800 = vpop.f32.mrb[0].mxu0
    %v3801 = vpop.f32.mrb[0].mxu0
    %v3802 = vpop.f32.mrb[0].mxu0
    %3803 = vdwg.mxu0
    %3805 = vrot.lane.b32.xlu0 %v3508, 96
    %v3806 = vpop.permute.xlu0 %3805
    %v3808 = vsel %vm274, %v3508, 0
    %v3811 = vsel %vm274, %v3806, 0
    %3813 = vmatprep.subr.bf16.mxu0 0
    %3814 = vmatpush1.bf16.xpose.msra.mxu0 %v3811
    %3815 = vmatprep.subr.bf16.mxu0 0
    %3816 = vmatpush1.bf16.xpose.msra.mxu0 0
    %3817 = vmatprep.subr.bf16.mxu0 0
    %3818 = vmatpush1.bf16.xpose.msra.mxu0 0
    %3819 = vmatprep.subr.bf16.mxu0 0
    %3820 = vmatpush1.bf16.xpose.msra.mxu0 0
    %3821 = vmatprep.subr.bf16.mxu0 0
    %3822 = vmatpush1.bf16.xpose.msra.mxu0 0
    %3823 = vmatprep.subr.bf16.mxu0 0
    %3824 = vmatpush1.bf16.xpose.msra.mxu0 0
    %3825 = vmatprep.subr.bf16.mxu0 0
    %3826 = vmatpush1.bf16.xpose.msra.mxu0 0
    %3827 = vmatprep.subr.bf16.mxu0 0
    %3828 = vmatpush1.bf16.xpose.msra.mxu0 0
    %3829 = vmatprep.subr.bf16.mxu0 0
    %3830 = vmatpush1.bf16.xpose.msra.mxu0 0
    %3831 = vmatprep.subr.bf16.mxu0 0
    %3832 = vmatpush1.bf16.xpose.msra.mxu0 0
    %3833 = vmatprep.subr.bf16.mxu0 0
    %3834 = vmatpush1.bf16.xpose.msra.mxu0 0
    %3835 = vmatprep.subr.bf16.mxu0 0
    %3836 = vmatpush1.bf16.xpose.msra.mxu0 0
    %3837 = vmatprep.subr.bf16.mxu0 0
    %3838 = vmatpush1.bf16.xpose.msra.mxu0 0
    %3839 = vmatprep.subr.bf16.mxu0 0
    %3840 = vmatpush1.bf16.xpose.msra.mxu0 0
    %3841 = vmatprep.subr.bf16.mxu0 0
    %3842 = vmatpush1.bf16.xpose.msra.mxu0 0
    %3843 = vmatprep.subr.bf16.mxu0 0
    %3844 = vmatpush1.bf16.xpose.msra.mxu0 0
    %3845 = vmatprep.mubr.bf16.mxu0 0
    %3846 = vmatmul.mubr.bf16.gmra.mrb[0].mxu0 %v3808
    %v3847 = vpop.f32.mrb[0].mxu0
    %v3848 = vadd.f32 0.0, %v3847
    %v3849 = vpop.f32.mrb[0].mxu0
    %v3850 = vpop.f32.mrb[0].mxu0
    %v3851 = vpop.f32.mrb[0].mxu0
    %3852 = vdwg.mxu0
    %3854 = vrot.lane.b32.xlu0 %v3509, 96
    %v3855 = vpop.permute.xlu0 %3854
    %v3857 = vsel %vm274, %v3509, 0
    %v3860 = vsel %vm274, %v3855, 0
    %3862 = vmatprep.subr.bf16.mxu0 0
    %3863 = vmatpush1.bf16.xpose.msra.mxu0 %v3860
    %3864 = vmatprep.subr.bf16.mxu0 0
    %3865 = vmatpush1.bf16.xpose.msra.mxu0 0
    %3866 = vmatprep.subr.bf16.mxu0 0
    %3867 = vmatpush1.bf16.xpose.msra.mxu0 0
    %3868 = vmatprep.subr.bf16.mxu0 0
    %3869 = vmatpush1.bf16.xpose.msra.mxu0 0
    %3870 = vmatprep.subr.bf16.mxu0 0
    %3871 = vmatpush1.bf16.xpose.msra.mxu0 0
    %3872 = vmatprep.subr.bf16.mxu0 0
    %3873 = vmatpush1.bf16.xpose.msra.mxu0 0
    %3874 = vmatprep.subr.bf16.mxu0 0
    %3875 = vmatpush1.bf16.xpose.msra.mxu0 0
    %3876 = vmatprep.subr.bf16.mxu0 0
    %3877 = vmatpush1.bf16.xpose.msra.mxu0 0
    %3878 = vmatprep.subr.bf16.mxu0 0
    %3879 = vmatpush1.bf16.xpose.msra.mxu0 0
    %3880 = vmatprep.subr.bf16.mxu0 0
    %3881 = vmatpush1.bf16.xpose.msra.mxu0 0
    %3882 = vmatprep.subr.bf16.mxu0 0
    %3883 = vmatpush1.bf16.xpose.msra.mxu0 0
    %3884 = vmatprep.subr.bf16.mxu0 0
    %3885 = vmatpush1.bf16.xpose.msra.mxu0 0
    %3886 = vmatprep.subr.bf16.mxu0 0
    %3887 = vmatpush1.bf16.xpose.msra.mxu0 0
    %3888 = vmatprep.subr.bf16.mxu0 0
    %3889 = vmatpush1.bf16.xpose.msra.mxu0 0
    %3890 = vmatprep.subr.bf16.mxu0 0
    %3891 = vmatpush1.bf16.xpose.msra.mxu0 0
    %3892 = vmatprep.subr.bf16.mxu0 0
    %3893 = vmatpush1.bf16.xpose.msra.mxu0 0
    %3894 = vmatprep.mubr.bf16.mxu0 0
    %3895 = vmatmul.mubr.bf16.gmra.mrb[0].mxu0 %v3857
    %v3896 = vpop.f32.mrb[0].mxu0
    %v3897 = vadd.f32 0.0, %v3896
    %v3898 = vpop.f32.mrb[0].mxu0
    %v3899 = vpop.f32.mrb[0].mxu0
    %v3900 = vpop.f32.mrb[0].mxu0
    %3901 = vdwg.mxu0
    %v3902 = vmul.f32 %v3554, %v115
    %v3903 = vmul.f32 %v3603, %v116
    %v3904 = vmul.f32 %v3652, %v115
    %v3905 = vmul.f32 %v3701, %v116
    %v3906 = vmul.f32 %v3750, %v115
    %v3907 = vmul.f32 %v3799, %v116
    %v3908 = vmul.f32 %v3848, %v115
    %v3909 = vmul.f32 %v3897, %v116
    %v3910 = vadd.f32 %v3902, %v119
    %v3911 = vadd.f32 %v3903, %v120
    %v3912 = vadd.f32 %v3904, %v119
    %v3913 = vadd.f32 %v3905, %v120
    %v3914 = vadd.f32 %v3906, %v119
    %v3915 = vadd.f32 %v3907, %v120
    %v3916 = vadd.f32 %v3908, %v119
    %v3917 = vadd.f32 %v3909, %v120
    %v3918 = vsel %vm274, %v3910, -inf
    %3919 = vmax.xlane.f32.xlu0 %v3918
    %v3920 = vpop.xlane.xlu0 %3919
    %v3921 = vsel %vm274, %v3911, -inf
    %3922 = vmax.xlane.f32.xlu0 %v3921
    %v3923 = vpop.xlane.xlu0 %3922
    %v3924 = vsel %vm274, %v3912, -inf
    %3925 = vmax.xlane.f32.xlu0 %v3924
    %v3926 = vpop.xlane.xlu0 %3925
    %v3927 = vsel %vm274, %v3913, -inf
    %3928 = vmax.xlane.f32.xlu0 %v3927
    %v3929 = vpop.xlane.xlu0 %3928
    %v3930 = vsel %vm274, %v3914, -inf
    %3931 = vmax.xlane.f32.xlu0 %v3930
    %v3932 = vpop.xlane.xlu0 %3931
    %v3933 = vsel %vm274, %v3915, -inf
    %3934 = vmax.xlane.f32.xlu0 %v3933
    %v3935 = vpop.xlane.xlu0 %3934
    %v3936 = vsel %vm274, %v3916, -inf
    %3937 = vmax.xlane.f32.xlu0 %v3936
    %v3938 = vpop.xlane.xlu0 %3937
    %v3939 = vsel %vm274, %v3917, -inf
    %3940 = vmax.xlane.f32.xlu0 %v3939
    %v3941 = vpop.xlane.xlu0 %3940
    %v3942 = vsub.f32 %v3910, %v3920
    %v3943 = vsub.f32 %v3911, %v3923
    %v3944 = vsub.f32 %v3912, %v3926
    %v3945 = vsub.f32 %v3913, %v3929
    %v3946 = vsub.f32 %v3914, %v3932
    %v3947 = vsub.f32 %v3915, %v3935
    %v3948 = vsub.f32 %v3916, %v3938
    %v3949 = vsub.f32 %v3917, %v3941
    %v3950 = vmul.f32 %v3942, 1.442695
    %v3951 = vpow.pop %v3950
    %v3952 = vmul.f32 %v3943, 1.442695
    %v3953 = vpow.pop %v3952
    %v3954 = vmul.f32 %v3944, 1.442695
    %v3955 = vpow.pop %v3954
    %v3956 = vmul.f32 %v3945, 1.442695
    %v3957 = vpow.pop %v3956
    %v3958 = vmul.f32 %v3946, 1.442695
    %v3959 = vpow.pop %v3958
    %v3960 = vmul.f32 %v3947, 1.442695
    %v3961 = vpow.pop %v3960
    %v3962 = vmul.f32 %v3948, 1.442695
    %v3963 = vpow.pop %v3962
    %v3964 = vmul.f32 %v3949, 1.442695
    %v3965 = vpow.pop %v3964
    %v3966 = vsel %vm274, %v3951, 0.0
    %3967 = vadd.xlane.f32.xlu0 %v3966
    %v3968 = vpop.xlane.xlu0 %3967
    %v3969 = vsel %vm274, %v3953, 0.0
    %3970 = vadd.xlane.f32.xlu0 %v3969
    %v3971 = vpop.xlane.xlu0 %3970
    %v3972 = vsel %vm274, %v3955, 0.0
    %3973 = vadd.xlane.f32.xlu0 %v3972
    %v3974 = vpop.xlane.xlu0 %3973
    %v3975 = vsel %vm274, %v3957, 0.0
    %3976 = vadd.xlane.f32.xlu0 %v3975
    %v3977 = vpop.xlane.xlu0 %3976
    %v3978 = vsel %vm274, %v3959, 0.0
    %3979 = vadd.xlane.f32.xlu0 %v3978
    %v3980 = vpop.xlane.xlu0 %3979
    %v3981 = vsel %vm274, %v3961, 0.0
    %3982 = vadd.xlane.f32.xlu0 %v3981
    %v3983 = vpop.xlane.xlu0 %3982
    %v3984 = vsel %vm274, %v3963, 0.0
    %3985 = vadd.xlane.f32.xlu0 %v3984
    %v3986 = vpop.xlane.xlu0 %3985
    %v3987 = vsel %vm274, %v3965, 0.0
    %3988 = vadd.xlane.f32.xlu0 %v3987
    %v3989 = vpop.xlane.xlu0 %3988
    %v3990 = vrcp.pop %v3968
    %v3991 = vrcp.pop %v3971
    %v3992 = vrcp.pop %v3974
    %v3993 = vrcp.pop %v3977
    %v3994 = vrcp.pop %v3980
    %v3995 = vrcp.pop %v3983
    %v3996 = vrcp.pop %v3986
    %v3997 = vrcp.pop %v3989
    %v3998 = vmul.f32 %v3951, %v3990
    %v3999 = vmul.f32 %v3953, %v3991
    %v4000 = vmul.f32 %v3955, %v3992
    %v4001 = vmul.f32 %v3957, %v3993
    %v4002 = vmul.f32 %v3959, %v3994
    %v4003 = vmul.f32 %v3961, %v3995
    %v4004 = vmul.f32 %v3963, %v3996
    %v4005 = vmul.f32 %v3965, %v3997
    %v4006 = vpack.c.bf16 %v3998, %v3998
    %v4007 = vpack.c.bf16 %v3999, %v3999
    %v4008 = vpack.c.bf16 %v4000, %v4000
    %v4009 = vpack.c.bf16 %v4001, %v4001
    %v4010 = vpack.c.bf16 %v4002, %v4002
    %v4011 = vpack.c.bf16 %v4003, %v4003
    %v4012 = vpack.c.bf16 %v4004, %v4004
    %v4013 = vpack.c.bf16 %v4005, %v4005
    %4014 = vrot.lane.b32.xlu0 %v3502, 64
    %v4015 = vpop.permute.xlu0 %4014
    %v4017 = vsel %vm274, %v4006, 0
    %v4020 = vsel %vm781, %v4015, 0
    %4022 = vmatprep.subr.bf16.mxu0 0
    %4023 = vmatpush1.bf16.msra.mxu0 %v4020
    %4024 = vmatprep.subr.bf16.mxu0 0
    %4025 = vmatpush1.bf16.msra.mxu0 0
    %4026 = vmatprep.subr.bf16.mxu0 0
    %4027 = vmatpush1.bf16.msra.mxu0 0
    %4028 = vmatprep.subr.bf16.mxu0 0
    %4029 = vmatpush1.bf16.msra.mxu0 0
    %4030 = vmatprep.subr.bf16.mxu0 0
    %4031 = vmatpush1.bf16.msra.mxu0 0
    %4032 = vmatprep.subr.bf16.mxu0 0
    %4033 = vmatpush1.bf16.msra.mxu0 0
    %4034 = vmatprep.subr.bf16.mxu0 0
    %4035 = vmatpush1.bf16.msra.mxu0 0
    %4036 = vmatprep.subr.bf16.mxu0 0
    %4037 = vmatpush1.bf16.msra.mxu0 0
    %4038 = vmatprep.subr.bf16.mxu0 0
    %4039 = vmatpush1.bf16.msra.mxu0 0
    %4040 = vmatprep.subr.bf16.mxu0 0
    %4041 = vmatpush1.bf16.msra.mxu0 0
    %4042 = vmatprep.subr.bf16.mxu0 0
    %4043 = vmatpush1.bf16.msra.mxu0 0
    %4044 = vmatprep.subr.bf16.mxu0 0
    %4045 = vmatpush1.bf16.msra.mxu0 0
    %4046 = vmatprep.subr.bf16.mxu0 0
    %4047 = vmatpush1.bf16.msra.mxu0 0
    %4048 = vmatprep.subr.bf16.mxu0 0
    %4049 = vmatpush1.bf16.msra.mxu0 0
    %4050 = vmatprep.subr.bf16.mxu0 0
    %4051 = vmatpush1.bf16.msra.mxu0 0
    %4052 = vmatprep.subr.bf16.mxu0 0
    %4053 = vmatpush1.bf16.msra.mxu0 0
    %4054 = vmatprep.mubr.bf16.mxu0 0
    %4055 = vmatmul.mubr.bf16.gmra.mrb[0].mxu0 %v4017
    %v4056 = vpop.f32.mrb[0].mxu0
    %v4057 = vadd.f32 0.0, %v4056
    %v4058 = vpop.f32.mrb[0].mxu0
    %v4059 = vpop.f32.mrb[0].mxu0
    %v4060 = vpop.f32.mrb[0].mxu0
    %4061 = vdwg.mxu0
    %4062 = vrot.lane.b32.xlu0 %v3503, 64
    %v4063 = vpop.permute.xlu0 %4062
    %v4065 = vsel %vm274, %v4007, 0
    %v4068 = vsel %vm781, %v4063, 0
    %4070 = vmatprep.subr.bf16.mxu0 0
    %4071 = vmatpush1.bf16.msra.mxu0 %v4068
    %4072 = vmatprep.subr.bf16.mxu0 0
    %4073 = vmatpush1.bf16.msra.mxu0 0
    %4074 = vmatprep.subr.bf16.mxu0 0
    %4075 = vmatpush1.bf16.msra.mxu0 0
    %4076 = vmatprep.subr.bf16.mxu0 0
    %4077 = vmatpush1.bf16.msra.mxu0 0
    %4078 = vmatprep.subr.bf16.mxu0 0
    %4079 = vmatpush1.bf16.msra.mxu0 0
    %4080 = vmatprep.subr.bf16.mxu0 0
    %4081 = vmatpush1.bf16.msra.mxu0 0
    %4082 = vmatprep.subr.bf16.mxu0 0
    %4083 = vmatpush1.bf16.msra.mxu0 0
    %4084 = vmatprep.subr.bf16.mxu0 0
    %4085 = vmatpush1.bf16.msra.mxu0 0
    %4086 = vmatprep.subr.bf16.mxu0 0
    %4087 = vmatpush1.bf16.msra.mxu0 0
    %4088 = vmatprep.subr.bf16.mxu0 0
    %4089 = vmatpush1.bf16.msra.mxu0 0
    %4090 = vmatprep.subr.bf16.mxu0 0
    %4091 = vmatpush1.bf16.msra.mxu0 0
    %4092 = vmatprep.subr.bf16.mxu0 0
    %4093 = vmatpush1.bf16.msra.mxu0 0
    %4094 = vmatprep.subr.bf16.mxu0 0
    %4095 = vmatpush1.bf16.msra.mxu0 0
    %4096 = vmatprep.subr.bf16.mxu0 0
    %4097 = vmatpush1.bf16.msra.mxu0 0
    %4098 = vmatprep.subr.bf16.mxu0 0
    %4099 = vmatpush1.bf16.msra.mxu0 0
    %4100 = vmatprep.subr.bf16.mxu0 0
    %4101 = vmatpush1.bf16.msra.mxu0 0
    %4102 = vmatprep.mubr.bf16.mxu0 0
    %4103 = vmatmul.mubr.bf16.gmra.mrb[0].mxu0 %v4065
    %v4104 = vpop.f32.mrb[0].mxu0
    %v4105 = vadd.f32 0.0, %v4104
    %v4106 = vpop.f32.mrb[0].mxu0
    %v4107 = vpop.f32.mrb[0].mxu0
    %v4108 = vpop.f32.mrb[0].mxu0
    %4109 = vdwg.mxu0
    %4110 = vrot.lane.b32.xlu0 %v3504, 64
    %v4111 = vpop.permute.xlu0 %4110
    %v4113 = vsel %vm274, %v4008, 0
    %v4116 = vsel %vm781, %v4111, 0
    %4118 = vmatprep.subr.bf16.mxu0 0
    %4119 = vmatpush1.bf16.msra.mxu0 %v4116
    %4120 = vmatprep.subr.bf16.mxu0 0
    %4121 = vmatpush1.bf16.msra.mxu0 0
    %4122 = vmatprep.subr.bf16.mxu0 0
    %4123 = vmatpush1.bf16.msra.mxu0 0
    %4124 = vmatprep.subr.bf16.mxu0 0
    %4125 = vmatpush1.bf16.msra.mxu0 0
    %4126 = vmatprep.subr.bf16.mxu0 0
    %4127 = vmatpush1.bf16.msra.mxu0 0
    %4128 = vmatprep.subr.bf16.mxu0 0
    %4129 = vmatpush1.bf16.msra.mxu0 0
    %4130 = vmatprep.subr.bf16.mxu0 0
    %4131 = vmatpush1.bf16.msra.mxu0 0
    %4132 = vmatprep.subr.bf16.mxu0 0
    %4133 = vmatpush1.bf16.msra.mxu0 0
    %4134 = vmatprep.subr.bf16.mxu0 0
    %4135 = vmatpush1.bf16.msra.mxu0 0
    %4136 = vmatprep.subr.bf16.mxu0 0
    %4137 = vmatpush1.bf16.msra.mxu0 0
    %4138 = vmatprep.subr.bf16.mxu0 0
    %4139 = vmatpush1.bf16.msra.mxu0 0
    %4140 = vmatprep.subr.bf16.mxu0 0
    %4141 = vmatpush1.bf16.msra.mxu0 0
    %4142 = vmatprep.subr.bf16.mxu0 0
    %4143 = vmatpush1.bf16.msra.mxu0 0
    %4144 = vmatprep.subr.bf16.mxu0 0
    %4145 = vmatpush1.bf16.msra.mxu0 0
    %4146 = vmatprep.subr.bf16.mxu0 0
    %4147 = vmatpush1.bf16.msra.mxu0 0
    %4148 = vmatprep.subr.bf16.mxu0 0
    %4149 = vmatpush1.bf16.msra.mxu0 0
    %4150 = vmatprep.mubr.bf16.mxu0 0
    %4151 = vmatmul.mubr.bf16.gmra.mrb[0].mxu0 %v4113
    %v4152 = vpop.f32.mrb[0].mxu0
    %v4153 = vadd.f32 0.0, %v4152
    %v4154 = vpop.f32.mrb[0].mxu0
    %v4155 = vpop.f32.mrb[0].mxu0
    %v4156 = vpop.f32.mrb[0].mxu0
    %4157 = vdwg.mxu0
    %4158 = vrot.lane.b32.xlu0 %v3505, 64
    %v4159 = vpop.permute.xlu0 %4158
    %v4161 = vsel %vm274, %v4009, 0
    %v4164 = vsel %vm781, %v4159, 0
    %4166 = vmatprep.subr.bf16.mxu0 0
    %4167 = vmatpush1.bf16.msra.mxu0 %v4164
    %4168 = vmatprep.subr.bf16.mxu0 0
    %4169 = vmatpush1.bf16.msra.mxu0 0
    %4170 = vmatprep.subr.bf16.mxu0 0
    %4171 = vmatpush1.bf16.msra.mxu0 0
    %4172 = vmatprep.subr.bf16.mxu0 0
    %4173 = vmatpush1.bf16.msra.mxu0 0
    %4174 = vmatprep.subr.bf16.mxu0 0
    %4175 = vmatpush1.bf16.msra.mxu0 0
    %4176 = vmatprep.subr.bf16.mxu0 0
    %4177 = vmatpush1.bf16.msra.mxu0 0
    %4178 = vmatprep.subr.bf16.mxu0 0
    %4179 = vmatpush1.bf16.msra.mxu0 0
    %4180 = vmatprep.subr.bf16.mxu0 0
    %4181 = vmatpush1.bf16.msra.mxu0 0
    %4182 = vmatprep.subr.bf16.mxu0 0
    %4183 = vmatpush1.bf16.msra.mxu0 0
    %4184 = vmatprep.subr.bf16.mxu0 0
    %4185 = vmatpush1.bf16.msra.mxu0 0
    %4186 = vmatprep.subr.bf16.mxu0 0
    %4187 = vmatpush1.bf16.msra.mxu0 0
    %4188 = vmatprep.subr.bf16.mxu0 0
    %4189 = vmatpush1.bf16.msra.mxu0 0
    %4190 = vmatprep.subr.bf16.mxu0 0
    %4191 = vmatpush1.bf16.msra.mxu0 0
    %4192 = vmatprep.subr.bf16.mxu0 0
    %4193 = vmatpush1.bf16.msra.mxu0 0
    %4194 = vmatprep.subr.bf16.mxu0 0
    %4195 = vmatpush1.bf16.msra.mxu0 0
    %4196 = vmatprep.subr.bf16.mxu0 0
    %4197 = vmatpush1.bf16.msra.mxu0 0
    %4198 = vmatprep.mubr.bf16.mxu0 0
    %4199 = vmatmul.mubr.bf16.gmra.mrb[0].mxu0 %v4161
    %v4200 = vpop.f32.mrb[0].mxu0
    %v4201 = vadd.f32 0.0, %v4200
    %v4202 = vpop.f32.mrb[0].mxu0
    %v4203 = vpop.f32.mrb[0].mxu0
    %v4204 = vpop.f32.mrb[0].mxu0
    %4205 = vdwg.mxu0
    %4206 = vrot.lane.b32.xlu0 %v3506, 64
    %v4207 = vpop.permute.xlu0 %4206
    %v4209 = vsel %vm274, %v4010, 0
    %v4212 = vsel %vm781, %v4207, 0
    %4214 = vmatprep.subr.bf16.mxu0 0
    %4215 = vmatpush1.bf16.msra.mxu0 %v4212
    %4216 = vmatprep.subr.bf16.mxu0 0
    %4217 = vmatpush1.bf16.msra.mxu0 0
    %4218 = vmatprep.subr.bf16.mxu0 0
    %4219 = vmatpush1.bf16.msra.mxu0 0
    %4220 = vmatprep.subr.bf16.mxu0 0
    %4221 = vmatpush1.bf16.msra.mxu0 0
    %4222 = vmatprep.subr.bf16.mxu0 0
    %4223 = vmatpush1.bf16.msra.mxu0 0
    %4224 = vmatprep.subr.bf16.mxu0 0
    %4225 = vmatpush1.bf16.msra.mxu0 0
    %4226 = vmatprep.subr.bf16.mxu0 0
    %4227 = vmatpush1.bf16.msra.mxu0 0
    %4228 = vmatprep.subr.bf16.mxu0 0
    %4229 = vmatpush1.bf16.msra.mxu0 0
    %4230 = vmatprep.subr.bf16.mxu0 0
    %4231 = vmatpush1.bf16.msra.mxu0 0
    %4232 = vmatprep.subr.bf16.mxu0 0
    %4233 = vmatpush1.bf16.msra.mxu0 0
    %4234 = vmatprep.subr.bf16.mxu0 0
    %4235 = vmatpush1.bf16.msra.mxu0 0
    %4236 = vmatprep.subr.bf16.mxu0 0
    %4237 = vmatpush1.bf16.msra.mxu0 0
    %4238 = vmatprep.subr.bf16.mxu0 0
    %4239 = vmatpush1.bf16.msra.mxu0 0
    %4240 = vmatprep.subr.bf16.mxu0 0
    %4241 = vmatpush1.bf16.msra.mxu0 0
    %4242 = vmatprep.subr.bf16.mxu0 0
    %4243 = vmatpush1.bf16.msra.mxu0 0
    %4244 = vmatprep.subr.bf16.mxu0 0
    %4245 = vmatpush1.bf16.msra.mxu0 0
    %4246 = vmatprep.mubr.bf16.mxu0 0
    %4247 = vmatmul.mubr.bf16.gmra.mrb[0].mxu0 %v4209
    %v4248 = vpop.f32.mrb[0].mxu0
    %v4249 = vadd.f32 0.0, %v4248
    %v4250 = vpop.f32.mrb[0].mxu0
    %v4251 = vpop.f32.mrb[0].mxu0
    %v4252 = vpop.f32.mrb[0].mxu0
    %4253 = vdwg.mxu0
    %4254 = vrot.lane.b32.xlu0 %v3507, 64
    %v4255 = vpop.permute.xlu0 %4254
    %v4257 = vsel %vm274, %v4011, 0
    %v4260 = vsel %vm781, %v4255, 0
    %4262 = vmatprep.subr.bf16.mxu0 0
    %4263 = vmatpush1.bf16.msra.mxu0 %v4260
    %4264 = vmatprep.subr.bf16.mxu0 0
    %4265 = vmatpush1.bf16.msra.mxu0 0
    %4266 = vmatprep.subr.bf16.mxu0 0
    %4267 = vmatpush1.bf16.msra.mxu0 0
    %4268 = vmatprep.subr.bf16.mxu0 0
    %4269 = vmatpush1.bf16.msra.mxu0 0
    %4270 = vmatprep.subr.bf16.mxu0 0
    %4271 = vmatpush1.bf16.msra.mxu0 0
    %4272 = vmatprep.subr.bf16.mxu0 0
    %4273 = vmatpush1.bf16.msra.mxu0 0
    %4274 = vmatprep.subr.bf16.mxu0 0
    %4275 = vmatpush1.bf16.msra.mxu0 0
    %4276 = vmatprep.subr.bf16.mxu0 0
    %4277 = vmatpush1.bf16.msra.mxu0 0
    %4278 = vmatprep.subr.bf16.mxu0 0
    %4279 = vmatpush1.bf16.msra.mxu0 0
    %4280 = vmatprep.subr.bf16.mxu0 0
    %4281 = vmatpush1.bf16.msra.mxu0 0
    %4282 = vmatprep.subr.bf16.mxu0 0
    %4283 = vmatpush1.bf16.msra.mxu0 0
    %4284 = vmatprep.subr.bf16.mxu0 0
    %4285 = vmatpush1.bf16.msra.mxu0 0
    %4286 = vmatprep.subr.bf16.mxu0 0
    %4287 = vmatpush1.bf16.msra.mxu0 0
    %4288 = vmatprep.subr.bf16.mxu0 0
    %4289 = vmatpush1.bf16.msra.mxu0 0
    %4290 = vmatprep.subr.bf16.mxu0 0
    %4291 = vmatpush1.bf16.msra.mxu0 0
    %4292 = vmatprep.subr.bf16.mxu0 0
    %4293 = vmatpush1.bf16.msra.mxu0 0
    %4294 = vmatprep.mubr.bf16.mxu0 0
    %4295 = vmatmul.mubr.bf16.gmra.mrb[0].mxu0 %v4257
    %v4296 = vpop.f32.mrb[0].mxu0
    %v4297 = vadd.f32 0.0, %v4296
    %v4298 = vpop.f32.mrb[0].mxu0
    %v4299 = vpop.f32.mrb[0].mxu0
    %v4300 = vpop.f32.mrb[0].mxu0
    %4301 = vdwg.mxu0
    %4302 = vrot.lane.b32.xlu0 %v3508, 64
    %v4303 = vpop.permute.xlu0 %4302
    %v4305 = vsel %vm274, %v4012, 0
    %v4308 = vsel %vm781, %v4303, 0
    %4310 = vmatprep.subr.bf16.mxu0 0
    %4311 = vmatpush1.bf16.msra.mxu0 %v4308
    %4312 = vmatprep.subr.bf16.mxu0 0
    %4313 = vmatpush1.bf16.msra.mxu0 0
    %4314 = vmatprep.subr.bf16.mxu0 0
    %4315 = vmatpush1.bf16.msra.mxu0 0
    %4316 = vmatprep.subr.bf16.mxu0 0
    %4317 = vmatpush1.bf16.msra.mxu0 0
    %4318 = vmatprep.subr.bf16.mxu0 0
    %4319 = vmatpush1.bf16.msra.mxu0 0
    %4320 = vmatprep.subr.bf16.mxu0 0
    %4321 = vmatpush1.bf16.msra.mxu0 0
    %4322 = vmatprep.subr.bf16.mxu0 0
    %4323 = vmatpush1.bf16.msra.mxu0 0
    %4324 = vmatprep.subr.bf16.mxu0 0
    %4325 = vmatpush1.bf16.msra.mxu0 0
    %4326 = vmatprep.subr.bf16.mxu0 0
    %4327 = vmatpush1.bf16.msra.mxu0 0
    %4328 = vmatprep.subr.bf16.mxu0 0
    %4329 = vmatpush1.bf16.msra.mxu0 0
    %4330 = vmatprep.subr.bf16.mxu0 0
    %4331 = vmatpush1.bf16.msra.mxu0 0
    %4332 = vmatprep.subr.bf16.mxu0 0
    %4333 = vmatpush1.bf16.msra.mxu0 0
    %4334 = vmatprep.subr.bf16.mxu0 0
    %4335 = vmatpush1.bf16.msra.mxu0 0
    %4336 = vmatprep.subr.bf16.mxu0 0
    %4337 = vmatpush1.bf16.msra.mxu0 0
    %4338 = vmatprep.subr.bf16.mxu0 0
    %4339 = vmatpush1.bf16.msra.mxu0 0
    %4340 = vmatprep.subr.bf16.mxu0 0
    %4341 = vmatpush1.bf16.msra.mxu0 0
    %4342 = vmatprep.mubr.bf16.mxu0 0
    %4343 = vmatmul.mubr.bf16.gmra.mrb[0].mxu0 %v4305
    %v4344 = vpop.f32.mrb[0].mxu0
    %v4345 = vadd.f32 0.0, %v4344
    %v4346 = vpop.f32.mrb[0].mxu0
    %v4347 = vpop.f32.mrb[0].mxu0
    %v4348 = vpop.f32.mrb[0].mxu0
    %4349 = vdwg.mxu0
    %4350 = vrot.lane.b32.xlu0 %v3509, 64
    %v4351 = vpop.permute.xlu0 %4350
    %v4353 = vsel %vm274, %v4013, 0
    %v4356 = vsel %vm781, %v4351, 0
    %4358 = vmatprep.subr.bf16.mxu0 0
    %4359 = vmatpush1.bf16.msra.mxu0 %v4356
    %4360 = vmatprep.subr.bf16.mxu0 0
    %4361 = vmatpush1.bf16.msra.mxu0 0
    %4362 = vmatprep.subr.bf16.mxu0 0
    %4363 = vmatpush1.bf16.msra.mxu0 0
    %4364 = vmatprep.subr.bf16.mxu0 0
    %4365 = vmatpush1.bf16.msra.mxu0 0
    %4366 = vmatprep.subr.bf16.mxu0 0
    %4367 = vmatpush1.bf16.msra.mxu0 0
    %4368 = vmatprep.subr.bf16.mxu0 0
    %4369 = vmatpush1.bf16.msra.mxu0 0
    %4370 = vmatprep.subr.bf16.mxu0 0
    %4371 = vmatpush1.bf16.msra.mxu0 0
    %4372 = vmatprep.subr.bf16.mxu0 0
    %4373 = vmatpush1.bf16.msra.mxu0 0
    %4374 = vmatprep.subr.bf16.mxu0 0
    %4375 = vmatpush1.bf16.msra.mxu0 0
    %4376 = vmatprep.subr.bf16.mxu0 0
    %4377 = vmatpush1.bf16.msra.mxu0 0
    %4378 = vmatprep.subr.bf16.mxu0 0
    %4379 = vmatpush1.bf16.msra.mxu0 0
    %4380 = vmatprep.subr.bf16.mxu0 0
    %4381 = vmatpush1.bf16.msra.mxu0 0
    %4382 = vmatprep.subr.bf16.mxu0 0
    %4383 = vmatpush1.bf16.msra.mxu0 0
    %4384 = vmatprep.subr.bf16.mxu0 0
    %4385 = vmatpush1.bf16.msra.mxu0 0
    %4386 = vmatprep.subr.bf16.mxu0 0
    %4387 = vmatpush1.bf16.msra.mxu0 0
    %4388 = vmatprep.subr.bf16.mxu0 0
    %4389 = vmatpush1.bf16.msra.mxu0 0
    %4390 = vmatprep.mubr.bf16.mxu0 0
    %4391 = vmatmul.mubr.bf16.gmra.mrb[0].mxu0 %v4353
    %v4392 = vpop.f32.mrb[0].mxu0
    %v4393 = vadd.f32 0.0, %v4392
    %v4394 = vpop.f32.mrb[0].mxu0
    %v4395 = vpop.f32.mrb[0].mxu0
    %v4396 = vpop.f32.mrb[0].mxu0
    %4397 = vdwg.mxu0
    %4400 = vrot.lane.b32.xlu0 %v4153, 8
    %v4401 = vpop.permute.xlu0 %4400
    %4402 = vrot.lane.b32.xlu0 %v4201, 8
    %v4403 = vpop.permute.xlu0 %4402
    %4408 = vrot.lane.b32.xlu0 %v4249, 16
    %v4409 = vpop.permute.xlu0 %4408
    %4410 = vrot.lane.b32.xlu0 %v4297, 16
    %v4411 = vpop.permute.xlu0 %4410
    %4416 = vrot.lane.b32.xlu0 %v4345, 24
    %v4417 = vpop.permute.xlu0 %4416
    %4418 = vrot.lane.b32.xlu0 %v4393, 24
    %v4419 = vpop.permute.xlu0 %4418
    %v4422 = vsel %vm274, %v4057, %v4401
    %v4423 = vsel %vm274, %v4105, %v4403
    %v4424 = vsel %vm1187, %v4422, %v4409
    %v4425 = vsel %vm1187, %v4423, %v4411
    %v4426 = vsel %vm1190, %v4424, %v4417
    %v4427 = vsel %vm1190, %v4425, %v4419
    %v4428 = vpack.c.bf16 %v4427, %v4426
    %s4429 = scalar_lea.vmem %s6, 16
    %v4430 = vld [vmem:[%s4429] sm:$0xf]
    %v4431 = vld [vmem:[%s4429 + $0x4] sm:$0xf]
    %v4432 = vld [vmem:[%s4429 + $0x8] sm:$0xf]
    %v4433 = vld [vmem:[%s4429 + $0xc] sm:$0xf]
    %v4438 = vunpack.c.l.b16 %v4430
    %v4439 = vunpack.c.l.b16 %v4431
    %v4440 = vunpack.c.l.b16 %v4432
    %v4441 = vunpack.c.l.b16 %v4433
    %v4442 = vpack.c.b16 %v4439, %v4438
    %v4443 = vpack.c.b16 %v4441, %v4440
    %v4447 = vsel %vm123, %v4428, 0
    %4449 = vmatprep.subr.bf16.mxu0 0
    %4450 = vmatpush1.bf16.msra.mxu0 %v4442
    %4451 = vmatprep.subr.bf16.mxu0 0
    %4452 = vmatpush1.bf16.msra.mxu0 %v4443
    %4453 = vmatprep.subr.bf16.mxu0 0
    %4454 = vmatpush1.bf16.msra.mxu0 0
    %4455 = vmatprep.subr.bf16.mxu0 0
    %4456 = vmatpush1.bf16.msra.mxu0 0
    %4457 = vmatprep.subr.bf16.mxu0 0
    %4458 = vmatpush1.bf16.msra.mxu0 0
    %4459 = vmatprep.subr.bf16.mxu0 0
    %4460 = vmatpush1.bf16.msra.mxu0 0
    %4461 = vmatprep.subr.bf16.mxu0 0
    %4462 = vmatpush1.bf16.msra.mxu0 0
    %4463 = vmatprep.subr.bf16.mxu0 0
    %4464 = vmatpush1.bf16.msra.mxu0 0
    %4465 = vmatprep.subr.bf16.mxu0 0
    %4466 = vmatpush1.bf16.msra.mxu0 0
    %4467 = vmatprep.subr.bf16.mxu0 0
    %4468 = vmatpush1.bf16.msra.mxu0 0
    %4469 = vmatprep.subr.bf16.mxu0 0
    %4470 = vmatpush1.bf16.msra.mxu0 0
    %4471 = vmatprep.subr.bf16.mxu0 0
    %4472 = vmatpush1.bf16.msra.mxu0 0
    %4473 = vmatprep.subr.bf16.mxu0 0
    %4474 = vmatpush1.bf16.msra.mxu0 0
    %4475 = vmatprep.subr.bf16.mxu0 0
    %4476 = vmatpush1.bf16.msra.mxu0 0
    %4477 = vmatprep.subr.bf16.mxu0 0
    %4478 = vmatpush1.bf16.msra.mxu0 0
    %4479 = vmatprep.subr.bf16.mxu0 0
    %4480 = vmatpush1.bf16.msra.mxu0 0
    %4481 = vmatprep.mubr.bf16.mxu0 0
    %4482 = vmatmul.mubr.bf16.gmra.mrb[0].mxu0 %v4447
    %v4483 = vpop.f32.mrb[0].mxu0
    %v4484 = vadd.f32 0.0, %v4483
    %v4485 = vpop.f32.mrb[0].mxu0
    %v4486 = vpop.f32.mrb[0].mxu0
    %v4487 = vadd.f32 0.0, %v4486
    %v4488 = vpop.f32.mrb[0].mxu0
    %4489 = vdwg.mxu0
    %v4490 = vadd.f32 %v3357, %v4484
    %v4491 = vadd.f32 %v3358, %v4487
    %v4492 = vld [vmem:[%s7 + $0x1] sm:$0x1]
    %v4493 = vlaneseq
    %v4494 = vshrl.u32 %v4493, 7
    %v4495 = vsub.s32 0, %v4494
    %v4496 = vrot.slane %v4492, %v4495
    %v4497 = vadd.f32 %v4490, %v4496
    %v4498 = vadd.f32 %v4491, %v4496
    %v4499 = vsel %vm123, %v4497, 0.0
    %4500 = vadd.xlane.f32.xlu0 %v4499
    %v4501 = vpop.xlane.xlu0 %4500
    %v4502 = vsel %vm123, %v4498, 0.0
    %4503 = vadd.xlane.f32.xlu0 %v4502
    %v4504 = vpop.xlane.xlu0 %4503
    %v4505 = vmul.f32 %v4501, %v130
    %v4506 = vmul.f32 %v4504, %v130
    %v4507 = vsub.f32 %v4497, %v4505
    %v4508 = vsub.f32 %v4498, %v4506
    %v4509 = vmul.f32 %v4507, %v4507
    %v4510 = vmul.f32 %v4508, %v4508
    %v4511 = vsel %vm123, %v4509, 0.0
    %4512 = vadd.xlane.f32.xlu0 %v4511
    %v4513 = vpop.xlane.xlu0 %4512
    %v4514 = vsel %vm123, %v4510, 0.0
    %4515 = vadd.xlane.f32.xlu0 %v4514
    %v4516 = vpop.xlane.xlu0 %4515
    %v4517 = vmul.f32 %v4513, 0.032258064
    %v4518 = vmul.f32 %v4516, 0.032258064
    %v4519 = vrsqrt.pop %v4517
    %v4520 = vmul.f32 %v4517, %v4519
    %vm4521 = vcmp.eq.f32.partialorder %v4517, inf
    %v4522 = vsel %vm4521, %v4517, %v4520
    %vm4523 = vcmp.eq.f32.partialorder %v4517, 0.0
    %v4524 = vand.u32 %v4517, 2147483648
    %v4525 = vsel %vm4523, %v4524, %v4522
    %v4526 = vrsqrt.pop %v4518
    %v4527 = vmul.f32 %v4518, %v4526
    %vm4528 = vcmp.eq.f32.partialorder %v4518, inf
    %v4529 = vsel %vm4528, %v4518, %v4527
    %vm4530 = vcmp.eq.f32.partialorder %v4518, 0.0
    %v4531 = vand.u32 %v4518, 2147483648
    %v4532 = vsel %vm4530, %v4531, %v4529
    %v4533 = vadd.f32 %v4525, 1e-06
    %v4534 = vadd.f32 %v4532, 1e-06
    %v4535 = vrcp.pop %v4533
    %v4536 = vmul.f32 %v4507, %v4535
    %v4537 = vrcp.pop %v4534
    %v4538 = vmul.f32 %v4508, %v4537
    %v4539 = vlaneseq
    %v4540 = vshrl.u32 %v4539, 7
    %v4541 = vsub.s32 1, %v4540
    %v4542 = vrot.slane %v3360, %v4541
    %v4543 = vmul.f32 %v4542, %v4536
    %v4544 = vmul.f32 %v4542, %v4538
    %v4545 = vlaneseq
    %v4546 = vshrl.u32 %v4545, 7
    %v4547 = vsub.s32 1, %v4546
    %v4548 = vrot.slane %v3362, %v4547
    %v4549 = vadd.f32 %v4543, %v4548
    %v4550 = vadd.f32 %v4544, %v4548
    %v4551 = vpack.c.bf16 %v4550, %v4549
    %s4552 = scalar_lea.vmem %s8, 256
    %v4553 = vld [vmem:[%s4552] sm:$0xff]
    %v4554 = vld [vmem:[%s4552 + $0x8] sm:$0xff]
    %v4555 = vld [vmem:[%s4552 + $0x40] sm:$0xff]
    %v4556 = vld [vmem:[%s4552 + $0x48] sm:$0xff]
    %v4557 = vld [vmem:[%s4552 + $0x80] sm:$0xff]
    %v4558 = vld [vmem:[%s4552 + $0x88] sm:$0xff]
    %v4559 = vld [vmem:[%s4552 + $0xc0] sm:$0xff]
    %v4560 = vld [vmem:[%s4552 + $0xc8] sm:$0xff]
    %s4561 = scalar_lea.vmem %s9, 1
    %v4562 = vld [vmem:[%s4561] ss:$2 sm:$0xf]
    %v4564 = vlaneseq
    %v4565 = vshrl.u32 %v4564, 7
    %v4566 = vsub.s32 0, %v4565
    %v4567 = vrot.slane %v4562, %v4566
    %v4568 = vlaneseq
    %v4569 = vshrl.u32 %v4568, 7
    %v4570 = vsub.s32 1, %v4569
    %v4571 = vrot.slane %v4562, %v4570
    %v4572 = vlaneseq
    %v4573 = vshrl.u32 %v4572, 7
    %v4574 = vsub.s32 2, %v4573
    %v4575 = vrot.slane %v4562, %v4574
    %v4576 = vlaneseq
    %v4577 = vshrl.u32 %v4576, 7
    %v4578 = vsub.s32 3, %v4577
    %v4579 = vrot.slane %v4562, %v4578
    %v4592 = vunpack.c.l.b16 %v4553
    %v4593 = vunpack.c.h.b16 %v4553
    %v4594 = vunpack.c.l.b16 %v4554
    %v4595 = vunpack.c.h.b16 %v4554
    %v4596 = vunpack.c.l.b16 %v4555
    %v4597 = vunpack.c.h.b16 %v4555
    %v4598 = vunpack.c.l.b16 %v4556
    %v4599 = vunpack.c.h.b16 %v4556
    %v4600 = vunpack.c.l.b16 %v4557
    %v4601 = vunpack.c.h.b16 %v4557
    %v4602 = vunpack.c.l.b16 %v4558
    %v4603 = vunpack.c.h.b16 %v4558
    %v4604 = vunpack.c.l.b16 %v4559
    %v4605 = vunpack.c.h.b16 %v4559
    %v4606 = vunpack.c.l.b16 %v4560
    %v4607 = vunpack.c.h.b16 %v4560
    %v4608 = vpack.c.b16 %v4596, %v4592
    %v4609 = vpack.c.b16 %v4597, %v4593
    %v4610 = vpack.c.b16 %v4598, %v4594
    %v4611 = vpack.c.b16 %v4599, %v4595
    %v4612 = vpack.c.b16 %v4604, %v4600
    %v4613 = vpack.c.b16 %v4605, %v4601
    %v4614 = vpack.c.b16 %v4606, %v4602
    %v4615 = vpack.c.b16 %v4607, %v4603
    %v4625 = vsel %vm123, %v4551, 0
    %4627 = vmatprep.subr.bf16.mxu0 %v4609
    %4628 = vmatpush1.bf16.msra.mxu0 %v4608
    %4629 = vmatprep.subr.bf16.mxu0 %v4613
    %4630 = vmatpush1.bf16.msra.mxu0 %v4612
    %4631 = vmatprep.subr.bf16.mxu0 0
    %4632 = vmatpush1.bf16.msra.mxu0 0
    %4633 = vmatprep.subr.bf16.mxu0 0
    %4634 = vmatpush1.bf16.msra.mxu0 0
    %4635 = vmatprep.subr.bf16.mxu0 0
    %4636 = vmatpush1.bf16.msra.mxu0 0
    %4637 = vmatprep.subr.bf16.mxu0 0
    %4638 = vmatpush1.bf16.msra.mxu0 0
    %4639 = vmatprep.subr.bf16.mxu0 0
    %4640 = vmatpush1.bf16.msra.mxu0 0
    %4641 = vmatprep.subr.bf16.mxu0 0
    %4642 = vmatpush1.bf16.msra.mxu0 0
    %4643 = vmatprep.subr.bf16.mxu0 0
    %4644 = vmatpush1.bf16.msra.mxu0 0
    %4645 = vmatprep.subr.bf16.mxu0 0
    %4646 = vmatpush1.bf16.msra.mxu0 0
    %4647 = vmatprep.subr.bf16.mxu0 0
    %4648 = vmatpush1.bf16.msra.mxu0 0
    %4649 = vmatprep.subr.bf16.mxu0 0
    %4650 = vmatpush1.bf16.msra.mxu0 0
    %4651 = vmatprep.subr.bf16.mxu0 0
    %4652 = vmatpush1.bf16.msra.mxu0 0
    %4653 = vmatprep.subr.bf16.mxu0 0
    %4654 = vmatpush1.bf16.msra.mxu0 0
    %4655 = vmatprep.subr.bf16.mxu0 0
    %4656 = vmatpush1.bf16.msra.mxu0 0
    %4657 = vmatprep.subr.bf16.mxu0 0
    %4658 = vmatpush1.bf16.msra.mxu0 0
    %4659 = vmatprep.mubr.bf16.mxu0 0
    %4660 = vmatmul.mubr.bf16.gmra.mrb[0].mxu0 %v4625
    %v4661 = vpop.f32.mrb[0].mxu0
    %v4662 = vadd.f32 %v4567, %v4661
    %v4663 = vpop.f32.mrb[0].mxu0
    %v4664 = vadd.f32 %v4571, %v4663
    %v4665 = vpop.f32.mrb[0].mxu0
    %v4666 = vadd.f32 %v4567, %v4665
    %v4667 = vpop.f32.mrb[0].mxu0
    %v4668 = vadd.f32 %v4571, %v4667
    %4669 = vdwg.mxu0
    %4670 = vmatprep.subr.bf16.mxu0 %v4611
    %4671 = vmatpush1.bf16.msra.mxu0 %v4610
    %4672 = vmatprep.subr.bf16.mxu0 %v4615
    %4673 = vmatpush1.bf16.msra.mxu0 %v4614
    %4674 = vmatprep.subr.bf16.mxu0 0
    %4675 = vmatpush1.bf16.msra.mxu0 0
    %4676 = vmatprep.subr.bf16.mxu0 0
    %4677 = vmatpush1.bf16.msra.mxu0 0
    %4678 = vmatprep.subr.bf16.mxu0 0
    %4679 = vmatpush1.bf16.msra.mxu0 0
    %4680 = vmatprep.subr.bf16.mxu0 0
    %4681 = vmatpush1.bf16.msra.mxu0 0
    %4682 = vmatprep.subr.bf16.mxu0 0
    %4683 = vmatpush1.bf16.msra.mxu0 0
    %4684 = vmatprep.subr.bf16.mxu0 0
    %4685 = vmatpush1.bf16.msra.mxu0 0
    %4686 = vmatprep.subr.bf16.mxu0 0
    %4687 = vmatpush1.bf16.msra.mxu0 0
    %4688 = vmatprep.subr.bf16.mxu0 0
    %4689 = vmatpush1.bf16.msra.mxu0 0
    %4690 = vmatprep.subr.bf16.mxu0 0
    %4691 = vmatpush1.bf16.msra.mxu0 0
    %4692 = vmatprep.subr.bf16.mxu0 0
    %4693 = vmatpush1.bf16.msra.mxu0 0
    %4694 = vmatprep.subr.bf16.mxu0 0
    %4695 = vmatpush1.bf16.msra.mxu0 0
    %4696 = vmatprep.subr.bf16.mxu0 0
    %4697 = vmatpush1.bf16.msra.mxu0 0
    %4698 = vmatprep.subr.bf16.mxu0 0
    %4699 = vmatpush1.bf16.msra.mxu0 0
    %4700 = vmatprep.subr.bf16.mxu0 0
    %4701 = vmatpush1.bf16.msra.mxu0 0
    %4702 = vmatprep.mubr.bf16.mxu0 0
    %4703 = vmatmul.mubr.bf16.gmra.mrb[0].mxu0 %v4625
    %v4704 = vpop.f32.mrb[0].mxu0
    %v4705 = vadd.f32 %v4575, %v4704
    %v4706 = vpop.f32.mrb[0].mxu0
    %v4707 = vadd.f32 %v4579, %v4706
    %v4708 = vpop.f32.mrb[0].mxu0
    %v4709 = vadd.f32 %v4575, %v4708
    %v4710 = vpop.f32.mrb[0].mxu0
    %v4711 = vadd.f32 %v4579, %v4710
    %4712 = vdwg.mxu0
    %v4713 = vmax.f32 %v4662, 0.0
    %v4714 = vmax.f32 %v4664, 0.0
    %v4715 = vmax.f32 %v4705, 0.0
    %v4716 = vmax.f32 %v4707, 0.0
    %v4717 = vmax.f32 %v4666, 0.0
    %v4718 = vmax.f32 %v4668, 0.0
    %v4719 = vmax.f32 %v4709, 0.0
    %v4720 = vmax.f32 %v4711, 0.0
    %v4721 = vpack.c.bf16 %v4717, %v4713
    %v4722 = vpack.c.bf16 %v4718, %v4714
    %v4723 = vpack.c.bf16 %v4719, %v4715
    %v4724 = vpack.c.bf16 %v4720, %v4716
    %s4725 = scalar_lea.vmem [#allocation2], 1024
    %v4726 = vld [vmem:[%s4725] sm:$0xf]
    %v4727 = vld [vmem:[%s4725 + $0x4] sm:$0xf]
    %v4728 = vld [vmem:[%s4725 + $0x8] sm:$0xf]
    %v4729 = vld [vmem:[%s4725 + $0xc] sm:$0xf]
    %v4730 = vld [vmem:[%s4725 + $0x10] sm:$0xf]
    %v4731 = vld [vmem:[%s4725 + $0x14] sm:$0xf]
    %v4732 = vld [vmem:[%s4725 + $0x18] sm:$0xf]
    %v4733 = vld [vmem:[%s4725 + $0x1c] sm:$0xf]
    %v4734 = vld [vmem:[%s4725 + $0x20] sm:$0xf]
    %v4735 = vld [vmem:[%s4725 + $0x24] sm:$0xf]
    %v4736 = vld [vmem:[%s4725 + $0x28] sm:$0xf]
    %v4737 = vld [vmem:[%s4725 + $0x2c] sm:$0xf]
    %v4738 = vld [vmem:[%s4725 + $0x30] sm:$0xf]
    %v4739 = vld [vmem:[%s4725 + $0x34] sm:$0xf]
    %v4740 = vld [vmem:[%s4725 + $0x38] sm:$0xf]
    %v4741 = vld [vmem:[%s4725 + $0x3c] sm:$0xf]
    %v4742 = vld [vmem:[%s4725 + $0x40] sm:$0xf]
    %v4743 = vld [vmem:[%s4725 + $0x44] sm:$0xf]
    %v4744 = vld [vmem:[%s4725 + $0x48] sm:$0xf]
    %v4745 = vld [vmem:[%s4725 + $0x4c] sm:$0xf]
    %v4746 = vld [vmem:[%s4725 + $0x50] sm:$0xf]
    %v4747 = vld [vmem:[%s4725 + $0x54] sm:$0xf]
    %v4748 = vld [vmem:[%s4725 + $0x58] sm:$0xf]
    %v4749 = vld [vmem:[%s4725 + $0x5c] sm:$0xf]
    %v4750 = vld [vmem:[%s4725 + $0x60] sm:$0xf]
    %v4751 = vld [vmem:[%s4725 + $0x64] sm:$0xf]
    %v4752 = vld [vmem:[%s4725 + $0x68] sm:$0xf]
    %v4753 = vld [vmem:[%s4725 + $0x6c] sm:$0xf]
    %v4754 = vld [vmem:[%s4725 + $0x70] sm:$0xf]
    %v4755 = vld [vmem:[%s4725 + $0x74] sm:$0xf]
    %v4756 = vld [vmem:[%s4725 + $0x78] sm:$0xf]
    %v4757 = vld [vmem:[%s4725 + $0x7c] sm:$0xf]
    %v4758 = vld [vmem:[%s4725 + $0x80] sm:$0xf]
    %v4759 = vld [vmem:[%s4725 + $0x84] sm:$0xf]
    %v4760 = vld [vmem:[%s4725 + $0x88] sm:$0xf]
    %v4761 = vld [vmem:[%s4725 + $0x8c] sm:$0xf]
    %v4762 = vld [vmem:[%s4725 + $0x90] sm:$0xf]
    %v4763 = vld [vmem:[%s4725 + $0x94] sm:$0xf]
    %v4764 = vld [vmem:[%s4725 + $0x98] sm:$0xf]
    %v4765 = vld [vmem:[%s4725 + $0x9c] sm:$0xf]
    %v4766 = vld [vmem:[%s4725 + $0xa0] sm:$0xf]
    %v4767 = vld [vmem:[%s4725 + $0xa4] sm:$0xf]
    %v4768 = vld [vmem:[%s4725 + $0xa8] sm:$0xf]
    %v4769 = vld [vmem:[%s4725 + $0xac] sm:$0xf]
    %v4770 = vld [vmem:[%s4725 + $0xb0] sm:$0xf]
    %v4771 = vld [vmem:[%s4725 + $0xb4] sm:$0xf]
    %v4772 = vld [vmem:[%s4725 + $0xb8] sm:$0xf]
    %v4773 = vld [vmem:[%s4725 + $0xbc] sm:$0xf]
    %v4774 = vld [vmem:[%s4725 + $0xc0] sm:$0xf]
    %v4775 = vld [vmem:[%s4725 + $0xc4] sm:$0xf]
    %v4776 = vld [vmem:[%s4725 + $0xc8] sm:$0xf]
    %v4777 = vld [vmem:[%s4725 + $0xcc] sm:$0xf]
    %v4778 = vld [vmem:[%s4725 + $0xd0] sm:$0xf]
    %v4779 = vld [vmem:[%s4725 + $0xd4] sm:$0xf]
    %v4780 = vld [vmem:[%s4725 + $0xd8] sm:$0xf]
    %v4781 = vld [vmem:[%s4725 + $0xdc] sm:$0xf]
    %v4782 = vld [vmem:[%s4725 + $0xe0] sm:$0xf]
    %v4783 = vld [vmem:[%s4725 + $0xe4] sm:$0xf]
    %v4784 = vld [vmem:[%s4725 + $0xe8] sm:$0xf]
    %v4785 = vld [vmem:[%s4725 + $0xec] sm:$0xf]
    %v4786 = vld [vmem:[%s4725 + $0xf0] sm:$0xf]
    %v4787 = vld [vmem:[%s4725 + $0xf4] sm:$0xf]
    %v4788 = vld [vmem:[%s4725 + $0xf8] sm:$0xf]
    %v4789 = vld [vmem:[%s4725 + $0xfc] sm:$0xf]
    %v4790 = vld [vmem:[%s4552 + $0x10] sm:$0xff]
    %v4791 = vld [vmem:[%s4552 + $0x18] sm:$0xff]
    %v4792 = vld [vmem:[%s4552 + $0x50] sm:$0xff]
    %v4793 = vld [vmem:[%s4552 + $0x58] sm:$0xff]
    %v4794 = vld [vmem:[%s4552 + $0x90] sm:$0xff]
    %v4795 = vld [vmem:[%s4552 + $0x98] sm:$0xff]
    %v4796 = vld [vmem:[%s4552 + $0xd0] sm:$0xff]
    %v4797 = vld [vmem:[%s4552 + $0xd8] sm:$0xff]
    %s4798 = scalar_lea.vmem %s9, 9
    %v4799 = vld [vmem:[%s4798] ss:$2 sm:$0xf]
    %v4801 = vlaneseq
    %v4802 = vshrl.u32 %v4801, 7
    %v4803 = vsub.s32 0, %v4802
    %v4804 = vrot.slane %v4799, %v4803
    %v4805 = vlaneseq
    %v4806 = vshrl.u32 %v4805, 7
    %v4807 = vsub.s32 1, %v4806
    %v4808 = vrot.slane %v4799, %v4807
    %v4809 = vlaneseq
    %v4810 = vshrl.u32 %v4809, 7
    %v4811 = vsub.s32 2, %v4810
    %v4812 = vrot.slane %v4799, %v4811
    %v4813 = vlaneseq
    %v4814 = vshrl.u32 %v4813, 7
    %v4815 = vsub.s32 3, %v4814
    %v4816 = vrot.slane %v4799, %v4815
    %v4829 = vunpack.c.l.b16 %v4790
    %v4830 = vunpack.c.h.b16 %v4790
    %v4831 = vunpack.c.l.b16 %v4791
    %v4832 = vunpack.c.h.b16 %v4791
    %v4833 = vunpack.c.l.b16 %v4792
    %v4834 = vunpack.c.h.b16 %v4792
    %v4835 = vunpack.c.l.b16 %v4793
    %v4836 = vunpack.c.h.b16 %v4793
    %v4837 = vunpack.c.l.b16 %v4794
    %v4838 = vunpack.c.h.b16 %v4794
    %v4839 = vunpack.c.l.b16 %v4795
    %v4840 = vunpack.c.h.b16 %v4795
    %v4841 = vunpack.c.l.b16 %v4796
    %v4842 = vunpack.c.h.b16 %v4796
    %v4843 = vunpack.c.l.b16 %v4797
    %v4844 = vunpack.c.h.b16 %v4797
    %v4845 = vpack.c.b16 %v4833, %v4829
    %v4846 = vpack.c.b16 %v4834, %v4830
    %v4847 = vpack.c.b16 %v4835, %v4831
    %v4848 = vpack.c.b16 %v4836, %v4832
    %v4849 = vpack.c.b16 %v4841, %v4837
    %v4850 = vpack.c.b16 %v4842, %v4838
    %v4851 = vpack.c.b16 %v4843, %v4839
    %v4852 = vpack.c.b16 %v4844, %v4840
    %4861 = vmatprep.subr.bf16.mxu0 %v4846
    %4862 = vmatpush1.bf16.msra.mxu0 %v4845
    %4863 = vmatprep.subr.bf16.mxu0 %v4850
    %4864 = vmatpush1.bf16.msra.mxu0 %v4849
    %4865 = vmatprep.subr.bf16.mxu0 0
    %4866 = vmatpush1.bf16.msra.mxu0 0
    %4867 = vmatprep.subr.bf16.mxu0 0
    %4868 = vmatpush1.bf16.msra.mxu0 0
    %4869 = vmatprep.subr.bf16.mxu0 0
    %4870 = vmatpush1.bf16.msra.mxu0 0
    %4871 = vmatprep.subr.bf16.mxu0 0
    %4872 = vmatpush1.bf16.msra.mxu0 0
    %4873 = vmatprep.subr.bf16.mxu0 0
    %4874 = vmatpush1.bf16.msra.mxu0 0
    %4875 = vmatprep.subr.bf16.mxu0 0
    %4876 = vmatpush1.bf16.msra.mxu0 0
    %4877 = vmatprep.subr.bf16.mxu0 0
    %4878 = vmatpush1.bf16.msra.mxu0 0
    %4879 = vmatprep.subr.bf16.mxu0 0
    %4880 = vmatpush1.bf16.msra.mxu0 0
    %4881 = vmatprep.subr.bf16.mxu0 0
    %4882 = vmatpush1.bf16.msra.mxu0 0
    %4883 = vmatprep.subr.bf16.mxu0 0
    %4884 = vmatpush1.bf16.msra.mxu0 0
    %4885 = vmatprep.subr.bf16.mxu0 0
    %4886 = vmatpush1.bf16.msra.mxu0 0
    %4887 = vmatprep.subr.bf16.mxu0 0
    %4888 = vmatpush1.bf16.msra.mxu0 0
    %4889 = vmatprep.subr.bf16.mxu0 0
    %4890 = vmatpush1.bf16.msra.mxu0 0
    %4891 = vmatprep.subr.bf16.mxu0 0
    %4892 = vmatpush1.bf16.msra.mxu0 0
    %4893 = vmatprep.mubr.bf16.mxu0 0
    %4894 = vmatmul.mubr.bf16.gmra.mrb[0].mxu0 %v4625
    %v4895 = vpop.f32.mrb[0].mxu0
    %v4896 = vadd.f32 %v4804, %v4895
    %v4897 = vpop.f32.mrb[0].mxu0
    %v4898 = vadd.f32 %v4808, %v4897
    %v4899 = vpop.f32.mrb[0].mxu0
    %v4900 = vadd.f32 %v4804, %v4899
    %v4901 = vpop.f32.mrb[0].mxu0
    %v4902 = vadd.f32 %v4808, %v4901
    %4903 = vdwg.mxu0
    %4904 = vmatprep.subr.bf16.mxu0 %v4848
    %4905 = vmatpush1.bf16.msra.mxu0 %v4847
    %4906 = vmatprep.subr.bf16.mxu0 %v4852
    %4907 = vmatpush1.bf16.msra.mxu0 %v4851
    %4908 = vmatprep.subr.bf16.mxu0 0
    %4909 = vmatpush1.bf16.msra.mxu0 0
    %4910 = vmatprep.subr.bf16.mxu0 0
    %4911 = vmatpush1.bf16.msra.mxu0 0
    %4912 = vmatprep.subr.bf16.mxu0 0
    %4913 = vmatpush1.bf16.msra.mxu0 0
    %4914 = vmatprep.subr.bf16.mxu0 0
    %4915 = vmatpush1.bf16.msra.mxu0 0
    %4916 = vmatprep.subr.bf16.mxu0 0
    %4917 = vmatpush1.bf16.msra.mxu0 0
    %4918 = vmatprep.subr.bf16.mxu0 0
    %4919 = vmatpush1.bf16.msra.mxu0 0
    %4920 = vmatprep.subr.bf16.mxu0 0
    %4921 = vmatpush1.bf16.msra.mxu0 0
    %4922 = vmatprep.subr.bf16.mxu0 0
    %4923 = vmatpush1.bf16.msra.mxu0 0
    %4924 = vmatprep.subr.bf16.mxu0 0
    %4925 = vmatpush1.bf16.msra.mxu0 0
    %4926 = vmatprep.subr.bf16.mxu0 0
    %4927 = vmatpush1.bf16.msra.mxu0 0
    %4928 = vmatprep.subr.bf16.mxu0 0
    %4929 = vmatpush1.bf16.msra.mxu0 0
    %4930 = vmatprep.subr.bf16.mxu0 0
    %4931 = vmatpush1.bf16.msra.mxu0 0
    %4932 = vmatprep.subr.bf16.mxu0 0
    %4933 = vmatpush1.bf16.msra.mxu0 0
    %4934 = vmatprep.subr.bf16.mxu0 0
    %4935 = vmatpush1.bf16.msra.mxu0 0
    %4936 = vmatprep.mubr.bf16.mxu0 0
    %4937 = vmatmul.mubr.bf16.gmra.mrb[0].mxu0 %v4625
    %v4938 = vpop.f32.mrb[0].mxu0
    %v4939 = vadd.f32 %v4812, %v4938
    %v4940 = vpop.f32.mrb[0].mxu0
    %v4941 = vadd.f32 %v4816, %v4940
    %v4942 = vpop.f32.mrb[0].mxu0
    %v4943 = vadd.f32 %v4812, %v4942
    %v4944 = vpop.f32.mrb[0].mxu0
    %v4945 = vadd.f32 %v4816, %v4944
    %4946 = vdwg.mxu0
    %v4947 = vmax.f32 %v4896, 0.0
    %v4948 = vmax.f32 %v4898, 0.0
    %v4949 = vmax.f32 %v4939, 0.0
    %v4950 = vmax.f32 %v4941, 0.0
    %v4951 = vmax.f32 %v4900, 0.0
    %v4952 = vmax.f32 %v4902, 0.0
    %v4953 = vmax.f32 %v4943, 0.0
    %v4954 = vmax.f32 %v4945, 0.0
    %v4955 = vpack.c.bf16 %v4951, %v4947
    %v4956 = vpack.c.bf16 %v4952, %v4948
    %v4957 = vpack.c.bf16 %v4953, %v4949
    %v4958 = vpack.c.bf16 %v4954, %v4950
    %v4959 = vld [vmem:[%s4725 + $0x100] sm:$0xf]
    %v4960 = vld [vmem:[%s4725 + $0x104] sm:$0xf]
    %v4961 = vld [vmem:[%s4725 + $0x108] sm:$0xf]
    %v4962 = vld [vmem:[%s4725 + $0x10c] sm:$0xf]
    %v4963 = vld [vmem:[%s4725 + $0x110] sm:$0xf]
    %v4964 = vld [vmem:[%s4725 + $0x114] sm:$0xf]
    %v4965 = vld [vmem:[%s4725 + $0x118] sm:$0xf]
    %v4966 = vld [vmem:[%s4725 + $0x11c] sm:$0xf]
    %v4967 = vld [vmem:[%s4725 + $0x120] sm:$0xf]
    %v4968 = vld [vmem:[%s4725 + $0x124] sm:$0xf]
    %v4969 = vld [vmem:[%s4725 + $0x128] sm:$0xf]
    %v4970 = vld [vmem:[%s4725 + $0x12c] sm:$0xf]
    %v4971 = vld [vmem:[%s4725 + $0x130] sm:$0xf]
    %v4972 = vld [vmem:[%s4725 + $0x134] sm:$0xf]
    %v4973 = vld [vmem:[%s4725 + $0x138] sm:$0xf]
    %v4974 = vld [vmem:[%s4725 + $0x13c] sm:$0xf]
    %v4975 = vld [vmem:[%s4725 + $0x140] sm:$0xf]
    %v4976 = vld [vmem:[%s4725 + $0x144] sm:$0xf]
    %v4977 = vld [vmem:[%s4725 + $0x148] sm:$0xf]
    %v4978 = vld [vmem:[%s4725 + $0x14c] sm:$0xf]
    %v4979 = vld [vmem:[%s4725 + $0x150] sm:$0xf]
    %v4980 = vld [vmem:[%s4725 + $0x154] sm:$0xf]
    %v4981 = vld [vmem:[%s4725 + $0x158] sm:$0xf]
    %v4982 = vld [vmem:[%s4725 + $0x15c] sm:$0xf]
    %v4983 = vld [vmem:[%s4725 + $0x160] sm:$0xf]
    %v4984 = vld [vmem:[%s4725 + $0x164] sm:$0xf]
    %v4985 = vld [vmem:[%s4725 + $0x168] sm:$0xf]
    %v4986 = vld [vmem:[%s4725 + $0x16c] sm:$0xf]
    %v4987 = vld [vmem:[%s4725 + $0x170] sm:$0xf]
    %v4988 = vld [vmem:[%s4725 + $0x174] sm:$0xf]
    %v4989 = vld [vmem:[%s4725 + $0x178] sm:$0xf]
    %v4990 = vld [vmem:[%s4725 + $0x17c] sm:$0xf]
    %v4991 = vld [vmem:[%s4725 + $0x180] sm:$0xf]
    %v4992 = vld [vmem:[%s4725 + $0x184] sm:$0xf]
    %v4993 = vld [vmem:[%s4725 + $0x188] sm:$0xf]
    %v4994 = vld [vmem:[%s4725 + $0x18c] sm:$0xf]
    %v4995 = vld [vmem:[%s4725 + $0x190] sm:$0xf]
    %v4996 = vld [vmem:[%s4725 + $0x194] sm:$0xf]
    %v4997 = vld [vmem:[%s4725 + $0x198] sm:$0xf]
    %v4998 = vld [vmem:[%s4725 + $0x19c] sm:$0xf]
    %v4999 = vld [vmem:[%s4725 + $0x1a0] sm:$0xf]
    %v5000 = vld [vmem:[%s4725 + $0x1a4] sm:$0xf]
    %v5001 = vld [vmem:[%s4725 + $0x1a8] sm:$0xf]
    %v5002 = vld [vmem:[%s4725 + $0x1ac] sm:$0xf]
    %v5003 = vld [vmem:[%s4725 + $0x1b0] sm:$0xf]
    %v5004 = vld [vmem:[%s4725 + $0x1b4] sm:$0xf]
    %v5005 = vld [vmem:[%s4725 + $0x1b8] sm:$0xf]
    %v5006 = vld [vmem:[%s4725 + $0x1bc] sm:$0xf]
    %v5007 = vld [vmem:[%s4725 + $0x1c0] sm:$0xf]
    %v5008 = vld [vmem:[%s4725 + $0x1c4] sm:$0xf]
    %v5009 = vld [vmem:[%s4725 + $0x1c8] sm:$0xf]
    %v5010 = vld [vmem:[%s4725 + $0x1cc] sm:$0xf]
    %v5011 = vld [vmem:[%s4725 + $0x1d0] sm:$0xf]
    %v5012 = vld [vmem:[%s4725 + $0x1d4] sm:$0xf]
    %v5013 = vld [vmem:[%s4725 + $0x1d8] sm:$0xf]
    %v5014 = vld [vmem:[%s4725 + $0x1dc] sm:$0xf]
    %v5015 = vld [vmem:[%s4725 + $0x1e0] sm:$0xf]
    %v5016 = vld [vmem:[%s4725 + $0x1e4] sm:$0xf]
    %v5017 = vld [vmem:[%s4725 + $0x1e8] sm:$0xf]
    %v5018 = vld [vmem:[%s4725 + $0x1ec] sm:$0xf]
    %v5019 = vld [vmem:[%s4725 + $0x1f0] sm:$0xf]
    %v5020 = vld [vmem:[%s4725 + $0x1f4] sm:$0xf]
    %v5021 = vld [vmem:[%s4725 + $0x1f8] sm:$0xf]
    %v5022 = vld [vmem:[%s4725 + $0x1fc] sm:$0xf]
    %v5087 = vunpack.c.l.b16 %v4959
    %v5088 = vunpack.c.l.b16 %v4960
    %v5089 = vunpack.c.l.b16 %v4961
    %v5090 = vunpack.c.l.b16 %v4962
    %v5091 = vunpack.c.l.b16 %v4963
    %v5092 = vunpack.c.l.b16 %v4964
    %v5093 = vunpack.c.l.b16 %v4965
    %v5094 = vunpack.c.l.b16 %v4966
    %v5095 = vunpack.c.l.b16 %v4967
    %v5096 = vunpack.c.l.b16 %v4968
    %v5097 = vunpack.c.l.b16 %v4969
    %v5098 = vunpack.c.l.b16 %v4970
    %v5099 = vunpack.c.l.b16 %v4971
    %v5100 = vunpack.c.l.b16 %v4972
    %v5101 = vunpack.c.l.b16 %v4973
    %v5102 = vunpack.c.l.b16 %v4974
    %v5103 = vunpack.c.l.b16 %v4975
    %v5104 = vunpack.c.l.b16 %v4976
    %v5105 = vunpack.c.l.b16 %v4977
    %v5106 = vunpack.c.l.b16 %v4978
    %v5107 = vunpack.c.l.b16 %v4979
    %v5108 = vunpack.c.l.b16 %v4980
    %v5109 = vunpack.c.l.b16 %v4981
    %v5110 = vunpack.c.l.b16 %v4982
    %v5111 = vunpack.c.l.b16 %v4983
    %v5112 = vunpack.c.l.b16 %v4984
    %v5113 = vunpack.c.l.b16 %v4985
    %v5114 = vunpack.c.l.b16 %v4986
    %v5115 = vunpack.c.l.b16 %v4987
    %v5116 = vunpack.c.l.b16 %v4988
    %v5117 = vunpack.c.l.b16 %v4989
    %v5118 = vunpack.c.l.b16 %v4990
    %v5119 = vunpack.c.l.b16 %v4991
    %v5120 = vunpack.c.l.b16 %v4992
    %v5121 = vunpack.c.l.b16 %v4993
    %v5122 = vunpack.c.l.b16 %v4994
    %v5123 = vunpack.c.l.b16 %v4995
    %v5124 = vunpack.c.l.b16 %v4996
    %v5125 = vunpack.c.l.b16 %v4997
    %v5126 = vunpack.c.l.b16 %v4998
    %v5127 = vunpack.c.l.b16 %v4999
    %v5128 = vunpack.c.l.b16 %v5000
    %v5129 = vunpack.c.l.b16 %v5001
    %v5130 = vunpack.c.l.b16 %v5002
    %v5131 = vunpack.c.l.b16 %v5003
    %v5132 = vunpack.c.l.b16 %v5004
    %v5133 = vunpack.c.l.b16 %v5005
    %v5134 = vunpack.c.l.b16 %v5006
    %v5135 = vunpack.c.l.b16 %v5007
    %v5136 = vunpack.c.l.b16 %v5008
    %v5137 = vunpack.c.l.b16 %v5009
    %v5138 = vunpack.c.l.b16 %v5010
    %v5139 = vunpack.c.l.b16 %v5011
    %v5140 = vunpack.c.l.b16 %v5012
    %v5141 = vunpack.c.l.b16 %v5013
    %v5142 = vunpack.c.l.b16 %v5014
    %v5143 = vunpack.c.l.b16 %v5015
    %v5144 = vunpack.c.l.b16 %v5016
    %v5145 = vunpack.c.l.b16 %v5017
    %v5146 = vunpack.c.l.b16 %v5018
    %v5147 = vunpack.c.l.b16 %v5019
    %v5148 = vunpack.c.l.b16 %v5020
    %v5149 = vunpack.c.l.b16 %v5021
    %v5150 = vunpack.c.l.b16 %v5022
    %v5151 = vpack.c.b16 %v5088, %v5087
    %v5152 = vpack.c.b16 %v5090, %v5089
    %v5153 = vpack.c.b16 %v5092, %v5091
    %v5154 = vpack.c.b16 %v5094, %v5093
    %v5155 = vpack.c.b16 %v5096, %v5095
    %v5156 = vpack.c.b16 %v5098, %v5097
    %v5157 = vpack.c.b16 %v5100, %v5099
    %v5158 = vpack.c.b16 %v5102, %v5101
    %v5159 = vpack.c.b16 %v5104, %v5103
    %v5160 = vpack.c.b16 %v5106, %v5105
    %v5161 = vpack.c.b16 %v5108, %v5107
    %v5162 = vpack.c.b16 %v5110, %v5109
    %v5163 = vpack.c.b16 %v5112, %v5111
    %v5164 = vpack.c.b16 %v5114, %v5113
    %v5165 = vpack.c.b16 %v5116, %v5115
    %v5166 = vpack.c.b16 %v5118, %v5117
    %v5167 = vpack.c.b16 %v5120, %v5119
    %v5168 = vpack.c.b16 %v5122, %v5121
    %v5169 = vpack.c.b16 %v5124, %v5123
    %v5170 = vpack.c.b16 %v5126, %v5125
    %v5171 = vpack.c.b16 %v5128, %v5127
    %v5172 = vpack.c.b16 %v5130, %v5129
    %v5173 = vpack.c.b16 %v5132, %v5131
    %v5174 = vpack.c.b16 %v5134, %v5133
    %v5175 = vpack.c.b16 %v5136, %v5135
    %v5176 = vpack.c.b16 %v5138, %v5137
    %v5177 = vpack.c.b16 %v5140, %v5139
    %v5178 = vpack.c.b16 %v5142, %v5141
    %v5179 = vpack.c.b16 %v5144, %v5143
    %v5180 = vpack.c.b16 %v5146, %v5145
    %v5181 = vpack.c.b16 %v5148, %v5147
    %v5182 = vpack.c.b16 %v5150, %v5149
    %5215 = vmatprep.subr.bf16.mxu0 0
    %5216 = vmatpush1.bf16.msra.mxu0 %v5151
    %5217 = vmatprep.subr.bf16.mxu0 0
    %5218 = vmatpush1.bf16.msra.mxu0 %v5152
    %5219 = vmatprep.subr.bf16.mxu0 0
    %5220 = vmatpush1.bf16.msra.mxu0 %v5153
    %5221 = vmatprep.subr.bf16.mxu0 0
    %5222 = vmatpush1.bf16.msra.mxu0 %v5154
    %5223 = vmatprep.subr.bf16.mxu0 0
    %5224 = vmatpush1.bf16.msra.mxu0 %v5155
    %5225 = vmatprep.subr.bf16.mxu0 0
    %5226 = vmatpush1.bf16.msra.mxu0 %v5156
    %5227 = vmatprep.subr.bf16.mxu0 0
    %5228 = vmatpush1.bf16.msra.mxu0 %v5157
    %5229 = vmatprep.subr.bf16.mxu0 0
    %5230 = vmatpush1.bf16.msra.mxu0 %v5158
    %5231 = vmatprep.subr.bf16.mxu0 0
    %5232 = vmatpush1.bf16.msra.mxu0 %v5159
    %5233 = vmatprep.subr.bf16.mxu0 0
    %5234 = vmatpush1.bf16.msra.mxu0 %v5160
    %5235 = vmatprep.subr.bf16.mxu0 0
    %5236 = vmatpush1.bf16.msra.mxu0 %v5161
    %5237 = vmatprep.subr.bf16.mxu0 0
    %5238 = vmatpush1.bf16.msra.mxu0 %v5162
    %5239 = vmatprep.subr.bf16.mxu0 0
    %5240 = vmatpush1.bf16.msra.mxu0 %v5163
    %5241 = vmatprep.subr.bf16.mxu0 0
    %5242 = vmatpush1.bf16.msra.mxu0 %v5164
    %5243 = vmatprep.subr.bf16.mxu0 0
    %5244 = vmatpush1.bf16.msra.mxu0 %v5165
    %5245 = vmatprep.subr.bf16.mxu0 0
    %5246 = vmatpush1.bf16.msra.mxu0 %v5166
    %5247 = vmatprep.mubr.bf16.mxu0 %v4956
    %5248 = vmatmul.mubr.bf16.gmra.mrb[0].mxu0 %v4955
    %v5249 = vpop.f32.mrb[0].mxu0
    %v5250 = vadd.f32 0.0, %v5249
    %v5251 = vpop.f32.mrb[0].mxu0
    %v5252 = vpop.f32.mrb[0].mxu0
    %v5253 = vadd.f32 0.0, %v5252
    %v5254 = vpop.f32.mrb[0].mxu0
    %5255 = vdwg.mxu0
    %5256 = vmatprep.subr.bf16.mxu0 0
    %5257 = vmatpush1.bf16.msra.mxu0 %v5167
    %5258 = vmatprep.subr.bf16.mxu0 0
    %5259 = vmatpush1.bf16.msra.mxu0 %v5168
    %5260 = vmatprep.subr.bf16.mxu0 0
    %5261 = vmatpush1.bf16.msra.mxu0 %v5169
    %5262 = vmatprep.subr.bf16.mxu0 0
    %5263 = vmatpush1.bf16.msra.mxu0 %v5170
    %5264 = vmatprep.subr.bf16.mxu0 0
    %5265 = vmatpush1.bf16.msra.mxu0 %v5171
    %5266 = vmatprep.subr.bf16.mxu0 0
    %5267 = vmatpush1.bf16.msra.mxu0 %v5172
    %5268 = vmatprep.subr.bf16.mxu0 0
    %5269 = vmatpush1.bf16.msra.mxu0 %v5173
    %5270 = vmatprep.subr.bf16.mxu0 0
    %5271 = vmatpush1.bf16.msra.mxu0 %v5174
    %5272 = vmatprep.subr.bf16.mxu0 0
    %5273 = vmatpush1.bf16.msra.mxu0 %v5175
    %5274 = vmatprep.subr.bf16.mxu0 0
    %5275 = vmatpush1.bf16.msra.mxu0 %v5176
    %5276 = vmatprep.subr.bf16.mxu0 0
    %5277 = vmatpush1.bf16.msra.mxu0 %v5177
    %5278 = vmatprep.subr.bf16.mxu0 0
    %5279 = vmatpush1.bf16.msra.mxu0 %v5178
    %5280 = vmatprep.subr.bf16.mxu0 0
    %5281 = vmatpush1.bf16.msra.mxu0 %v5179
    %5282 = vmatprep.subr.bf16.mxu0 0
    %5283 = vmatpush1.bf16.msra.mxu0 %v5180
    %5284 = vmatprep.subr.bf16.mxu0 0
    %5285 = vmatpush1.bf16.msra.mxu0 %v5181
    %5286 = vmatprep.subr.bf16.mxu0 0
    %5287 = vmatpush1.bf16.msra.mxu0 %v5182
    %5288 = vmatprep.mubr.bf16.mxu0 %v4958
    %5289 = vmatmul.mubr.bf16.gmra.mrb[0].mxu0 %v4957
    %v5290 = vpop.f32.mrb[0].mxu0
    %v5291 = vadd.f32 %v5250, %v5290
    %v5292 = vpop.f32.mrb[0].mxu0
    %v5293 = vpop.f32.mrb[0].mxu0
    %v5294 = vadd.f32 %v5253, %v5293
    %v5295 = vpop.f32.mrb[0].mxu0
    %5296 = vdwg.mxu0
    %v5361 = vunpack.c.l.b16 %v4726
    %v5362 = vunpack.c.l.b16 %v4727
    %v5363 = vunpack.c.l.b16 %v4728
    %v5364 = vunpack.c.l.b16 %v4729
    %v5365 = vunpack.c.l.b16 %v4730
    %v5366 = vunpack.c.l.b16 %v4731
    %v5367 = vunpack.c.l.b16 %v4732
    %v5368 = vunpack.c.l.b16 %v4733
    %v5369 = vunpack.c.l.b16 %v4734
    %v5370 = vunpack.c.l.b16 %v4735
    %v5371 = vunpack.c.l.b16 %v4736
    %v5372 = vunpack.c.l.b16 %v4737
    %v5373 = vunpack.c.l.b16 %v4738
    %v5374 = vunpack.c.l.b16 %v4739
    %v5375 = vunpack.c.l.b16 %v4740
    %v5376 = vunpack.c.l.b16 %v4741
    %v5377 = vunpack.c.l.b16 %v4742
    %v5378 = vunpack.c.l.b16 %v4743
    %v5379 = vunpack.c.l.b16 %v4744
    %v5380 = vunpack.c.l.b16 %v4745
    %v5381 = vunpack.c.l.b16 %v4746
    %v5382 = vunpack.c.l.b16 %v4747
    %v5383 = vunpack.c.l.b16 %v4748
    %v5384 = vunpack.c.l.b16 %v4749
    %v5385 = vunpack.c.l.b16 %v4750
    %v5386 = vunpack.c.l.b16 %v4751
    %v5387 = vunpack.c.l.b16 %v4752
    %v5388 = vunpack.c.l.b16 %v4753
    %v5389 = vunpack.c.l.b16 %v4754
    %v5390 = vunpack.c.l.b16 %v4755
    %v5391 = vunpack.c.l.b16 %v4756
    %v5392 = vunpack.c.l.b16 %v4757
    %v5393 = vunpack.c.l.b16 %v4758
    %v5394 = vunpack.c.l.b16 %v4759
    %v5395 = vunpack.c.l.b16 %v4760
    %v5396 = vunpack.c.l.b16 %v4761
    %v5397 = vunpack.c.l.b16 %v4762
    %v5398 = vunpack.c.l.b16 %v4763
    %v5399 = vunpack.c.l.b16 %v4764
    %v5400 = vunpack.c.l.b16 %v4765
    %v5401 = vunpack.c.l.b16 %v4766
    %v5402 = vunpack.c.l.b16 %v4767
    %v5403 = vunpack.c.l.b16 %v4768
    %v5404 = vunpack.c.l.b16 %v4769
    %v5405 = vunpack.c.l.b16 %v4770
    %v5406 = vunpack.c.l.b16 %v4771
    %v5407 = vunpack.c.l.b16 %v4772
    %v5408 = vunpack.c.l.b16 %v4773
    %v5409 = vunpack.c.l.b16 %v4774
    %v5410 = vunpack.c.l.b16 %v4775
    %v5411 = vunpack.c.l.b16 %v4776
    %v5412 = vunpack.c.l.b16 %v4777
    %v5413 = vunpack.c.l.b16 %v4778
    %v5414 = vunpack.c.l.b16 %v4779
    %v5415 = vunpack.c.l.b16 %v4780
    %v5416 = vunpack.c.l.b16 %v4781
    %v5417 = vunpack.c.l.b16 %v4782
    %v5418 = vunpack.c.l.b16 %v4783
    %v5419 = vunpack.c.l.b16 %v4784
    %v5420 = vunpack.c.l.b16 %v4785
    %v5421 = vunpack.c.l.b16 %v4786
    %v5422 = vunpack.c.l.b16 %v4787
    %v5423 = vunpack.c.l.b16 %v4788
    %v5424 = vunpack.c.l.b16 %v4789
    %v5425 = vpack.c.b16 %v5362, %v5361
    %v5426 = vpack.c.b16 %v5364, %v5363
    %v5427 = vpack.c.b16 %v5366, %v5365
    %v5428 = vpack.c.b16 %v5368, %v5367
    %v5429 = vpack.c.b16 %v5370, %v5369
    %v5430 = vpack.c.b16 %v5372, %v5371
    %v5431 = vpack.c.b16 %v5374, %v5373
    %v5432 = vpack.c.b16 %v5376, %v5375
    %v5433 = vpack.c.b16 %v5378, %v5377
    %v5434 = vpack.c.b16 %v5380, %v5379
    %v5435 = vpack.c.b16 %v5382, %v5381
    %v5436 = vpack.c.b16 %v5384, %v5383
    %v5437 = vpack.c.b16 %v5386, %v5385
    %v5438 = vpack.c.b16 %v5388, %v5387
    %v5439 = vpack.c.b16 %v5390, %v5389
    %v5440 = vpack.c.b16 %v5392, %v5391
    %v5441 = vpack.c.b16 %v5394, %v5393
    %v5442 = vpack.c.b16 %v5396, %v5395
    %v5443 = vpack.c.b16 %v5398, %v5397
    %v5444 = vpack.c.b16 %v5400, %v5399
    %v5445 = vpack.c.b16 %v5402, %v5401
    %v5446 = vpack.c.b16 %v5404, %v5403
    %v5447 = vpack.c.b16 %v5406, %v5405
    %v5448 = vpack.c.b16 %v5408, %v5407
    %v5449 = vpack.c.b16 %v5410, %v5409
    %v5450 = vpack.c.b16 %v5412, %v5411
    %v5451 = vpack.c.b16 %v5414, %v5413
    %v5452 = vpack.c.b16 %v5416, %v5415
    %v5453 = vpack.c.b16 %v5418, %v5417
    %v5454 = vpack.c.b16 %v5420, %v5419
    %v5455 = vpack.c.b16 %v5422, %v5421
    %v5456 = vpack.c.b16 %v5424, %v5423
    %5489 = vmatprep.subr.bf16.mxu0 0
    %5490 = vmatpush1.bf16.msra.mxu0 %v5425
    %5491 = vmatprep.subr.bf16.mxu0 0
    %5492 = vmatpush1.bf16.msra.mxu0 %v5426
    %5493 = vmatprep.subr.bf16.mxu0 0
    %5494 = vmatpush1.bf16.msra.mxu0 %v5427
    %5495 = vmatprep.subr.bf16.mxu0 0
    %5496 = vmatpush1.bf16.msra.mxu0 %v5428
    %5497 = vmatprep.subr.bf16.mxu0 0
    %5498 = vmatpush1.bf16.msra.mxu0 %v5429
    %5499 = vmatprep.subr.bf16.mxu0 0
    %5500 = vmatpush1.bf16.msra.mxu0 %v5430
    %5501 = vmatprep.subr.bf16.mxu0 0
    %5502 = vmatpush1.bf16.msra.mxu0 %v5431
    %5503 = vmatprep.subr.bf16.mxu0 0
    %5504 = vmatpush1.bf16.msra.mxu0 %v5432
    %5505 = vmatprep.subr.bf16.mxu0 0
    %5506 = vmatpush1.bf16.msra.mxu0 %v5433
    %5507 = vmatprep.subr.bf16.mxu0 0
    %5508 = vmatpush1.bf16.msra.mxu0 %v5434
    %5509 = vmatprep.subr.bf16.mxu0 0
    %5510 = vmatpush1.bf16.msra.mxu0 %v5435
    %5511 = vmatprep.subr.bf16.mxu0 0
    %5512 = vmatpush1.bf16.msra.mxu0 %v5436
    %5513 = vmatprep.subr.bf16.mxu0 0
    %5514 = vmatpush1.bf16.msra.mxu0 %v5437
    %5515 = vmatprep.subr.bf16.mxu0 0
    %5516 = vmatpush1.bf16.msra.mxu0 %v5438
    %5517 = vmatprep.subr.bf16.mxu0 0
    %5518 = vmatpush1.bf16.msra.mxu0 %v5439
    %5519 = vmatprep.subr.bf16.mxu0 0
    %5520 = vmatpush1.bf16.msra.mxu0 %v5440
    %5521 = vmatprep.mubr.bf16.mxu0 %v4722
    %5522 = vmatmul.mubr.bf16.gmra.mrb[0].mxu0 %v4721
    %v5523 = vpop.f32.mrb[0].mxu0
    %v5524 = vadd.f32 %v5291, %v5523
    %v5525 = vpop.f32.mrb[0].mxu0
    %v5526 = vpop.f32.mrb[0].mxu0
    %v5527 = vadd.f32 %v5294, %v5526
    %v5528 = vpop.f32.mrb[0].mxu0
    %5529 = vdwg.mxu0
    %5530 = vmatprep.subr.bf16.mxu0 0
    %5531 = vmatpush1.bf16.msra.mxu0 %v5441
    %5532 = vmatprep.subr.bf16.mxu0 0
    %5533 = vmatpush1.bf16.msra.mxu0 %v5442
    %5534 = vmatprep.subr.bf16.mxu0 0
    %5535 = vmatpush1.bf16.msra.mxu0 %v5443
    %5536 = vmatprep.subr.bf16.mxu0 0
    %5537 = vmatpush1.bf16.msra.mxu0 %v5444
    %5538 = vmatprep.subr.bf16.mxu0 0
    %5539 = vmatpush1.bf16.msra.mxu0 %v5445
    %5540 = vmatprep.subr.bf16.mxu0 0
    %5541 = vmatpush1.bf16.msra.mxu0 %v5446
    %5542 = vmatprep.subr.bf16.mxu0 0
    %5543 = vmatpush1.bf16.msra.mxu0 %v5447
    %5544 = vmatprep.subr.bf16.mxu0 0
    %5545 = vmatpush1.bf16.msra.mxu0 %v5448
    %5546 = vmatprep.subr.bf16.mxu0 0
    %5547 = vmatpush1.bf16.msra.mxu0 %v5449
    %5548 = vmatprep.subr.bf16.mxu0 0
    %5549 = vmatpush1.bf16.msra.mxu0 %v5450
    %5550 = vmatprep.subr.bf16.mxu0 0
    %5551 = vmatpush1.bf16.msra.mxu0 %v5451
    %5552 = vmatprep.subr.bf16.mxu0 0
    %5553 = vmatpush1.bf16.msra.mxu0 %v5452
    %5554 = vmatprep.subr.bf16.mxu0 0
    %5555 = vmatpush1.bf16.msra.mxu0 %v5453
    %5556 = vmatprep.subr.bf16.mxu0 0
    %5557 = vmatpush1.bf16.msra.mxu0 %v5454
    %5558 = vmatprep.subr.bf16.mxu0 0
    %5559 = vmatpush1.bf16.msra.mxu0 %v5455
    %5560 = vmatprep.subr.bf16.mxu0 0
    %5561 = vmatpush1.bf16.msra.mxu0 %v5456
    %5562 = vmatprep.mubr.bf16.mxu0 %v4724
    %5563 = vmatmul.mubr.bf16.gmra.mrb[0].mxu0 %v4723
    %v5564 = vpop.f32.mrb[0].mxu0
    %v5565 = vadd.f32 %v5524, %v5564
    %v5566 = vpop.f32.mrb[0].mxu0
    %v5567 = vpop.f32.mrb[0].mxu0
    %v5568 = vadd.f32 %v5527, %v5567
    %v5569 = vpop.f32.mrb[0].mxu0
    %5570 = vdwg.mxu0
    %v5571 = vld [vmem:[%s4552 + $0x20] sm:$0xff]
    %v5572 = vld [vmem:[%s4552 + $0x28] sm:$0xff]
    %v5573 = vld [vmem:[%s4552 + $0x60] sm:$0xff]
    %v5574 = vld [vmem:[%s4552 + $0x68] sm:$0xff]
    %v5575 = vld [vmem:[%s4552 + $0xa0] sm:$0xff]
    %v5576 = vld [vmem:[%s4552 + $0xa8] sm:$0xff]
    %v5577 = vld [vmem:[%s4552 + $0xe0] sm:$0xff]
    %v5578 = vld [vmem:[%s4552 + $0xe8] sm:$0xff]
    %s5579 = scalar_lea.vmem %s9, 17
    %v5580 = vld [vmem:[%s5579] ss:$2 sm:$0xf]
    %v5582 = vlaneseq
    %v5583 = vshrl.u32 %v5582, 7
    %v5584 = vsub.s32 0, %v5583
    %v5585 = vrot.slane %v5580, %v5584
    %v5586 = vlaneseq
    %v5587 = vshrl.u32 %v5586, 7
    %v5588 = vsub.s32 1, %v5587
    %v5589 = vrot.slane %v5580, %v5588
    %v5590 = vlaneseq
    %v5591 = vshrl.u32 %v5590, 7
    %v5592 = vsub.s32 2, %v5591
    %v5593 = vrot.slane %v5580, %v5592
    %v5594 = vlaneseq
    %v5595 = vshrl.u32 %v5594, 7
    %v5596 = vsub.s32 3, %v5595
    %v5597 = vrot.slane %v5580, %v5596
    %v5610 = vunpack.c.l.b16 %v5571
    %v5611 = vunpack.c.h.b16 %v5571
    %v5612 = vunpack.c.l.b16 %v5572
    %v5613 = vunpack.c.h.b16 %v5572
    %v5614 = vunpack.c.l.b16 %v5573
    %v5615 = vunpack.c.h.b16 %v5573
    %v5616 = vunpack.c.l.b16 %v5574
    %v5617 = vunpack.c.h.b16 %v5574
    %v5618 = vunpack.c.l.b16 %v5575
    %v5619 = vunpack.c.h.b16 %v5575
    %v5620 = vunpack.c.l.b16 %v5576
    %v5621 = vunpack.c.h.b16 %v5576
    %v5622 = vunpack.c.l.b16 %v5577
    %v5623 = vunpack.c.h.b16 %v5577
    %v5624 = vunpack.c.l.b16 %v5578
    %v5625 = vunpack.c.h.b16 %v5578
    %v5626 = vpack.c.b16 %v5614, %v5610
    %v5627 = vpack.c.b16 %v5615, %v5611
    %v5628 = vpack.c.b16 %v5616, %v5612
    %v5629 = vpack.c.b16 %v5617, %v5613
    %v5630 = vpack.c.b16 %v5622, %v5618
    %v5631 = vpack.c.b16 %v5623, %v5619
    %v5632 = vpack.c.b16 %v5624, %v5620
    %v5633 = vpack.c.b16 %v5625, %v5621
    %5642 = vmatprep.subr.bf16.mxu0 %v5627
    %5643 = vmatpush1.bf16.msra.mxu0 %v5626
    %5644 = vmatprep.subr.bf16.mxu0 %v5631
    %5645 = vmatpush1.bf16.msra.mxu0 %v5630
    %5646 = vmatprep.subr.bf16.mxu0 0
    %5647 = vmatpush1.bf16.msra.mxu0 0
    %5648 = vmatprep.subr.bf16.mxu0 0
    %5649 = vmatpush1.bf16.msra.mxu0 0
    %5650 = vmatprep.subr.bf16.mxu0 0
    %5651 = vmatpush1.bf16.msra.mxu0 0
    %5652 = vmatprep.subr.bf16.mxu0 0
    %5653 = vmatpush1.bf16.msra.mxu0 0
    %5654 = vmatprep.subr.bf16.mxu0 0
    %5655 = vmatpush1.bf16.msra.mxu0 0
    %5656 = vmatprep.subr.bf16.mxu0 0
    %5657 = vmatpush1.bf16.msra.mxu0 0
    %5658 = vmatprep.subr.bf16.mxu0 0
    %5659 = vmatpush1.bf16.msra.mxu0 0
    %5660 = vmatprep.subr.bf16.mxu0 0
    %5661 = vmatpush1.bf16.msra.mxu0 0
    %5662 = vmatprep.subr.bf16.mxu0 0
    %5663 = vmatpush1.bf16.msra.mxu0 0
    %5664 = vmatprep.subr.bf16.mxu0 0
    %5665 = vmatpush1.bf16.msra.mxu0 0
    %5666 = vmatprep.subr.bf16.mxu0 0
    %5667 = vmatpush1.bf16.msra.mxu0 0
    %5668 = vmatprep.subr.bf16.mxu0 0
    %5669 = vmatpush1.bf16.msra.mxu0 0
    %5670 = vmatprep.subr.bf16.mxu0 0
    %5671 = vmatpush1.bf16.msra.mxu0 0
    %5672 = vmatprep.subr.bf16.mxu0 0
    %5673 = vmatpush1.bf16.msra.mxu0 0
    %5674 = vmatprep.mubr.bf16.mxu0 0
    %5675 = vmatmul.mubr.bf16.gmra.mrb[0].mxu0 %v4625
    %v5676 = vpop.f32.mrb[0].mxu0
    %v5677 = vadd.f32 %v5585, %v5676
    %v5678 = vpop.f32.mrb[0].mxu0
    %v5679 = vadd.f32 %v5589, %v5678
    %v5680 = vpop.f32.mrb[0].mxu0
    %v5681 = vadd.f32 %v5585, %v5680
    %v5682 = vpop.f32.mrb[0].mxu0
    %v5683 = vadd.f32 %v5589, %v5682
    %5684 = vdwg.mxu0
    %5685 = vmatprep.subr.bf16.mxu0 %v5629
    %5686 = vmatpush1.bf16.msra.mxu0 %v5628
    %5687 = vmatprep.subr.bf16.mxu0 %v5633
    %5688 = vmatpush1.bf16.msra.mxu0 %v5632
    %5689 = vmatprep.subr.bf16.mxu0 0
    %5690 = vmatpush1.bf16.msra.mxu0 0
    %5691 = vmatprep.subr.bf16.mxu0 0
    %5692 = vmatpush1.bf16.msra.mxu0 0
    %5693 = vmatprep.subr.bf16.mxu0 0
    %5694 = vmatpush1.bf16.msra.mxu0 0
    %5695 = vmatprep.subr.bf16.mxu0 0
    %5696 = vmatpush1.bf16.msra.mxu0 0
    %5697 = vmatprep.subr.bf16.mxu0 0
    %5698 = vmatpush1.bf16.msra.mxu0 0
    %5699 = vmatprep.subr.bf16.mxu0 0
    %5700 = vmatpush1.bf16.msra.mxu0 0
    %5701 = vmatprep.subr.bf16.mxu0 0
    %5702 = vmatpush1.bf16.msra.mxu0 0
    %5703 = vmatprep.subr.bf16.mxu0 0
    %5704 = vmatpush1.bf16.msra.mxu0 0
    %5705 = vmatprep.subr.bf16.mxu0 0
    %5706 = vmatpush1.bf16.msra.mxu0 0
    %5707 = vmatprep.subr.bf16.mxu0 0
    %5708 = vmatpush1.bf16.msra.mxu0 0
    %5709 = vmatprep.subr.bf16.mxu0 0
    %5710 = vmatpush1.bf16.msra.mxu0 0
    %5711 = vmatprep.subr.bf16.mxu0 0
    %5712 = vmatpush1.bf16.msra.mxu0 0
    %5713 = vmatprep.subr.bf16.mxu0 0
    %5714 = vmatpush1.bf16.msra.mxu0 0
    %5715 = vmatprep.subr.bf16.mxu0 0
    %5716 = vmatpush1.bf16.msra.mxu0 0
    %5717 = vmatprep.mubr.bf16.mxu0 0
    %5718 = vmatmul.mubr.bf16.gmra.mrb[0].mxu0 %v4625
    %v5719 = vpop.f32.mrb[0].mxu0
    %v5720 = vadd.f32 %v5593, %v5719
    %v5721 = vpop.f32.mrb[0].mxu0
    %v5722 = vadd.f32 %v5597, %v5721
    %v5723 = vpop.f32.mrb[0].mxu0
    %v5724 = vadd.f32 %v5593, %v5723
    %v5725 = vpop.f32.mrb[0].mxu0
    %v5726 = vadd.f32 %v5597, %v5725
    %5727 = vdwg.mxu0
    %v5728 = vmax.f32 %v5677, 0.0
    %v5729 = vmax.f32 %v5679, 0.0
    %v5730 = vmax.f32 %v5720, 0.0
    %v5731 = vmax.f32 %v5722, 0.0
    %v5732 = vmax.f32 %v5681, 0.0
    %v5733 = vmax.f32 %v5683, 0.0
    %v5734 = vmax.f32 %v5724, 0.0
    %v5735 = vmax.f32 %v5726, 0.0
    %v5736 = vpack.c.bf16 %v5732, %v5728
    %v5737 = vpack.c.bf16 %v5733, %v5729
    %v5738 = vpack.c.bf16 %v5734, %v5730
    %v5739 = vpack.c.bf16 %v5735, %v5731
    %v5740 = vld [vmem:[%s4725 + $0x200] sm:$0xf]
    %v5741 = vld [vmem:[%s4725 + $0x204] sm:$0xf]
    %v5742 = vld [vmem:[%s4725 + $0x208] sm:$0xf]
    %v5743 = vld [vmem:[%s4725 + $0x20c] sm:$0xf]
    %v5744 = vld [vmem:[%s4725 + $0x210] sm:$0xf]
    %v5745 = vld [vmem:[%s4725 + $0x214] sm:$0xf]
    %v5746 = vld [vmem:[%s4725 + $0x218] sm:$0xf]
    %v5747 = vld [vmem:[%s4725 + $0x21c] sm:$0xf]
    %v5748 = vld [vmem:[%s4725 + $0x220] sm:$0xf]
    %v5749 = vld [vmem:[%s4725 + $0x224] sm:$0xf]
    %v5750 = vld [vmem:[%s4725 + $0x228] sm:$0xf]
    %v5751 = vld [vmem:[%s4725 + $0x22c] sm:$0xf]
    %v5752 = vld [vmem:[%s4725 + $0x230] sm:$0xf]
    %v5753 = vld [vmem:[%s4725 + $0x234] sm:$0xf]
    %v5754 = vld [vmem:[%s4725 + $0x238] sm:$0xf]
    %v5755 = vld [vmem:[%s4725 + $0x23c] sm:$0xf]
    %v5756 = vld [vmem:[%s4725 + $0x240] sm:$0xf]
    %v5757 = vld [vmem:[%s4725 + $0x244] sm:$0xf]
    %v5758 = vld [vmem:[%s4725 + $0x248] sm:$0xf]
    %v5759 = vld [vmem:[%s4725 + $0x24c] sm:$0xf]
    %v5760 = vld [vmem:[%s4725 + $0x250] sm:$0xf]
    %v5761 = vld [vmem:[%s4725 + $0x254] sm:$0xf]
    %v5762 = vld [vmem:[%s4725 + $0x258] sm:$0xf]
    %v5763 = vld [vmem:[%s4725 + $0x25c] sm:$0xf]
    %v5764 = vld [vmem:[%s4725 + $0x260] sm:$0xf]
    %v5765 = vld [vmem:[%s4725 + $0x264] sm:$0xf]
    %v5766 = vld [vmem:[%s4725 + $0x268] sm:$0xf]
    %v5767 = vld [vmem:[%s4725 + $0x26c] sm:$0xf]
    %v5768 = vld [vmem:[%s4725 + $0x270] sm:$0xf]
    %v5769 = vld [vmem:[%s4725 + $0x274] sm:$0xf]
    %v5770 = vld [vmem:[%s4725 + $0x278] sm:$0xf]
    %v5771 = vld [vmem:[%s4725 + $0x27c] sm:$0xf]
    %v5772 = vld [vmem:[%s4725 + $0x280] sm:$0xf]
    %v5773 = vld [vmem:[%s4725 + $0x284] sm:$0xf]
    %v5774 = vld [vmem:[%s4725 + $0x288] sm:$0xf]
    %v5775 = vld [vmem:[%s4725 + $0x28c] sm:$0xf]
    %v5776 = vld [vmem:[%s4725 + $0x290] sm:$0xf]
    %v5777 = vld [vmem:[%s4725 + $0x294] sm:$0xf]
    %v5778 = vld [vmem:[%s4725 + $0x298] sm:$0xf]
    %v5779 = vld [vmem:[%s4725 + $0x29c] sm:$0xf]
    %v5780 = vld [vmem:[%s4725 + $0x2a0] sm:$0xf]
    %v5781 = vld [vmem:[%s4725 + $0x2a4] sm:$0xf]
    %v5782 = vld [vmem:[%s4725 + $0x2a8] sm:$0xf]
    %v5783 = vld [vmem:[%s4725 + $0x2ac] sm:$0xf]
    %v5784 = vld [vmem:[%s4725 + $0x2b0] sm:$0xf]
    %v5785 = vld [vmem:[%s4725 + $0x2b4] sm:$0xf]
    %v5786 = vld [vmem:[%s4725 + $0x2b8] sm:$0xf]
    %v5787 = vld [vmem:[%s4725 + $0x2bc] sm:$0xf]
    %v5788 = vld [vmem:[%s4725 + $0x2c0] sm:$0xf]
    %v5789 = vld [vmem:[%s4725 + $0x2c4] sm:$0xf]
    %v5790 = vld [vmem:[%s4725 + $0x2c8] sm:$0xf]
    %v5791 = vld [vmem:[%s4725 + $0x2cc] sm:$0xf]
    %v5792 = vld [vmem:[%s4725 + $0x2d0] sm:$0xf]
    %v5793 = vld [vmem:[%s4725 + $0x2d4] sm:$0xf]
    %v5794 = vld [vmem:[%s4725 + $0x2d8] sm:$0xf]
    %v5795 = vld [vmem:[%s4725 + $0x2dc] sm:$0xf]
    %v5796 = vld [vmem:[%s4725 + $0x2e0] sm:$0xf]
    %v5797 = vld [vmem:[%s4725 + $0x2e4] sm:$0xf]
    %v5798 = vld [vmem:[%s4725 + $0x2e8] sm:$0xf]
    %v5799 = vld [vmem:[%s4725 + $0x2ec] sm:$0xf]
    %v5800 = vld [vmem:[%s4725 + $0x2f0] sm:$0xf]
    %v5801 = vld [vmem:[%s4725 + $0x2f4] sm:$0xf]
    %v5802 = vld [vmem:[%s4725 + $0x2f8] sm:$0xf]
    %v5803 = vld [vmem:[%s4725 + $0x2fc] sm:$0xf]
    %v5868 = vunpack.c.l.b16 %v5740
    %v5869 = vunpack.c.l.b16 %v5741
    %v5870 = vunpack.c.l.b16 %v5742
    %v5871 = vunpack.c.l.b16 %v5743
    %v5872 = vunpack.c.l.b16 %v5744
    %v5873 = vunpack.c.l.b16 %v5745
    %v5874 = vunpack.c.l.b16 %v5746
    %v5875 = vunpack.c.l.b16 %v5747
    %v5876 = vunpack.c.l.b16 %v5748
    %v5877 = vunpack.c.l.b16 %v5749
    %v5878 = vunpack.c.l.b16 %v5750
    %v5879 = vunpack.c.l.b16 %v5751
    %v5880 = vunpack.c.l.b16 %v5752
    %v5881 = vunpack.c.l.b16 %v5753
    %v5882 = vunpack.c.l.b16 %v5754
    %v5883 = vunpack.c.l.b16 %v5755
    %v5884 = vunpack.c.l.b16 %v5756
    %v5885 = vunpack.c.l.b16 %v5757
    %v5886 = vunpack.c.l.b16 %v5758
    %v5887 = vunpack.c.l.b16 %v5759
    %v5888 = vunpack.c.l.b16 %v5760
    %v5889 = vunpack.c.l.b16 %v5761
    %v5890 = vunpack.c.l.b16 %v5762
    %v5891 = vunpack.c.l.b16 %v5763
    %v5892 = vunpack.c.l.b16 %v5764
    %v5893 = vunpack.c.l.b16 %v5765
    %v5894 = vunpack.c.l.b16 %v5766
    %v5895 = vunpack.c.l.b16 %v5767
    %v5896 = vunpack.c.l.b16 %v5768
    %v5897 = vunpack.c.l.b16 %v5769
    %v5898 = vunpack.c.l.b16 %v5770
    %v5899 = vunpack.c.l.b16 %v5771
    %v5900 = vunpack.c.l.b16 %v5772
    %v5901 = vunpack.c.l.b16 %v5773
    %v5902 = vunpack.c.l.b16 %v5774
    %v5903 = vunpack.c.l.b16 %v5775
    %v5904 = vunpack.c.l.b16 %v5776
    %v5905 = vunpack.c.l.b16 %v5777
    %v5906 = vunpack.c.l.b16 %v5778
    %v5907 = vunpack.c.l.b16 %v5779
    %v5908 = vunpack.c.l.b16 %v5780
    %v5909 = vunpack.c.l.b16 %v5781
    %v5910 = vunpack.c.l.b16 %v5782
    %v5911 = vunpack.c.l.b16 %v5783
    %v5912 = vunpack.c.l.b16 %v5784
    %v5913 = vunpack.c.l.b16 %v5785
    %v5914 = vunpack.c.l.b16 %v5786
    %v5915 = vunpack.c.l.b16 %v5787
    %v5916 = vunpack.c.l.b16 %v5788
    %v5917 = vunpack.c.l.b16 %v5789
    %v5918 = vunpack.c.l.b16 %v5790
    %v5919 = vunpack.c.l.b16 %v5791
    %v5920 = vunpack.c.l.b16 %v5792
    %v5921 = vunpack.c.l.b16 %v5793
    %v5922 = vunpack.c.l.b16 %v5794
    %v5923 = vunpack.c.l.b16 %v5795
    %v5924 = vunpack.c.l.b16 %v5796
    %v5925 = vunpack.c.l.b16 %v5797
    %v5926 = vunpack.c.l.b16 %v5798
    %v5927 = vunpack.c.l.b16 %v5799
    %v5928 = vunpack.c.l.b16 %v5800
    %v5929 = vunpack.c.l.b16 %v5801
    %v5930 = vunpack.c.l.b16 %v5802
    %v5931 = vunpack.c.l.b16 %v5803
    %v5932 = vpack.c.b16 %v5869, %v5868
    %v5933 = vpack.c.b16 %v5871, %v5870
    %v5934 = vpack.c.b16 %v5873, %v5872
    %v5935 = vpack.c.b16 %v5875, %v5874
    %v5936 = vpack.c.b16 %v5877, %v5876
    %v5937 = vpack.c.b16 %v5879, %v5878
    %v5938 = vpack.c.b16 %v5881, %v5880
    %v5939 = vpack.c.b16 %v5883, %v5882
    %v5940 = vpack.c.b16 %v5885, %v5884
    %v5941 = vpack.c.b16 %v5887, %v5886
    %v5942 = vpack.c.b16 %v5889, %v5888
    %v5943 = vpack.c.b16 %v5891, %v5890
    %v5944 = vpack.c.b16 %v5893, %v5892
    %v5945 = vpack.c.b16 %v5895, %v5894
    %v5946 = vpack.c.b16 %v5897, %v5896
    %v5947 = vpack.c.b16 %v5899, %v5898
    %v5948 = vpack.c.b16 %v5901, %v5900
    %v5949 = vpack.c.b16 %v5903, %v5902
    %v5950 = vpack.c.b16 %v5905, %v5904
    %v5951 = vpack.c.b16 %v5907, %v5906
    %v5952 = vpack.c.b16 %v5909, %v5908
    %v5953 = vpack.c.b16 %v5911, %v5910
    %v5954 = vpack.c.b16 %v5913, %v5912
    %v5955 = vpack.c.b16 %v5915, %v5914
    %v5956 = vpack.c.b16 %v5917, %v5916
    %v5957 = vpack.c.b16 %v5919, %v5918
    %v5958 = vpack.c.b16 %v5921, %v5920
    %v5959 = vpack.c.b16 %v5923, %v5922
    %v5960 = vpack.c.b16 %v5925, %v5924
    %v5961 = vpack.c.b16 %v5927, %v5926
    %v5962 = vpack.c.b16 %v5929, %v5928
    %v5963 = vpack.c.b16 %v5931, %v5930
    %5996 = vmatprep.subr.bf16.mxu0 0
    %5997 = vmatpush1.bf16.msra.mxu0 %v5932
    %5998 = vmatprep.subr.bf16.mxu0 0
    %5999 = vmatpush1.bf16.msra.mxu0 %v5933
    %6000 = vmatprep.subr.bf16.mxu0 0
    %6001 = vmatpush1.bf16.msra.mxu0 %v5934
    %6002 = vmatprep.subr.bf16.mxu0 0
    %6003 = vmatpush1.bf16.msra.mxu0 %v5935
    %6004 = vmatprep.subr.bf16.mxu0 0
    %6005 = vmatpush1.bf16.msra.mxu0 %v5936
    %6006 = vmatprep.subr.bf16.mxu0 0
    %6007 = vmatpush1.bf16.msra.mxu0 %v5937
    %6008 = vmatprep.subr.bf16.mxu0 0
    %6009 = vmatpush1.bf16.msra.mxu0 %v5938
    %6010 = vmatprep.subr.bf16.mxu0 0
    %6011 = vmatpush1.bf16.msra.mxu0 %v5939
    %6012 = vmatprep.subr.bf16.mxu0 0
    %6013 = vmatpush1.bf16.msra.mxu0 %v5940
    %6014 = vmatprep.subr.bf16.mxu0 0
    %6015 = vmatpush1.bf16.msra.mxu0 %v5941
    %6016 = vmatprep.subr.bf16.mxu0 0
    %6017 = vmatpush1.bf16.msra.mxu0 %v5942
    %6018 = vmatprep.subr.bf16.mxu0 0
    %6019 = vmatpush1.bf16.msra.mxu0 %v5943
    %6020 = vmatprep.subr.bf16.mxu0 0
    %6021 = vmatpush1.bf16.msra.mxu0 %v5944
    %6022 = vmatprep.subr.bf16.mxu0 0
    %6023 = vmatpush1.bf16.msra.mxu0 %v5945
    %6024 = vmatprep.subr.bf16.mxu0 0
    %6025 = vmatpush1.bf16.msra.mxu0 %v5946
    %6026 = vmatprep.subr.bf16.mxu0 0
    %6027 = vmatpush1.bf16.msra.mxu0 %v5947
    %6028 = vmatprep.mubr.bf16.mxu0 %v5737
    %6029 = vmatmul.mubr.bf16.gmra.mrb[0].mxu0 %v5736
    %v6030 = vpop.f32.mrb[0].mxu0
    %v6031 = vadd.f32 0.0, %v6030
    %v6032 = vpop.f32.mrb[0].mxu0
    %v6033 = vpop.f32.mrb[0].mxu0
    %v6034 = vadd.f32 0.0, %v6033
    %v6035 = vpop.f32.mrb[0].mxu0
    %6036 = vdwg.mxu0
    %6037 = vmatprep.subr.bf16.mxu0 0
    %6038 = vmatpush1.bf16.msra.mxu0 %v5948
    %6039 = vmatprep.subr.bf16.mxu0 0
    %6040 = vmatpush1.bf16.msra.mxu0 %v5949
    %6041 = vmatprep.subr.bf16.mxu0 0
    %6042 = vmatpush1.bf16.msra.mxu0 %v5950
    %6043 = vmatprep.subr.bf16.mxu0 0
    %6044 = vmatpush1.bf16.msra.mxu0 %v5951
    %6045 = vmatprep.subr.bf16.mxu0 0
    %6046 = vmatpush1.bf16.msra.mxu0 %v5952
    %6047 = vmatprep.subr.bf16.mxu0 0
    %6048 = vmatpush1.bf16.msra.mxu0 %v5953
    %6049 = vmatprep.subr.bf16.mxu0 0
    %6050 = vmatpush1.bf16.msra.mxu0 %v5954
    %6051 = vmatprep.subr.bf16.mxu0 0
    %6052 = vmatpush1.bf16.msra.mxu0 %v5955
    %6053 = vmatprep.subr.bf16.mxu0 0
    %6054 = vmatpush1.bf16.msra.mxu0 %v5956
    %6055 = vmatprep.subr.bf16.mxu0 0
    %6056 = vmatpush1.bf16.msra.mxu0 %v5957
    %6057 = vmatprep.subr.bf16.mxu0 0
    %6058 = vmatpush1.bf16.msra.mxu0 %v5958
    %6059 = vmatprep.subr.bf16.mxu0 0
    %6060 = vmatpush1.bf16.msra.mxu0 %v5959
    %6061 = vmatprep.subr.bf16.mxu0 0
    %6062 = vmatpush1.bf16.msra.mxu0 %v5960
    %6063 = vmatprep.subr.bf16.mxu0 0
    %6064 = vmatpush1.bf16.msra.mxu0 %v5961
    %6065 = vmatprep.subr.bf16.mxu0 0
    %6066 = vmatpush1.bf16.msra.mxu0 %v5962
    %6067 = vmatprep.subr.bf16.mxu0 0
    %6068 = vmatpush1.bf16.msra.mxu0 %v5963
    %6069 = vmatprep.mubr.bf16.mxu0 %v5739
    %6070 = vmatmul.mubr.bf16.gmra.mrb[0].mxu0 %v5738
    %v6071 = vpop.f32.mrb[0].mxu0
    %v6072 = vadd.f32 %v6031, %v6071
    %v6073 = vpop.f32.mrb[0].mxu0
    %v6074 = vpop.f32.mrb[0].mxu0
    %v6075 = vadd.f32 %v6034, %v6074
    %v6076 = vpop.f32.mrb[0].mxu0
    %6077 = vdwg.mxu0
    %v6078 = vadd.f32 %v5565, %v6072
    %v6079 = vadd.f32 %v5568, %v6075
    %v6080 = vld [vmem:[%s4552 + $0x30] sm:$0xff]
    %v6081 = vld [vmem:[%s4552 + $0x38] sm:$0xff]
    %v6082 = vld [vmem:[%s4552 + $0x70] sm:$0xff]
    %v6083 = vld [vmem:[%s4552 + $0x78] sm:$0xff]
    %v6084 = vld [vmem:[%s4552 + $0xb0] sm:$0xff]
    %v6085 = vld [vmem:[%s4552 + $0xb8] sm:$0xff]
    %v6086 = vld [vmem:[%s4552 + $0xf0] sm:$0xff]
    %v6087 = vld [vmem:[%s4552 + $0xf8] sm:$0xff]
    %s6088 = scalar_lea.vmem %s9, 25
    %v6089 = vld [vmem:[%s6088] ss:$2 sm:$0xf]
    %v6091 = vlaneseq
    %v6092 = vshrl.u32 %v6091, 7
    %v6093 = vsub.s32 0, %v6092
    %v6094 = vrot.slane %v6089, %v6093
    %v6095 = vlaneseq
    %v6096 = vshrl.u32 %v6095, 7
    %v6097 = vsub.s32 1, %v6096
    %v6098 = vrot.slane %v6089, %v6097
    %v6099 = vlaneseq
    %v6100 = vshrl.u32 %v6099, 7
    %v6101 = vsub.s32 2, %v6100
    %v6102 = vrot.slane %v6089, %v6101
    %v6103 = vlaneseq
    %v6104 = vshrl.u32 %v6103, 7
    %v6105 = vsub.s32 3, %v6104
    %v6106 = vrot.slane %v6089, %v6105
    %v6119 = vunpack.c.l.b16 %v6080
    %v6120 = vunpack.c.h.b16 %v6080
    %v6121 = vunpack.c.l.b16 %v6081
    %v6122 = vunpack.c.h.b16 %v6081
    %v6123 = vunpack.c.l.b16 %v6082
    %v6124 = vunpack.c.h.b16 %v6082
    %v6125 = vunpack.c.l.b16 %v6083
    %v6126 = vunpack.c.h.b16 %v6083
    %v6127 = vunpack.c.l.b16 %v6084
    %v6128 = vunpack.c.h.b16 %v6084
    %v6129 = vunpack.c.l.b16 %v6085
    %v6130 = vunpack.c.h.b16 %v6085
    %v6131 = vunpack.c.l.b16 %v6086
    %v6132 = vunpack.c.h.b16 %v6086
    %v6133 = vunpack.c.l.b16 %v6087
    %v6134 = vunpack.c.h.b16 %v6087
    %v6135 = vpack.c.b16 %v6123, %v6119
    %v6136 = vpack.c.b16 %v6124, %v6120
    %v6137 = vpack.c.b16 %v6125, %v6121
    %v6138 = vpack.c.b16 %v6126, %v6122
    %v6139 = vpack.c.b16 %v6131, %v6127
    %v6140 = vpack.c.b16 %v6132, %v6128
    %v6141 = vpack.c.b16 %v6133, %v6129
    %v6142 = vpack.c.b16 %v6134, %v6130
    %6151 = vmatprep.subr.bf16.mxu0 %v6136
    %6152 = vmatpush1.bf16.msra.mxu0 %v6135
    %6153 = vmatprep.subr.bf16.mxu0 %v6140
    %6154 = vmatpush1.bf16.msra.mxu0 %v6139
    %6155 = vmatprep.subr.bf16.mxu0 0
    %6156 = vmatpush1.bf16.msra.mxu0 0
    %6157 = vmatprep.subr.bf16.mxu0 0
    %6158 = vmatpush1.bf16.msra.mxu0 0
    %6159 = vmatprep.subr.bf16.mxu0 0
    %6160 = vmatpush1.bf16.msra.mxu0 0
    %6161 = vmatprep.subr.bf16.mxu0 0
    %6162 = vmatpush1.bf16.msra.mxu0 0
    %6163 = vmatprep.subr.bf16.mxu0 0
    %6164 = vmatpush1.bf16.msra.mxu0 0
    %6165 = vmatprep.subr.bf16.mxu0 0
    %6166 = vmatpush1.bf16.msra.mxu0 0
    %6167 = vmatprep.subr.bf16.mxu0 0
    %6168 = vmatpush1.bf16.msra.mxu0 0
    %6169 = vmatprep.subr.bf16.mxu0 0
    %6170 = vmatpush1.bf16.msra.mxu0 0
    %6171 = vmatprep.subr.bf16.mxu0 0
    %6172 = vmatpush1.bf16.msra.mxu0 0
    %6173 = vmatprep.subr.bf16.mxu0 0
    %6174 = vmatpush1.bf16.msra.mxu0 0
    %6175 = vmatprep.subr.bf16.mxu0 0
    %6176 = vmatpush1.bf16.msra.mxu0 0
    %6177 = vmatprep.subr.bf16.mxu0 0
    %6178 = vmatpush1.bf16.msra.mxu0 0
    %6179 = vmatprep.subr.bf16.mxu0 0
    %6180 = vmatpush1.bf16.msra.mxu0 0
    %6181 = vmatprep.subr.bf16.mxu0 0
    %6182 = vmatpush1.bf16.msra.mxu0 0
    %6183 = vmatprep.mubr.bf16.mxu0 0
    %6184 = vmatmul.mubr.bf16.gmra.mrb[0].mxu0 %v4625
    %v6185 = vpop.f32.mrb[0].mxu0
    %v6186 = vadd.f32 %v6094, %v6185
    %v6187 = vpop.f32.mrb[0].mxu0
    %v6188 = vadd.f32 %v6098, %v6187
    %v6189 = vpop.f32.mrb[0].mxu0
    %v6190 = vadd.f32 %v6094, %v6189
    %v6191 = vpop.f32.mrb[0].mxu0
    %v6192 = vadd.f32 %v6098, %v6191
    %6193 = vdwg.mxu0
    %6194 = vmatprep.subr.bf16.mxu0 %v6138
    %6195 = vmatpush1.bf16.msra.mxu0 %v6137
    %6196 = vmatprep.subr.bf16.mxu0 %v6142
    %6197 = vmatpush1.bf16.msra.mxu0 %v6141
    %6198 = vmatprep.subr.bf16.mxu0 0
    %6199 = vmatpush1.bf16.msra.mxu0 0
    %6200 = vmatprep.subr.bf16.mxu0 0
    %6201 = vmatpush1.bf16.msra.mxu0 0
    %6202 = vmatprep.subr.bf16.mxu0 0
    %6203 = vmatpush1.bf16.msra.mxu0 0
    %6204 = vmatprep.subr.bf16.mxu0 0
    %6205 = vmatpush1.bf16.msra.mxu0 0
    %6206 = vmatprep.subr.bf16.mxu0 0
    %6207 = vmatpush1.bf16.msra.mxu0 0
    %6208 = vmatprep.subr.bf16.mxu0 0
    %6209 = vmatpush1.bf16.msra.mxu0 0
    %6210 = vmatprep.subr.bf16.mxu0 0
    %6211 = vmatpush1.bf16.msra.mxu0 0
    %6212 = vmatprep.subr.bf16.mxu0 0
    %6213 = vmatpush1.bf16.msra.mxu0 0
    %6214 = vmatprep.subr.bf16.mxu0 0
    %6215 = vmatpush1.bf16.msra.mxu0 0
    %6216 = vmatprep.subr.bf16.mxu0 0
    %6217 = vmatpush1.bf16.msra.mxu0 0
    %6218 = vmatprep.subr.bf16.mxu0 0
    %6219 = vmatpush1.bf16.msra.mxu0 0
    %6220 = vmatprep.subr.bf16.mxu0 0
    %6221 = vmatpush1.bf16.msra.mxu0 0
    %6222 = vmatprep.subr.bf16.mxu0 0
    %6223 = vmatpush1.bf16.msra.mxu0 0
    %6224 = vmatprep.subr.bf16.mxu0 0
    %6225 = vmatpush1.bf16.msra.mxu0 0
    %6226 = vmatprep.mubr.bf16.mxu0 0
    %6227 = vmatmul.mubr.bf16.gmra.mrb[0].mxu0 %v4625
    %v6228 = vpop.f32.mrb[0].mxu0
    %v6229 = vadd.f32 %v6102, %v6228
    %v6230 = vpop.f32.mrb[0].mxu0
    %v6231 = vadd.f32 %v6106, %v6230
    %v6232 = vpop.f32.mrb[0].mxu0
    %v6233 = vadd.f32 %v6102, %v6232
    %v6234 = vpop.f32.mrb[0].mxu0
    %v6235 = vadd.f32 %v6106, %v6234
    %6236 = vdwg.mxu0
    %v6237 = vmax.f32 %v6186, 0.0
    %v6238 = vmax.f32 %v6188, 0.0
    %v6239 = vmax.f32 %v6229, 0.0
    %v6240 = vmax.f32 %v6231, 0.0
    %v6241 = vmax.f32 %v6190, 0.0
    %v6242 = vmax.f32 %v6192, 0.0
    %v6243 = vmax.f32 %v6233, 0.0
    %v6244 = vmax.f32 %v6235, 0.0
    %v6245 = vpack.c.bf16 %v6241, %v6237
    %v6246 = vpack.c.bf16 %v6242, %v6238
    %v6247 = vpack.c.bf16 %v6243, %v6239
    %v6248 = vpack.c.bf16 %v6244, %v6240
    %v6249 = vld [vmem:[%s4725 + $0x300] sm:$0xf]
    %v6250 = vld [vmem:[%s4725 + $0x304] sm:$0xf]
    %v6251 = vld [vmem:[%s4725 + $0x308] sm:$0xf]
    %v6252 = vld [vmem:[%s4725 + $0x30c] sm:$0xf]
    %v6253 = vld [vmem:[%s4725 + $0x310] sm:$0xf]
    %v6254 = vld [vmem:[%s4725 + $0x314] sm:$0xf]
    %v6255 = vld [vmem:[%s4725 + $0x318] sm:$0xf]
    %v6256 = vld [vmem:[%s4725 + $0x31c] sm:$0xf]
    %v6257 = vld [vmem:[%s4725 + $0x320] sm:$0xf]
    %v6258 = vld [vmem:[%s4725 + $0x324] sm:$0xf]
    %v6259 = vld [vmem:[%s4725 + $0x328] sm:$0xf]
    %v6260 = vld [vmem:[%s4725 + $0x32c] sm:$0xf]
    %v6261 = vld [vmem:[%s4725 + $0x330] sm:$0xf]
    %v6262 = vld [vmem:[%s4725 + $0x334] sm:$0xf]
    %v6263 = vld [vmem:[%s4725 + $0x338] sm:$0xf]
    %v6264 = vld [vmem:[%s4725 + $0x33c] sm:$0xf]
    %v6265 = vld [vmem:[%s4725 + $0x340] sm:$0xf]
    %v6266 = vld [vmem:[%s4725 + $0x344] sm:$0xf]
    %v6267 = vld [vmem:[%s4725 + $0x348] sm:$0xf]
    %v6268 = vld [vmem:[%s4725 + $0x34c] sm:$0xf]
    %v6269 = vld [vmem:[%s4725 + $0x350] sm:$0xf]
    %v6270 = vld [vmem:[%s4725 + $0x354] sm:$0xf]
    %v6271 = vld [vmem:[%s4725 + $0x358] sm:$0xf]
    %v6272 = vld [vmem:[%s4725 + $0x35c] sm:$0xf]
    %v6273 = vld [vmem:[%s4725 + $0x360] sm:$0xf]
    %v6274 = vld [vmem:[%s4725 + $0x364] sm:$0xf]
    %v6275 = vld [vmem:[%s4725 + $0x368] sm:$0xf]
    %v6276 = vld [vmem:[%s4725 + $0x36c] sm:$0xf]
    %v6277 = vld [vmem:[%s4725 + $0x370] sm:$0xf]
    %v6278 = vld [vmem:[%s4725 + $0x374] sm:$0xf]
    %v6279 = vld [vmem:[%s4725 + $0x378] sm:$0xf]
    %v6280 = vld [vmem:[%s4725 + $0x37c] sm:$0xf]
    %v6281 = vld [vmem:[%s4725 + $0x380] sm:$0xf]
    %v6282 = vld [vmem:[%s4725 + $0x384] sm:$0xf]
    %v6283 = vld [vmem:[%s4725 + $0x388] sm:$0xf]
    %v6284 = vld [vmem:[%s4725 + $0x38c] sm:$0xf]
    %v6285 = vld [vmem:[%s4725 + $0x390] sm:$0xf]
    %v6286 = vld [vmem:[%s4725 + $0x394] sm:$0xf]
    %v6287 = vld [vmem:[%s4725 + $0x398] sm:$0xf]
    %v6288 = vld [vmem:[%s4725 + $0x39c] sm:$0xf]
    %v6289 = vld [vmem:[%s4725 + $0x3a0] sm:$0xf]
    %v6290 = vld [vmem:[%s4725 + $0x3a4] sm:$0xf]
    %v6291 = vld [vmem:[%s4725 + $0x3a8] sm:$0xf]
    %v6292 = vld [vmem:[%s4725 + $0x3ac] sm:$0xf]
    %v6293 = vld [vmem:[%s4725 + $0x3b0] sm:$0xf]
    %v6294 = vld [vmem:[%s4725 + $0x3b4] sm:$0xf]
    %v6295 = vld [vmem:[%s4725 + $0x3b8] sm:$0xf]
    %v6296 = vld [vmem:[%s4725 + $0x3bc] sm:$0xf]
    %v6297 = vld [vmem:[%s4725 + $0x3c0] sm:$0xf]
    %v6298 = vld [vmem:[%s4725 + $0x3c4] sm:$0xf]
    %v6299 = vld [vmem:[%s4725 + $0x3c8] sm:$0xf]
    %v6300 = vld [vmem:[%s4725 + $0x3cc] sm:$0xf]
    %v6301 = vld [vmem:[%s4725 + $0x3d0] sm:$0xf]
    %v6302 = vld [vmem:[%s4725 + $0x3d4] sm:$0xf]
    %v6303 = vld [vmem:[%s4725 + $0x3d8] sm:$0xf]
    %v6304 = vld [vmem:[%s4725 + $0x3dc] sm:$0xf]
    %v6305 = vld [vmem:[%s4725 + $0x3e0] sm:$0xf]
    %v6306 = vld [vmem:[%s4725 + $0x3e4] sm:$0xf]
    %v6307 = vld [vmem:[%s4725 + $0x3e8] sm:$0xf]
    %v6308 = vld [vmem:[%s4725 + $0x3ec] sm:$0xf]
    %v6309 = vld [vmem:[%s4725 + $0x3f0] sm:$0xf]
    %v6310 = vld [vmem:[%s4725 + $0x3f4] sm:$0xf]
    %v6311 = vld [vmem:[%s4725 + $0x3f8] sm:$0xf]
    %v6312 = vld [vmem:[%s4725 + $0x3fc] sm:$0xf]
    %v6377 = vunpack.c.l.b16 %v6249
    %v6378 = vunpack.c.l.b16 %v6250
    %v6379 = vunpack.c.l.b16 %v6251
    %v6380 = vunpack.c.l.b16 %v6252
    %v6381 = vunpack.c.l.b16 %v6253
    %v6382 = vunpack.c.l.b16 %v6254
    %v6383 = vunpack.c.l.b16 %v6255
    %v6384 = vunpack.c.l.b16 %v6256
    %v6385 = vunpack.c.l.b16 %v6257
    %v6386 = vunpack.c.l.b16 %v6258
    %v6387 = vunpack.c.l.b16 %v6259
    %v6388 = vunpack.c.l.b16 %v6260
    %v6389 = vunpack.c.l.b16 %v6261
    %v6390 = vunpack.c.l.b16 %v6262
    %v6391 = vunpack.c.l.b16 %v6263
    %v6392 = vunpack.c.l.b16 %v6264
    %v6393 = vunpack.c.l.b16 %v6265
    %v6394 = vunpack.c.l.b16 %v6266
    %v6395 = vunpack.c.l.b16 %v6267
    %v6396 = vunpack.c.l.b16 %v6268
    %v6397 = vunpack.c.l.b16 %v6269
    %v6398 = vunpack.c.l.b16 %v6270
    %v6399 = vunpack.c.l.b16 %v6271
    %v6400 = vunpack.c.l.b16 %v6272
    %v6401 = vunpack.c.l.b16 %v6273
    %v6402 = vunpack.c.l.b16 %v6274
    %v6403 = vunpack.c.l.b16 %v6275
    %v6404 = vunpack.c.l.b16 %v6276
    %v6405 = vunpack.c.l.b16 %v6277
    %v6406 = vunpack.c.l.b16 %v6278
    %v6407 = vunpack.c.l.b16 %v6279
    %v6408 = vunpack.c.l.b16 %v6280
    %v6409 = vunpack.c.l.b16 %v6281
    %v6410 = vunpack.c.l.b16 %v6282
    %v6411 = vunpack.c.l.b16 %v6283
    %v6412 = vunpack.c.l.b16 %v6284
    %v6413 = vunpack.c.l.b16 %v6285
    %v6414 = vunpack.c.l.b16 %v6286
    %v6415 = vunpack.c.l.b16 %v6287
    %v6416 = vunpack.c.l.b16 %v6288
    %v6417 = vunpack.c.l.b16 %v6289
    %v6418 = vunpack.c.l.b16 %v6290
    %v6419 = vunpack.c.l.b16 %v6291
    %v6420 = vunpack.c.l.b16 %v6292
    %v6421 = vunpack.c.l.b16 %v6293
    %v6422 = vunpack.c.l.b16 %v6294
    %v6423 = vunpack.c.l.b16 %v6295
    %v6424 = vunpack.c.l.b16 %v6296
    %v6425 = vunpack.c.l.b16 %v6297
    %v6426 = vunpack.c.l.b16 %v6298
    %v6427 = vunpack.c.l.b16 %v6299
    %v6428 = vunpack.c.l.b16 %v6300
    %v6429 = vunpack.c.l.b16 %v6301
    %v6430 = vunpack.c.l.b16 %v6302
    %v6431 = vunpack.c.l.b16 %v6303
    %v6432 = vunpack.c.l.b16 %v6304
    %v6433 = vunpack.c.l.b16 %v6305
    %v6434 = vunpack.c.l.b16 %v6306
    %v6435 = vunpack.c.l.b16 %v6307
    %v6436 = vunpack.c.l.b16 %v6308
    %v6437 = vunpack.c.l.b16 %v6309
    %v6438 = vunpack.c.l.b16 %v6310
    %v6439 = vunpack.c.l.b16 %v6311
    %v6440 = vunpack.c.l.b16 %v6312
    %v6441 = vpack.c.b16 %v6378, %v6377
    %v6442 = vpack.c.b16 %v6380, %v6379
    %v6443 = vpack.c.b16 %v6382, %v6381
    %v6444 = vpack.c.b16 %v6384, %v6383
    %v6445 = vpack.c.b16 %v6386, %v6385
    %v6446 = vpack.c.b16 %v6388, %v6387
    %v6447 = vpack.c.b16 %v6390, %v6389
    %v6448 = vpack.c.b16 %v6392, %v6391
    %v6449 = vpack.c.b16 %v6394, %v6393
    %v6450 = vpack.c.b16 %v6396, %v6395
    %v6451 = vpack.c.b16 %v6398, %v6397
    %v6452 = vpack.c.b16 %v6400, %v6399
    %v6453 = vpack.c.b16 %v6402, %v6401
    %v6454 = vpack.c.b16 %v6404, %v6403
    %v6455 = vpack.c.b16 %v6406, %v6405
    %v6456 = vpack.c.b16 %v6408, %v6407
    %v6457 = vpack.c.b16 %v6410, %v6409
    %v6458 = vpack.c.b16 %v6412, %v6411
    %v6459 = vpack.c.b16 %v6414, %v6413
    %v6460 = vpack.c.b16 %v6416, %v6415
    %v6461 = vpack.c.b16 %v6418, %v6417
    %v6462 = vpack.c.b16 %v6420, %v6419
    %v6463 = vpack.c.b16 %v6422, %v6421
    %v6464 = vpack.c.b16 %v6424, %v6423
    %v6465 = vpack.c.b16 %v6426, %v6425
    %v6466 = vpack.c.b16 %v6428, %v6427
    %v6467 = vpack.c.b16 %v6430, %v6429
    %v6468 = vpack.c.b16 %v6432, %v6431
    %v6469 = vpack.c.b16 %v6434, %v6433
    %v6470 = vpack.c.b16 %v6436, %v6435
    %v6471 = vpack.c.b16 %v6438, %v6437
    %v6472 = vpack.c.b16 %v6440, %v6439
    %6505 = vmatprep.subr.bf16.mxu0 0
    %6506 = vmatpush1.bf16.msra.mxu0 %v6441
    %6507 = vmatprep.subr.bf16.mxu0 0
    %6508 = vmatpush1.bf16.msra.mxu0 %v6442
    %6509 = vmatprep.subr.bf16.mxu0 0
    %6510 = vmatpush1.bf16.msra.mxu0 %v6443
    %6511 = vmatprep.subr.bf16.mxu0 0
    %6512 = vmatpush1.bf16.msra.mxu0 %v6444
    %6513 = vmatprep.subr.bf16.mxu0 0
    %6514 = vmatpush1.bf16.msra.mxu0 %v6445
    %6515 = vmatprep.subr.bf16.mxu0 0
    %6516 = vmatpush1.bf16.msra.mxu0 %v6446
    %6517 = vmatprep.subr.bf16.mxu0 0
    %6518 = vmatpush1.bf16.msra.mxu0 %v6447
    %6519 = vmatprep.subr.bf16.mxu0 0
    %6520 = vmatpush1.bf16.msra.mxu0 %v6448
    %6521 = vmatprep.subr.bf16.mxu0 0
    %6522 = vmatpush1.bf16.msra.mxu0 %v6449
    %6523 = vmatprep.subr.bf16.mxu0 0
    %6524 = vmatpush1.bf16.msra.mxu0 %v6450
    %6525 = vmatprep.subr.bf16.mxu0 0
    %6526 = vmatpush1.bf16.msra.mxu0 %v6451
    %6527 = vmatprep.subr.bf16.mxu0 0
    %6528 = vmatpush1.bf16.msra.mxu0 %v6452
    %6529 = vmatprep.subr.bf16.mxu0 0
    %6530 = vmatpush1.bf16.msra.mxu0 %v6453
    %6531 = vmatprep.subr.bf16.mxu0 0
    %6532 = vmatpush1.bf16.msra.mxu0 %v6454
    %6533 = vmatprep.subr.bf16.mxu0 0
    %6534 = vmatpush1.bf16.msra.mxu0 %v6455
    %6535 = vmatprep.subr.bf16.mxu0 0
    %6536 = vmatpush1.bf16.msra.mxu0 %v6456
    %6537 = vmatprep.mubr.bf16.mxu0 %v6246
    %6538 = vmatmul.mubr.bf16.gmra.mrb[0].mxu0 %v6245
    %v6539 = vpop.f32.mrb[0].mxu0
    %v6540 = vadd.f32 0.0, %v6539
    %v6541 = vpop.f32.mrb[0].mxu0
    %v6542 = vpop.f32.mrb[0].mxu0
    %v6543 = vadd.f32 0.0, %v6542
    %v6544 = vpop.f32.mrb[0].mxu0
    %6545 = vdwg.mxu0
    %6546 = vmatprep.subr.bf16.mxu0 0
    %6547 = vmatpush1.bf16.msra.mxu0 %v6457
    %6548 = vmatprep.subr.bf16.mxu0 0
    %6549 = vmatpush1.bf16.msra.mxu0 %v6458
    %6550 = vmatprep.subr.bf16.mxu0 0
    %6551 = vmatpush1.bf16.msra.mxu0 %v6459
    %6552 = vmatprep.subr.bf16.mxu0 0
    %6553 = vmatpush1.bf16.msra.mxu0 %v6460
    %6554 = vmatprep.subr.bf16.mxu0 0
    %6555 = vmatpush1.bf16.msra.mxu0 %v6461
    %6556 = vmatprep.subr.bf16.mxu0 0
    %6557 = vmatpush1.bf16.msra.mxu0 %v6462
    %6558 = vmatprep.subr.bf16.mxu0 0
    %6559 = vmatpush1.bf16.msra.mxu0 %v6463
    %6560 = vmatprep.subr.bf16.mxu0 0
    %6561 = vmatpush1.bf16.msra.mxu0 %v6464
    %6562 = vmatprep.subr.bf16.mxu0 0
    %6563 = vmatpush1.bf16.msra.mxu0 %v6465
    %6564 = vmatprep.subr.bf16.mxu0 0
    %6565 = vmatpush1.bf16.msra.mxu0 %v6466
    %6566 = vmatprep.subr.bf16.mxu0 0
    %6567 = vmatpush1.bf16.msra.mxu0 %v6467
    %6568 = vmatprep.subr.bf16.mxu0 0
    %6569 = vmatpush1.bf16.msra.mxu0 %v6468
    %6570 = vmatprep.subr.bf16.mxu0 0
    %6571 = vmatpush1.bf16.msra.mxu0 %v6469
    %6572 = vmatprep.subr.bf16.mxu0 0
    %6573 = vmatpush1.bf16.msra.mxu0 %v6470
    %6574 = vmatprep.subr.bf16.mxu0 0
    %6575 = vmatpush1.bf16.msra.mxu0 %v6471
    %6576 = vmatprep.subr.bf16.mxu0 0
    %6577 = vmatpush1.bf16.msra.mxu0 %v6472
    %6578 = vmatprep.mubr.bf16.mxu0 %v6248
    %6579 = vmatmul.mubr.bf16.gmra.mrb[0].mxu0 %v6247
    %v6580 = vpop.f32.mrb[0].mxu0
    %v6581 = vadd.f32 %v6540, %v6580
    %v6582 = vpop.f32.mrb[0].mxu0
    %v6583 = vpop.f32.mrb[0].mxu0
    %v6584 = vadd.f32 %v6543, %v6583
    %v6585 = vpop.f32.mrb[0].mxu0
    %6586 = vdwg.mxu0
    %v6587 = vadd.f32 %v6078, %v6581
    %v6588 = vadd.f32 %v6079, %v6584
    %v6589 = vadd.f32 %v4497, %v6587
    %v6590 = vadd.f32 %v4498, %v6588
    %v6591 = vld [vmem:[%s11 + $0x1] sm:$0x1]
    %v6592 = vlaneseq
    %v6593 = vshrl.u32 %v6592, 7
    %v6594 = vsub.s32 0, %v6593
    %v6595 = vrot.slane %v6591, %v6594
    %v6596 = vadd.f32 %v6589, %v6595
    %v6597 = vadd.f32 %v6590, %v6595
    %6598 = vst.msk [vmem:[#allocation5] sm:$0xff] %vm123, %v6596
    %6599 = vst.msk [vmem:[#allocation5 + $0x8] sm:$0xff] %vm123, %v6597
    // Predicated region
    $region54: #{_lambda_.1} parent=1 // pred_check
      _
    $region55: #{_lambda_.1} parent=1 // pred_check_branch
      %6601 = sbr.rel (0) target = $region57
    $region56: #{_lambda_.1} parent=1 // pred_region
      %s6603 = ssub.s32 256, 256
      %6604 = vsyncadd [#allocation4], %s6603
      %s6605 = sshll.u32 [#allocation5], 4
      %s6606 = int_to_ptr.vmem [resolvable:$true] %s6605
      %6611 = dma.vmem_to_hbm [thread:$0]  %s6606, 256, %s12, [#allocation4], 128, 128, 8
    $region57: #{_lambda_.1} parent=1 // pred_fallthru
      _
    // Predicated region
    $region58: #{_lambda_.1} parent=1 // pred_check
      _
    $region59: #{_lambda_.1} parent=1 // pred_check_branch
      %6613 = sbr.rel (0) target = $region61
    $region60: #{_lambda_.1} parent=1 // pred_region
      %6614 = dma.done [#allocation4], 256
    $region61: #{_lambda_.1} parent=1 // pred_fallthru
      _
    %6615 = vsyncpa [#allocation3], 1
    %6616 = vsyncpa [#allocation4], 1

</llo_original>
